<compile_context>
chip_gen: v6e
topology: v6e:2x2x1
jax: 0.10.0
libtpu: 0.0.40
codegen_flags: <defaults>
</compile_context>

<pallas_src>
import functools

import jax
import jax.numpy as jnp
from jax import lax
from jax.experimental import pallas as pl
from jax.experimental.pallas import tpu as pltpu


def _fused_encoder_kernel(p_ref, w1_ref, b1_ref, w2_ref, b2_ref, o_ref, y1_ref,
                          *, W, TH, C1, C2):
    """Fused Conv(3->C1,5x5,p2)+ReLU -> Conv(C1->C2,3x3,p1)+ReLU, one row tile.

    p_ref : (TH+2, W+2, 128) bf16  conv1 im2col patches (K=75 zero-padded to 128)
                                   for conv1 output rows [r*TH-1, r*TH+TH] and
                                   columns [-1, W] (the conv2 halo).
    w1_ref: (128, C1)        bf16  conv1 weight, im2col-flattened (dy,dx,cin), K-padded
    b1_ref: (1, C1)          f32
    w2_ref: (9, C1, C2)      bf16  conv2 weight, one (C1,C2) slab per (dy,dx) tap
    b2_ref: (1, C2)          f32
    o_ref : (TH, W, C2)      f32   output row tile
    y1_ref: (TH+2, W+2, C1)  bf16  conv1 activation tile + conv2 halo (VMEM scratch)
    """
    r = pl.program_id(1)
    nr = pl.num_programs(1)

    # ---------------- conv1: one lane-dense im2col matmul (K = 128) ------------
    y1 = lax.dot_general(
        p_ref[...], w1_ref[...],
        dimension_numbers=(((2,), (0,)), ((), ())),
        preferred_element_type=jnp.float32)                     # (TH+2, W+2, C1)
    y1_ref[...] = jnp.maximum(y1 + b1_ref[...], 0.0).astype(jnp.bfloat16)

    # conv2's zero padding of the conv1 activation: the halo columns/rows that
    # fall outside the image must be zero (not conv1 evaluated out of range).
    # Direct zero stores on the border only — no full-tile mask.
    zcol = jnp.zeros((TH + 2, 1, C1), jnp.bfloat16)
    y1_ref[:, 0:1, :] = zcol
    y1_ref[:, W + 1:W + 2, :] = zcol

    @pl.when(r == 0)
    def _():
        y1_ref[0:1, :, :] = jnp.zeros((1, W + 2, C1), jnp.bfloat16)

    @pl.when(r == nr - 1)
    def _():
        y1_ref[TH + 1:TH + 2, :, :] = jnp.zeros((1, W + 2, C1), jnp.bfloat16)

    # --------- conv2: 9 tap-accumulated K=C1 matmuls (no im2col materialization)
    acc = None
    for dy in range(3):
        for dx in range(3):
            tap = lax.dot_general(
                y1_ref[dy:dy + TH, dx:dx + W, :], w2_ref[dy * 3 + dx],
                dimension_numbers=(((2,), (0,)), ((), ())),
                preferred_element_type=jnp.float32)             # (TH, W, C2)
            acc = tap if acc is None else acc + tap

    o_ref[...] = jnp.maximum(acc + b2_ref[...], 0.0)            # f32, direct store


def _vmem_limit_bytes():
    """~85% of physical VMEM, capped at 100 MB (v5e/v6e: 128 MiB; v7x: 64 MiB)."""
    try:
        cap = int(pltpu.get_tpu_info().vmem_capacity_bytes)
    except Exception:
        cap = 64 << 20
    return int(min(cap * 85 // 100, 100 << 20))


def _per_step_vmem_bytes(TH, W, C1, C2, K1=128):
    patches = 2 * (TH + 2) * (W + 2) * K1 * 2        # bf16, double-buffered
    y1 = (TH + 2) * (W + 2) * C1 * 2                 # bf16 scratch (single)
    out = 2 * TH * W * C2 * 4                        # f32, double-buffered
    wts = 2 * (K1 * C1 + 9 * C1 * C2 + 2 * C2) * 2   # bf16 weights, double-buffered
    return patches + y1 + out + wts


def _pick_row_tile(H, W, budget, C1, C2):
    """Smallest divisor of H with conv2 matmul M = TH*W >= ~512 that fits the
    VMEM budget; small images fall back to TH = H (one tile per image)."""
    divisors = [t for t in range(1, H + 1) if H % t == 0]
    fitting = [t for t in divisors if _per_step_vmem_bytes(t, W, C1, C2) <= budget]
    if not fitting:
        return divisors[0]
    for t in fitting:
        if t * W >= 512:
            return t
    return fitting[-1]


def encoder_block_nhwc(x_nhwc, w1, b1, w2, b2, *, row_tile=None):
    """x: (N,H,W,3) f32; w1: (5,5,3,256); w2: (3,3,256,256) HWIO. -> (N,H,W,256) f32."""
    N, H, W, Cin = x_nhwc.shape
    KH1, KW1, _, C1 = w1.shape
    KH2, KW2, _, C2 = w2.shape
    assert Cin == 3 and (KH1, KW1) == (5, 5) and (KH2, KW2) == (3, 3)

    vmem_limit = _vmem_limit_bytes()
    TH = (row_tile if row_tile is not None
          else _pick_row_tile(H, W, int(vmem_limit * 0.8), C1, C2))
    assert H % TH == 0
    nr = H // TH
    K1 = 128  # conv1 im2col K (5*5*3 = 75) zero-padded to one full lane vector

    # conv1 im2col on the tiny 3-channel input (host/XLA side), lane-dense bf16.
    # Pad by 3 = conv1 pad 2 + conv2 halo 1; patch positions cover rows/cols [-1, H]/[-1, W].
    xp = jnp.pad(x_nhwc, ((0, 0), (3, 3), (3, 3), (0, 0)))
    pat = jnp.concatenate(
        [xp[:, dy:dy + H + 2, dx:dx + W + 2, :]
         for dy in range(5) for dx in range(5)],
        axis=-1)                                                  # (N, H+2, W+2, 75)
    pat = jnp.pad(pat, ((0, 0), (0, 0), (0, 0), (0, K1 - KH1 * KW1 * Cin)))
    pat = pat.astype(jnp.bfloat16)
    # Pre-slice into per-row-tile slabs (with the +-1 conv2 halo rows) so the
    # kernel's input block is O(TH)-resident — no whole-image VMEM block.
    row_idx = jnp.arange(nr)[:, None] * TH + jnp.arange(TH + 2)[None, :]
    pat_t = pat[:, row_idx].reshape(N * nr, TH + 2, W + 2, K1)

    # im2col-flattened bf16 weights: row index = dy*(KW*Cin) + dx*Cin + cin.
    w1r = jnp.pad(w1.reshape(KH1 * KW1 * Cin, C1),
                  ((0, K1 - KH1 * KW1 * Cin), (0, 0))).astype(jnp.bfloat16)
    w2r = w2.reshape(KH2 * KW2, C1, C2).astype(jnp.bfloat16)
    b1r = b1.reshape(1, C1).astype(jnp.float32)
    b2r = b2.reshape(1, C2).astype(jnp.float32)

    kernel = functools.partial(_fused_encoder_kernel, W=W, TH=TH, C1=C1, C2=C2)

    flops = 2 * N * H * W * C1 * (KH1 * KW1 * Cin + KH2 * KW2 * C2)
    bytes_accessed = (pat_t.size * 2 + N * H * W * C2 * 4
                      + w1r.size * 2 + w2r.size * 2 + (C1 + C2) * 4)

    return pl.pallas_call(
        kernel,
        out_shape=jax.ShapeDtypeStruct((N, H, W, C2), jnp.float32),
        grid_spec=pltpu.PrefetchScalarGridSpec(
            num_scalar_prefetch=0,
            grid=(N, nr),
            in_specs=[
                # Per-row-tile patch slab; slab index = n*nr + r.
                pl.BlockSpec((None, TH + 2, W + 2, K1),
                             lambda n, r: (n * nr + r, 0, 0, 0)),
                pl.BlockSpec((K1, C1), lambda n, r: (0, 0)),
                pl.BlockSpec((1, C1), lambda n, r: (0, 0)),
                pl.BlockSpec((KH2 * KW2, C1, C2), lambda n, r: (0, 0, 0)),
                pl.BlockSpec((1, C2), lambda n, r: (0, 0)),
            ],
            out_specs=pl.BlockSpec((None, TH, W, C2), lambda n, r: (n, r, 0, 0)),
            scratch_shapes=[pltpu.VMEM((TH + 2, W + 2, C1), jnp.bfloat16)],
        ),
        compiler_params=pltpu.CompilerParams(
            dimension_semantics=("parallel", "parallel"),
            vmem_limit_bytes=vmem_limit,
        ),
        cost_estimate=pl.CostEstimate(flops=flops, transcendentals=0,
                                      bytes_accessed=bytes_accessed),
    )(pat_t, w1r, b1r, w2r, b2r)


def encoder_block(x_nchw, params):
    """Forward pass of EncoderBlock. Input/output NCHW (PyTorch convention).

    Note: in a full pipeline the NCHW<->NHWC transposes should be folded into
    the surrounding ops (stay NHWC end-to-end); they are kept here only to
    match the PyTorch interface.
    """
    w1, b1, w2, b2 = params
    x = jnp.transpose(x_nchw, (0, 2, 3, 1))                # NCHW -> NHWC
    y = encoder_block_nhwc(x, w1, b1, w2, b2)
    return jnp.transpose(y, (0, 3, 1, 2))                  # NHWC -> NCHW


def init_params(key):
    """Deterministic synthetic parameters matching the module's shapes (HWIO)."""
    k1, k2, k3, k4 = jax.random.split(key, 4)
    w1 = jax.random.normal(k1, (5, 5, 3, 256), jnp.float32) * 0.05
    b1 = jax.random.normal(k2, (256,), jnp.float32) * 0.05
    w2 = jax.random.normal(k3, (3, 3, 256, 256), jnp.float32) * 0.02
    b2 = jax.random.normal(k4, (256,), jnp.float32) * 0.02
    return w1, b1, w2, b2


def _reference(x_nchw, params):
    """Pure-JAX reference with the same bf16-operand / f32-accumulate precision
    as the kernel (matches the f32 PyTorch module to ~bf16 precision, ~1%)."""
    w1, b1, w2, b2 = params

    def conv(x, w, b, pad):
        y = lax.conv_general_dilated(
            x.astype(jnp.bfloat16), w.astype(jnp.bfloat16),
            window_strides=(1, 1), padding=[(pad, pad), (pad, pad)],
            dimension_numbers=("NHWC", "HWIO", "NHWC"),
            preferred_element_type=jnp.float32)
        return jnp.maximum(y + b.reshape(1, 1, 1, -1), 0.0)

    x = jnp.transpose(x_nchw, (0, 2, 3, 1))
    x = conv(x, w1, b1, 2)
    x = conv(x, w2, b2, 1)
    return jnp.transpose(x, (0, 3, 1, 2))


if __name__ == "__main__":
    key = jax.random.PRNGKey(0)
    kx, kp = jax.random.split(key)

    # Small shapes consistent with the module: NCHW, Cin fixed to 3 by the module.
    x = jax.random.normal(kx, (2, 3, 16, 16), jnp.float32)
    params = init_params(kp)

    out = jax.block_until_ready(encoder_block(x, params))
    assert out.shape == (2, 256, 16, 16), out.shape

    ref = jax.block_until_ready(_reference(x, params))
    assert jnp.allclose(out, ref, rtol=5e-3, atol=5e-3), float(
        jnp.max(jnp.abs(out - ref)))

    print("KERNEL_OK")
</pallas_src>

<mosaic_0001>
module attributes {stable_mosaic.version = 11 : i64} {
  func.func @_fused_encoder_kernel(%arg0: i32, %arg1: i32, %arg2: memref<1x18x18x128xbf16, #tpu.memory_space<vmem>>, %arg3: memref<128x256xbf16, #tpu.memory_space<vmem>>, %arg4: memref<1x256xf32, #tpu.memory_space<vmem>>, %arg5: memref<9x256x256xbf16, #tpu.memory_space<vmem>>, %arg6: memref<1x256xf32, #tpu.memory_space<vmem>>, %arg7: memref<1x16x16x256xf32, #tpu.memory_space<vmem>>, %arg8: memref<18x18x256xbf16, #tpu.memory_space<vmem>>) attributes {dimension_semantics = [#tpu.dimension_semantics<parallel>, #tpu.dimension_semantics<parallel>], iteration_bounds = array<i64: 2, 1>, scalar_prefetch = 0 : i64, scratch_operands = 1 : i64, tpu.core_type = #tpu.core_type<tc>, window_params = [{transform_indices = @transform_0, window_bounds = array<i64: 1, 18, 18, 128>}, {pipeline_mode = #tpu.pipeline_mode<synchronous>, transform_indices = @transform_1, window_bounds = array<i64: 128, 256>}, {pipeline_mode = #tpu.pipeline_mode<synchronous>, transform_indices = @transform_2, window_bounds = array<i64: 1, 256>}, {pipeline_mode = #tpu.pipeline_mode<synchronous>, transform_indices = @transform_3, window_bounds = array<i64: 9, 256, 256>}, {pipeline_mode = #tpu.pipeline_mode<synchronous>, transform_indices = @transform_4, window_bounds = array<i64: 1, 256>}, {transform_indices = @transform_5, window_bounds = array<i64: 1, 16, 16, 256>}]} {
    %c0 = arith.constant 0 : index
    %c0_0 = arith.constant 0 : index
    %c0_1 = arith.constant 0 : index
    %c0_2 = arith.constant 0 : index
    %0 = vector.load %arg2[%c0, %c0_0, %c0_1, %c0_2] : memref<1x18x18x128xbf16, #tpu.memory_space<vmem>>, vector<1x18x18x128xbf16>
    %1 = vector.shape_cast %0 : vector<1x18x18x128xbf16> to vector<18x18x128xbf16>
    %c0_3 = arith.constant 0 : index
    %c0_4 = arith.constant 0 : index
    %2 = vector.load %arg3[%c0_3, %c0_4] : memref<128x256xbf16, #tpu.memory_space<vmem>>, vector<128x256xbf16>
    %cst = arith.constant dense<0.000000e+00> : vector<18x18x256xf32>
    %3 = tpu.matmul %1, %2, %cst {dimension_numbers = #tpu.dot_dimension_numbers<[2], [0], [0, 1], [1], [0, 0, 0, 1, 1, 1], [], []>} : vector<18x18x128xbf16>, vector<128x256xbf16>, vector<18x18x256xf32> -> vector<18x18x256xf32>
    %c0_5 = arith.constant 0 : index
    %c0_6 = arith.constant 0 : index
    %4 = vector.load %arg4[%c0_5, %c0_6] : memref<1x256xf32, #tpu.memory_space<vmem>>, vector<1x256xf32>
    %5 = vector.shape_cast %4 : vector<1x256xf32> to vector<1x1x256xf32>
    %6 = vector.broadcast %5 : vector<1x1x256xf32> to vector<18x18x256xf32>
    %7 = arith.addf %3, %6 : vector<18x18x256xf32>
    %cst_7 = arith.constant 0.000000e+00 : f32
    %8 = vector.broadcast %cst_7 : f32 to vector<18x18x256xf32>
    %9 = arith.maximumf %7, %8 : vector<18x18x256xf32>
    %10 = arith.truncf %9 : vector<18x18x256xf32> to vector<18x18x256xbf16>
    %c0_8 = arith.constant 0 : index
    %c0_9 = arith.constant 0 : index
    %c0_10 = arith.constant 0 : index
    %11 = vector.load %arg8[%c0_8, %c0_9, %c0_10] : memref<18x18x256xbf16, #tpu.memory_space<vmem>>, vector<18x18x256xbf16>
    tpu.vector_store %arg8[%c0_8, %c0_9, %c0_10], %10 {strides = array<i32>} : memref<18x18x256xbf16, #tpu.memory_space<vmem>>, vector<18x18x256xbf16>,
    %cst_11 = arith.constant 0.000000e+00 : bf16
    %12 = vector.broadcast %cst_11 : bf16 to vector<18x1x256xbf16>
    %c0_12 = arith.constant 0 : index
    %c0_13 = arith.constant 0 : index
    %c0_14 = arith.constant 0 : index
    %13 = vector.load %arg8[%c0_12, %c0_13, %c0_14] : memref<18x18x256xbf16, #tpu.memory_space<vmem>>, vector<18x1x256xbf16>
    tpu.vector_store %arg8[%c0_12, %c0_13, %c0_14], %12 {strides = array<i32>} : memref<18x18x256xbf16, #tpu.memory_space<vmem>>, vector<18x1x256xbf16>,
    %c0_15 = arith.constant 0 : index
    %c17 = arith.constant 17 : index
    %c0_16 = arith.constant 0 : index
    %14 = vector.load %arg8[%c0_15, %c17, %c0_16] : memref<18x18x256xbf16, #tpu.memory_space<vmem>>, vector<18x1x256xbf16>
    tpu.vector_store %arg8[%c0_15, %c17, %c0_16], %12 {strides = array<i32>} : memref<18x18x256xbf16, #tpu.memory_space<vmem>>, vector<18x1x256xbf16>,
    %c0_i32 = arith.constant 0 : i32
    %15 = arith.cmpi eq, %arg1, %c0_i32 : i32
    %16 = arith.extui %15 : i1 to i32
    %c0_i32_17 = arith.constant 0 : i32
    %17 = arith.cmpi ne, %16, %c0_i32_17 : i32
    scf.if %17 {
      %cst_82 = arith.constant 0.000000e+00 : bf16
      %74 = vector.broadcast %cst_82 : bf16 to vector<1x18x256xbf16>
      %c0_83 = arith.constant 0 : index
      %c0_84 = arith.constant 0 : index
      %c0_85 = arith.constant 0 : index
      %75 = vector.load %arg8[%c0_83, %c0_84, %c0_85] : memref<18x18x256xbf16, #tpu.memory_space<vmem>>, vector<1x18x256xbf16>
      tpu.vector_store %arg8[%c0_83, %c0_84, %c0_85], %74 {strides = array<i32>} : memref<18x18x256xbf16, #tpu.memory_space<vmem>>, vector<1x18x256xbf16>,
    } else {
    }
    %c0_i32_18 = arith.constant 0 : i32
    %18 = arith.cmpi eq, %arg1, %c0_i32_18 : i32
    %19 = arith.extui %18 : i1 to i32
    %c0_i32_19 = arith.constant 0 : i32
    %20 = arith.cmpi ne, %19, %c0_i32_19 : i32
    scf.if %20 {
      %cst_82 = arith.constant 0.000000e+00 : bf16
      %74 = vector.broadcast %cst_82 : bf16 to vector<1x18x256xbf16>
      %c17_83 = arith.constant 17 : index
      %c0_84 = arith.constant 0 : index
      %c0_85 = arith.constant 0 : index
      %75 = vector.load %arg8[%c17_83, %c0_84, %c0_85] : memref<18x18x256xbf16, #tpu.memory_space<vmem>>, vector<1x18x256xbf16>
      tpu.vector_store %arg8[%c17_83, %c0_84, %c0_85], %74 {strides = array<i32>} : memref<18x18x256xbf16, #tpu.memory_space<vmem>>, vector<1x18x256xbf16>,
    } else {
    }
    %c0_20 = arith.constant 0 : index
    %c0_21 = arith.constant 0 : index
    %c0_22 = arith.constant 0 : index
    %21 = vector.load %arg8[%c0_20, %c0_21, %c0_22] : memref<18x18x256xbf16, #tpu.memory_space<vmem>>, vector<16x16x256xbf16>
    %c0_23 = arith.constant 0 : index
    %c0_24 = arith.constant 0 : index
    %c0_25 = arith.constant 0 : index
    %22 = vector.load %arg5[%c0_23, %c0_24, %c0_25] : memref<9x256x256xbf16, #tpu.memory_space<vmem>>, vector<1x256x256xbf16>
    %23 = vector.shape_cast %22 : vector<1x256x256xbf16> to vector<256x256xbf16>
    %cst_26 = arith.constant dense<0.000000e+00> : vector<16x16x256xf32>
    %24 = tpu.matmul %21, %23, %cst_26 {dimension_numbers = #tpu.dot_dimension_numbers<[2], [0], [0, 1], [1], [0, 0, 0, 1, 1, 1], [], []>} : vector<16x16x256xbf16>, vector<256x256xbf16>, vector<16x16x256xf32> -> vector<16x16x256xf32>
    %c0_27 = arith.constant 0 : index
    %c1 = arith.constant 1 : index
    %c0_28 = arith.constant 0 : index
    %25 = vector.load %arg8[%c0_27, %c1, %c0_28] : memref<18x18x256xbf16, #tpu.memory_space<vmem>>, vector<16x16x256xbf16>
    %c1_29 = arith.constant 1 : index
    %c0_30 = arith.constant 0 : index
    %c0_31 = arith.constant 0 : index
    %26 = vector.load %arg5[%c1_29, %c0_30, %c0_31] : memref<9x256x256xbf16, #tpu.memory_space<vmem>>, vector<1x256x256xbf16>
    %27 = vector.shape_cast %26 : vector<1x256x256xbf16> to vector<256x256xbf16>
    %cst_32 = arith.constant dense<0.000000e+00> : vector<16x16x256xf32>
    %28 = tpu.matmul %25, %27, %cst_32 {dimension_numbers = #tpu.dot_dimension_numbers<[2], [0], [0, 1], [1], [0, 0, 0, 1, 1, 1], [], []>} : vector<16x16x256xbf16>, vector<256x256xbf16>, vector<16x16x256xf32> -> vector<16x16x256xf32>
    %29 = arith.addf %24, %28 : vector<16x16x256xf32>
    %c0_33 = arith.constant 0 : index
    %c2 = arith.constant 2 : index
    %c0_34 = arith.constant 0 : index
    %30 = vector.load %arg8[%c0_33, %c2, %c0_34] : memref<18x18x256xbf16, #tpu.memory_space<vmem>>, vector<16x16x256xbf16>
    %c2_35 = arith.constant 2 : index
    %c0_36 = arith.constant 0 : index
    %c0_37 = arith.constant 0 : index
    %31 = vector.load %arg5[%c2_35, %c0_36, %c0_37] : memref<9x256x256xbf16, #tpu.memory_space<vmem>>, vector<1x256x256xbf16>
    %32 = vector.shape_cast %31 : vector<1x256x256xbf16> to vector<256x256xbf16>
    %cst_38 = arith.constant dense<0.000000e+00> : vector<16x16x256xf32>
    %33 = tpu.matmul %30, %32, %cst_38 {dimension_numbers = #tpu.dot_dimension_numbers<[2], [0], [0, 1], [1], [0, 0, 0, 1, 1, 1], [], []>} : vector<16x16x256xbf16>, vector<256x256xbf16>, vector<16x16x256xf32> -> vector<16x16x256xf32>
    %34 = arith.addf %29, %33 : vector<16x16x256xf32>
    %c1_39 = arith.constant 1 : index
    %c0_40 = arith.constant 0 : index
    %c0_41 = arith.constant 0 : index
    %35 = vector.load %arg8[%c1_39, %c0_40, %c0_41] : memref<18x18x256xbf16, #tpu.memory_space<vmem>>, vector<16x16x256xbf16>
    %c3 = arith.constant 3 : index
    %c0_42 = arith.constant 0 : index
    %c0_43 = arith.constant 0 : index
    %36 = vector.load %arg5[%c3, %c0_42, %c0_43] : memref<9x256x256xbf16, #tpu.memory_space<vmem>>, vector<1x256x256xbf16>
    %37 = vector.shape_cast %36 : vector<1x256x256xbf16> to vector<256x256xbf16>
    %cst_44 = arith.constant dense<0.000000e+00> : vector<16x16x256xf32>
    %38 = tpu.matmul %35, %37, %cst_44 {dimension_numbers = #tpu.dot_dimension_numbers<[2], [0], [0, 1], [1], [0, 0, 0, 1, 1, 1], [], []>} : vector<16x16x256xbf16>, vector<256x256xbf16>, vector<16x16x256xf32> -> vector<16x16x256xf32>
    %39 = arith.addf %34, %38 : vector<16x16x256xf32>
    %c1_45 = arith.constant 1 : index
    %c1_46 = arith.constant 1 : index
    %c0_47 = arith.constant 0 : index
    %40 = vector.load %arg8[%c1_45, %c1_46, %c0_47] : memref<18x18x256xbf16, #tpu.memory_space<vmem>>, vector<16x16x256xbf16>
    %c4 = arith.constant 4 : index
    %c0_48 = arith.constant 0 : index
    %c0_49 = arith.constant 0 : index
    %41 = vector.load %arg5[%c4, %c0_48, %c0_49] : memref<9x256x256xbf16, #tpu.memory_space<vmem>>, vector<1x256x256xbf16>
    %42 = vector.shape_cast %41 : vector<1x256x256xbf16> to vector<256x256xbf16>
    %cst_50 = arith.constant dense<0.000000e+00> : vector<16x16x256xf32>
    %43 = tpu.matmul %40, %42, %cst_50 {dimension_numbers = #tpu.dot_dimension_numbers<[2], [0], [0, 1], [1], [0, 0, 0, 1, 1, 1], [], []>} : vector<16x16x256xbf16>, vector<256x256xbf16>, vector<16x16x256xf32> -> vector<16x16x256xf32>
    %44 = arith.addf %39, %43 : vector<16x16x256xf32>
    %c1_51 = arith.constant 1 : index
    %c2_52 = arith.constant 2 : index
    %c0_53 = arith.constant 0 : index
    %45 = vector.load %arg8[%c1_51, %c2_52, %c0_53] : memref<18x18x256xbf16, #tpu.memory_space<vmem>>, vector<16x16x256xbf16>
    %c5 = arith.constant 5 : index
    %c0_54 = arith.constant 0 : index
    %c0_55 = arith.constant 0 : index
    %46 = vector.load %arg5[%c5, %c0_54, %c0_55] : memref<9x256x256xbf16, #tpu.memory_space<vmem>>, vector<1x256x256xbf16>
    %47 = vector.shape_cast %46 : vector<1x256x256xbf16> to vector<256x256xbf16>
    %cst_56 = arith.constant dense<0.000000e+00> : vector<16x16x256xf32>
    %48 = tpu.matmul %45, %47, %cst_56 {dimension_numbers = #tpu.dot_dimension_numbers<[2], [0], [0, 1], [1], [0, 0, 0, 1, 1, 1], [], []>} : vector<16x16x256xbf16>, vector<256x256xbf16>, vector<16x16x256xf32> -> vector<16x16x256xf32>
    %49 = arith.addf %44, %48 : vector<16x16x256xf32>
    %c2_57 = arith.constant 2 : index
    %c0_58 = arith.constant 0 : index
    %c0_59 = arith.constant 0 : index
    %50 = vector.load %arg8[%c2_57, %c0_58, %c0_59] : memref<18x18x256xbf16, #tpu.memory_space<vmem>>, vector<16x16x256xbf16>
    %c6 = arith.constant 6 : index
    %c0_60 = arith.constant 0 : index
    %c0_61 = arith.constant 0 : index
    %51 = vector.load %arg5[%c6, %c0_60, %c0_61] : memref<9x256x256xbf16, #tpu.memory_space<vmem>>, vector<1x256x256xbf16>
    %52 = vector.shape_cast %51 : vector<1x256x256xbf16> to vector<256x256xbf16>
    %cst_62 = arith.constant dense<0.000000e+00> : vector<16x16x256xf32>
    %53 = tpu.matmul %50, %52, %cst_62 {dimension_numbers = #tpu.dot_dimension_numbers<[2], [0], [0, 1], [1], [0, 0, 0, 1, 1, 1], [], []>} : vector<16x16x256xbf16>, vector<256x256xbf16>, vector<16x16x256xf32> -> vector<16x16x256xf32>
    %54 = arith.addf %49, %53 : vector<16x16x256xf32>
    %c2_63 = arith.constant 2 : index
    %c1_64 = arith.constant 1 : index
    %c0_65 = arith.constant 0 : index
    %55 = vector.load %arg8[%c2_63, %c1_64, %c0_65] : memref<18x18x256xbf16, #tpu.memory_space<vmem>>, vector<16x16x256xbf16>
    %c7 = arith.constant 7 : index
    %c0_66 = arith.constant 0 : index
    %c0_67 = arith.constant 0 : index
    %56 = vector.load %arg5[%c7, %c0_66, %c0_67] : memref<9x256x256xbf16, #tpu.memory_space<vmem>>, vector<1x256x256xbf16>
    %57 = vector.shape_cast %56 : vector<1x256x256xbf16> to vector<256x256xbf16>
    %cst_68 = arith.constant dense<0.000000e+00> : vector<16x16x256xf32>
    %58 = tpu.matmul %55, %57, %cst_68 {dimension_numbers = #tpu.dot_dimension_numbers<[2], [0], [0, 1], [1], [0, 0, 0, 1, 1, 1], [], []>} : vector<16x16x256xbf16>, vector<256x256xbf16>, vector<16x16x256xf32> -> vector<16x16x256xf32>
    %59 = arith.addf %54, %58 : vector<16x16x256xf32>
    %c2_69 = arith.constant 2 : index
    %c2_70 = arith.constant 2 : index
    %c0_71 = arith.constant 0 : index
    %60 = vector.load %arg8[%c2_69, %c2_70, %c0_71] : memref<18x18x256xbf16, #tpu.memory_space<vmem>>, vector<16x16x256xbf16>
    %c8 = arith.constant 8 : index
    %c0_72 = arith.constant 0 : index
    %c0_73 = arith.constant 0 : index
    %61 = vector.load %arg5[%c8, %c0_72, %c0_73] : memref<9x256x256xbf16, #tpu.memory_space<vmem>>, vector<1x256x256xbf16>
    %62 = vector.shape_cast %61 : vector<1x256x256xbf16> to vector<256x256xbf16>
    %cst_74 = arith.constant dense<0.000000e+00> : vector<16x16x256xf32>
    %63 = tpu.matmul %60, %62, %cst_74 {dimension_numbers = #tpu.dot_dimension_numbers<[2], [0], [0, 1], [1], [0, 0, 0, 1, 1, 1], [], []>} : vector<16x16x256xbf16>, vector<256x256xbf16>, vector<16x16x256xf32> -> vector<16x16x256xf32>
    %64 = arith.addf %59, %63 : vector<16x16x256xf32>
    %c0_75 = arith.constant 0 : index
    %c0_76 = arith.constant 0 : index
    %65 = vector.load %arg6[%c0_75, %c0_76] : memref<1x256xf32, #tpu.memory_space<vmem>>, vector<1x256xf32>
    %66 = vector.shape_cast %65 : vector<1x256xf32> to vector<1x1x256xf32>
    %67 = vector.broadcast %66 : vector<1x1x256xf32> to vector<16x16x256xf32>
    %68 = arith.addf %64, %67 : vector<16x16x256xf32>
    %cst_77 = arith.constant 0.000000e+00 : f32
    %69 = vector.broadcast %cst_77 : f32 to vector<16x16x256xf32>
    %70 = arith.maximumf %68, %69 : vector<16x16x256xf32>
    %c0_78 = arith.constant 0 : index
    %c0_79 = arith.constant 0 : index
    %c0_80 = arith.constant 0 : index
    %c0_81 = arith.constant 0 : index
    %71 = vector.load %arg7[%c0_78, %c0_79, %c0_80, %c0_81] : memref<1x16x16x256xf32, #tpu.memory_space<vmem>>, vector<1x16x16x256xf32>
    %72 = vector.shape_cast %71 : vector<1x16x16x256xf32> to vector<16x16x256xf32>
    %73 = vector.shape_cast %70 : vector<16x16x256xf32> to vector<1x16x16x256xf32>
    tpu.vector_store %arg7[%c0_78, %c0_79, %c0_80, %c0_81], %73 {strides = array<i32>} : memref<1x16x16x256xf32, #tpu.memory_space<vmem>>, vector<1x16x16x256xf32>,
    return
  }
  func.func @transform_0(%arg0: i32, %arg1: i32) -> (i32, i32, i32, i32) {
    %c1_i32 = arith.constant 1 : i32
    %0 = arith.muli %arg0, %c1_i32 : i32
    %1 = arith.addi %0, %arg1 : i32
    %c0_i32 = arith.constant 0 : i32
    %c0_i32_0 = arith.constant 0 : i32
    %c0_i32_1 = arith.constant 0 : i32
    %c0_i32_2 = arith.constant 0 : i32
    return %1, %c0_i32, %c0_i32_0, %c0_i32_1 : i32, i32, i32, i32
  }
  func.func @transform_1(%arg0: i32, %arg1: i32) -> (i32, i32) {
    %c0_i32 = arith.constant 0 : i32
    %c0_i32_0 = arith.constant 0 : i32
    %c0_i32_1 = arith.constant 0 : i32
    return %c0_i32, %c0_i32_0 : i32, i32
  }
  func.func @transform_2(%arg0: i32, %arg1: i32) -> (i32, i32) {
    %c0_i32 = arith.constant 0 : i32
    %c0_i32_0 = arith.constant 0 : i32
    %c0_i32_1 = arith.constant 0 : i32
    return %c0_i32, %c0_i32_0 : i32, i32
  }
  func.func @transform_3(%arg0: i32, %arg1: i32) -> (i32, i32, i32) {
    %c0_i32 = arith.constant 0 : i32
    %c0_i32_0 = arith.constant 0 : i32
    %c0_i32_1 = arith.constant 0 : i32
    %c0_i32_2 = arith.constant 0 : i32
    return %c0_i32, %c0_i32_0, %c0_i32_1 : i32, i32, i32
  }
  func.func @transform_4(%arg0: i32, %arg1: i32) -> (i32, i32) {
    %c0_i32 = arith.constant 0 : i32
    %c0_i32_0 = arith.constant 0 : i32
    %c0_i32_1 = arith.constant 0 : i32
    return %c0_i32, %c0_i32_0 : i32, i32
  }
  func.func @transform_5(%arg0: i32, %arg1: i32) -> (i32, i32, i32, i32) {
    %c0_i32 = arith.constant 0 : i32
    %c0_i32_0 = arith.constant 0 : i32
    %c0_i32_1 = arith.constant 0 : i32
    return %arg0, %arg1, %c0_i32, %c0_i32_0 : i32, i32, i32, i32
  }
}

</mosaic_0001>

<llo_original>
// kernel: tpu_custom_call.1
$region0: #{tpu_custom_call.1}
  #allocation0 [shape = 'u32[]', space=smem, size = 0x4, offset = 0x4, fixed_abs, tag = 'smem constant byte address 0x4 - core index']
  #allocation1 [shape = 'u32[144,128]{1,0:T(1,128)}', space=vmem, size = 0x12000, scoped, tag = 'internal scratch']
  #allocation2 [shape = 'bf16[18,18,256]{2,1,0:T(8,128)(2,1)}', space=vmem, size = 0x36000, scoped, tag = 'scratch operand']
  %s0 = inlined_call_operand.vmem [shape: bf16[2,18,18,128], index: 0, kind: input, shape index: {}]
  %s1 = inlined_call_operand.hbm [shape: bf16[128,256], index: 1, kind: input, shape index: {}]
  %s2 = inlined_call_operand.hbm [shape: f32[1,256], index: 2, kind: input, shape index: {}]
  %s3 = inlined_call_operand.hbm [shape: bf16[9,256,256], index: 3, kind: input, shape index: {}]
  %s4 = inlined_call_operand.hbm [shape: f32[1,256], index: 4, kind: input, shape index: {}]
  %s5 = inlined_call_operand.hbm [shape: f32[2,16,16,256], index: 5, kind: output, shape index: {}]
  %s6 = sld [smem:[#allocation0]]
  $region73: #{tpu_custom_call.1} parent=0
    _
  %s8 = ssub.s32 1, %s6
  %s9 = scalar_select 0, %s8, %s6
  $region1: #{tpu_custom_call.1} parent=0
    #allocation3 [shape = 'u8[65536]{0}', space=vmem, size = 0x10000, scoped, tag = 'input window, operand 1, single buffered']
    #allocation4 [shape = 's32[2]{0}', space=sflag, size = 0x8, scoped, tag = 'scoped memory for tpu_custom_call.1']
    #allocation5 [shape = 's32[2]{0}', space=sflag, size = 0x8, scoped, tag = 'scoped memory for tpu_custom_call.1']
    #allocation6 [shape = 'u8[1024]{0}', space=vmem, size = 0x400, scoped, tag = 'input window, operand 2, single buffered']
    #allocation7 [shape = 's32[1]{0}', space=sflag, size = 0x4, scoped, tag = 'scoped memory for tpu_custom_call.1']
    #allocation8 [shape = 'u8[1179648]{0}', space=vmem, size = 0x120000, scoped, tag = 'input window, operand 3, single buffered']
    #allocation9 [shape = 'u8[1024]{0}', space=vmem, size = 0x400, scoped, tag = 'input window, operand 4, single buffered']
    #allocation10 [shape = 's32[1]{0}', space=sflag, size = 0x4, scoped, tag = 'scoped memory for tpu_custom_call.1']
    #allocation11 [shape = 'u8[524288]{0}', space=vmem, size = 0x80000, scoped, tag = 'output window, operand 0']
    %10 = vsyncpa [#allocation4], 0
    %11 = vsyncpa [#allocation7], 0
    %12 = vsyncpa [#allocation10], 0
    %13 = vsyncpa [#allocation5], 0
    %s14 = scalar_lea.sflag [#allocation5], 1
    %15 = vsyncpa %s14, 0
    loop: start=0, step=1, limit=4
    $region2: #{tpu_custom_call.1} parent=1 // loop_pre_header
      _
    $region3: #{tpu_custom_call.1} parent=1 // loop_header
      %s17 = sphi 0, %s21
      %p18 = scmp.ge.s32.totalorder %s17, 4
      %s24 = sphi 0, %s36
      %s25 = sphi 0, %s32
      %s26 = sphi 0, %s24
      %s27 = sphi 0, %s25
      %s28 = sphi 0, %s26
      %s29 = sphi 0, %s27
      %s41 = sphi 0, %s43
      %s44 = sphi 0, %s41
      %s45 = sphi 0, %s44
      %s61 = sphi 0, %s45
      %s65 = sphi 0, %s65
      %s67 = sphi 0, %s65
      %s68 = sphi 0, %s67
      %s82 = sphi 0, %s68
      %s86 = sphi 0, %s86
      %s88 = sphi 0, %s86
      %s89 = sphi 0, %s88
      %s103 = sphi 0, %s89
      %s107 = sphi 0, %s107
      %s109 = sphi 0, %s107
      %s110 = sphi 0, %s109
      %s124 = sphi 0, %s110
      %s128 = sphi 0, %s128
      %s130 = sphi 0, %s128
      %s131 = sphi 0, %s130
      %s145 = sphi 0, %s131
      %s153 = sphi 0, %s155
      %s156 = sphi 0, %s153
      %s157 = sphi 0, %s156
      %s173 = sphi 0, %s157
    $region4: #{tpu_custom_call.1} parent=1 // loop_header_branch
      %20 = sbr.rel (%p18) target = $region8
    $region5: #{tpu_custom_call.1} parent=1 // loop_body
      %s22 = ssub.s32 %s17, 1
      %s23 = ssub.s32 %s17, 2
      %s30 = sadd.s32 1, %s25
      %p31 = scmp.ge.s32.totalorder %s30, 1
      %s32 = scalar_select %p31, 0, %s30
      %s33 = sadd.s32 1, %s24
      %s34 = scalar_select %p31, %s33, %s24
      %p35 = scmp.ge.s32.totalorder %s34, 2
      %s36 = scalar_select %p35, 0, %s34
      %s37 = sadd.s32 %s24, %s25
      %s38 = sadd.s32 %s36, %s32
      %s39 = ssub.s32 %s37, %s38
      %p40 = scmp.eq.s32.totalorder %s39, 0
      %s42 = sadd.s32 %s41, 1
      %s43 = scalar_select %p40, %s41, %s42
      %p46 = pneg %p40
      %p47 = scmp.eq.s32.totalorder %s17, 1
      %p48 = por %p46, %p47
      %p49 = scmp.ne.s32.totalorder %s41, %s44
      %p50 = scmp.eq.s32.totalorder %s17, 0
      %p51 = por %p49, %p50
      %p52 = scmp.ne.s32.totalorder %s41, %s44
      %p53 = scmp.eq.s32.totalorder %s22, 1
      %p54 = por %p52, %p53
      %p55 = scmp.ne.s32.totalorder %s44, %s45
      %p56 = scmp.eq.s32.totalorder %s22, 0
      %p57 = por %p55, %p56
      %p58 = scmp.ne.s32.totalorder %s44, %s45
      %p59 = scmp.eq.s32.totalorder %s23, 1
      %p60 = por %p58, %p59
      %p62 = scmp.ne.s32.totalorder %s45, %s61
      %p63 = scmp.eq.s32.totalorder %s23, 0
      %p64 = por %p62, %p63
      %s66 = sadd.s32 %s65, 1
      %p69 = scmp.eq.s32.totalorder %s17, 1
      %p70 = scmp.ne.s32.totalorder %s65, %s67
      %p71 = scmp.eq.s32.totalorder %s17, 0
      %p72 = por %p70, %p71
      %p73 = scmp.ne.s32.totalorder %s65, %s67
      %p74 = scmp.eq.s32.totalorder %s22, 1
      %p75 = por %p73, %p74
      %p76 = scmp.ne.s32.totalorder %s67, %s68
      %p77 = scmp.eq.s32.totalorder %s22, 0
      %p78 = por %p76, %p77
      %p79 = scmp.ne.s32.totalorder %s67, %s68
      %p80 = scmp.eq.s32.totalorder %s23, 1
      %p81 = por %p79, %p80
      %p83 = scmp.ne.s32.totalorder %s68, %s82
      %p84 = scmp.eq.s32.totalorder %s23, 0
      %p85 = por %p83, %p84
      %s87 = sadd.s32 %s86, 1
      %p90 = scmp.eq.s32.totalorder %s17, 1
      %p91 = scmp.ne.s32.totalorder %s86, %s88
      %p92 = scmp.eq.s32.totalorder %s17, 0
      %p93 = por %p91, %p92
      %p94 = scmp.ne.s32.totalorder %s86, %s88
      %p95 = scmp.eq.s32.totalorder %s22, 1
      %p96 = por %p94, %p95
      %p97 = scmp.ne.s32.totalorder %s88, %s89
      %p98 = scmp.eq.s32.totalorder %s22, 0
      %p99 = por %p97, %p98
      %p100 = scmp.ne.s32.totalorder %s88, %s89
      %p101 = scmp.eq.s32.totalorder %s23, 1
      %p102 = por %p100, %p101
      %p104 = scmp.ne.s32.totalorder %s89, %s103
      %p105 = scmp.eq.s32.totalorder %s23, 0
      %p106 = por %p104, %p105
      %s108 = sadd.s32 %s107, 1
      %p111 = scmp.eq.s32.totalorder %s17, 1
      %p112 = scmp.ne.s32.totalorder %s107, %s109
      %p113 = scmp.eq.s32.totalorder %s17, 0
      %p114 = por %p112, %p113
      %p115 = scmp.ne.s32.totalorder %s107, %s109
      %p116 = scmp.eq.s32.totalorder %s22, 1
      %p117 = por %p115, %p116
      %p118 = scmp.ne.s32.totalorder %s109, %s110
      %p119 = scmp.eq.s32.totalorder %s22, 0
      %p120 = por %p118, %p119
      %p121 = scmp.ne.s32.totalorder %s109, %s110
      %p122 = scmp.eq.s32.totalorder %s23, 1
      %p123 = por %p121, %p122
      %p125 = scmp.ne.s32.totalorder %s110, %s124
      %p126 = scmp.eq.s32.totalorder %s23, 0
      %p127 = por %p125, %p126
      %s129 = sadd.s32 %s128, 1
      %p132 = scmp.eq.s32.totalorder %s17, 1
      %p133 = scmp.ne.s32.totalorder %s128, %s130
      %p134 = scmp.eq.s32.totalorder %s17, 0
      %p135 = por %p133, %p134
      %p136 = scmp.ne.s32.totalorder %s128, %s130
      %p137 = scmp.eq.s32.totalorder %s22, 1
      %p138 = por %p136, %p137
      %p139 = scmp.ne.s32.totalorder %s130, %s131
      %p140 = scmp.eq.s32.totalorder %s22, 0
      %p141 = por %p139, %p140
      %p142 = scmp.ne.s32.totalorder %s130, %s131
      %p143 = scmp.eq.s32.totalorder %s23, 1
      %p144 = por %p142, %p143
      %p146 = scmp.ne.s32.totalorder %s131, %s145
      %p147 = scmp.eq.s32.totalorder %s23, 0
      %p148 = por %p146, %p147
      %s149 = ssub.s32 %s24, %s36
      %s150 = ssub.s32 %s25, %s32
      %s151 = sor.u32 %s149, %s150
      %p152 = scmp.eq.s32.totalorder %s151, 0
      %s154 = sadd.s32 %s153, 1
      %s155 = scalar_select %p152, %s153, %s154
      %p158 = pneg %p152
      %p159 = scmp.eq.s32.totalorder %s17, 1
      %p160 = por %p158, %p159
      %p161 = scmp.ne.s32.totalorder %s153, %s156
      %p162 = scmp.eq.s32.totalorder %s17, 0
      %p163 = por %p161, %p162
      %p164 = scmp.ne.s32.totalorder %s153, %s156
      %p165 = scmp.eq.s32.totalorder %s22, 1
      %p166 = por %p164, %p165
      %p167 = scmp.ne.s32.totalorder %s156, %s157
      %p168 = scmp.eq.s32.totalorder %s22, 0
      %p169 = por %p167, %p168
      %p170 = scmp.ne.s32.totalorder %s156, %s157
      %p171 = scmp.eq.s32.totalorder %s23, 1
      %p172 = por %p170, %p171
      %p174 = scmp.ne.s32.totalorder %s157, %s173
      %p175 = scmp.eq.s32.totalorder %s23, 0
      %p176 = por %p174, %p175
      %p177 = scmp.le.s32.totalorder 1, %s17
      %p178 = scmp.lt.s32.totalorder %s17, 3
      %p179 = pnand %p177, %p178
      %p180 = pneg %p179
      // Predicated region
      $region9: #{tpu_custom_call.1} parent=5 // pred_check
        _
      $region10: #{tpu_custom_call.1} parent=5 // pred_check_branch
        %182 = sbr.rel (%p179) target = $region12
      $region11: #{tpu_custom_call.1} parent=5 // pred_region
        %s183 = ssub.s32 %s17, 1
        // Predicated region
        $region13: #{tpu_custom_call.1} parent=11 // pred_check
          %p184 = pneg %p78
        $region14: #{tpu_custom_call.1} parent=11 // pred_check_branch
          %186 = sbr.rel (%p184) target = $region16
        $region15: #{tpu_custom_call.1} parent=11 // pred_region
          %s188 = ssub.s32 2048, 2048
          %189 = vsyncadd [#allocation4], %s188
          %s190 = sshll.u32 [#allocation3], 4
          %s191 = int_to_ptr.vmem [resolvable:$true] %s190
          %196 = dma.hbm_to_vmem [thread:$0]  %s1, 2048, %s191, [#allocation4], 128, 128, 8
        $region16: #{tpu_custom_call.1} parent=11 // pred_fallthru
          _
        // Predicated region
        $region17: #{tpu_custom_call.1} parent=11 // pred_check
          %p197 = pneg %p99
        $region18: #{tpu_custom_call.1} parent=11 // pred_check_branch
          %199 = sbr.rel (%p197) target = $region20
        $region19: #{tpu_custom_call.1} parent=11 // pred_region
          %s201 = ssub.s32 32, 32
          %202 = vsyncadd [#allocation7], %s201
          %s204 = sshll.u32 [#allocation6], 4
          %s205 = int_to_ptr.vmem [resolvable:$true] %s204
          %207 = dma.hbm_to_vmem [thread:$0]  %s2, 32, %s205, [#allocation7]
        $region20: #{tpu_custom_call.1} parent=11 // pred_fallthru
          _
        // Predicated region
        $region21: #{tpu_custom_call.1} parent=11 // pred_check
          %p208 = pneg %p120
        $region22: #{tpu_custom_call.1} parent=11 // pred_check_branch
          %210 = sbr.rel (%p208) target = $region24
        $region23: #{tpu_custom_call.1} parent=11 // pred_region
          %s212 = ssub.s32 36864, 36864
          %213 = vsyncadd [#allocation7], %s212
          %s214 = sshll.u32 [#allocation8], 4
          %s215 = int_to_ptr.vmem [resolvable:$true] %s214
          %220 = dma.hbm_to_vmem [thread:$0]  %s3, 36864, %s215, [#allocation7], 128, 128, 8
        $region24: #{tpu_custom_call.1} parent=11 // pred_fallthru
          _
        // Predicated region
        $region25: #{tpu_custom_call.1} parent=11 // pred_check
          %p221 = pneg %p141
        $region26: #{tpu_custom_call.1} parent=11 // pred_check_branch
          %223 = sbr.rel (%p221) target = $region28
        $region27: #{tpu_custom_call.1} parent=11 // pred_region
          %s225 = ssub.s32 32, 32
          %226 = vsyncadd [#allocation10], %s225
          %s228 = sshll.u32 [#allocation9], 4
          %s229 = int_to_ptr.vmem [resolvable:$true] %s228
          %231 = dma.hbm_to_vmem [thread:$0]  %s4, 32, %s229, [#allocation10]
        $region28: #{tpu_custom_call.1} parent=11 // pred_fallthru
          _
      $region12: #{tpu_custom_call.1} parent=5 // pred_fallthru
        _
      %p232 = scmp.lt.s32.totalorder %s17, 2
      // Predicated region
      $region29: #{tpu_custom_call.1} parent=5 // pred_check
        %p233 = pneg %p232
      $region30: #{tpu_custom_call.1} parent=5 // pred_check_branch
        %235 = sbr.rel (%p233) target = $region32
      $region31: #{tpu_custom_call.1} parent=5 // pred_region
        // Predicated region
        $region33: #{tpu_custom_call.1} parent=31 // pred_check
          %p236 = pneg %p51
        $region34: #{tpu_custom_call.1} parent=31 // pred_check_branch
          %238 = sbr.rel (%p236) target = $region36
        $region35: #{tpu_custom_call.1} parent=31 // pred_region
          %s239 = sadd.s32 %s24, %s25
          %p240 = scmp.lt.s32.totalorder %s239, 1
          %s241 = scalar_select %p240, %s239, 1
          %s242 = smul.addr %s241, 54
          %s243 = smul.addr %s242, 4
          %s244 = scalar_lea.vmem %s0, %s243
          %s245 = sadd.s32 %s24, %s25
        $region36: #{tpu_custom_call.1} parent=31 // pred_fallthru
          _
      $region32: #{tpu_custom_call.1} parent=5 // pred_fallthru
        _
      %p246 = scmp.le.s32.totalorder 1, %s17
      %p247 = scmp.lt.s32.totalorder %s17, 3
      %p248 = pnand %p246, %p247
      %p249 = pneg %p248
      // Predicated region
      $region37: #{tpu_custom_call.1} parent=5 // pred_check
        _
      $region38: #{tpu_custom_call.1} parent=5 // pred_check_branch
        %251 = sbr.rel (%p248) target = $region40
      $region39: #{tpu_custom_call.1} parent=5 // pred_region
        %s252 = ssub.s32 %s17, 1
        // Predicated region
        $region41: #{tpu_custom_call.1} parent=39 // pred_check
          %p253 = pneg %p78
        $region42: #{tpu_custom_call.1} parent=39 // pred_check_branch
          %255 = sbr.rel (%p253) target = $region44
        $region43: #{tpu_custom_call.1} parent=39 // pred_region
          %256 = dma.done [#allocation4], 2048
        $region44: #{tpu_custom_call.1} parent=39 // pred_fallthru
          _
        // Predicated region
        $region45: #{tpu_custom_call.1} parent=39 // pred_check
          %p257 = pneg %p99
        $region46: #{tpu_custom_call.1} parent=39 // pred_check_branch
          %259 = sbr.rel (%p257) target = $region48
        $region47: #{tpu_custom_call.1} parent=39 // pred_region
          %260 = dma.done [#allocation7], 32
        $region48: #{tpu_custom_call.1} parent=39 // pred_fallthru
          _
        // Predicated region
        $region49: #{tpu_custom_call.1} parent=39 // pred_check
          %p261 = pneg %p120
        $region50: #{tpu_custom_call.1} parent=39 // pred_check_branch
          %263 = sbr.rel (%p261) target = $region52
        $region51: #{tpu_custom_call.1} parent=39 // pred_region
          %264 = dma.done [#allocation7], 36864
        $region52: #{tpu_custom_call.1} parent=39 // pred_fallthru
          _
        // Predicated region
        $region53: #{tpu_custom_call.1} parent=39 // pred_check
          %p265 = pneg %p141
        $region54: #{tpu_custom_call.1} parent=39 // pred_check_branch
          %267 = sbr.rel (%p265) target = $region56
        $region55: #{tpu_custom_call.1} parent=39 // pred_region
          %268 = dma.done [#allocation10], 32
        $region56: #{tpu_custom_call.1} parent=39 // pred_fallthru
          _
        %s269 = sadd.s32 %s26, %s27
        %p270 = scmp.lt.s32.totalorder %s269, 1
        %s271 = scalar_select %p270, %s269, 1
        %s272 = smul.addr %s271, 54
        %s273 = smul.addr %s272, 4
        %s274 = scalar_lea.vmem %s0, %s273
        %p275 = pneg %p57
        %p276 = pneg %p54
        %p277 = pneg %p78
        %p278 = pneg %p75
        %p279 = pneg %p99
        %p280 = pneg %p96
        %p281 = pneg %p120
        %p282 = pneg %p117
        %p283 = pneg %p141
        %p284 = pneg %p138
        %p285 = pneg %p169
        %p286 = pneg %p166
        %s287 = sand.u32 %s156, 1
        %s288 = scalar_lea.sflag [#allocation5], %s287
        %s289 = sand.u32 %s156, 1
        %s290 = smul.addr %s289, 512
        %s291 = scalar_lea.vmem [#allocation11], %s290
        %s292 = sadd.s32 %s26, %s27
        %p293 = scmp.lt.s32.totalorder %s292, 1
        %s294 = scalar_select %p293, %s292, 1
        %s295 = smul.addr %s294, 54
        %s296 = smul.addr %s295, 4
        %s297 = scalar_lea.vmem %s0, %s296
        %s298 = sadd.s32 %s26, %s27
        %s299 = smul.u32 16, %s27
        %v301 = vld [vmem:[%s297] sm:$0xf]
        %v302 = vld [vmem:[%s297 + $0x4] sm:$0xf]
        %v303 = vld [vmem:[%s297 + $0x8] sm:$0x1]
        %v304 = vld [vmem:[%s297 + $0xc] sm:$0xf]
        %v305 = vld [vmem:[%s297 + $0x10] sm:$0xf]
        %v306 = vld [vmem:[%s297 + $0x14] sm:$0x1]
        %v307 = vld [vmem:[%s297 + $0x18] sm:$0xf]
        %v308 = vld [vmem:[%s297 + $0x1c] sm:$0xf]
        %v309 = vld [vmem:[%s297 + $0x20] sm:$0x1]
        %v310 = vld [vmem:[%s297 + $0x24] sm:$0xf]
        %v311 = vld [vmem:[%s297 + $0x28] sm:$0xf]
        %v312 = vld [vmem:[%s297 + $0x2c] sm:$0x1]
        %v313 = vld [vmem:[%s297 + $0x30] sm:$0xf]
        %v314 = vld [vmem:[%s297 + $0x34] sm:$0xf]
        %v315 = vld [vmem:[%s297 + $0x38] sm:$0x1]
        %v316 = vld [vmem:[%s297 + $0x3c] sm:$0xf]
        %v317 = vld [vmem:[%s297 + $0x40] sm:$0xf]
        %v318 = vld [vmem:[%s297 + $0x44] sm:$0x1]
        %v319 = vld [vmem:[%s297 + $0x48] sm:$0xf]
        %v320 = vld [vmem:[%s297 + $0x4c] sm:$0xf]
        %v321 = vld [vmem:[%s297 + $0x50] sm:$0x1]
        %v322 = vld [vmem:[%s297 + $0x54] sm:$0xf]
        %v323 = vld [vmem:[%s297 + $0x58] sm:$0xf]
        %v324 = vld [vmem:[%s297 + $0x5c] sm:$0x1]
        %v325 = vld [vmem:[%s297 + $0x60] sm:$0xf]
        %v326 = vld [vmem:[%s297 + $0x64] sm:$0xf]
        %v327 = vld [vmem:[%s297 + $0x68] sm:$0x1]
        %v328 = vld [vmem:[%s297 + $0x6c] sm:$0xf]
        %v329 = vld [vmem:[%s297 + $0x70] sm:$0xf]
        %v330 = vld [vmem:[%s297 + $0x74] sm:$0x1]
        %v331 = vld [vmem:[%s297 + $0x78] sm:$0xf]
        %v332 = vld [vmem:[%s297 + $0x7c] sm:$0xf]
        %v333 = vld [vmem:[%s297 + $0x80] sm:$0x1]
        %v334 = vld [vmem:[%s297 + $0x84] sm:$0xf]
        %v335 = vld [vmem:[%s297 + $0x88] sm:$0xf]
        %v336 = vld [vmem:[%s297 + $0x8c] sm:$0x1]
        %v337 = vld [vmem:[%s297 + $0x90] sm:$0xf]
        %v338 = vld [vmem:[%s297 + $0x94] sm:$0xf]
        %v339 = vld [vmem:[%s297 + $0x98] sm:$0x1]
        %v340 = vld [vmem:[%s297 + $0x9c] sm:$0xf]
        %v341 = vld [vmem:[%s297 + $0xa0] sm:$0xf]
        %v342 = vld [vmem:[%s297 + $0xa4] sm:$0x1]
        %v343 = vld [vmem:[%s297 + $0xa8] sm:$0xf]
        %v344 = vld [vmem:[%s297 + $0xac] sm:$0xf]
        %v345 = vld [vmem:[%s297 + $0xb0] sm:$0x1]
        %v346 = vld [vmem:[%s297 + $0xb4] sm:$0xf]
        %v347 = vld [vmem:[%s297 + $0xb8] sm:$0xf]
        %v348 = vld [vmem:[%s297 + $0xbc] sm:$0x1]
        %v349 = vld [vmem:[%s297 + $0xc0] sm:$0xf]
        %v350 = vld [vmem:[%s297 + $0xc4] sm:$0xf]
        %v351 = vld [vmem:[%s297 + $0xc8] sm:$0x1]
        %v352 = vld [vmem:[%s297 + $0xcc] sm:$0xf]
        %v353 = vld [vmem:[%s297 + $0xd0] sm:$0xf]
        %v354 = vld [vmem:[%s297 + $0xd4] sm:$0x1]
        %v355 = vld [vmem:[#allocation3] sm:$0xff]
        %v356 = vld [vmem:[#allocation3 + $0x8] sm:$0xff]
        %v357 = vld [vmem:[#allocation3 + $0x10] sm:$0xff]
        %v358 = vld [vmem:[#allocation3 + $0x18] sm:$0xff]
        %v359 = vld [vmem:[#allocation3 + $0x20] sm:$0xff]
        %v360 = vld [vmem:[#allocation3 + $0x28] sm:$0xff]
        %v361 = vld [vmem:[#allocation3 + $0x30] sm:$0xff]
        %v362 = vld [vmem:[#allocation3 + $0x38] sm:$0xff]
        %v363 = vld [vmem:[#allocation3 + $0x40] sm:$0xff]
        %v364 = vld [vmem:[#allocation3 + $0x48] sm:$0xff]
        %v365 = vld [vmem:[#allocation3 + $0x50] sm:$0xff]
        %v366 = vld [vmem:[#allocation3 + $0x58] sm:$0xff]
        %v367 = vld [vmem:[#allocation3 + $0x60] sm:$0xff]
        %v368 = vld [vmem:[#allocation3 + $0x68] sm:$0xff]
        %v369 = vld [vmem:[#allocation3 + $0x70] sm:$0xff]
        %v370 = vld [vmem:[#allocation3 + $0x78] sm:$0xff]
        %v371 = vld [vmem:[#allocation6] sm:$0x3]
        %v373 = vlaneseq
        %v374 = vshrl.u32 %v373, 7
        %v375 = vsub.s32 0, %v374
        %v376 = vrot.slane %v371, %v375
        %v377 = vlaneseq
        %v378 = vshrl.u32 %v377, 7
        %v379 = vsub.s32 1, %v378
        %v380 = vrot.slane %v371, %v379
        %v436 = vunpack.c.l.s4 1966171168
        %v437 = vunpack.c.0.s8 %v436
        %v438 = vlaneseq
        %v439 = vshrl.u32 %v438, 7
        %v440 = vsub.s32 %v437, %v439
        %v441 = vrot.slane %v301, %v440
        %v442 = vcombine.high %v441, %v441
        %v444 = vunpack.c.l.s4 1966171168
        %v445 = vunpack.c.0.s8 %v444
        %v446 = vlaneseq
        %v447 = vshrl.u32 %v446, 7
        %v448 = vsub.s32 %v445, %v447
        %v449 = vrot.slane %v441, %v448
        %v451 = vunpack.c.l.s4 1966171168
        %v452 = vunpack.c.0.s8 %v451
        %v453 = vlaneseq
        %v454 = vshrl.u32 %v453, 7
        %v455 = vsub.s32 %v452, %v454
        %v456 = vrot.slane %v442, %v455
        %v457 = vcombine.high %v449, %v449
        %v458 = vcombine.high %v456, %v456
        %v460 = vunpack.c.l.s4 1966171168
        %v461 = vunpack.c.0.s8 %v460
        %v462 = vlaneseq
        %v463 = vshrl.u32 %v462, 7
        %v464 = vsub.s32 %v461, %v463
        %v465 = vrot.slane %v302, %v464
        %v466 = vcombine.high %v465, %v465
        %v468 = vunpack.c.l.s4 1966171168
        %v469 = vunpack.c.0.s8 %v468
        %v470 = vlaneseq
        %v471 = vshrl.u32 %v470, 7
        %v472 = vsub.s32 %v469, %v471
        %v473 = vrot.slane %v465, %v472
        %v475 = vunpack.c.l.s4 1966171168
        %v476 = vunpack.c.0.s8 %v475
        %v477 = vlaneseq
        %v478 = vshrl.u32 %v477, 7
        %v479 = vsub.s32 %v476, %v478
        %v480 = vrot.slane %v466, %v479
        %v481 = vcombine.high %v473, %v473
        %v482 = vcombine.high %v480, %v480
        %v484 = vunpack.c.l.s4 1966171168
        %v485 = vunpack.c.0.s8 %v484
        %v486 = vlaneseq
        %v487 = vshrl.u32 %v486, 7
        %v488 = vsub.s32 %v485, %v487
        %v489 = vrot.slane %v303, %v488
        %v491 = vunpack.c.l.s4 1966171168
        %v492 = vunpack.c.0.s8 %v491
        %v493 = vlaneseq
        %v494 = vshrl.u32 %v493, 7
        %v495 = vsub.s32 %v492, %v494
        %v496 = vrot.slane %v489, %v495
        %v498 = vunpack.c.l.s4 1966171168
        %v499 = vunpack.c.0.s8 %v498
        %v500 = vlaneseq
        %v501 = vshrl.u32 %v500, 7
        %v502 = vsub.s32 %v499, %v501
        %v503 = vrot.slane %v304, %v502
        %v504 = vcombine.high %v503, %v503
        %v506 = vunpack.c.l.s4 1966171168
        %v507 = vunpack.c.0.s8 %v506
        %v508 = vlaneseq
        %v509 = vshrl.u32 %v508, 7
        %v510 = vsub.s32 %v507, %v509
        %v511 = vrot.slane %v503, %v510
        %v513 = vunpack.c.l.s4 1966171168
        %v514 = vunpack.c.0.s8 %v513
        %v515 = vlaneseq
        %v516 = vshrl.u32 %v515, 7
        %v517 = vsub.s32 %v514, %v516
        %v518 = vrot.slane %v504, %v517
        %v519 = vcombine.high %v511, %v511
        %v520 = vcombine.high %v518, %v518
        %v522 = vunpack.c.l.s4 1966171168
        %v523 = vunpack.c.0.s8 %v522
        %v524 = vlaneseq
        %v525 = vshrl.u32 %v524, 7
        %v526 = vsub.s32 %v523, %v525
        %v527 = vrot.slane %v305, %v526
        %v528 = vcombine.high %v527, %v527
        %v530 = vunpack.c.l.s4 1966171168
        %v531 = vunpack.c.0.s8 %v530
        %v532 = vlaneseq
        %v533 = vshrl.u32 %v532, 7
        %v534 = vsub.s32 %v531, %v533
        %v535 = vrot.slane %v527, %v534
        %v537 = vunpack.c.l.s4 1966171168
        %v538 = vunpack.c.0.s8 %v537
        %v539 = vlaneseq
        %v540 = vshrl.u32 %v539, 7
        %v541 = vsub.s32 %v538, %v540
        %v542 = vrot.slane %v528, %v541
        %v543 = vcombine.high %v535, %v535
        %v544 = vcombine.high %v542, %v542
        %v546 = vunpack.c.l.s4 1966171168
        %v547 = vunpack.c.0.s8 %v546
        %v548 = vlaneseq
        %v549 = vshrl.u32 %v548, 7
        %v550 = vsub.s32 %v547, %v549
        %v551 = vrot.slane %v306, %v550
        %v553 = vunpack.c.l.s4 1966171168
        %v554 = vunpack.c.0.s8 %v553
        %v555 = vlaneseq
        %v556 = vshrl.u32 %v555, 7
        %v557 = vsub.s32 %v554, %v556
        %v558 = vrot.slane %v551, %v557
        %v560 = vunpack.c.l.s4 1966171168
        %v561 = vunpack.c.0.s8 %v560
        %v562 = vlaneseq
        %v563 = vshrl.u32 %v562, 7
        %v564 = vsub.s32 %v561, %v563
        %v565 = vrot.slane %v307, %v564
        %v566 = vcombine.high %v565, %v565
        %v568 = vunpack.c.l.s4 1966171168
        %v569 = vunpack.c.0.s8 %v568
        %v570 = vlaneseq
        %v571 = vshrl.u32 %v570, 7
        %v572 = vsub.s32 %v569, %v571
        %v573 = vrot.slane %v565, %v572
        %v575 = vunpack.c.l.s4 1966171168
        %v576 = vunpack.c.0.s8 %v575
        %v577 = vlaneseq
        %v578 = vshrl.u32 %v577, 7
        %v579 = vsub.s32 %v576, %v578
        %v580 = vrot.slane %v566, %v579
        %v581 = vcombine.high %v573, %v573
        %v582 = vcombine.high %v580, %v580
        %v584 = vunpack.c.l.s4 1966171168
        %v585 = vunpack.c.0.s8 %v584
        %v586 = vlaneseq
        %v587 = vshrl.u32 %v586, 7
        %v588 = vsub.s32 %v585, %v587
        %v589 = vrot.slane %v308, %v588
        %v590 = vcombine.high %v589, %v589
        %v592 = vunpack.c.l.s4 1966171168
        %v593 = vunpack.c.0.s8 %v592
        %v594 = vlaneseq
        %v595 = vshrl.u32 %v594, 7
        %v596 = vsub.s32 %v593, %v595
        %v597 = vrot.slane %v589, %v596
        %v599 = vunpack.c.l.s4 1966171168
        %v600 = vunpack.c.0.s8 %v599
        %v601 = vlaneseq
        %v602 = vshrl.u32 %v601, 7
        %v603 = vsub.s32 %v600, %v602
        %v604 = vrot.slane %v590, %v603
        %v605 = vcombine.high %v597, %v597
        %v606 = vcombine.high %v604, %v604
        %v608 = vunpack.c.l.s4 1966171168
        %v609 = vunpack.c.0.s8 %v608
        %v610 = vlaneseq
        %v611 = vshrl.u32 %v610, 7
        %v612 = vsub.s32 %v609, %v611
        %v613 = vrot.slane %v309, %v612
        %v615 = vunpack.c.l.s4 1966171168
        %v616 = vunpack.c.0.s8 %v615
        %v617 = vlaneseq
        %v618 = vshrl.u32 %v617, 7
        %v619 = vsub.s32 %v616, %v618
        %v620 = vrot.slane %v613, %v619
        %v622 = vunpack.c.l.s4 1966171168
        %v623 = vunpack.c.0.s8 %v622
        %v624 = vlaneseq
        %v625 = vshrl.u32 %v624, 7
        %v626 = vsub.s32 %v623, %v625
        %v627 = vrot.slane %v310, %v626
        %v628 = vcombine.high %v627, %v627
        %v630 = vunpack.c.l.s4 1966171168
        %v631 = vunpack.c.0.s8 %v630
        %v632 = vlaneseq
        %v633 = vshrl.u32 %v632, 7
        %v634 = vsub.s32 %v631, %v633
        %v635 = vrot.slane %v627, %v634
        %v637 = vunpack.c.l.s4 1966171168
        %v638 = vunpack.c.0.s8 %v637
        %v639 = vlaneseq
        %v640 = vshrl.u32 %v639, 7
        %v641 = vsub.s32 %v638, %v640
        %v642 = vrot.slane %v628, %v641
        %v643 = vcombine.high %v635, %v635
        %v644 = vcombine.high %v642, %v642
        %v646 = vunpack.c.l.s4 1966171168
        %v647 = vunpack.c.0.s8 %v646
        %v648 = vlaneseq
        %v649 = vshrl.u32 %v648, 7
        %v650 = vsub.s32 %v647, %v649
        %v651 = vrot.slane %v311, %v650
        %v652 = vcombine.high %v651, %v651
        %v654 = vunpack.c.l.s4 1966171168
        %v655 = vunpack.c.0.s8 %v654
        %v656 = vlaneseq
        %v657 = vshrl.u32 %v656, 7
        %v658 = vsub.s32 %v655, %v657
        %v659 = vrot.slane %v651, %v658
        %v661 = vunpack.c.l.s4 1966171168
        %v662 = vunpack.c.0.s8 %v661
        %v663 = vlaneseq
        %v664 = vshrl.u32 %v663, 7
        %v665 = vsub.s32 %v662, %v664
        %v666 = vrot.slane %v652, %v665
        %v667 = vcombine.high %v659, %v659
        %v668 = vcombine.high %v666, %v666
        %v670 = vunpack.c.l.s4 1966171168
        %v671 = vunpack.c.0.s8 %v670
        %v672 = vlaneseq
        %v673 = vshrl.u32 %v672, 7
        %v674 = vsub.s32 %v671, %v673
        %v675 = vrot.slane %v312, %v674
        %v677 = vunpack.c.l.s4 1966171168
        %v678 = vunpack.c.0.s8 %v677
        %v679 = vlaneseq
        %v680 = vshrl.u32 %v679, 7
        %v681 = vsub.s32 %v678, %v680
        %v682 = vrot.slane %v675, %v681
        %v684 = vunpack.c.l.s4 1966171168
        %v685 = vunpack.c.0.s8 %v684
        %v686 = vlaneseq
        %v687 = vshrl.u32 %v686, 7
        %v688 = vsub.s32 %v685, %v687
        %v689 = vrot.slane %v313, %v688
        %v690 = vcombine.high %v689, %v689
        %v692 = vunpack.c.l.s4 1966171168
        %v693 = vunpack.c.0.s8 %v692
        %v694 = vlaneseq
        %v695 = vshrl.u32 %v694, 7
        %v696 = vsub.s32 %v693, %v695
        %v697 = vrot.slane %v689, %v696
        %v699 = vunpack.c.l.s4 1966171168
        %v700 = vunpack.c.0.s8 %v699
        %v701 = vlaneseq
        %v702 = vshrl.u32 %v701, 7
        %v703 = vsub.s32 %v700, %v702
        %v704 = vrot.slane %v690, %v703
        %v705 = vcombine.high %v697, %v697
        %v706 = vcombine.high %v704, %v704
        %v708 = vunpack.c.l.s4 1966171168
        %v709 = vunpack.c.0.s8 %v708
        %v710 = vlaneseq
        %v711 = vshrl.u32 %v710, 7
        %v712 = vsub.s32 %v709, %v711
        %v713 = vrot.slane %v314, %v712
        %v714 = vcombine.high %v713, %v713
        %v716 = vunpack.c.l.s4 1966171168
        %v717 = vunpack.c.0.s8 %v716
        %v718 = vlaneseq
        %v719 = vshrl.u32 %v718, 7
        %v720 = vsub.s32 %v717, %v719
        %v721 = vrot.slane %v713, %v720
        %v723 = vunpack.c.l.s4 1966171168
        %v724 = vunpack.c.0.s8 %v723
        %v725 = vlaneseq
        %v726 = vshrl.u32 %v725, 7
        %v727 = vsub.s32 %v724, %v726
        %v728 = vrot.slane %v714, %v727
        %v729 = vcombine.high %v721, %v721
        %v730 = vcombine.high %v728, %v728
        %v732 = vunpack.c.l.s4 1966171168
        %v733 = vunpack.c.0.s8 %v732
        %v734 = vlaneseq
        %v735 = vshrl.u32 %v734, 7
        %v736 = vsub.s32 %v733, %v735
        %v737 = vrot.slane %v315, %v736
        %v739 = vunpack.c.l.s4 1966171168
        %v740 = vunpack.c.0.s8 %v739
        %v741 = vlaneseq
        %v742 = vshrl.u32 %v741, 7
        %v743 = vsub.s32 %v740, %v742
        %v744 = vrot.slane %v737, %v743
        %v746 = vunpack.c.l.s4 1966171168
        %v747 = vunpack.c.0.s8 %v746
        %v748 = vlaneseq
        %v749 = vshrl.u32 %v748, 7
        %v750 = vsub.s32 %v747, %v749
        %v751 = vrot.slane %v316, %v750
        %v752 = vcombine.high %v751, %v751
        %v754 = vunpack.c.l.s4 1966171168
        %v755 = vunpack.c.0.s8 %v754
        %v756 = vlaneseq
        %v757 = vshrl.u32 %v756, 7
        %v758 = vsub.s32 %v755, %v757
        %v759 = vrot.slane %v751, %v758
        %v761 = vunpack.c.l.s4 1966171168
        %v762 = vunpack.c.0.s8 %v761
        %v763 = vlaneseq
        %v764 = vshrl.u32 %v763, 7
        %v765 = vsub.s32 %v762, %v764
        %v766 = vrot.slane %v752, %v765
        %v767 = vcombine.high %v759, %v759
        %v768 = vcombine.high %v766, %v766
        %v770 = vunpack.c.l.s4 1966171168
        %v771 = vunpack.c.0.s8 %v770
        %v772 = vlaneseq
        %v773 = vshrl.u32 %v772, 7
        %v774 = vsub.s32 %v771, %v773
        %v775 = vrot.slane %v317, %v774
        %v776 = vcombine.high %v775, %v775
        %v778 = vunpack.c.l.s4 1966171168
        %v779 = vunpack.c.0.s8 %v778
        %v780 = vlaneseq
        %v781 = vshrl.u32 %v780, 7
        %v782 = vsub.s32 %v779, %v781
        %v783 = vrot.slane %v775, %v782
        %v785 = vunpack.c.l.s4 1966171168
        %v786 = vunpack.c.0.s8 %v785
        %v787 = vlaneseq
        %v788 = vshrl.u32 %v787, 7
        %v789 = vsub.s32 %v786, %v788
        %v790 = vrot.slane %v776, %v789
        %v791 = vcombine.high %v783, %v783
        %v792 = vcombine.high %v790, %v790
        %v794 = vunpack.c.l.s4 1966171168
        %v795 = vunpack.c.0.s8 %v794
        %v796 = vlaneseq
        %v797 = vshrl.u32 %v796, 7
        %v798 = vsub.s32 %v795, %v797
        %v799 = vrot.slane %v318, %v798
        %v801 = vunpack.c.l.s4 1966171168
        %v802 = vunpack.c.0.s8 %v801
        %v803 = vlaneseq
        %v804 = vshrl.u32 %v803, 7
        %v805 = vsub.s32 %v802, %v804
        %v806 = vrot.slane %v799, %v805
        %v808 = vunpack.c.l.s4 1966171168
        %v809 = vunpack.c.0.s8 %v808
        %v810 = vlaneseq
        %v811 = vshrl.u32 %v810, 7
        %v812 = vsub.s32 %v809, %v811
        %v813 = vrot.slane %v319, %v812
        %v814 = vcombine.high %v813, %v813
        %v816 = vunpack.c.l.s4 1966171168
        %v817 = vunpack.c.0.s8 %v816
        %v818 = vlaneseq
        %v819 = vshrl.u32 %v818, 7
        %v820 = vsub.s32 %v817, %v819
        %v821 = vrot.slane %v813, %v820
        %v823 = vunpack.c.l.s4 1966171168
        %v824 = vunpack.c.0.s8 %v823
        %v825 = vlaneseq
        %v826 = vshrl.u32 %v825, 7
        %v827 = vsub.s32 %v824, %v826
        %v828 = vrot.slane %v814, %v827
        %v829 = vcombine.high %v821, %v821
        %v830 = vcombine.high %v828, %v828
        %v832 = vunpack.c.l.s4 1966171168
        %v833 = vunpack.c.0.s8 %v832
        %v834 = vlaneseq
        %v835 = vshrl.u32 %v834, 7
        %v836 = vsub.s32 %v833, %v835
        %v837 = vrot.slane %v320, %v836
        %v838 = vcombine.high %v837, %v837
        %v840 = vunpack.c.l.s4 1966171168
        %v841 = vunpack.c.0.s8 %v840
        %v842 = vlaneseq
        %v843 = vshrl.u32 %v842, 7
        %v844 = vsub.s32 %v841, %v843
        %v845 = vrot.slane %v837, %v844
        %v847 = vunpack.c.l.s4 1966171168
        %v848 = vunpack.c.0.s8 %v847
        %v849 = vlaneseq
        %v850 = vshrl.u32 %v849, 7
        %v851 = vsub.s32 %v848, %v850
        %v852 = vrot.slane %v838, %v851
        %v853 = vcombine.high %v845, %v845
        %v854 = vcombine.high %v852, %v852
        %v856 = vunpack.c.l.s4 1966171168
        %v857 = vunpack.c.0.s8 %v856
        %v858 = vlaneseq
        %v859 = vshrl.u32 %v858, 7
        %v860 = vsub.s32 %v857, %v859
        %v861 = vrot.slane %v321, %v860
        %v863 = vunpack.c.l.s4 1966171168
        %v864 = vunpack.c.0.s8 %v863
        %v865 = vlaneseq
        %v866 = vshrl.u32 %v865, 7
        %v867 = vsub.s32 %v864, %v866
        %v868 = vrot.slane %v861, %v867
        %v870 = vunpack.c.l.s4 1966171168
        %v871 = vunpack.c.0.s8 %v870
        %v872 = vlaneseq
        %v873 = vshrl.u32 %v872, 7
        %v874 = vsub.s32 %v871, %v873
        %v875 = vrot.slane %v322, %v874
        %v876 = vcombine.high %v875, %v875
        %v878 = vunpack.c.l.s4 1966171168
        %v879 = vunpack.c.0.s8 %v878
        %v880 = vlaneseq
        %v881 = vshrl.u32 %v880, 7
        %v882 = vsub.s32 %v879, %v881
        %v883 = vrot.slane %v875, %v882
        %v885 = vunpack.c.l.s4 1966171168
        %v886 = vunpack.c.0.s8 %v885
        %v887 = vlaneseq
        %v888 = vshrl.u32 %v887, 7
        %v889 = vsub.s32 %v886, %v888
        %v890 = vrot.slane %v876, %v889
        %v891 = vcombine.high %v883, %v883
        %v892 = vcombine.high %v890, %v890
        %v894 = vunpack.c.l.s4 1966171168
        %v895 = vunpack.c.0.s8 %v894
        %v896 = vlaneseq
        %v897 = vshrl.u32 %v896, 7
        %v898 = vsub.s32 %v895, %v897
        %v899 = vrot.slane %v323, %v898
        %v900 = vcombine.high %v899, %v899
        %v902 = vunpack.c.l.s4 1966171168
        %v903 = vunpack.c.0.s8 %v902
        %v904 = vlaneseq
        %v905 = vshrl.u32 %v904, 7
        %v906 = vsub.s32 %v903, %v905
        %v907 = vrot.slane %v899, %v906
        %v909 = vunpack.c.l.s4 1966171168
        %v910 = vunpack.c.0.s8 %v909
        %v911 = vlaneseq
        %v912 = vshrl.u32 %v911, 7
        %v913 = vsub.s32 %v910, %v912
        %v914 = vrot.slane %v900, %v913
        %v915 = vcombine.high %v907, %v907
        %v916 = vcombine.high %v914, %v914
        %v918 = vunpack.c.l.s4 1966171168
        %v919 = vunpack.c.0.s8 %v918
        %v920 = vlaneseq
        %v921 = vshrl.u32 %v920, 7
        %v922 = vsub.s32 %v919, %v921
        %v923 = vrot.slane %v324, %v922
        %v925 = vunpack.c.l.s4 1966171168
        %v926 = vunpack.c.0.s8 %v925
        %v927 = vlaneseq
        %v928 = vshrl.u32 %v927, 7
        %v929 = vsub.s32 %v926, %v928
        %v930 = vrot.slane %v923, %v929
        %v932 = vunpack.c.l.s4 1966171168
        %v933 = vunpack.c.0.s8 %v932
        %v934 = vlaneseq
        %v935 = vshrl.u32 %v934, 7
        %v936 = vsub.s32 %v933, %v935
        %v937 = vrot.slane %v325, %v936
        %v938 = vcombine.high %v937, %v937
        %v940 = vunpack.c.l.s4 1966171168
        %v941 = vunpack.c.0.s8 %v940
        %v942 = vlaneseq
        %v943 = vshrl.u32 %v942, 7
        %v944 = vsub.s32 %v941, %v943
        %v945 = vrot.slane %v937, %v944
        %v947 = vunpack.c.l.s4 1966171168
        %v948 = vunpack.c.0.s8 %v947
        %v949 = vlaneseq
        %v950 = vshrl.u32 %v949, 7
        %v951 = vsub.s32 %v948, %v950
        %v952 = vrot.slane %v938, %v951
        %v953 = vcombine.high %v945, %v945
        %v954 = vcombine.high %v952, %v952
        %v956 = vunpack.c.l.s4 1966171168
        %v957 = vunpack.c.0.s8 %v956
        %v958 = vlaneseq
        %v959 = vshrl.u32 %v958, 7
        %v960 = vsub.s32 %v957, %v959
        %v961 = vrot.slane %v326, %v960
        %v962 = vcombine.high %v961, %v961
        %v964 = vunpack.c.l.s4 1966171168
        %v965 = vunpack.c.0.s8 %v964
        %v966 = vlaneseq
        %v967 = vshrl.u32 %v966, 7
        %v968 = vsub.s32 %v965, %v967
        %v969 = vrot.slane %v961, %v968
        %v971 = vunpack.c.l.s4 1966171168
        %v972 = vunpack.c.0.s8 %v971
        %v973 = vlaneseq
        %v974 = vshrl.u32 %v973, 7
        %v975 = vsub.s32 %v972, %v974
        %v976 = vrot.slane %v962, %v975
        %v977 = vcombine.high %v969, %v969
        %v978 = vcombine.high %v976, %v976
        %v980 = vunpack.c.l.s4 1966171168
        %v981 = vunpack.c.0.s8 %v980
        %v982 = vlaneseq
        %v983 = vshrl.u32 %v982, 7
        %v984 = vsub.s32 %v981, %v983
        %v985 = vrot.slane %v327, %v984
        %v987 = vunpack.c.l.s4 1966171168
        %v988 = vunpack.c.0.s8 %v987
        %v989 = vlaneseq
        %v990 = vshrl.u32 %v989, 7
        %v991 = vsub.s32 %v988, %v990
        %v992 = vrot.slane %v985, %v991
        %v994 = vunpack.c.l.s4 1966171168
        %v995 = vunpack.c.0.s8 %v994
        %v996 = vlaneseq
        %v997 = vshrl.u32 %v996, 7
        %v998 = vsub.s32 %v995, %v997
        %v999 = vrot.slane %v328, %v998
        %v1000 = vcombine.high %v999, %v999
        %v1002 = vunpack.c.l.s4 1966171168
        %v1003 = vunpack.c.0.s8 %v1002
        %v1004 = vlaneseq
        %v1005 = vshrl.u32 %v1004, 7
        %v1006 = vsub.s32 %v1003, %v1005
        %v1007 = vrot.slane %v999, %v1006
        %v1009 = vunpack.c.l.s4 1966171168
        %v1010 = vunpack.c.0.s8 %v1009
        %v1011 = vlaneseq
        %v1012 = vshrl.u32 %v1011, 7
        %v1013 = vsub.s32 %v1010, %v1012
        %v1014 = vrot.slane %v1000, %v1013
        %v1015 = vcombine.high %v1007, %v1007
        %v1016 = vcombine.high %v1014, %v1014
        %v1018 = vunpack.c.l.s4 1966171168
        %v1019 = vunpack.c.0.s8 %v1018
        %v1020 = vlaneseq
        %v1021 = vshrl.u32 %v1020, 7
        %v1022 = vsub.s32 %v1019, %v1021
        %v1023 = vrot.slane %v329, %v1022
        %v1024 = vcombine.high %v1023, %v1023
        %v1026 = vunpack.c.l.s4 1966171168
        %v1027 = vunpack.c.0.s8 %v1026
        %v1028 = vlaneseq
        %v1029 = vshrl.u32 %v1028, 7
        %v1030 = vsub.s32 %v1027, %v1029
        %v1031 = vrot.slane %v1023, %v1030
        %v1033 = vunpack.c.l.s4 1966171168
        %v1034 = vunpack.c.0.s8 %v1033
        %v1035 = vlaneseq
        %v1036 = vshrl.u32 %v1035, 7
        %v1037 = vsub.s32 %v1034, %v1036
        %v1038 = vrot.slane %v1024, %v1037
        %v1039 = vcombine.high %v1031, %v1031
        %v1040 = vcombine.high %v1038, %v1038
        %v1042 = vunpack.c.l.s4 1966171168
        %v1043 = vunpack.c.0.s8 %v1042
        %v1044 = vlaneseq
        %v1045 = vshrl.u32 %v1044, 7
        %v1046 = vsub.s32 %v1043, %v1045
        %v1047 = vrot.slane %v330, %v1046
        %v1049 = vunpack.c.l.s4 1966171168
        %v1050 = vunpack.c.0.s8 %v1049
        %v1051 = vlaneseq
        %v1052 = vshrl.u32 %v1051, 7
        %v1053 = vsub.s32 %v1050, %v1052
        %v1054 = vrot.slane %v1047, %v1053
        %v1056 = vunpack.c.l.s4 1966171168
        %v1057 = vunpack.c.0.s8 %v1056
        %v1058 = vlaneseq
        %v1059 = vshrl.u32 %v1058, 7
        %v1060 = vsub.s32 %v1057, %v1059
        %v1061 = vrot.slane %v331, %v1060
        %v1062 = vcombine.high %v1061, %v1061
        %v1064 = vunpack.c.l.s4 1966171168
        %v1065 = vunpack.c.0.s8 %v1064
        %v1066 = vlaneseq
        %v1067 = vshrl.u32 %v1066, 7
        %v1068 = vsub.s32 %v1065, %v1067
        %v1069 = vrot.slane %v1061, %v1068
        %v1071 = vunpack.c.l.s4 1966171168
        %v1072 = vunpack.c.0.s8 %v1071
        %v1073 = vlaneseq
        %v1074 = vshrl.u32 %v1073, 7
        %v1075 = vsub.s32 %v1072, %v1074
        %v1076 = vrot.slane %v1062, %v1075
        %v1077 = vcombine.high %v1069, %v1069
        %v1078 = vcombine.high %v1076, %v1076
        %v1080 = vunpack.c.l.s4 1966171168
        %v1081 = vunpack.c.0.s8 %v1080
        %v1082 = vlaneseq
        %v1083 = vshrl.u32 %v1082, 7
        %v1084 = vsub.s32 %v1081, %v1083
        %v1085 = vrot.slane %v332, %v1084
        %v1086 = vcombine.high %v1085, %v1085
        %v1088 = vunpack.c.l.s4 1966171168
        %v1089 = vunpack.c.0.s8 %v1088
        %v1090 = vlaneseq
        %v1091 = vshrl.u32 %v1090, 7
        %v1092 = vsub.s32 %v1089, %v1091
        %v1093 = vrot.slane %v1085, %v1092
        %v1095 = vunpack.c.l.s4 1966171168
        %v1096 = vunpack.c.0.s8 %v1095
        %v1097 = vlaneseq
        %v1098 = vshrl.u32 %v1097, 7
        %v1099 = vsub.s32 %v1096, %v1098
        %v1100 = vrot.slane %v1086, %v1099
        %v1101 = vcombine.high %v1093, %v1093
        %v1102 = vcombine.high %v1100, %v1100
        %v1104 = vunpack.c.l.s4 1966171168
        %v1105 = vunpack.c.0.s8 %v1104
        %v1106 = vlaneseq
        %v1107 = vshrl.u32 %v1106, 7
        %v1108 = vsub.s32 %v1105, %v1107
        %v1109 = vrot.slane %v333, %v1108
        %v1111 = vunpack.c.l.s4 1966171168
        %v1112 = vunpack.c.0.s8 %v1111
        %v1113 = vlaneseq
        %v1114 = vshrl.u32 %v1113, 7
        %v1115 = vsub.s32 %v1112, %v1114
        %v1116 = vrot.slane %v1109, %v1115
        %v1118 = vunpack.c.l.s4 1966171168
        %v1119 = vunpack.c.0.s8 %v1118
        %v1120 = vlaneseq
        %v1121 = vshrl.u32 %v1120, 7
        %v1122 = vsub.s32 %v1119, %v1121
        %v1123 = vrot.slane %v334, %v1122
        %v1124 = vcombine.high %v1123, %v1123
        %v1126 = vunpack.c.l.s4 1966171168
        %v1127 = vunpack.c.0.s8 %v1126
        %v1128 = vlaneseq
        %v1129 = vshrl.u32 %v1128, 7
        %v1130 = vsub.s32 %v1127, %v1129
        %v1131 = vrot.slane %v1123, %v1130
        %v1133 = vunpack.c.l.s4 1966171168
        %v1134 = vunpack.c.0.s8 %v1133
        %v1135 = vlaneseq
        %v1136 = vshrl.u32 %v1135, 7
        %v1137 = vsub.s32 %v1134, %v1136
        %v1138 = vrot.slane %v1124, %v1137
        %v1139 = vcombine.high %v1131, %v1131
        %v1140 = vcombine.high %v1138, %v1138
        %v1142 = vunpack.c.l.s4 1966171168
        %v1143 = vunpack.c.0.s8 %v1142
        %v1144 = vlaneseq
        %v1145 = vshrl.u32 %v1144, 7
        %v1146 = vsub.s32 %v1143, %v1145
        %v1147 = vrot.slane %v335, %v1146
        %v1148 = vcombine.high %v1147, %v1147
        %v1150 = vunpack.c.l.s4 1966171168
        %v1151 = vunpack.c.0.s8 %v1150
        %v1152 = vlaneseq
        %v1153 = vshrl.u32 %v1152, 7
        %v1154 = vsub.s32 %v1151, %v1153
        %v1155 = vrot.slane %v1147, %v1154
        %v1157 = vunpack.c.l.s4 1966171168
        %v1158 = vunpack.c.0.s8 %v1157
        %v1159 = vlaneseq
        %v1160 = vshrl.u32 %v1159, 7
        %v1161 = vsub.s32 %v1158, %v1160
        %v1162 = vrot.slane %v1148, %v1161
        %v1163 = vcombine.high %v1155, %v1155
        %v1164 = vcombine.high %v1162, %v1162
        %v1166 = vunpack.c.l.s4 1966171168
        %v1167 = vunpack.c.0.s8 %v1166
        %v1168 = vlaneseq
        %v1169 = vshrl.u32 %v1168, 7
        %v1170 = vsub.s32 %v1167, %v1169
        %v1171 = vrot.slane %v336, %v1170
        %v1173 = vunpack.c.l.s4 1966171168
        %v1174 = vunpack.c.0.s8 %v1173
        %v1175 = vlaneseq
        %v1176 = vshrl.u32 %v1175, 7
        %v1177 = vsub.s32 %v1174, %v1176
        %v1178 = vrot.slane %v1171, %v1177
        %v1180 = vunpack.c.l.s4 1966171168
        %v1181 = vunpack.c.0.s8 %v1180
        %v1182 = vlaneseq
        %v1183 = vshrl.u32 %v1182, 7
        %v1184 = vsub.s32 %v1181, %v1183
        %v1185 = vrot.slane %v337, %v1184
        %v1186 = vcombine.high %v1185, %v1185
        %v1188 = vunpack.c.l.s4 1966171168
        %v1189 = vunpack.c.0.s8 %v1188
        %v1190 = vlaneseq
        %v1191 = vshrl.u32 %v1190, 7
        %v1192 = vsub.s32 %v1189, %v1191
        %v1193 = vrot.slane %v1185, %v1192
        %v1195 = vunpack.c.l.s4 1966171168
        %v1196 = vunpack.c.0.s8 %v1195
        %v1197 = vlaneseq
        %v1198 = vshrl.u32 %v1197, 7
        %v1199 = vsub.s32 %v1196, %v1198
        %v1200 = vrot.slane %v1186, %v1199
        %v1201 = vcombine.high %v1193, %v1193
        %v1202 = vcombine.high %v1200, %v1200
        %v1204 = vunpack.c.l.s4 1966171168
        %v1205 = vunpack.c.0.s8 %v1204
        %v1206 = vlaneseq
        %v1207 = vshrl.u32 %v1206, 7
        %v1208 = vsub.s32 %v1205, %v1207
        %v1209 = vrot.slane %v338, %v1208
        %v1210 = vcombine.high %v1209, %v1209
        %v1212 = vunpack.c.l.s4 1966171168
        %v1213 = vunpack.c.0.s8 %v1212
        %v1214 = vlaneseq
        %v1215 = vshrl.u32 %v1214, 7
        %v1216 = vsub.s32 %v1213, %v1215
        %v1217 = vrot.slane %v1209, %v1216
        %v1219 = vunpack.c.l.s4 1966171168
        %v1220 = vunpack.c.0.s8 %v1219
        %v1221 = vlaneseq
        %v1222 = vshrl.u32 %v1221, 7
        %v1223 = vsub.s32 %v1220, %v1222
        %v1224 = vrot.slane %v1210, %v1223
        %v1225 = vcombine.high %v1217, %v1217
        %v1226 = vcombine.high %v1224, %v1224
        %v1228 = vunpack.c.l.s4 1966171168
        %v1229 = vunpack.c.0.s8 %v1228
        %v1230 = vlaneseq
        %v1231 = vshrl.u32 %v1230, 7
        %v1232 = vsub.s32 %v1229, %v1231
        %v1233 = vrot.slane %v339, %v1232
        %v1235 = vunpack.c.l.s4 1966171168
        %v1236 = vunpack.c.0.s8 %v1235
        %v1237 = vlaneseq
        %v1238 = vshrl.u32 %v1237, 7
        %v1239 = vsub.s32 %v1236, %v1238
        %v1240 = vrot.slane %v1233, %v1239
        %v1242 = vunpack.c.l.s4 1966171168
        %v1243 = vunpack.c.0.s8 %v1242
        %v1244 = vlaneseq
        %v1245 = vshrl.u32 %v1244, 7
        %v1246 = vsub.s32 %v1243, %v1245
        %v1247 = vrot.slane %v340, %v1246
        %v1248 = vcombine.high %v1247, %v1247
        %v1250 = vunpack.c.l.s4 1966171168
        %v1251 = vunpack.c.0.s8 %v1250
        %v1252 = vlaneseq
        %v1253 = vshrl.u32 %v1252, 7
        %v1254 = vsub.s32 %v1251, %v1253
        %v1255 = vrot.slane %v1247, %v1254
        %v1257 = vunpack.c.l.s4 1966171168
        %v1258 = vunpack.c.0.s8 %v1257
        %v1259 = vlaneseq
        %v1260 = vshrl.u32 %v1259, 7
        %v1261 = vsub.s32 %v1258, %v1260
        %v1262 = vrot.slane %v1248, %v1261
        %v1263 = vcombine.high %v1255, %v1255
        %v1264 = vcombine.high %v1262, %v1262
        %v1266 = vunpack.c.l.s4 1966171168
        %v1267 = vunpack.c.0.s8 %v1266
        %v1268 = vlaneseq
        %v1269 = vshrl.u32 %v1268, 7
        %v1270 = vsub.s32 %v1267, %v1269
        %v1271 = vrot.slane %v341, %v1270
        %v1272 = vcombine.high %v1271, %v1271
        %v1274 = vunpack.c.l.s4 1966171168
        %v1275 = vunpack.c.0.s8 %v1274
        %v1276 = vlaneseq
        %v1277 = vshrl.u32 %v1276, 7
        %v1278 = vsub.s32 %v1275, %v1277
        %v1279 = vrot.slane %v1271, %v1278
        %v1281 = vunpack.c.l.s4 1966171168
        %v1282 = vunpack.c.0.s8 %v1281
        %v1283 = vlaneseq
        %v1284 = vshrl.u32 %v1283, 7
        %v1285 = vsub.s32 %v1282, %v1284
        %v1286 = vrot.slane %v1272, %v1285
        %v1287 = vcombine.high %v1279, %v1279
        %v1288 = vcombine.high %v1286, %v1286
        %v1290 = vunpack.c.l.s4 1966171168
        %v1291 = vunpack.c.0.s8 %v1290
        %v1292 = vlaneseq
        %v1293 = vshrl.u32 %v1292, 7
        %v1294 = vsub.s32 %v1291, %v1293
        %v1295 = vrot.slane %v342, %v1294
        %v1297 = vunpack.c.l.s4 1966171168
        %v1298 = vunpack.c.0.s8 %v1297
        %v1299 = vlaneseq
        %v1300 = vshrl.u32 %v1299, 7
        %v1301 = vsub.s32 %v1298, %v1300
        %v1302 = vrot.slane %v1295, %v1301
        %v1304 = vunpack.c.l.s4 1966171168
        %v1305 = vunpack.c.0.s8 %v1304
        %v1306 = vlaneseq
        %v1307 = vshrl.u32 %v1306, 7
        %v1308 = vsub.s32 %v1305, %v1307
        %v1309 = vrot.slane %v343, %v1308
        %v1310 = vcombine.high %v1309, %v1309
        %v1312 = vunpack.c.l.s4 1966171168
        %v1313 = vunpack.c.0.s8 %v1312
        %v1314 = vlaneseq
        %v1315 = vshrl.u32 %v1314, 7
        %v1316 = vsub.s32 %v1313, %v1315
        %v1317 = vrot.slane %v1309, %v1316
        %v1319 = vunpack.c.l.s4 1966171168
        %v1320 = vunpack.c.0.s8 %v1319
        %v1321 = vlaneseq
        %v1322 = vshrl.u32 %v1321, 7
        %v1323 = vsub.s32 %v1320, %v1322
        %v1324 = vrot.slane %v1310, %v1323
        %v1325 = vcombine.high %v1317, %v1317
        %v1326 = vcombine.high %v1324, %v1324
        %v1328 = vunpack.c.l.s4 1966171168
        %v1329 = vunpack.c.0.s8 %v1328
        %v1330 = vlaneseq
        %v1331 = vshrl.u32 %v1330, 7
        %v1332 = vsub.s32 %v1329, %v1331
        %v1333 = vrot.slane %v344, %v1332
        %v1334 = vcombine.high %v1333, %v1333
        %v1336 = vunpack.c.l.s4 1966171168
        %v1337 = vunpack.c.0.s8 %v1336
        %v1338 = vlaneseq
        %v1339 = vshrl.u32 %v1338, 7
        %v1340 = vsub.s32 %v1337, %v1339
        %v1341 = vrot.slane %v1333, %v1340
        %v1343 = vunpack.c.l.s4 1966171168
        %v1344 = vunpack.c.0.s8 %v1343
        %v1345 = vlaneseq
        %v1346 = vshrl.u32 %v1345, 7
        %v1347 = vsub.s32 %v1344, %v1346
        %v1348 = vrot.slane %v1334, %v1347
        %v1349 = vcombine.high %v1341, %v1341
        %v1350 = vcombine.high %v1348, %v1348
        %v1352 = vunpack.c.l.s4 1966171168
        %v1353 = vunpack.c.0.s8 %v1352
        %v1354 = vlaneseq
        %v1355 = vshrl.u32 %v1354, 7
        %v1356 = vsub.s32 %v1353, %v1355
        %v1357 = vrot.slane %v345, %v1356
        %v1359 = vunpack.c.l.s4 1966171168
        %v1360 = vunpack.c.0.s8 %v1359
        %v1361 = vlaneseq
        %v1362 = vshrl.u32 %v1361, 7
        %v1363 = vsub.s32 %v1360, %v1362
        %v1364 = vrot.slane %v1357, %v1363
        %v1366 = vunpack.c.l.s4 1966171168
        %v1367 = vunpack.c.0.s8 %v1366
        %v1368 = vlaneseq
        %v1369 = vshrl.u32 %v1368, 7
        %v1370 = vsub.s32 %v1367, %v1369
        %v1371 = vrot.slane %v346, %v1370
        %v1372 = vcombine.high %v1371, %v1371
        %v1374 = vunpack.c.l.s4 1966171168
        %v1375 = vunpack.c.0.s8 %v1374
        %v1376 = vlaneseq
        %v1377 = vshrl.u32 %v1376, 7
        %v1378 = vsub.s32 %v1375, %v1377
        %v1379 = vrot.slane %v1371, %v1378
        %v1381 = vunpack.c.l.s4 1966171168
        %v1382 = vunpack.c.0.s8 %v1381
        %v1383 = vlaneseq
        %v1384 = vshrl.u32 %v1383, 7
        %v1385 = vsub.s32 %v1382, %v1384
        %v1386 = vrot.slane %v1372, %v1385
        %v1387 = vcombine.high %v1379, %v1379
        %v1388 = vcombine.high %v1386, %v1386
        %v1390 = vunpack.c.l.s4 1966171168
        %v1391 = vunpack.c.0.s8 %v1390
        %v1392 = vlaneseq
        %v1393 = vshrl.u32 %v1392, 7
        %v1394 = vsub.s32 %v1391, %v1393
        %v1395 = vrot.slane %v347, %v1394
        %v1396 = vcombine.high %v1395, %v1395
        %v1398 = vunpack.c.l.s4 1966171168
        %v1399 = vunpack.c.0.s8 %v1398
        %v1400 = vlaneseq
        %v1401 = vshrl.u32 %v1400, 7
        %v1402 = vsub.s32 %v1399, %v1401
        %v1403 = vrot.slane %v1395, %v1402
        %v1405 = vunpack.c.l.s4 1966171168
        %v1406 = vunpack.c.0.s8 %v1405
        %v1407 = vlaneseq
        %v1408 = vshrl.u32 %v1407, 7
        %v1409 = vsub.s32 %v1406, %v1408
        %v1410 = vrot.slane %v1396, %v1409
        %v1411 = vcombine.high %v1403, %v1403
        %v1412 = vcombine.high %v1410, %v1410
        %v1414 = vunpack.c.l.s4 1966171168
        %v1415 = vunpack.c.0.s8 %v1414
        %v1416 = vlaneseq
        %v1417 = vshrl.u32 %v1416, 7
        %v1418 = vsub.s32 %v1415, %v1417
        %v1419 = vrot.slane %v348, %v1418
        %v1421 = vunpack.c.l.s4 1966171168
        %v1422 = vunpack.c.0.s8 %v1421
        %v1423 = vlaneseq
        %v1424 = vshrl.u32 %v1423, 7
        %v1425 = vsub.s32 %v1422, %v1424
        %v1426 = vrot.slane %v1419, %v1425
        %v1428 = vunpack.c.l.s4 1966171168
        %v1429 = vunpack.c.0.s8 %v1428
        %v1430 = vlaneseq
        %v1431 = vshrl.u32 %v1430, 7
        %v1432 = vsub.s32 %v1429, %v1431
        %v1433 = vrot.slane %v349, %v1432
        %v1434 = vcombine.high %v1433, %v1433
        %v1436 = vunpack.c.l.s4 1966171168
        %v1437 = vunpack.c.0.s8 %v1436
        %v1438 = vlaneseq
        %v1439 = vshrl.u32 %v1438, 7
        %v1440 = vsub.s32 %v1437, %v1439
        %v1441 = vrot.slane %v1433, %v1440
        %v1443 = vunpack.c.l.s4 1966171168
        %v1444 = vunpack.c.0.s8 %v1443
        %v1445 = vlaneseq
        %v1446 = vshrl.u32 %v1445, 7
        %v1447 = vsub.s32 %v1444, %v1446
        %v1448 = vrot.slane %v1434, %v1447
        %v1449 = vcombine.high %v1441, %v1441
        %v1450 = vcombine.high %v1448, %v1448
        %v1452 = vunpack.c.l.s4 1966171168
        %v1453 = vunpack.c.0.s8 %v1452
        %v1454 = vlaneseq
        %v1455 = vshrl.u32 %v1454, 7
        %v1456 = vsub.s32 %v1453, %v1455
        %v1457 = vrot.slane %v350, %v1456
        %v1458 = vcombine.high %v1457, %v1457
        %v1460 = vunpack.c.l.s4 1966171168
        %v1461 = vunpack.c.0.s8 %v1460
        %v1462 = vlaneseq
        %v1463 = vshrl.u32 %v1462, 7
        %v1464 = vsub.s32 %v1461, %v1463
        %v1465 = vrot.slane %v1457, %v1464
        %v1467 = vunpack.c.l.s4 1966171168
        %v1468 = vunpack.c.0.s8 %v1467
        %v1469 = vlaneseq
        %v1470 = vshrl.u32 %v1469, 7
        %v1471 = vsub.s32 %v1468, %v1470
        %v1472 = vrot.slane %v1458, %v1471
        %v1473 = vcombine.high %v1465, %v1465
        %v1474 = vcombine.high %v1472, %v1472
        %v1476 = vunpack.c.l.s4 1966171168
        %v1477 = vunpack.c.0.s8 %v1476
        %v1478 = vlaneseq
        %v1479 = vshrl.u32 %v1478, 7
        %v1480 = vsub.s32 %v1477, %v1479
        %v1481 = vrot.slane %v351, %v1480
        %v1483 = vunpack.c.l.s4 1966171168
        %v1484 = vunpack.c.0.s8 %v1483
        %v1485 = vlaneseq
        %v1486 = vshrl.u32 %v1485, 7
        %v1487 = vsub.s32 %v1484, %v1486
        %v1488 = vrot.slane %v1481, %v1487
        %v1490 = vunpack.c.l.s4 1966171168
        %v1491 = vunpack.c.0.s8 %v1490
        %v1492 = vlaneseq
        %v1493 = vshrl.u32 %v1492, 7
        %v1494 = vsub.s32 %v1491, %v1493
        %v1495 = vrot.slane %v352, %v1494
        %v1496 = vcombine.high %v1495, %v1495
        %v1498 = vunpack.c.l.s4 1966171168
        %v1499 = vunpack.c.0.s8 %v1498
        %v1500 = vlaneseq
        %v1501 = vshrl.u32 %v1500, 7
        %v1502 = vsub.s32 %v1499, %v1501
        %v1503 = vrot.slane %v1495, %v1502
        %v1505 = vunpack.c.l.s4 1966171168
        %v1506 = vunpack.c.0.s8 %v1505
        %v1507 = vlaneseq
        %v1508 = vshrl.u32 %v1507, 7
        %v1509 = vsub.s32 %v1506, %v1508
        %v1510 = vrot.slane %v1496, %v1509
        %v1511 = vcombine.high %v1503, %v1503
        %v1512 = vcombine.high %v1510, %v1510
        %v1514 = vunpack.c.l.s4 1966171168
        %v1515 = vunpack.c.0.s8 %v1514
        %v1516 = vlaneseq
        %v1517 = vshrl.u32 %v1516, 7
        %v1518 = vsub.s32 %v1515, %v1517
        %v1519 = vrot.slane %v353, %v1518
        %v1520 = vcombine.high %v1519, %v1519
        %v1522 = vunpack.c.l.s4 1966171168
        %v1523 = vunpack.c.0.s8 %v1522
        %v1524 = vlaneseq
        %v1525 = vshrl.u32 %v1524, 7
        %v1526 = vsub.s32 %v1523, %v1525
        %v1527 = vrot.slane %v1519, %v1526
        %v1529 = vunpack.c.l.s4 1966171168
        %v1530 = vunpack.c.0.s8 %v1529
        %v1531 = vlaneseq
        %v1532 = vshrl.u32 %v1531, 7
        %v1533 = vsub.s32 %v1530, %v1532
        %v1534 = vrot.slane %v1520, %v1533
        %v1535 = vcombine.high %v1527, %v1527
        %v1536 = vcombine.high %v1534, %v1534
        %v1538 = vunpack.c.l.s4 1966171168
        %v1539 = vunpack.c.0.s8 %v1538
        %v1540 = vlaneseq
        %v1541 = vshrl.u32 %v1540, 7
        %v1542 = vsub.s32 %v1539, %v1541
        %v1543 = vrot.slane %v354, %v1542
        %v1545 = vunpack.c.l.s4 1966171168
        %v1546 = vunpack.c.0.s8 %v1545
        %v1547 = vlaneseq
        %v1548 = vshrl.u32 %v1547, 7
        %v1549 = vsub.s32 %v1546, %v1548
        %v1550 = vrot.slane %v1543, %v1549
        %v1551 = vcombine.low %v376, %v380
        %v1552 = vcombine.high %v376, %v380
        %v1554 = vunpack.c.l.s4 1983009808
        %v1555 = vunpack.c.0.s8 %v1554
        %v1556 = vlaneseq
        %v1557 = vshrl.u32 %v1556, 7
        %v1558 = vsub.s32 %v1555, %v1557
        %v1559 = vrot.slane %v1551, %v1558
        %v1561 = vunpack.c.l.s4 1983009808
        %v1562 = vunpack.c.0.s8 %v1561
        %v1563 = vlaneseq
        %v1564 = vshrl.u32 %v1563, 7
        %v1565 = vsub.s32 %v1562, %v1564
        %v1566 = vrot.slane %v1552, %v1565
        %v1567 = vcombine.high %v1559, %v1559
        %v1568 = vcombine.high %v1566, %v1566
        %v1569 = vcombine.low %v449, %v456
        %v1570 = vcombine.low %v457, %v458
        %v1571 = vcombine.low %v473, %v480
        %v1572 = vcombine.low %v481, %v482
        %v1574 = vunpack.c.l.s4 1966171168
        %v1575 = vunpack.c.0.s8 %v1574
        %v1576 = vlaneseq
        %v1577 = vshrl.u32 %v1576, 7
        %v1578 = vsub.s32 %v1575, %v1577
        %v1579 = vrot.slane %v1569, %v1578
        %v1581 = vunpack.c.l.s4 1966171168
        %v1582 = vunpack.c.0.s8 %v1581
        %v1583 = vlaneseq
        %v1584 = vshrl.u32 %v1583, 7
        %v1585 = vsub.s32 %v1582, %v1584
        %v1586 = vrot.slane %v1570, %v1585
        %v1588 = vunpack.c.l.s4 1966171168
        %v1589 = vunpack.c.0.s8 %v1588
        %v1590 = vlaneseq
        %v1591 = vshrl.u32 %v1590, 7
        %v1592 = vsub.s32 %v1589, %v1591
        %v1593 = vrot.slane %v1571, %v1592
        %v1595 = vunpack.c.l.s4 1966171168
        %v1596 = vunpack.c.0.s8 %v1595
        %v1597 = vlaneseq
        %v1598 = vshrl.u32 %v1597, 7
        %v1599 = vsub.s32 %v1596, %v1598
        %v1600 = vrot.slane %v1572, %v1599
        %v1601 = vcombine.low %v1579, %v1586
        %v1602 = vcombine.low %v1593, %v1600
        %v1604 = vunpack.c.l.s4 1966171168
        %v1605 = vunpack.c.0.s8 %v1604
        %v1606 = vlaneseq
        %v1607 = vshrl.u32 %v1606, 7
        %v1608 = vsub.s32 %v1605, %v1607
        %v1609 = vrot.slane %v1601, %v1608
        %v1611 = vunpack.c.l.s4 1966171168
        %v1612 = vunpack.c.0.s8 %v1611
        %v1613 = vlaneseq
        %v1614 = vshrl.u32 %v1613, 7
        %v1615 = vsub.s32 %v1612, %v1614
        %v1616 = vrot.slane %v1602, %v1615
        %v1617 = vcombine.low %v1609, %v1616
        %v1618 = vcombine.low %v496, %v511
        %v1619 = vcombine.low %v518, %v519
        %v1620 = vcombine.low %v520, %v535
        %v1621 = vcombine.low %v542, %v543
        %v1623 = vunpack.c.l.s4 1966171168
        %v1624 = vunpack.c.0.s8 %v1623
        %v1625 = vlaneseq
        %v1626 = vshrl.u32 %v1625, 7
        %v1627 = vsub.s32 %v1624, %v1626
        %v1628 = vrot.slane %v1618, %v1627
        %v1630 = vunpack.c.l.s4 1966171168
        %v1631 = vunpack.c.0.s8 %v1630
        %v1632 = vlaneseq
        %v1633 = vshrl.u32 %v1632, 7
        %v1634 = vsub.s32 %v1631, %v1633
        %v1635 = vrot.slane %v1619, %v1634
        %v1637 = vunpack.c.l.s4 1966171168
        %v1638 = vunpack.c.0.s8 %v1637
        %v1639 = vlaneseq
        %v1640 = vshrl.u32 %v1639, 7
        %v1641 = vsub.s32 %v1638, %v1640
        %v1642 = vrot.slane %v1620, %v1641
        %v1644 = vunpack.c.l.s4 1966171168
        %v1645 = vunpack.c.0.s8 %v1644
        %v1646 = vlaneseq
        %v1647 = vshrl.u32 %v1646, 7
        %v1648 = vsub.s32 %v1645, %v1647
        %v1649 = vrot.slane %v1621, %v1648
        %v1650 = vcombine.low %v1628, %v1635
        %v1651 = vcombine.low %v1642, %v1649
        %v1653 = vunpack.c.l.s4 1966171168
        %v1654 = vunpack.c.0.s8 %v1653
        %v1655 = vlaneseq
        %v1656 = vshrl.u32 %v1655, 7
        %v1657 = vsub.s32 %v1654, %v1656
        %v1658 = vrot.slane %v1650, %v1657
        %v1660 = vunpack.c.l.s4 1966171168
        %v1661 = vunpack.c.0.s8 %v1660
        %v1662 = vlaneseq
        %v1663 = vshrl.u32 %v1662, 7
        %v1664 = vsub.s32 %v1661, %v1663
        %v1665 = vrot.slane %v1651, %v1664
        %v1666 = vcombine.low %v1658, %v1665
        %v1667 = vcombine.low %v544, %v558
        %v1668 = vcombine.low %v573, %v580
        %v1669 = vcombine.low %v581, %v582
        %v1670 = vcombine.low %v597, %v604
        %v1672 = vunpack.c.l.s4 1966171168
        %v1673 = vunpack.c.0.s8 %v1672
        %v1674 = vlaneseq
        %v1675 = vshrl.u32 %v1674, 7
        %v1676 = vsub.s32 %v1673, %v1675
        %v1677 = vrot.slane %v1667, %v1676
        %v1679 = vunpack.c.l.s4 1966171168
        %v1680 = vunpack.c.0.s8 %v1679
        %v1681 = vlaneseq
        %v1682 = vshrl.u32 %v1681, 7
        %v1683 = vsub.s32 %v1680, %v1682
        %v1684 = vrot.slane %v1668, %v1683
        %v1686 = vunpack.c.l.s4 1966171168
        %v1687 = vunpack.c.0.s8 %v1686
        %v1688 = vlaneseq
        %v1689 = vshrl.u32 %v1688, 7
        %v1690 = vsub.s32 %v1687, %v1689
        %v1691 = vrot.slane %v1669, %v1690
        %v1693 = vunpack.c.l.s4 1966171168
        %v1694 = vunpack.c.0.s8 %v1693
        %v1695 = vlaneseq
        %v1696 = vshrl.u32 %v1695, 7
        %v1697 = vsub.s32 %v1694, %v1696
        %v1698 = vrot.slane %v1670, %v1697
        %v1699 = vcombine.low %v1677, %v1684
        %v1700 = vcombine.low %v1691, %v1698
        %v1702 = vunpack.c.l.s4 1966171168
        %v1703 = vunpack.c.0.s8 %v1702
        %v1704 = vlaneseq
        %v1705 = vshrl.u32 %v1704, 7
        %v1706 = vsub.s32 %v1703, %v1705
        %v1707 = vrot.slane %v1699, %v1706
        %v1709 = vunpack.c.l.s4 1966171168
        %v1710 = vunpack.c.0.s8 %v1709
        %v1711 = vlaneseq
        %v1712 = vshrl.u32 %v1711, 7
        %v1713 = vsub.s32 %v1710, %v1712
        %v1714 = vrot.slane %v1700, %v1713
        %v1715 = vcombine.low %v1707, %v1714
        %v1716 = vcombine.low %v605, %v606
        %v1717 = vcombine.low %v620, %v635
        %v1718 = vcombine.low %v642, %v643
        %v1719 = vcombine.low %v644, %v659
        %v1721 = vunpack.c.l.s4 1966171168
        %v1722 = vunpack.c.0.s8 %v1721
        %v1723 = vlaneseq
        %v1724 = vshrl.u32 %v1723, 7
        %v1725 = vsub.s32 %v1722, %v1724
        %v1726 = vrot.slane %v1716, %v1725
        %v1728 = vunpack.c.l.s4 1966171168
        %v1729 = vunpack.c.0.s8 %v1728
        %v1730 = vlaneseq
        %v1731 = vshrl.u32 %v1730, 7
        %v1732 = vsub.s32 %v1729, %v1731
        %v1733 = vrot.slane %v1717, %v1732
        %v1735 = vunpack.c.l.s4 1966171168
        %v1736 = vunpack.c.0.s8 %v1735
        %v1737 = vlaneseq
        %v1738 = vshrl.u32 %v1737, 7
        %v1739 = vsub.s32 %v1736, %v1738
        %v1740 = vrot.slane %v1718, %v1739
        %v1742 = vunpack.c.l.s4 1966171168
        %v1743 = vunpack.c.0.s8 %v1742
        %v1744 = vlaneseq
        %v1745 = vshrl.u32 %v1744, 7
        %v1746 = vsub.s32 %v1743, %v1745
        %v1747 = vrot.slane %v1719, %v1746
        %v1748 = vcombine.low %v1726, %v1733
        %v1749 = vcombine.low %v1740, %v1747
        %v1751 = vunpack.c.l.s4 1966171168
        %v1752 = vunpack.c.0.s8 %v1751
        %v1753 = vlaneseq
        %v1754 = vshrl.u32 %v1753, 7
        %v1755 = vsub.s32 %v1752, %v1754
        %v1756 = vrot.slane %v1748, %v1755
        %v1758 = vunpack.c.l.s4 1966171168
        %v1759 = vunpack.c.0.s8 %v1758
        %v1760 = vlaneseq
        %v1761 = vshrl.u32 %v1760, 7
        %v1762 = vsub.s32 %v1759, %v1761
        %v1763 = vrot.slane %v1749, %v1762
        %v1764 = vcombine.low %v1756, %v1763
        %v1765 = vcombine.low %v666, %v667
        %v1766 = vcombine.low %v668, %v682
        %v1767 = vcombine.low %v697, %v704
        %v1768 = vcombine.low %v705, %v706
        %v1770 = vunpack.c.l.s4 1966171168
        %v1771 = vunpack.c.0.s8 %v1770
        %v1772 = vlaneseq
        %v1773 = vshrl.u32 %v1772, 7
        %v1774 = vsub.s32 %v1771, %v1773
        %v1775 = vrot.slane %v1765, %v1774
        %v1777 = vunpack.c.l.s4 1966171168
        %v1778 = vunpack.c.0.s8 %v1777
        %v1779 = vlaneseq
        %v1780 = vshrl.u32 %v1779, 7
        %v1781 = vsub.s32 %v1778, %v1780
        %v1782 = vrot.slane %v1766, %v1781
        %v1784 = vunpack.c.l.s4 1966171168
        %v1785 = vunpack.c.0.s8 %v1784
        %v1786 = vlaneseq
        %v1787 = vshrl.u32 %v1786, 7
        %v1788 = vsub.s32 %v1785, %v1787
        %v1789 = vrot.slane %v1767, %v1788
        %v1791 = vunpack.c.l.s4 1966171168
        %v1792 = vunpack.c.0.s8 %v1791
        %v1793 = vlaneseq
        %v1794 = vshrl.u32 %v1793, 7
        %v1795 = vsub.s32 %v1792, %v1794
        %v1796 = vrot.slane %v1768, %v1795
        %v1797 = vcombine.low %v1775, %v1782
        %v1798 = vcombine.low %v1789, %v1796
        %v1800 = vunpack.c.l.s4 1966171168
        %v1801 = vunpack.c.0.s8 %v1800
        %v1802 = vlaneseq
        %v1803 = vshrl.u32 %v1802, 7
        %v1804 = vsub.s32 %v1801, %v1803
        %v1805 = vrot.slane %v1797, %v1804
        %v1807 = vunpack.c.l.s4 1966171168
        %v1808 = vunpack.c.0.s8 %v1807
        %v1809 = vlaneseq
        %v1810 = vshrl.u32 %v1809, 7
        %v1811 = vsub.s32 %v1808, %v1810
        %v1812 = vrot.slane %v1798, %v1811
        %v1813 = vcombine.low %v1805, %v1812
        %v1814 = vcombine.low %v721, %v728
        %v1815 = vcombine.low %v729, %v730
        %v1816 = vcombine.low %v744, %v759
        %v1817 = vcombine.low %v766, %v767
        %v1819 = vunpack.c.l.s4 1966171168
        %v1820 = vunpack.c.0.s8 %v1819
        %v1821 = vlaneseq
        %v1822 = vshrl.u32 %v1821, 7
        %v1823 = vsub.s32 %v1820, %v1822
        %v1824 = vrot.slane %v1814, %v1823
        %v1826 = vunpack.c.l.s4 1966171168
        %v1827 = vunpack.c.0.s8 %v1826
        %v1828 = vlaneseq
        %v1829 = vshrl.u32 %v1828, 7
        %v1830 = vsub.s32 %v1827, %v1829
        %v1831 = vrot.slane %v1815, %v1830
        %v1833 = vunpack.c.l.s4 1966171168
        %v1834 = vunpack.c.0.s8 %v1833
        %v1835 = vlaneseq
        %v1836 = vshrl.u32 %v1835, 7
        %v1837 = vsub.s32 %v1834, %v1836
        %v1838 = vrot.slane %v1816, %v1837
        %v1840 = vunpack.c.l.s4 1966171168
        %v1841 = vunpack.c.0.s8 %v1840
        %v1842 = vlaneseq
        %v1843 = vshrl.u32 %v1842, 7
        %v1844 = vsub.s32 %v1841, %v1843
        %v1845 = vrot.slane %v1817, %v1844
        %v1846 = vcombine.low %v1824, %v1831
        %v1847 = vcombine.low %v1838, %v1845
        %v1849 = vunpack.c.l.s4 1966171168
        %v1850 = vunpack.c.0.s8 %v1849
        %v1851 = vlaneseq
        %v1852 = vshrl.u32 %v1851, 7
        %v1853 = vsub.s32 %v1850, %v1852
        %v1854 = vrot.slane %v1846, %v1853
        %v1856 = vunpack.c.l.s4 1966171168
        %v1857 = vunpack.c.0.s8 %v1856
        %v1858 = vlaneseq
        %v1859 = vshrl.u32 %v1858, 7
        %v1860 = vsub.s32 %v1857, %v1859
        %v1861 = vrot.slane %v1847, %v1860
        %v1862 = vcombine.low %v1854, %v1861
        %v1863 = vcombine.low %v768, %v783
        %v1864 = vcombine.low %v790, %v791
        %v1865 = vcombine.low %v792, %v806
        %v1866 = vcombine.low %v821, %v828
        %v1868 = vunpack.c.l.s4 1966171168
        %v1869 = vunpack.c.0.s8 %v1868
        %v1870 = vlaneseq
        %v1871 = vshrl.u32 %v1870, 7
        %v1872 = vsub.s32 %v1869, %v1871
        %v1873 = vrot.slane %v1863, %v1872
        %v1875 = vunpack.c.l.s4 1966171168
        %v1876 = vunpack.c.0.s8 %v1875
        %v1877 = vlaneseq
        %v1878 = vshrl.u32 %v1877, 7
        %v1879 = vsub.s32 %v1876, %v1878
        %v1880 = vrot.slane %v1864, %v1879
        %v1882 = vunpack.c.l.s4 1966171168
        %v1883 = vunpack.c.0.s8 %v1882
        %v1884 = vlaneseq
        %v1885 = vshrl.u32 %v1884, 7
        %v1886 = vsub.s32 %v1883, %v1885
        %v1887 = vrot.slane %v1865, %v1886
        %v1889 = vunpack.c.l.s4 1966171168
        %v1890 = vunpack.c.0.s8 %v1889
        %v1891 = vlaneseq
        %v1892 = vshrl.u32 %v1891, 7
        %v1893 = vsub.s32 %v1890, %v1892
        %v1894 = vrot.slane %v1866, %v1893
        %v1895 = vcombine.low %v1873, %v1880
        %v1896 = vcombine.low %v1887, %v1894
        %v1898 = vunpack.c.l.s4 1966171168
        %v1899 = vunpack.c.0.s8 %v1898
        %v1900 = vlaneseq
        %v1901 = vshrl.u32 %v1900, 7
        %v1902 = vsub.s32 %v1899, %v1901
        %v1903 = vrot.slane %v1895, %v1902
        %v1905 = vunpack.c.l.s4 1966171168
        %v1906 = vunpack.c.0.s8 %v1905
        %v1907 = vlaneseq
        %v1908 = vshrl.u32 %v1907, 7
        %v1909 = vsub.s32 %v1906, %v1908
        %v1910 = vrot.slane %v1896, %v1909
        %v1911 = vcombine.low %v1903, %v1910
        %v1912 = vcombine.low %v829, %v830
        %v1913 = vcombine.low %v845, %v852
        %v1914 = vcombine.low %v853, %v854
        %v1915 = vcombine.low %v868, %v883
        %v1917 = vunpack.c.l.s4 1966171168
        %v1918 = vunpack.c.0.s8 %v1917
        %v1919 = vlaneseq
        %v1920 = vshrl.u32 %v1919, 7
        %v1921 = vsub.s32 %v1918, %v1920
        %v1922 = vrot.slane %v1912, %v1921
        %v1924 = vunpack.c.l.s4 1966171168
        %v1925 = vunpack.c.0.s8 %v1924
        %v1926 = vlaneseq
        %v1927 = vshrl.u32 %v1926, 7
        %v1928 = vsub.s32 %v1925, %v1927
        %v1929 = vrot.slane %v1913, %v1928
        %v1931 = vunpack.c.l.s4 1966171168
        %v1932 = vunpack.c.0.s8 %v1931
        %v1933 = vlaneseq
        %v1934 = vshrl.u32 %v1933, 7
        %v1935 = vsub.s32 %v1932, %v1934
        %v1936 = vrot.slane %v1914, %v1935
        %v1938 = vunpack.c.l.s4 1966171168
        %v1939 = vunpack.c.0.s8 %v1938
        %v1940 = vlaneseq
        %v1941 = vshrl.u32 %v1940, 7
        %v1942 = vsub.s32 %v1939, %v1941
        %v1943 = vrot.slane %v1915, %v1942
        %v1944 = vcombine.low %v1922, %v1929
        %v1945 = vcombine.low %v1936, %v1943
        %v1947 = vunpack.c.l.s4 1966171168
        %v1948 = vunpack.c.0.s8 %v1947
        %v1949 = vlaneseq
        %v1950 = vshrl.u32 %v1949, 7
        %v1951 = vsub.s32 %v1948, %v1950
        %v1952 = vrot.slane %v1944, %v1951
        %v1954 = vunpack.c.l.s4 1966171168
        %v1955 = vunpack.c.0.s8 %v1954
        %v1956 = vlaneseq
        %v1957 = vshrl.u32 %v1956, 7
        %v1958 = vsub.s32 %v1955, %v1957
        %v1959 = vrot.slane %v1945, %v1958
        %v1960 = vcombine.low %v1952, %v1959
        %v1961 = vcombine.low %v890, %v891
        %v1962 = vcombine.low %v892, %v907
        %v1963 = vcombine.low %v914, %v915
        %v1964 = vcombine.low %v916, %v930
        %v1966 = vunpack.c.l.s4 1966171168
        %v1967 = vunpack.c.0.s8 %v1966
        %v1968 = vlaneseq
        %v1969 = vshrl.u32 %v1968, 7
        %v1970 = vsub.s32 %v1967, %v1969
        %v1971 = vrot.slane %v1961, %v1970
        %v1973 = vunpack.c.l.s4 1966171168
        %v1974 = vunpack.c.0.s8 %v1973
        %v1975 = vlaneseq
        %v1976 = vshrl.u32 %v1975, 7
        %v1977 = vsub.s32 %v1974, %v1976
        %v1978 = vrot.slane %v1962, %v1977
        %v1980 = vunpack.c.l.s4 1966171168
        %v1981 = vunpack.c.0.s8 %v1980
        %v1982 = vlaneseq
        %v1983 = vshrl.u32 %v1982, 7
        %v1984 = vsub.s32 %v1981, %v1983
        %v1985 = vrot.slane %v1963, %v1984
        %v1987 = vunpack.c.l.s4 1966171168
        %v1988 = vunpack.c.0.s8 %v1987
        %v1989 = vlaneseq
        %v1990 = vshrl.u32 %v1989, 7
        %v1991 = vsub.s32 %v1988, %v1990
        %v1992 = vrot.slane %v1964, %v1991
        %v1993 = vcombine.low %v1971, %v1978
        %v1994 = vcombine.low %v1985, %v1992
        %v1996 = vunpack.c.l.s4 1966171168
        %v1997 = vunpack.c.0.s8 %v1996
        %v1998 = vlaneseq
        %v1999 = vshrl.u32 %v1998, 7
        %v2000 = vsub.s32 %v1997, %v1999
        %v2001 = vrot.slane %v1993, %v2000
        %v2003 = vunpack.c.l.s4 1966171168
        %v2004 = vunpack.c.0.s8 %v2003
        %v2005 = vlaneseq
        %v2006 = vshrl.u32 %v2005, 7
        %v2007 = vsub.s32 %v2004, %v2006
        %v2008 = vrot.slane %v1994, %v2007
        %v2009 = vcombine.low %v2001, %v2008
        %v2010 = vcombine.low %v945, %v952
        %v2011 = vcombine.low %v953, %v954
        %v2012 = vcombine.low %v969, %v976
        %v2013 = vcombine.low %v977, %v978
        %v2015 = vunpack.c.l.s4 1966171168
        %v2016 = vunpack.c.0.s8 %v2015
        %v2017 = vlaneseq
        %v2018 = vshrl.u32 %v2017, 7
        %v2019 = vsub.s32 %v2016, %v2018
        %v2020 = vrot.slane %v2010, %v2019
        %v2022 = vunpack.c.l.s4 1966171168
        %v2023 = vunpack.c.0.s8 %v2022
        %v2024 = vlaneseq
        %v2025 = vshrl.u32 %v2024, 7
        %v2026 = vsub.s32 %v2023, %v2025
        %v2027 = vrot.slane %v2011, %v2026
        %v2029 = vunpack.c.l.s4 1966171168
        %v2030 = vunpack.c.0.s8 %v2029
        %v2031 = vlaneseq
        %v2032 = vshrl.u32 %v2031, 7
        %v2033 = vsub.s32 %v2030, %v2032
        %v2034 = vrot.slane %v2012, %v2033
        %v2036 = vunpack.c.l.s4 1966171168
        %v2037 = vunpack.c.0.s8 %v2036
        %v2038 = vlaneseq
        %v2039 = vshrl.u32 %v2038, 7
        %v2040 = vsub.s32 %v2037, %v2039
        %v2041 = vrot.slane %v2013, %v2040
        %v2042 = vcombine.low %v2020, %v2027
        %v2043 = vcombine.low %v2034, %v2041
        %v2045 = vunpack.c.l.s4 1966171168
        %v2046 = vunpack.c.0.s8 %v2045
        %v2047 = vlaneseq
        %v2048 = vshrl.u32 %v2047, 7
        %v2049 = vsub.s32 %v2046, %v2048
        %v2050 = vrot.slane %v2042, %v2049
        %v2052 = vunpack.c.l.s4 1966171168
        %v2053 = vunpack.c.0.s8 %v2052
        %v2054 = vlaneseq
        %v2055 = vshrl.u32 %v2054, 7
        %v2056 = vsub.s32 %v2053, %v2055
        %v2057 = vrot.slane %v2043, %v2056
        %v2058 = vcombine.low %v2050, %v2057
        %v2059 = vcombine.low %v992, %v1007
        %v2060 = vcombine.low %v1014, %v1015
        %v2061 = vcombine.low %v1016, %v1031
        %v2062 = vcombine.low %v1038, %v1039
        %v2064 = vunpack.c.l.s4 1966171168
        %v2065 = vunpack.c.0.s8 %v2064
        %v2066 = vlaneseq
        %v2067 = vshrl.u32 %v2066, 7
        %v2068 = vsub.s32 %v2065, %v2067
        %v2069 = vrot.slane %v2059, %v2068
        %v2071 = vunpack.c.l.s4 1966171168
        %v2072 = vunpack.c.0.s8 %v2071
        %v2073 = vlaneseq
        %v2074 = vshrl.u32 %v2073, 7
        %v2075 = vsub.s32 %v2072, %v2074
        %v2076 = vrot.slane %v2060, %v2075
        %v2078 = vunpack.c.l.s4 1966171168
        %v2079 = vunpack.c.0.s8 %v2078
        %v2080 = vlaneseq
        %v2081 = vshrl.u32 %v2080, 7
        %v2082 = vsub.s32 %v2079, %v2081
        %v2083 = vrot.slane %v2061, %v2082
        %v2085 = vunpack.c.l.s4 1966171168
        %v2086 = vunpack.c.0.s8 %v2085
        %v2087 = vlaneseq
        %v2088 = vshrl.u32 %v2087, 7
        %v2089 = vsub.s32 %v2086, %v2088
        %v2090 = vrot.slane %v2062, %v2089
        %v2091 = vcombine.low %v2069, %v2076
        %v2092 = vcombine.low %v2083, %v2090
        %v2094 = vunpack.c.l.s4 1966171168
        %v2095 = vunpack.c.0.s8 %v2094
        %v2096 = vlaneseq
        %v2097 = vshrl.u32 %v2096, 7
        %v2098 = vsub.s32 %v2095, %v2097
        %v2099 = vrot.slane %v2091, %v2098
        %v2101 = vunpack.c.l.s4 1966171168
        %v2102 = vunpack.c.0.s8 %v2101
        %v2103 = vlaneseq
        %v2104 = vshrl.u32 %v2103, 7
        %v2105 = vsub.s32 %v2102, %v2104
        %v2106 = vrot.slane %v2092, %v2105
        %v2107 = vcombine.low %v2099, %v2106
        %v2108 = vcombine.low %v1040, %v1054
        %v2109 = vcombine.low %v1069, %v1076
        %v2110 = vcombine.low %v1077, %v1078
        %v2111 = vcombine.low %v1093, %v1100
        %v2113 = vunpack.c.l.s4 1966171168
        %v2114 = vunpack.c.0.s8 %v2113
        %v2115 = vlaneseq
        %v2116 = vshrl.u32 %v2115, 7
        %v2117 = vsub.s32 %v2114, %v2116
        %v2118 = vrot.slane %v2108, %v2117
        %v2120 = vunpack.c.l.s4 1966171168
        %v2121 = vunpack.c.0.s8 %v2120
        %v2122 = vlaneseq
        %v2123 = vshrl.u32 %v2122, 7
        %v2124 = vsub.s32 %v2121, %v2123
        %v2125 = vrot.slane %v2109, %v2124
        %v2127 = vunpack.c.l.s4 1966171168
        %v2128 = vunpack.c.0.s8 %v2127
        %v2129 = vlaneseq
        %v2130 = vshrl.u32 %v2129, 7
        %v2131 = vsub.s32 %v2128, %v2130
        %v2132 = vrot.slane %v2110, %v2131
        %v2134 = vunpack.c.l.s4 1966171168
        %v2135 = vunpack.c.0.s8 %v2134
        %v2136 = vlaneseq
        %v2137 = vshrl.u32 %v2136, 7
        %v2138 = vsub.s32 %v2135, %v2137
        %v2139 = vrot.slane %v2111, %v2138
        %v2140 = vcombine.low %v2118, %v2125
        %v2141 = vcombine.low %v2132, %v2139
        %v2143 = vunpack.c.l.s4 1966171168
        %v2144 = vunpack.c.0.s8 %v2143
        %v2145 = vlaneseq
        %v2146 = vshrl.u32 %v2145, 7
        %v2147 = vsub.s32 %v2144, %v2146
        %v2148 = vrot.slane %v2140, %v2147
        %v2150 = vunpack.c.l.s4 1966171168
        %v2151 = vunpack.c.0.s8 %v2150
        %v2152 = vlaneseq
        %v2153 = vshrl.u32 %v2152, 7
        %v2154 = vsub.s32 %v2151, %v2153
        %v2155 = vrot.slane %v2141, %v2154
        %v2156 = vcombine.low %v2148, %v2155
        %v2157 = vcombine.low %v1101, %v1102
        %v2158 = vcombine.low %v1116, %v1131
        %v2159 = vcombine.low %v1138, %v1139
        %v2160 = vcombine.low %v1140, %v1155
        %v2162 = vunpack.c.l.s4 1966171168
        %v2163 = vunpack.c.0.s8 %v2162
        %v2164 = vlaneseq
        %v2165 = vshrl.u32 %v2164, 7
        %v2166 = vsub.s32 %v2163, %v2165
        %v2167 = vrot.slane %v2157, %v2166
        %v2169 = vunpack.c.l.s4 1966171168
        %v2170 = vunpack.c.0.s8 %v2169
        %v2171 = vlaneseq
        %v2172 = vshrl.u32 %v2171, 7
        %v2173 = vsub.s32 %v2170, %v2172
        %v2174 = vrot.slane %v2158, %v2173
        %v2176 = vunpack.c.l.s4 1966171168
        %v2177 = vunpack.c.0.s8 %v2176
        %v2178 = vlaneseq
        %v2179 = vshrl.u32 %v2178, 7
        %v2180 = vsub.s32 %v2177, %v2179
        %v2181 = vrot.slane %v2159, %v2180
        %v2183 = vunpack.c.l.s4 1966171168
        %v2184 = vunpack.c.0.s8 %v2183
        %v2185 = vlaneseq
        %v2186 = vshrl.u32 %v2185, 7
        %v2187 = vsub.s32 %v2184, %v2186
        %v2188 = vrot.slane %v2160, %v2187
        %v2189 = vcombine.low %v2167, %v2174
        %v2190 = vcombine.low %v2181, %v2188
        %v2192 = vunpack.c.l.s4 1966171168
        %v2193 = vunpack.c.0.s8 %v2192
        %v2194 = vlaneseq
        %v2195 = vshrl.u32 %v2194, 7
        %v2196 = vsub.s32 %v2193, %v2195
        %v2197 = vrot.slane %v2189, %v2196
        %v2199 = vunpack.c.l.s4 1966171168
        %v2200 = vunpack.c.0.s8 %v2199
        %v2201 = vlaneseq
        %v2202 = vshrl.u32 %v2201, 7
        %v2203 = vsub.s32 %v2200, %v2202
        %v2204 = vrot.slane %v2190, %v2203
        %v2205 = vcombine.low %v2197, %v2204
        %v2206 = vcombine.low %v1162, %v1163
        %v2207 = vcombine.low %v1164, %v1178
        %v2208 = vcombine.low %v1193, %v1200
        %v2209 = vcombine.low %v1201, %v1202
        %v2211 = vunpack.c.l.s4 1966171168
        %v2212 = vunpack.c.0.s8 %v2211
        %v2213 = vlaneseq
        %v2214 = vshrl.u32 %v2213, 7
        %v2215 = vsub.s32 %v2212, %v2214
        %v2216 = vrot.slane %v2206, %v2215
        %v2218 = vunpack.c.l.s4 1966171168
        %v2219 = vunpack.c.0.s8 %v2218
        %v2220 = vlaneseq
        %v2221 = vshrl.u32 %v2220, 7
        %v2222 = vsub.s32 %v2219, %v2221
        %v2223 = vrot.slane %v2207, %v2222
        %v2225 = vunpack.c.l.s4 1966171168
        %v2226 = vunpack.c.0.s8 %v2225
        %v2227 = vlaneseq
        %v2228 = vshrl.u32 %v2227, 7
        %v2229 = vsub.s32 %v2226, %v2228
        %v2230 = vrot.slane %v2208, %v2229
        %v2232 = vunpack.c.l.s4 1966171168
        %v2233 = vunpack.c.0.s8 %v2232
        %v2234 = vlaneseq
        %v2235 = vshrl.u32 %v2234, 7
        %v2236 = vsub.s32 %v2233, %v2235
        %v2237 = vrot.slane %v2209, %v2236
        %v2238 = vcombine.low %v2216, %v2223
        %v2239 = vcombine.low %v2230, %v2237
        %v2241 = vunpack.c.l.s4 1966171168
        %v2242 = vunpack.c.0.s8 %v2241
        %v2243 = vlaneseq
        %v2244 = vshrl.u32 %v2243, 7
        %v2245 = vsub.s32 %v2242, %v2244
        %v2246 = vrot.slane %v2238, %v2245
        %v2248 = vunpack.c.l.s4 1966171168
        %v2249 = vunpack.c.0.s8 %v2248
        %v2250 = vlaneseq
        %v2251 = vshrl.u32 %v2250, 7
        %v2252 = vsub.s32 %v2249, %v2251
        %v2253 = vrot.slane %v2239, %v2252
        %v2254 = vcombine.low %v2246, %v2253
        %v2255 = vcombine.low %v1217, %v1224
        %v2256 = vcombine.low %v1225, %v1226
        %v2257 = vcombine.low %v1240, %v1255
        %v2258 = vcombine.low %v1262, %v1263
        %v2260 = vunpack.c.l.s4 1966171168
        %v2261 = vunpack.c.0.s8 %v2260
        %v2262 = vlaneseq
        %v2263 = vshrl.u32 %v2262, 7
        %v2264 = vsub.s32 %v2261, %v2263
        %v2265 = vrot.slane %v2255, %v2264
        %v2267 = vunpack.c.l.s4 1966171168
        %v2268 = vunpack.c.0.s8 %v2267
        %v2269 = vlaneseq
        %v2270 = vshrl.u32 %v2269, 7
        %v2271 = vsub.s32 %v2268, %v2270
        %v2272 = vrot.slane %v2256, %v2271
        %v2274 = vunpack.c.l.s4 1966171168
        %v2275 = vunpack.c.0.s8 %v2274
        %v2276 = vlaneseq
        %v2277 = vshrl.u32 %v2276, 7
        %v2278 = vsub.s32 %v2275, %v2277
        %v2279 = vrot.slane %v2257, %v2278
        %v2281 = vunpack.c.l.s4 1966171168
        %v2282 = vunpack.c.0.s8 %v2281
        %v2283 = vlaneseq
        %v2284 = vshrl.u32 %v2283, 7
        %v2285 = vsub.s32 %v2282, %v2284
        %v2286 = vrot.slane %v2258, %v2285
        %v2287 = vcombine.low %v2265, %v2272
        %v2288 = vcombine.low %v2279, %v2286
        %v2290 = vunpack.c.l.s4 1966171168
        %v2291 = vunpack.c.0.s8 %v2290
        %v2292 = vlaneseq
        %v2293 = vshrl.u32 %v2292, 7
        %v2294 = vsub.s32 %v2291, %v2293
        %v2295 = vrot.slane %v2287, %v2294
        %v2297 = vunpack.c.l.s4 1966171168
        %v2298 = vunpack.c.0.s8 %v2297
        %v2299 = vlaneseq
        %v2300 = vshrl.u32 %v2299, 7
        %v2301 = vsub.s32 %v2298, %v2300
        %v2302 = vrot.slane %v2288, %v2301
        %v2303 = vcombine.low %v2295, %v2302
        %v2304 = vcombine.low %v1264, %v1279
        %v2305 = vcombine.low %v1286, %v1287
        %v2306 = vcombine.low %v1288, %v1302
        %v2307 = vcombine.low %v1317, %v1324
        %v2309 = vunpack.c.l.s4 1966171168
        %v2310 = vunpack.c.0.s8 %v2309
        %v2311 = vlaneseq
        %v2312 = vshrl.u32 %v2311, 7
        %v2313 = vsub.s32 %v2310, %v2312
        %v2314 = vrot.slane %v2304, %v2313
        %v2316 = vunpack.c.l.s4 1966171168
        %v2317 = vunpack.c.0.s8 %v2316
        %v2318 = vlaneseq
        %v2319 = vshrl.u32 %v2318, 7
        %v2320 = vsub.s32 %v2317, %v2319
        %v2321 = vrot.slane %v2305, %v2320
        %v2323 = vunpack.c.l.s4 1966171168
        %v2324 = vunpack.c.0.s8 %v2323
        %v2325 = vlaneseq
        %v2326 = vshrl.u32 %v2325, 7
        %v2327 = vsub.s32 %v2324, %v2326
        %v2328 = vrot.slane %v2306, %v2327
        %v2330 = vunpack.c.l.s4 1966171168
        %v2331 = vunpack.c.0.s8 %v2330
        %v2332 = vlaneseq
        %v2333 = vshrl.u32 %v2332, 7
        %v2334 = vsub.s32 %v2331, %v2333
        %v2335 = vrot.slane %v2307, %v2334
        %v2336 = vcombine.low %v2314, %v2321
        %v2337 = vcombine.low %v2328, %v2335
        %v2339 = vunpack.c.l.s4 1966171168
        %v2340 = vunpack.c.0.s8 %v2339
        %v2341 = vlaneseq
        %v2342 = vshrl.u32 %v2341, 7
        %v2343 = vsub.s32 %v2340, %v2342
        %v2344 = vrot.slane %v2336, %v2343
        %v2346 = vunpack.c.l.s4 1966171168
        %v2347 = vunpack.c.0.s8 %v2346
        %v2348 = vlaneseq
        %v2349 = vshrl.u32 %v2348, 7
        %v2350 = vsub.s32 %v2347, %v2349
        %v2351 = vrot.slane %v2337, %v2350
        %v2352 = vcombine.low %v2344, %v2351
        %v2353 = vcombine.low %v1325, %v1326
        %v2354 = vcombine.low %v1341, %v1348
        %v2355 = vcombine.low %v1349, %v1350
        %v2356 = vcombine.low %v1364, %v1379
        %v2358 = vunpack.c.l.s4 1966171168
        %v2359 = vunpack.c.0.s8 %v2358
        %v2360 = vlaneseq
        %v2361 = vshrl.u32 %v2360, 7
        %v2362 = vsub.s32 %v2359, %v2361
        %v2363 = vrot.slane %v2353, %v2362
        %v2365 = vunpack.c.l.s4 1966171168
        %v2366 = vunpack.c.0.s8 %v2365
        %v2367 = vlaneseq
        %v2368 = vshrl.u32 %v2367, 7
        %v2369 = vsub.s32 %v2366, %v2368
        %v2370 = vrot.slane %v2354, %v2369
        %v2372 = vunpack.c.l.s4 1966171168
        %v2373 = vunpack.c.0.s8 %v2372
        %v2374 = vlaneseq
        %v2375 = vshrl.u32 %v2374, 7
        %v2376 = vsub.s32 %v2373, %v2375
        %v2377 = vrot.slane %v2355, %v2376
        %v2379 = vunpack.c.l.s4 1966171168
        %v2380 = vunpack.c.0.s8 %v2379
        %v2381 = vlaneseq
        %v2382 = vshrl.u32 %v2381, 7
        %v2383 = vsub.s32 %v2380, %v2382
        %v2384 = vrot.slane %v2356, %v2383
        %v2385 = vcombine.low %v2363, %v2370
        %v2386 = vcombine.low %v2377, %v2384
        %v2388 = vunpack.c.l.s4 1966171168
        %v2389 = vunpack.c.0.s8 %v2388
        %v2390 = vlaneseq
        %v2391 = vshrl.u32 %v2390, 7
        %v2392 = vsub.s32 %v2389, %v2391
        %v2393 = vrot.slane %v2385, %v2392
        %v2395 = vunpack.c.l.s4 1966171168
        %v2396 = vunpack.c.0.s8 %v2395
        %v2397 = vlaneseq
        %v2398 = vshrl.u32 %v2397, 7
        %v2399 = vsub.s32 %v2396, %v2398
        %v2400 = vrot.slane %v2386, %v2399
        %v2401 = vcombine.low %v2393, %v2400
        %v2402 = vcombine.low %v1386, %v1387
        %v2403 = vcombine.low %v1388, %v1403
        %v2404 = vcombine.low %v1410, %v1411
        %v2405 = vcombine.low %v1412, %v1426
        %v2407 = vunpack.c.l.s4 1966171168
        %v2408 = vunpack.c.0.s8 %v2407
        %v2409 = vlaneseq
        %v2410 = vshrl.u32 %v2409, 7
        %v2411 = vsub.s32 %v2408, %v2410
        %v2412 = vrot.slane %v2402, %v2411
        %v2414 = vunpack.c.l.s4 1966171168
        %v2415 = vunpack.c.0.s8 %v2414
        %v2416 = vlaneseq
        %v2417 = vshrl.u32 %v2416, 7
        %v2418 = vsub.s32 %v2415, %v2417
        %v2419 = vrot.slane %v2403, %v2418
        %v2421 = vunpack.c.l.s4 1966171168
        %v2422 = vunpack.c.0.s8 %v2421
        %v2423 = vlaneseq
        %v2424 = vshrl.u32 %v2423, 7
        %v2425 = vsub.s32 %v2422, %v2424
        %v2426 = vrot.slane %v2404, %v2425
        %v2428 = vunpack.c.l.s4 1966171168
        %v2429 = vunpack.c.0.s8 %v2428
        %v2430 = vlaneseq
        %v2431 = vshrl.u32 %v2430, 7
        %v2432 = vsub.s32 %v2429, %v2431
        %v2433 = vrot.slane %v2405, %v2432
        %v2434 = vcombine.low %v2412, %v2419
        %v2435 = vcombine.low %v2426, %v2433
        %v2437 = vunpack.c.l.s4 1966171168
        %v2438 = vunpack.c.0.s8 %v2437
        %v2439 = vlaneseq
        %v2440 = vshrl.u32 %v2439, 7
        %v2441 = vsub.s32 %v2438, %v2440
        %v2442 = vrot.slane %v2434, %v2441
        %v2444 = vunpack.c.l.s4 1966171168
        %v2445 = vunpack.c.0.s8 %v2444
        %v2446 = vlaneseq
        %v2447 = vshrl.u32 %v2446, 7
        %v2448 = vsub.s32 %v2445, %v2447
        %v2449 = vrot.slane %v2435, %v2448
        %v2450 = vcombine.low %v2442, %v2449
        %v2451 = vcombine.low %v1441, %v1448
        %v2452 = vcombine.low %v1449, %v1450
        %v2453 = vcombine.low %v1465, %v1472
        %v2454 = vcombine.low %v1473, %v1474
        %v2456 = vunpack.c.l.s4 1966171168
        %v2457 = vunpack.c.0.s8 %v2456
        %v2458 = vlaneseq
        %v2459 = vshrl.u32 %v2458, 7
        %v2460 = vsub.s32 %v2457, %v2459
        %v2461 = vrot.slane %v2451, %v2460
        %v2463 = vunpack.c.l.s4 1966171168
        %v2464 = vunpack.c.0.s8 %v2463
        %v2465 = vlaneseq
        %v2466 = vshrl.u32 %v2465, 7
        %v2467 = vsub.s32 %v2464, %v2466
        %v2468 = vrot.slane %v2452, %v2467
        %v2470 = vunpack.c.l.s4 1966171168
        %v2471 = vunpack.c.0.s8 %v2470
        %v2472 = vlaneseq
        %v2473 = vshrl.u32 %v2472, 7
        %v2474 = vsub.s32 %v2471, %v2473
        %v2475 = vrot.slane %v2453, %v2474
        %v2477 = vunpack.c.l.s4 1966171168
        %v2478 = vunpack.c.0.s8 %v2477
        %v2479 = vlaneseq
        %v2480 = vshrl.u32 %v2479, 7
        %v2481 = vsub.s32 %v2478, %v2480
        %v2482 = vrot.slane %v2454, %v2481
        %v2483 = vcombine.low %v2461, %v2468
        %v2484 = vcombine.low %v2475, %v2482
        %v2486 = vunpack.c.l.s4 1966171168
        %v2487 = vunpack.c.0.s8 %v2486
        %v2488 = vlaneseq
        %v2489 = vshrl.u32 %v2488, 7
        %v2490 = vsub.s32 %v2487, %v2489
        %v2491 = vrot.slane %v2483, %v2490
        %v2493 = vunpack.c.l.s4 1966171168
        %v2494 = vunpack.c.0.s8 %v2493
        %v2495 = vlaneseq
        %v2496 = vshrl.u32 %v2495, 7
        %v2497 = vsub.s32 %v2494, %v2496
        %v2498 = vrot.slane %v2484, %v2497
        %v2499 = vcombine.low %v2491, %v2498
        %v2500 = vcombine.low %v1488, %v1503
        %v2501 = vcombine.low %v1510, %v1511
        %v2502 = vcombine.low %v1512, %v1527
        %v2503 = vcombine.low %v1534, %v1535
        %v2505 = vunpack.c.l.s4 1966171168
        %v2506 = vunpack.c.0.s8 %v2505
        %v2507 = vlaneseq
        %v2508 = vshrl.u32 %v2507, 7
        %v2509 = vsub.s32 %v2506, %v2508
        %v2510 = vrot.slane %v2500, %v2509
        %v2512 = vunpack.c.l.s4 1966171168
        %v2513 = vunpack.c.0.s8 %v2512
        %v2514 = vlaneseq
        %v2515 = vshrl.u32 %v2514, 7
        %v2516 = vsub.s32 %v2513, %v2515
        %v2517 = vrot.slane %v2501, %v2516
        %v2519 = vunpack.c.l.s4 1966171168
        %v2520 = vunpack.c.0.s8 %v2519
        %v2521 = vlaneseq
        %v2522 = vshrl.u32 %v2521, 7
        %v2523 = vsub.s32 %v2520, %v2522
        %v2524 = vrot.slane %v2502, %v2523
        %v2526 = vunpack.c.l.s4 1966171168
        %v2527 = vunpack.c.0.s8 %v2526
        %v2528 = vlaneseq
        %v2529 = vshrl.u32 %v2528, 7
        %v2530 = vsub.s32 %v2527, %v2529
        %v2531 = vrot.slane %v2503, %v2530
        %v2532 = vcombine.low %v2510, %v2517
        %v2533 = vcombine.low %v2524, %v2531
        %v2535 = vunpack.c.l.s4 1966171168
        %v2536 = vunpack.c.0.s8 %v2535
        %v2537 = vlaneseq
        %v2538 = vshrl.u32 %v2537, 7
        %v2539 = vsub.s32 %v2536, %v2538
        %v2540 = vrot.slane %v2532, %v2539
        %v2542 = vunpack.c.l.s4 1966171168
        %v2543 = vunpack.c.0.s8 %v2542
        %v2544 = vlaneseq
        %v2545 = vshrl.u32 %v2544, 7
        %v2546 = vsub.s32 %v2543, %v2545
        %v2547 = vrot.slane %v2533, %v2546
        %v2548 = vcombine.low %v2540, %v2547
        %v2549 = vcombine.low %v1536, %v1550
        %v2551 = vunpack.c.l.s4 1966171168
        %v2552 = vunpack.c.0.s8 %v2551
        %v2553 = vlaneseq
        %v2554 = vshrl.u32 %v2553, 7
        %v2555 = vsub.s32 %v2552, %v2554
        %v2556 = vrot.slane %v2549, %v2555
        %v2558 = vunpack.c.l.s4 1966171168
        %v2559 = vunpack.c.0.s8 %v2558
        %v2560 = vlaneseq
        %v2561 = vshrl.u32 %v2560, 7
        %v2562 = vsub.s32 %v2559, %v2561
        %v2563 = vrot.slane %v2556, %v2562
        %v2601 = vunpack.c.l.b16 %v355
        %v2602 = vunpack.c.h.b16 %v355
        %v2603 = vunpack.c.l.b16 %v356
        %v2604 = vunpack.c.h.b16 %v356
        %v2605 = vunpack.c.l.b16 %v357
        %v2606 = vunpack.c.h.b16 %v357
        %v2607 = vunpack.c.l.b16 %v358
        %v2608 = vunpack.c.h.b16 %v358
        %v2609 = vunpack.c.l.b16 %v359
        %v2610 = vunpack.c.h.b16 %v359
        %v2611 = vunpack.c.l.b16 %v360
        %v2612 = vunpack.c.h.b16 %v360
        %v2613 = vunpack.c.l.b16 %v361
        %v2614 = vunpack.c.h.b16 %v361
        %v2615 = vunpack.c.l.b16 %v362
        %v2616 = vunpack.c.h.b16 %v362
        %v2617 = vunpack.c.l.b16 %v363
        %v2618 = vunpack.c.h.b16 %v363
        %v2619 = vunpack.c.l.b16 %v364
        %v2620 = vunpack.c.h.b16 %v364
        %v2621 = vunpack.c.l.b16 %v365
        %v2622 = vunpack.c.h.b16 %v365
        %v2623 = vunpack.c.l.b16 %v366
        %v2624 = vunpack.c.h.b16 %v366
        %v2625 = vunpack.c.l.b16 %v367
        %v2626 = vunpack.c.h.b16 %v367
        %v2627 = vunpack.c.l.b16 %v368
        %v2628 = vunpack.c.h.b16 %v368
        %v2629 = vunpack.c.l.b16 %v369
        %v2630 = vunpack.c.h.b16 %v369
        %v2631 = vunpack.c.l.b16 %v370
        %v2632 = vunpack.c.h.b16 %v370
        %v2633 = vpack.c.b16 %v2603, %v2601
        %v2634 = vpack.c.b16 %v2604, %v2602
        %v2635 = vpack.c.b16 %v2607, %v2605
        %v2636 = vpack.c.b16 %v2608, %v2606
        %v2637 = vpack.c.b16 %v2611, %v2609
        %v2638 = vpack.c.b16 %v2612, %v2610
        %v2639 = vpack.c.b16 %v2615, %v2613
        %v2640 = vpack.c.b16 %v2616, %v2614
        %v2641 = vpack.c.b16 %v2619, %v2617
        %v2642 = vpack.c.b16 %v2620, %v2618
        %v2643 = vpack.c.b16 %v2623, %v2621
        %v2644 = vpack.c.b16 %v2624, %v2622
        %v2645 = vpack.c.b16 %v2627, %v2625
        %v2646 = vpack.c.b16 %v2628, %v2626
        %v2647 = vpack.c.b16 %v2631, %v2629
        %v2648 = vpack.c.b16 %v2632, %v2630
        %v2665 = vcombine.low %v1559, %v1567
        %v2666 = vcombine.low %v1566, %v1568
        %v2668 = vunpack.c.l.s4 1983009808
        %v2669 = vunpack.c.0.s8 %v2668
        %v2670 = vlaneseq
        %v2671 = vshrl.u32 %v2670, 7
        %v2672 = vsub.s32 %v2669, %v2671
        %v2673 = vrot.slane %v2665, %v2672
        %v2675 = vunpack.c.l.s4 1983009808
        %v2676 = vunpack.c.0.s8 %v2675
        %v2677 = vlaneseq
        %v2678 = vshrl.u32 %v2677, 7
        %v2679 = vsub.s32 %v2676, %v2678
        %v2680 = vrot.slane %v2666, %v2679
        %v2681 = vcombine.low %v2673, %v2680
        %v2682 = vcombine.high %v2673, %v2680
        %v2683 = vcombine.low %v1559, %v1559
        %v2684 = vcombine.low %v1567, %v1566
        %v2686 = vunpack.c.l.s4 1983009808
        %v2687 = vunpack.c.0.s8 %v2686
        %v2688 = vlaneseq
        %v2689 = vshrl.u32 %v2688, 7
        %v2690 = vsub.s32 %v2687, %v2689
        %v2691 = vrot.slane %v2683, %v2690
        %v2693 = vunpack.c.l.s4 1983009808
        %v2694 = vunpack.c.0.s8 %v2693
        %v2695 = vlaneseq
        %v2696 = vshrl.u32 %v2695, 7
        %v2697 = vsub.s32 %v2694, %v2696
        %v2698 = vrot.slane %v2684, %v2697
        %v2699 = vcombine.low %v2691, %v2698
        %v2700 = vcombine.high %v2691, %v2698
        %v2701 = vcombine.low %v1568, %v1559
        %v2703 = vunpack.c.l.s4 1983009808
        %v2704 = vunpack.c.0.s8 %v2703
        %v2705 = vlaneseq
        %v2706 = vshrl.u32 %v2705, 7
        %v2707 = vsub.s32 %v2704, %v2706
        %v2708 = vrot.slane %v2701, %v2707
        %v2709 = vcombine.low %v2708, %v2698
        %v2710 = vcombine.high %v2708, %v2698
        %v2711 = vcombine.low %v2708, %v2673
        %v2712 = vcombine.high %v2708, %v2673
        %v2713 = vcombine.low %v2680, %v2673
        %v2714 = vcombine.high %v2680, %v2673
        %v2715 = vcombine.low %v2680, %v2691
        %v2716 = vcombine.high %v2680, %v2691
        %v2717 = vcombine.low %v2698, %v2708
        %v2718 = vcombine.high %v2698, %v2708
        %v2719 = vcombine.high %v2708, %v2708
        %2736 = vmatprep.subr.bf16.mxu0 %v2648
        %2737 = vmatpush1.bf16.msra.mxu0 %v2647
        %2738 = vmatprep.subr.bf16.mxu0 %v2646
        %2739 = vmatpush1.bf16.msra.mxu0 %v2645
        %2740 = vmatprep.subr.bf16.mxu0 %v2644
        %2741 = vmatpush1.bf16.msra.mxu0 %v2643
        %2742 = vmatprep.subr.bf16.mxu0 %v2642
        %2743 = vmatpush1.bf16.msra.mxu0 %v2641
        %2744 = vmatprep.subr.bf16.mxu0 %v2640
        %2745 = vmatpush1.bf16.msra.mxu0 %v2639
        %2746 = vmatprep.subr.bf16.mxu0 %v2638
        %2747 = vmatpush1.bf16.msra.mxu0 %v2637
        %2748 = vmatprep.subr.bf16.mxu0 %v2636
        %2749 = vmatpush1.bf16.msra.mxu0 %v2635
        %2750 = vmatprep.subr.bf16.mxu0 %v2634
        %2751 = vmatpush1.bf16.msra.mxu0 %v2633
        %2752 = vmatprep.subr.bf16.mxu0 0
        %2753 = vmatpush2.bf16.msra.mxu0 0
        %2754 = vmatprep.subr.bf16.mxu0 0
        %2755 = vmatpush2.bf16.msra.mxu0 0
        %2756 = vmatprep.subr.bf16.mxu0 0
        %2757 = vmatpush2.bf16.msra.mxu0 0
        %2758 = vmatprep.subr.bf16.mxu0 0
        %2759 = vmatpush2.bf16.msra.mxu0 0
        %2760 = vmatprep.subr.bf16.mxu0 0
        %2761 = vmatpush2.bf16.msra.mxu0 0
        %2762 = vmatprep.subr.bf16.mxu0 0
        %2763 = vmatpush2.bf16.msra.mxu0 0
        %2764 = vmatprep.subr.bf16.mxu0 0
        %2765 = vmatpush2.bf16.msra.mxu0 0
        %2766 = vmatprep.subr.bf16.mxu0 0
        %2767 = vmatpush2.bf16.msra.mxu0 0
        %2768 = vmatprep.mubr.bf16.mxu0 0
        %2769 = vmatmul.mubr.bf16.gmra.mxu0 %v1617
        %v2770 = vpop.f32.mrf.mxu0
        %v2771 = vadd.f32 %v2681, %v2770
        %v2772 = vpop.f32.mrf.mxu0
        %v2773 = vadd.f32 %v2682, %v2772
        %v2774 = vpop.f32.mrf.mxu0
        %v2775 = vadd.f32 %v2681, %v2774
        %v2776 = vpop.f32.mrf.mxu0
        %v2777 = vadd.f32 %v2682, %v2776
        %2778 = vmatprep.mubr.bf16.mxu0 0
        %2779 = vmatmul.mubr.bf16.gmra.mxu0 %v1666
        %v2780 = vpop.f32.mrf.mxu0
        %v2781 = vadd.f32 %v2699, %v2780
        %v2782 = vpop.f32.mrf.mxu0
        %v2783 = vadd.f32 %v2700, %v2782
        %v2784 = vpop.f32.mrf.mxu0
        %v2785 = vadd.f32 %v2709, %v2784
        %v2786 = vpop.f32.mrf.mxu0
        %v2787 = vadd.f32 %v2710, %v2786
        %2788 = vmatprep.mubr.bf16.mxu0 0
        %2789 = vmatmul.mubr.bf16.gmra.mxu0 %v1715
        %v2790 = vpop.f32.mrf.mxu0
        %v2791 = vadd.f32 %v2711, %v2790
        %v2792 = vpop.f32.mrf.mxu0
        %v2793 = vadd.f32 %v2712, %v2792
        %v2794 = vpop.f32.mrf.mxu0
        %v2795 = vadd.f32 %v2713, %v2794
        %v2796 = vpop.f32.mrf.mxu0
        %v2797 = vadd.f32 %v2714, %v2796
        %2798 = vmatprep.mubr.bf16.mxu0 0
        %2799 = vmatmul.mubr.bf16.gmra.mxu0 %v1764
        %v2800 = vpop.f32.mrf.mxu0
        %v2801 = vadd.f32 %v2715, %v2800
        %v2802 = vpop.f32.mrf.mxu0
        %v2803 = vadd.f32 %v2716, %v2802
        %v2804 = vpop.f32.mrf.mxu0
        %v2805 = vadd.f32 %v2717, %v2804
        %v2806 = vpop.f32.mrf.mxu0
        %v2807 = vadd.f32 %v2718, %v2806
        %2808 = vmatprep.mubr.bf16.mxu0 0
        %2809 = vmatmul.mubr.bf16.gmra.mxu0 %v1813
        %v2810 = vpop.f32.mrf.mxu0
        %v2811 = vadd.f32 %v2717, %v2810
        %v2812 = vpop.f32.mrf.mxu0
        %v2813 = vadd.f32 %v2718, %v2812
        %v2814 = vpop.f32.mrf.mxu0
        %v2815 = vadd.f32 %v2681, %v2814
        %v2816 = vpop.f32.mrf.mxu0
        %v2817 = vadd.f32 %v2682, %v2816
        %2818 = vmatprep.mubr.bf16.mxu0 0
        %2819 = vmatmul.mubr.bf16.gmra.mxu0 %v1862
        %v2820 = vpop.f32.mrf.mxu0
        %v2821 = vadd.f32 %v2681, %v2820
        %v2822 = vpop.f32.mrf.mxu0
        %v2823 = vadd.f32 %v2682, %v2822
        %v2824 = vpop.f32.mrf.mxu0
        %v2825 = vadd.f32 %v2699, %v2824
        %v2826 = vpop.f32.mrf.mxu0
        %v2827 = vadd.f32 %v2700, %v2826
        %2828 = vmatprep.mubr.bf16.mxu0 0
        %2829 = vmatmul.mubr.bf16.gmra.mxu0 %v1911
        %v2830 = vpop.f32.mrf.mxu0
        %v2831 = vadd.f32 %v2709, %v2830
        %v2832 = vpop.f32.mrf.mxu0
        %v2833 = vadd.f32 %v2710, %v2832
        %v2834 = vpop.f32.mrf.mxu0
        %v2835 = vadd.f32 %v2711, %v2834
        %v2836 = vpop.f32.mrf.mxu0
        %v2837 = vadd.f32 %v2712, %v2836
        %2838 = vmatprep.mubr.bf16.mxu0 0
        %2839 = vmatmul.mubr.bf16.gmra.mxu0 %v1960
        %v2840 = vpop.f32.mrf.mxu0
        %v2841 = vadd.f32 %v2713, %v2840
        %v2842 = vpop.f32.mrf.mxu0
        %v2843 = vadd.f32 %v2714, %v2842
        %v2844 = vpop.f32.mrf.mxu0
        %v2845 = vadd.f32 %v2715, %v2844
        %v2846 = vpop.f32.mrf.mxu0
        %v2847 = vadd.f32 %v2716, %v2846
        %2848 = vmatprep.mubr.bf16.mxu0 0
        %2849 = vmatmul.mubr.bf16.gmra.mxu0 %v2009
        %v2850 = vpop.f32.mrf.mxu0
        %v2851 = vadd.f32 %v2717, %v2850
        %v2852 = vpop.f32.mrf.mxu0
        %v2853 = vadd.f32 %v2718, %v2852
        %v2854 = vpop.f32.mrf.mxu0
        %v2855 = vadd.f32 %v2717, %v2854
        %v2856 = vpop.f32.mrf.mxu0
        %v2857 = vadd.f32 %v2718, %v2856
        %2858 = vmatprep.mubr.bf16.mxu0 0
        %2859 = vmatmul.mubr.bf16.gmra.mxu0 %v2058
        %v2860 = vpop.f32.mrf.mxu0
        %v2861 = vadd.f32 %v2681, %v2860
        %v2862 = vpop.f32.mrf.mxu0
        %v2863 = vadd.f32 %v2682, %v2862
        %v2864 = vpop.f32.mrf.mxu0
        %v2865 = vadd.f32 %v2681, %v2864
        %v2866 = vpop.f32.mrf.mxu0
        %v2867 = vadd.f32 %v2682, %v2866
        %2868 = vmatprep.mubr.bf16.mxu0 0
        %2869 = vmatmul.mubr.bf16.gmra.mxu0 %v2107
        %v2870 = vpop.f32.mrf.mxu0
        %v2871 = vadd.f32 %v2699, %v2870
        %v2872 = vpop.f32.mrf.mxu0
        %v2873 = vadd.f32 %v2700, %v2872
        %v2874 = vpop.f32.mrf.mxu0
        %v2875 = vadd.f32 %v2709, %v2874
        %v2876 = vpop.f32.mrf.mxu0
        %v2877 = vadd.f32 %v2710, %v2876
        %2878 = vmatprep.mubr.bf16.mxu0 0
        %2879 = vmatmul.mubr.bf16.gmra.mxu0 %v2156
        %v2880 = vpop.f32.mrf.mxu0
        %v2881 = vadd.f32 %v2711, %v2880
        %v2882 = vpop.f32.mrf.mxu0
        %v2883 = vadd.f32 %v2712, %v2882
        %v2884 = vpop.f32.mrf.mxu0
        %v2885 = vadd.f32 %v2713, %v2884
        %v2886 = vpop.f32.mrf.mxu0
        %v2887 = vadd.f32 %v2714, %v2886
        %2888 = vmatprep.mubr.bf16.mxu0 0
        %2889 = vmatmul.mubr.bf16.gmra.mxu0 %v2205
        %v2890 = vpop.f32.mrf.mxu0
        %v2891 = vadd.f32 %v2715, %v2890
        %v2892 = vpop.f32.mrf.mxu0
        %v2893 = vadd.f32 %v2716, %v2892
        %v2894 = vpop.f32.mrf.mxu0
        %v2895 = vadd.f32 %v2717, %v2894
        %v2896 = vpop.f32.mrf.mxu0
        %v2897 = vadd.f32 %v2718, %v2896
        %2898 = vmatprep.mubr.bf16.mxu0 0
        %2899 = vmatmul.mubr.bf16.gmra.mxu0 %v2254
        %v2900 = vpop.f32.mrf.mxu0
        %v2901 = vadd.f32 %v2717, %v2900
        %v2902 = vpop.f32.mrf.mxu0
        %v2903 = vadd.f32 %v2718, %v2902
        %v2904 = vpop.f32.mrf.mxu0
        %v2905 = vadd.f32 %v2681, %v2904
        %v2906 = vpop.f32.mrf.mxu0
        %v2907 = vadd.f32 %v2682, %v2906
        %2908 = vmatprep.mubr.bf16.mxu0 0
        %2909 = vmatmul.mubr.bf16.gmra.mxu0 %v2303
        %v2910 = vpop.f32.mrf.mxu0
        %v2911 = vadd.f32 %v2681, %v2910
        %v2912 = vpop.f32.mrf.mxu0
        %v2913 = vadd.f32 %v2682, %v2912
        %v2914 = vpop.f32.mrf.mxu0
        %v2915 = vadd.f32 %v2699, %v2914
        %v2916 = vpop.f32.mrf.mxu0
        %v2917 = vadd.f32 %v2700, %v2916
        %2918 = vmatprep.mubr.bf16.mxu0 0
        %2919 = vmatmul.mubr.bf16.gmra.mxu0 %v2352
        %v2920 = vpop.f32.mrf.mxu0
        %v2921 = vadd.f32 %v2709, %v2920
        %v2922 = vpop.f32.mrf.mxu0
        %v2923 = vadd.f32 %v2710, %v2922
        %v2924 = vpop.f32.mrf.mxu0
        %v2925 = vadd.f32 %v2711, %v2924
        %v2926 = vpop.f32.mrf.mxu0
        %v2927 = vadd.f32 %v2712, %v2926
        %2928 = vmatprep.mubr.bf16.mxu0 0
        %2929 = vmatmul.mubr.bf16.gmra.mxu0 %v2401
        %v2930 = vpop.f32.mrf.mxu0
        %v2931 = vadd.f32 %v2713, %v2930
        %v2932 = vpop.f32.mrf.mxu0
        %v2933 = vadd.f32 %v2714, %v2932
        %v2934 = vpop.f32.mrf.mxu0
        %v2935 = vadd.f32 %v2715, %v2934
        %v2936 = vpop.f32.mrf.mxu0
        %v2937 = vadd.f32 %v2716, %v2936
        %2938 = vmatprep.mubr.bf16.mxu0 0
        %2939 = vmatmul.mubr.bf16.gmra.mxu0 %v2450
        %v2940 = vpop.f32.mrf.mxu0
        %v2941 = vadd.f32 %v2717, %v2940
        %v2942 = vpop.f32.mrf.mxu0
        %v2943 = vadd.f32 %v2718, %v2942
        %v2944 = vpop.f32.mrf.mxu0
        %v2945 = vadd.f32 %v2717, %v2944
        %v2946 = vpop.f32.mrf.mxu0
        %v2947 = vadd.f32 %v2718, %v2946
        %2948 = vmatprep.mubr.bf16.mxu0 0
        %2949 = vmatmul.mubr.bf16.gmra.mxu0 %v2499
        %v2950 = vpop.f32.mrf.mxu0
        %v2951 = vadd.f32 %v2681, %v2950
        %v2952 = vpop.f32.mrf.mxu0
        %v2953 = vadd.f32 %v2682, %v2952
        %v2954 = vpop.f32.mrf.mxu0
        %v2955 = vadd.f32 %v2681, %v2954
        %v2956 = vpop.f32.mrf.mxu0
        %v2957 = vadd.f32 %v2682, %v2956
        %2958 = vmatprep.mubr.bf16.mxu0 0
        %2959 = vmatmul.mubr.bf16.gmra.mxu0 %v2548
        %v2960 = vpop.f32.mrf.mxu0
        %v2961 = vadd.f32 %v2699, %v2960
        %v2962 = vpop.f32.mrf.mxu0
        %v2963 = vadd.f32 %v2700, %v2962
        %v2964 = vpop.f32.mrf.mxu0
        %v2965 = vadd.f32 %v2709, %v2964
        %v2966 = vpop.f32.mrf.mxu0
        %v2967 = vadd.f32 %v2710, %v2966
        %2968 = vmatprep.mubr.bf16.mxu0 0
        %2969 = vmatmul.mubr.bf16.gmra.mxu0 %v2563
        %v2970 = vpop.f32.mrf.mxu0
        %v2971 = vadd.f32 %v2708, %v2970
        %v2972 = vpop.f32.mrf.mxu0
        %v2973 = vadd.f32 %v2719, %v2972
        %v2974 = vpop.f32.mrf.mxu0
        %v2975 = vpop.f32.mrf.mxu0
        %2976 = vdwg.mxu0
        %v3059 = vcombine.low %v2771, %v2773
        %v3060 = vcombine.high %v2771, %v2773
        %v3062 = vunpack.c.l.s4 1983009808
        %v3063 = vunpack.c.0.s8 %v3062
        %v3064 = vlaneseq
        %v3065 = vshrl.u32 %v3064, 7
        %v3066 = vsub.s32 %v3063, %v3065
        %v3067 = vrot.slane %v3059, %v3066
        %v3069 = vunpack.c.l.s4 1983009808
        %v3070 = vunpack.c.0.s8 %v3069
        %v3071 = vlaneseq
        %v3072 = vshrl.u32 %v3071, 7
        %v3073 = vsub.s32 %v3070, %v3072
        %v3074 = vrot.slane %v3060, %v3073
        %v3075 = vcombine.high %v3067, %v3067
        %v3076 = vcombine.high %v3074, %v3074
        %v3077 = vcombine.low %v2775, %v2777
        %v3078 = vcombine.high %v2775, %v2777
        %v3080 = vunpack.c.l.s4 1983009808
        %v3081 = vunpack.c.0.s8 %v3080
        %v3082 = vlaneseq
        %v3083 = vshrl.u32 %v3082, 7
        %v3084 = vsub.s32 %v3081, %v3083
        %v3085 = vrot.slane %v3077, %v3084
        %v3087 = vunpack.c.l.s4 1983009808
        %v3088 = vunpack.c.0.s8 %v3087
        %v3089 = vlaneseq
        %v3090 = vshrl.u32 %v3089, 7
        %v3091 = vsub.s32 %v3088, %v3090
        %v3092 = vrot.slane %v3078, %v3091
        %v3093 = vcombine.high %v3085, %v3085
        %v3094 = vcombine.high %v3092, %v3092
        %v3095 = vcombine.low %v2781, %v2783
        %v3096 = vcombine.high %v2781, %v2783
        %v3098 = vunpack.c.l.s4 1983009808
        %v3099 = vunpack.c.0.s8 %v3098
        %v3100 = vlaneseq
        %v3101 = vshrl.u32 %v3100, 7
        %v3102 = vsub.s32 %v3099, %v3101
        %v3103 = vrot.slane %v3095, %v3102
        %v3105 = vunpack.c.l.s4 1983009808
        %v3106 = vunpack.c.0.s8 %v3105
        %v3107 = vlaneseq
        %v3108 = vshrl.u32 %v3107, 7
        %v3109 = vsub.s32 %v3106, %v3108
        %v3110 = vrot.slane %v3096, %v3109
        %v3111 = vcombine.high %v3103, %v3103
        %v3112 = vcombine.high %v3110, %v3110
        %v3113 = vcombine.low %v2785, %v2787
        %v3114 = vcombine.high %v2785, %v2787
        %v3116 = vunpack.c.l.s4 1983009808
        %v3117 = vunpack.c.0.s8 %v3116
        %v3118 = vlaneseq
        %v3119 = vshrl.u32 %v3118, 7
        %v3120 = vsub.s32 %v3117, %v3119
        %v3121 = vrot.slane %v3113, %v3120
        %v3123 = vunpack.c.l.s4 1983009808
        %v3124 = vunpack.c.0.s8 %v3123
        %v3125 = vlaneseq
        %v3126 = vshrl.u32 %v3125, 7
        %v3127 = vsub.s32 %v3124, %v3126
        %v3128 = vrot.slane %v3114, %v3127
        %v3129 = vcombine.high %v3121, %v3121
        %v3130 = vcombine.high %v3128, %v3128
        %v3131 = vcombine.low %v2791, %v2793
        %v3132 = vcombine.high %v2791, %v2793
        %v3134 = vunpack.c.l.s4 1983009808
        %v3135 = vunpack.c.0.s8 %v3134
        %v3136 = vlaneseq
        %v3137 = vshrl.u32 %v3136, 7
        %v3138 = vsub.s32 %v3135, %v3137
        %v3139 = vrot.slane %v3131, %v3138
        %v3141 = vunpack.c.l.s4 1983009808
        %v3142 = vunpack.c.0.s8 %v3141
        %v3143 = vlaneseq
        %v3144 = vshrl.u32 %v3143, 7
        %v3145 = vsub.s32 %v3142, %v3144
        %v3146 = vrot.slane %v3132, %v3145
        %v3147 = vcombine.high %v3139, %v3139
        %v3148 = vcombine.high %v3146, %v3146
        %v3149 = vcombine.low %v2795, %v2797
        %v3150 = vcombine.high %v2795, %v2797
        %v3152 = vunpack.c.l.s4 1983009808
        %v3153 = vunpack.c.0.s8 %v3152
        %v3154 = vlaneseq
        %v3155 = vshrl.u32 %v3154, 7
        %v3156 = vsub.s32 %v3153, %v3155
        %v3157 = vrot.slane %v3149, %v3156
        %v3159 = vunpack.c.l.s4 1983009808
        %v3160 = vunpack.c.0.s8 %v3159
        %v3161 = vlaneseq
        %v3162 = vshrl.u32 %v3161, 7
        %v3163 = vsub.s32 %v3160, %v3162
        %v3164 = vrot.slane %v3150, %v3163
        %v3165 = vcombine.high %v3157, %v3157
        %v3166 = vcombine.high %v3164, %v3164
        %v3167 = vcombine.low %v2801, %v2803
        %v3168 = vcombine.high %v2801, %v2803
        %v3170 = vunpack.c.l.s4 1983009808
        %v3171 = vunpack.c.0.s8 %v3170
        %v3172 = vlaneseq
        %v3173 = vshrl.u32 %v3172, 7
        %v3174 = vsub.s32 %v3171, %v3173
        %v3175 = vrot.slane %v3167, %v3174
        %v3177 = vunpack.c.l.s4 1983009808
        %v3178 = vunpack.c.0.s8 %v3177
        %v3179 = vlaneseq
        %v3180 = vshrl.u32 %v3179, 7
        %v3181 = vsub.s32 %v3178, %v3180
        %v3182 = vrot.slane %v3168, %v3181
        %v3183 = vcombine.high %v3175, %v3175
        %v3184 = vcombine.high %v3182, %v3182
        %v3185 = vcombine.low %v2805, %v2807
        %v3186 = vcombine.high %v2805, %v2807
        %v3188 = vunpack.c.l.s4 1983009808
        %v3189 = vunpack.c.0.s8 %v3188
        %v3190 = vlaneseq
        %v3191 = vshrl.u32 %v3190, 7
        %v3192 = vsub.s32 %v3189, %v3191
        %v3193 = vrot.slane %v3185, %v3192
        %v3195 = vunpack.c.l.s4 1983009808
        %v3196 = vunpack.c.0.s8 %v3195
        %v3197 = vlaneseq
        %v3198 = vshrl.u32 %v3197, 7
        %v3199 = vsub.s32 %v3196, %v3198
        %v3200 = vrot.slane %v3186, %v3199
        %v3201 = vcombine.high %v3193, %v3193
        %v3202 = vcombine.high %v3200, %v3200
        %v3203 = vcombine.low %v2811, %v2813
        %v3204 = vcombine.high %v2811, %v2813
        %v3206 = vunpack.c.l.s4 1983009808
        %v3207 = vunpack.c.0.s8 %v3206
        %v3208 = vlaneseq
        %v3209 = vshrl.u32 %v3208, 7
        %v3210 = vsub.s32 %v3207, %v3209
        %v3211 = vrot.slane %v3203, %v3210
        %v3213 = vunpack.c.l.s4 1983009808
        %v3214 = vunpack.c.0.s8 %v3213
        %v3215 = vlaneseq
        %v3216 = vshrl.u32 %v3215, 7
        %v3217 = vsub.s32 %v3214, %v3216
        %v3218 = vrot.slane %v3204, %v3217
        %v3219 = vcombine.high %v3211, %v3211
        %v3220 = vcombine.high %v3218, %v3218
        %v3221 = vcombine.low %v2815, %v2817
        %v3222 = vcombine.high %v2815, %v2817
        %v3224 = vunpack.c.l.s4 1983009808
        %v3225 = vunpack.c.0.s8 %v3224
        %v3226 = vlaneseq
        %v3227 = vshrl.u32 %v3226, 7
        %v3228 = vsub.s32 %v3225, %v3227
        %v3229 = vrot.slane %v3221, %v3228
        %v3231 = vunpack.c.l.s4 1983009808
        %v3232 = vunpack.c.0.s8 %v3231
        %v3233 = vlaneseq
        %v3234 = vshrl.u32 %v3233, 7
        %v3235 = vsub.s32 %v3232, %v3234
        %v3236 = vrot.slane %v3222, %v3235
        %v3237 = vcombine.high %v3229, %v3229
        %v3238 = vcombine.high %v3236, %v3236
        %v3239 = vcombine.low %v2821, %v2823
        %v3240 = vcombine.high %v2821, %v2823
        %v3242 = vunpack.c.l.s4 1983009808
        %v3243 = vunpack.c.0.s8 %v3242
        %v3244 = vlaneseq
        %v3245 = vshrl.u32 %v3244, 7
        %v3246 = vsub.s32 %v3243, %v3245
        %v3247 = vrot.slane %v3239, %v3246
        %v3249 = vunpack.c.l.s4 1983009808
        %v3250 = vunpack.c.0.s8 %v3249
        %v3251 = vlaneseq
        %v3252 = vshrl.u32 %v3251, 7
        %v3253 = vsub.s32 %v3250, %v3252
        %v3254 = vrot.slane %v3240, %v3253
        %v3255 = vcombine.high %v3247, %v3247
        %v3256 = vcombine.high %v3254, %v3254
        %v3257 = vcombine.low %v2825, %v2827
        %v3258 = vcombine.high %v2825, %v2827
        %v3260 = vunpack.c.l.s4 1983009808
        %v3261 = vunpack.c.0.s8 %v3260
        %v3262 = vlaneseq
        %v3263 = vshrl.u32 %v3262, 7
        %v3264 = vsub.s32 %v3261, %v3263
        %v3265 = vrot.slane %v3257, %v3264
        %v3267 = vunpack.c.l.s4 1983009808
        %v3268 = vunpack.c.0.s8 %v3267
        %v3269 = vlaneseq
        %v3270 = vshrl.u32 %v3269, 7
        %v3271 = vsub.s32 %v3268, %v3270
        %v3272 = vrot.slane %v3258, %v3271
        %v3273 = vcombine.high %v3265, %v3265
        %v3274 = vcombine.high %v3272, %v3272
        %v3275 = vcombine.low %v2831, %v2833
        %v3276 = vcombine.high %v2831, %v2833
        %v3278 = vunpack.c.l.s4 1983009808
        %v3279 = vunpack.c.0.s8 %v3278
        %v3280 = vlaneseq
        %v3281 = vshrl.u32 %v3280, 7
        %v3282 = vsub.s32 %v3279, %v3281
        %v3283 = vrot.slane %v3275, %v3282
        %v3285 = vunpack.c.l.s4 1983009808
        %v3286 = vunpack.c.0.s8 %v3285
        %v3287 = vlaneseq
        %v3288 = vshrl.u32 %v3287, 7
        %v3289 = vsub.s32 %v3286, %v3288
        %v3290 = vrot.slane %v3276, %v3289
        %v3291 = vcombine.high %v3283, %v3283
        %v3292 = vcombine.high %v3290, %v3290
        %v3293 = vcombine.low %v2835, %v2837
        %v3294 = vcombine.high %v2835, %v2837
        %v3296 = vunpack.c.l.s4 1983009808
        %v3297 = vunpack.c.0.s8 %v3296
        %v3298 = vlaneseq
        %v3299 = vshrl.u32 %v3298, 7
        %v3300 = vsub.s32 %v3297, %v3299
        %v3301 = vrot.slane %v3293, %v3300
        %v3303 = vunpack.c.l.s4 1983009808
        %v3304 = vunpack.c.0.s8 %v3303
        %v3305 = vlaneseq
        %v3306 = vshrl.u32 %v3305, 7
        %v3307 = vsub.s32 %v3304, %v3306
        %v3308 = vrot.slane %v3294, %v3307
        %v3309 = vcombine.high %v3301, %v3301
        %v3310 = vcombine.high %v3308, %v3308
        %v3311 = vcombine.low %v2841, %v2843
        %v3312 = vcombine.high %v2841, %v2843
        %v3314 = vunpack.c.l.s4 1983009808
        %v3315 = vunpack.c.0.s8 %v3314
        %v3316 = vlaneseq
        %v3317 = vshrl.u32 %v3316, 7
        %v3318 = vsub.s32 %v3315, %v3317
        %v3319 = vrot.slane %v3311, %v3318
        %v3321 = vunpack.c.l.s4 1983009808
        %v3322 = vunpack.c.0.s8 %v3321
        %v3323 = vlaneseq
        %v3324 = vshrl.u32 %v3323, 7
        %v3325 = vsub.s32 %v3322, %v3324
        %v3326 = vrot.slane %v3312, %v3325
        %v3327 = vcombine.high %v3319, %v3319
        %v3328 = vcombine.high %v3326, %v3326
        %v3329 = vcombine.low %v2845, %v2847
        %v3330 = vcombine.high %v2845, %v2847
        %v3332 = vunpack.c.l.s4 1983009808
        %v3333 = vunpack.c.0.s8 %v3332
        %v3334 = vlaneseq
        %v3335 = vshrl.u32 %v3334, 7
        %v3336 = vsub.s32 %v3333, %v3335
        %v3337 = vrot.slane %v3329, %v3336
        %v3339 = vunpack.c.l.s4 1983009808
        %v3340 = vunpack.c.0.s8 %v3339
        %v3341 = vlaneseq
        %v3342 = vshrl.u32 %v3341, 7
        %v3343 = vsub.s32 %v3340, %v3342
        %v3344 = vrot.slane %v3330, %v3343
        %v3345 = vcombine.high %v3337, %v3337
        %v3346 = vcombine.high %v3344, %v3344
        %v3347 = vcombine.low %v2851, %v2853
        %v3348 = vcombine.high %v2851, %v2853
        %v3350 = vunpack.c.l.s4 1983009808
        %v3351 = vunpack.c.0.s8 %v3350
        %v3352 = vlaneseq
        %v3353 = vshrl.u32 %v3352, 7
        %v3354 = vsub.s32 %v3351, %v3353
        %v3355 = vrot.slane %v3347, %v3354
        %v3357 = vunpack.c.l.s4 1983009808
        %v3358 = vunpack.c.0.s8 %v3357
        %v3359 = vlaneseq
        %v3360 = vshrl.u32 %v3359, 7
        %v3361 = vsub.s32 %v3358, %v3360
        %v3362 = vrot.slane %v3348, %v3361
        %v3363 = vcombine.high %v3355, %v3355
        %v3364 = vcombine.high %v3362, %v3362
        %v3365 = vcombine.low %v2855, %v2857
        %v3366 = vcombine.high %v2855, %v2857
        %v3368 = vunpack.c.l.s4 1983009808
        %v3369 = vunpack.c.0.s8 %v3368
        %v3370 = vlaneseq
        %v3371 = vshrl.u32 %v3370, 7
        %v3372 = vsub.s32 %v3369, %v3371
        %v3373 = vrot.slane %v3365, %v3372
        %v3375 = vunpack.c.l.s4 1983009808
        %v3376 = vunpack.c.0.s8 %v3375
        %v3377 = vlaneseq
        %v3378 = vshrl.u32 %v3377, 7
        %v3379 = vsub.s32 %v3376, %v3378
        %v3380 = vrot.slane %v3366, %v3379
        %v3381 = vcombine.high %v3373, %v3373
        %v3382 = vcombine.high %v3380, %v3380
        %v3383 = vcombine.low %v2861, %v2863
        %v3384 = vcombine.high %v2861, %v2863
        %v3386 = vunpack.c.l.s4 1983009808
        %v3387 = vunpack.c.0.s8 %v3386
        %v3388 = vlaneseq
        %v3389 = vshrl.u32 %v3388, 7
        %v3390 = vsub.s32 %v3387, %v3389
        %v3391 = vrot.slane %v3383, %v3390
        %v3393 = vunpack.c.l.s4 1983009808
        %v3394 = vunpack.c.0.s8 %v3393
        %v3395 = vlaneseq
        %v3396 = vshrl.u32 %v3395, 7
        %v3397 = vsub.s32 %v3394, %v3396
        %v3398 = vrot.slane %v3384, %v3397
        %v3399 = vcombine.high %v3391, %v3391
        %v3400 = vcombine.high %v3398, %v3398
        %v3401 = vcombine.low %v2865, %v2867
        %v3402 = vcombine.high %v2865, %v2867
        %v3404 = vunpack.c.l.s4 1983009808
        %v3405 = vunpack.c.0.s8 %v3404
        %v3406 = vlaneseq
        %v3407 = vshrl.u32 %v3406, 7
        %v3408 = vsub.s32 %v3405, %v3407
        %v3409 = vrot.slane %v3401, %v3408
        %v3411 = vunpack.c.l.s4 1983009808
        %v3412 = vunpack.c.0.s8 %v3411
        %v3413 = vlaneseq
        %v3414 = vshrl.u32 %v3413, 7
        %v3415 = vsub.s32 %v3412, %v3414
        %v3416 = vrot.slane %v3402, %v3415
        %v3417 = vcombine.high %v3409, %v3409
        %v3418 = vcombine.high %v3416, %v3416
        %v3419 = vcombine.low %v2871, %v2873
        %v3420 = vcombine.high %v2871, %v2873
        %v3422 = vunpack.c.l.s4 1983009808
        %v3423 = vunpack.c.0.s8 %v3422
        %v3424 = vlaneseq
        %v3425 = vshrl.u32 %v3424, 7
        %v3426 = vsub.s32 %v3423, %v3425
        %v3427 = vrot.slane %v3419, %v3426
        %v3429 = vunpack.c.l.s4 1983009808
        %v3430 = vunpack.c.0.s8 %v3429
        %v3431 = vlaneseq
        %v3432 = vshrl.u32 %v3431, 7
        %v3433 = vsub.s32 %v3430, %v3432
        %v3434 = vrot.slane %v3420, %v3433
        %v3435 = vcombine.high %v3427, %v3427
        %v3436 = vcombine.high %v3434, %v3434
        %v3437 = vcombine.low %v2875, %v2877
        %v3438 = vcombine.high %v2875, %v2877
        %v3440 = vunpack.c.l.s4 1983009808
        %v3441 = vunpack.c.0.s8 %v3440
        %v3442 = vlaneseq
        %v3443 = vshrl.u32 %v3442, 7
        %v3444 = vsub.s32 %v3441, %v3443
        %v3445 = vrot.slane %v3437, %v3444
        %v3447 = vunpack.c.l.s4 1983009808
        %v3448 = vunpack.c.0.s8 %v3447
        %v3449 = vlaneseq
        %v3450 = vshrl.u32 %v3449, 7
        %v3451 = vsub.s32 %v3448, %v3450
        %v3452 = vrot.slane %v3438, %v3451
        %v3453 = vcombine.high %v3445, %v3445
        %v3454 = vcombine.high %v3452, %v3452
        %v3455 = vcombine.low %v2881, %v2883
        %v3456 = vcombine.high %v2881, %v2883
        %v3458 = vunpack.c.l.s4 1983009808
        %v3459 = vunpack.c.0.s8 %v3458
        %v3460 = vlaneseq
        %v3461 = vshrl.u32 %v3460, 7
        %v3462 = vsub.s32 %v3459, %v3461
        %v3463 = vrot.slane %v3455, %v3462
        %v3465 = vunpack.c.l.s4 1983009808
        %v3466 = vunpack.c.0.s8 %v3465
        %v3467 = vlaneseq
        %v3468 = vshrl.u32 %v3467, 7
        %v3469 = vsub.s32 %v3466, %v3468
        %v3470 = vrot.slane %v3456, %v3469
        %v3471 = vcombine.high %v3463, %v3463
        %v3472 = vcombine.high %v3470, %v3470
        %v3473 = vcombine.low %v2885, %v2887
        %v3474 = vcombine.high %v2885, %v2887
        %v3476 = vunpack.c.l.s4 1983009808
        %v3477 = vunpack.c.0.s8 %v3476
        %v3478 = vlaneseq
        %v3479 = vshrl.u32 %v3478, 7
        %v3480 = vsub.s32 %v3477, %v3479
        %v3481 = vrot.slane %v3473, %v3480
        %v3483 = vunpack.c.l.s4 1983009808
        %v3484 = vunpack.c.0.s8 %v3483
        %v3485 = vlaneseq
        %v3486 = vshrl.u32 %v3485, 7
        %v3487 = vsub.s32 %v3484, %v3486
        %v3488 = vrot.slane %v3474, %v3487
        %v3489 = vcombine.high %v3481, %v3481
        %v3490 = vcombine.high %v3488, %v3488
        %v3491 = vcombine.low %v2891, %v2893
        %v3492 = vcombine.high %v2891, %v2893
        %v3494 = vunpack.c.l.s4 1983009808
        %v3495 = vunpack.c.0.s8 %v3494
        %v3496 = vlaneseq
        %v3497 = vshrl.u32 %v3496, 7
        %v3498 = vsub.s32 %v3495, %v3497
        %v3499 = vrot.slane %v3491, %v3498
        %v3501 = vunpack.c.l.s4 1983009808
        %v3502 = vunpack.c.0.s8 %v3501
        %v3503 = vlaneseq
        %v3504 = vshrl.u32 %v3503, 7
        %v3505 = vsub.s32 %v3502, %v3504
        %v3506 = vrot.slane %v3492, %v3505
        %v3507 = vcombine.high %v3499, %v3499
        %v3508 = vcombine.high %v3506, %v3506
        %v3509 = vcombine.low %v2895, %v2897
        %v3510 = vcombine.high %v2895, %v2897
        %v3512 = vunpack.c.l.s4 1983009808
        %v3513 = vunpack.c.0.s8 %v3512
        %v3514 = vlaneseq
        %v3515 = vshrl.u32 %v3514, 7
        %v3516 = vsub.s32 %v3513, %v3515
        %v3517 = vrot.slane %v3509, %v3516
        %v3519 = vunpack.c.l.s4 1983009808
        %v3520 = vunpack.c.0.s8 %v3519
        %v3521 = vlaneseq
        %v3522 = vshrl.u32 %v3521, 7
        %v3523 = vsub.s32 %v3520, %v3522
        %v3524 = vrot.slane %v3510, %v3523
        %v3525 = vcombine.high %v3517, %v3517
        %v3526 = vcombine.high %v3524, %v3524
        %v3527 = vcombine.low %v2901, %v2903
        %v3528 = vcombine.high %v2901, %v2903
        %v3530 = vunpack.c.l.s4 1983009808
        %v3531 = vunpack.c.0.s8 %v3530
        %v3532 = vlaneseq
        %v3533 = vshrl.u32 %v3532, 7
        %v3534 = vsub.s32 %v3531, %v3533
        %v3535 = vrot.slane %v3527, %v3534
        %v3537 = vunpack.c.l.s4 1983009808
        %v3538 = vunpack.c.0.s8 %v3537
        %v3539 = vlaneseq
        %v3540 = vshrl.u32 %v3539, 7
        %v3541 = vsub.s32 %v3538, %v3540
        %v3542 = vrot.slane %v3528, %v3541
        %v3543 = vcombine.high %v3535, %v3535
        %v3544 = vcombine.high %v3542, %v3542
        %v3545 = vcombine.low %v2905, %v2907
        %v3546 = vcombine.high %v2905, %v2907
        %v3548 = vunpack.c.l.s4 1983009808
        %v3549 = vunpack.c.0.s8 %v3548
        %v3550 = vlaneseq
        %v3551 = vshrl.u32 %v3550, 7
        %v3552 = vsub.s32 %v3549, %v3551
        %v3553 = vrot.slane %v3545, %v3552
        %v3555 = vunpack.c.l.s4 1983009808
        %v3556 = vunpack.c.0.s8 %v3555
        %v3557 = vlaneseq
        %v3558 = vshrl.u32 %v3557, 7
        %v3559 = vsub.s32 %v3556, %v3558
        %v3560 = vrot.slane %v3546, %v3559
        %v3561 = vcombine.high %v3553, %v3553
        %v3562 = vcombine.high %v3560, %v3560
        %v3563 = vcombine.low %v2911, %v2913
        %v3564 = vcombine.high %v2911, %v2913
        %v3566 = vunpack.c.l.s4 1983009808
        %v3567 = vunpack.c.0.s8 %v3566
        %v3568 = vlaneseq
        %v3569 = vshrl.u32 %v3568, 7
        %v3570 = vsub.s32 %v3567, %v3569
        %v3571 = vrot.slane %v3563, %v3570
        %v3573 = vunpack.c.l.s4 1983009808
        %v3574 = vunpack.c.0.s8 %v3573
        %v3575 = vlaneseq
        %v3576 = vshrl.u32 %v3575, 7
        %v3577 = vsub.s32 %v3574, %v3576
        %v3578 = vrot.slane %v3564, %v3577
        %v3579 = vcombine.high %v3571, %v3571
        %v3580 = vcombine.high %v3578, %v3578
        %v3581 = vcombine.low %v2915, %v2917
        %v3582 = vcombine.high %v2915, %v2917
        %v3584 = vunpack.c.l.s4 1983009808
        %v3585 = vunpack.c.0.s8 %v3584
        %v3586 = vlaneseq
        %v3587 = vshrl.u32 %v3586, 7
        %v3588 = vsub.s32 %v3585, %v3587
        %v3589 = vrot.slane %v3581, %v3588
        %v3591 = vunpack.c.l.s4 1983009808
        %v3592 = vunpack.c.0.s8 %v3591
        %v3593 = vlaneseq
        %v3594 = vshrl.u32 %v3593, 7
        %v3595 = vsub.s32 %v3592, %v3594
        %v3596 = vrot.slane %v3582, %v3595
        %v3597 = vcombine.high %v3589, %v3589
        %v3598 = vcombine.high %v3596, %v3596
        %v3599 = vcombine.low %v2921, %v2923
        %v3600 = vcombine.high %v2921, %v2923
        %v3602 = vunpack.c.l.s4 1983009808
        %v3603 = vunpack.c.0.s8 %v3602
        %v3604 = vlaneseq
        %v3605 = vshrl.u32 %v3604, 7
        %v3606 = vsub.s32 %v3603, %v3605
        %v3607 = vrot.slane %v3599, %v3606
        %v3609 = vunpack.c.l.s4 1983009808
        %v3610 = vunpack.c.0.s8 %v3609
        %v3611 = vlaneseq
        %v3612 = vshrl.u32 %v3611, 7
        %v3613 = vsub.s32 %v3610, %v3612
        %v3614 = vrot.slane %v3600, %v3613
        %v3615 = vcombine.high %v3607, %v3607
        %v3616 = vcombine.high %v3614, %v3614
        %v3617 = vcombine.low %v2925, %v2927
        %v3618 = vcombine.high %v2925, %v2927
        %v3620 = vunpack.c.l.s4 1983009808
        %v3621 = vunpack.c.0.s8 %v3620
        %v3622 = vlaneseq
        %v3623 = vshrl.u32 %v3622, 7
        %v3624 = vsub.s32 %v3621, %v3623
        %v3625 = vrot.slane %v3617, %v3624
        %v3627 = vunpack.c.l.s4 1983009808
        %v3628 = vunpack.c.0.s8 %v3627
        %v3629 = vlaneseq
        %v3630 = vshrl.u32 %v3629, 7
        %v3631 = vsub.s32 %v3628, %v3630
        %v3632 = vrot.slane %v3618, %v3631
        %v3633 = vcombine.high %v3625, %v3625
        %v3634 = vcombine.high %v3632, %v3632
        %v3635 = vcombine.low %v2931, %v2933
        %v3636 = vcombine.high %v2931, %v2933
        %v3638 = vunpack.c.l.s4 1983009808
        %v3639 = vunpack.c.0.s8 %v3638
        %v3640 = vlaneseq
        %v3641 = vshrl.u32 %v3640, 7
        %v3642 = vsub.s32 %v3639, %v3641
        %v3643 = vrot.slane %v3635, %v3642
        %v3645 = vunpack.c.l.s4 1983009808
        %v3646 = vunpack.c.0.s8 %v3645
        %v3647 = vlaneseq
        %v3648 = vshrl.u32 %v3647, 7
        %v3649 = vsub.s32 %v3646, %v3648
        %v3650 = vrot.slane %v3636, %v3649
        %v3651 = vcombine.high %v3643, %v3643
        %v3652 = vcombine.high %v3650, %v3650
        %v3653 = vcombine.low %v2935, %v2937
        %v3654 = vcombine.high %v2935, %v2937
        %v3656 = vunpack.c.l.s4 1983009808
        %v3657 = vunpack.c.0.s8 %v3656
        %v3658 = vlaneseq
        %v3659 = vshrl.u32 %v3658, 7
        %v3660 = vsub.s32 %v3657, %v3659
        %v3661 = vrot.slane %v3653, %v3660
        %v3663 = vunpack.c.l.s4 1983009808
        %v3664 = vunpack.c.0.s8 %v3663
        %v3665 = vlaneseq
        %v3666 = vshrl.u32 %v3665, 7
        %v3667 = vsub.s32 %v3664, %v3666
        %v3668 = vrot.slane %v3654, %v3667
        %v3669 = vcombine.high %v3661, %v3661
        %v3670 = vcombine.high %v3668, %v3668
        %v3671 = vcombine.low %v2941, %v2943
        %v3672 = vcombine.high %v2941, %v2943
        %v3674 = vunpack.c.l.s4 1983009808
        %v3675 = vunpack.c.0.s8 %v3674
        %v3676 = vlaneseq
        %v3677 = vshrl.u32 %v3676, 7
        %v3678 = vsub.s32 %v3675, %v3677
        %v3679 = vrot.slane %v3671, %v3678
        %v3681 = vunpack.c.l.s4 1983009808
        %v3682 = vunpack.c.0.s8 %v3681
        %v3683 = vlaneseq
        %v3684 = vshrl.u32 %v3683, 7
        %v3685 = vsub.s32 %v3682, %v3684
        %v3686 = vrot.slane %v3672, %v3685
        %v3687 = vcombine.high %v3679, %v3679
        %v3688 = vcombine.high %v3686, %v3686
        %v3689 = vcombine.low %v2945, %v2947
        %v3690 = vcombine.high %v2945, %v2947
        %v3692 = vunpack.c.l.s4 1983009808
        %v3693 = vunpack.c.0.s8 %v3692
        %v3694 = vlaneseq
        %v3695 = vshrl.u32 %v3694, 7
        %v3696 = vsub.s32 %v3693, %v3695
        %v3697 = vrot.slane %v3689, %v3696
        %v3699 = vunpack.c.l.s4 1983009808
        %v3700 = vunpack.c.0.s8 %v3699
        %v3701 = vlaneseq
        %v3702 = vshrl.u32 %v3701, 7
        %v3703 = vsub.s32 %v3700, %v3702
        %v3704 = vrot.slane %v3690, %v3703
        %v3705 = vcombine.high %v3697, %v3697
        %v3706 = vcombine.high %v3704, %v3704
        %v3707 = vcombine.low %v2951, %v2953
        %v3708 = vcombine.high %v2951, %v2953
        %v3710 = vunpack.c.l.s4 1983009808
        %v3711 = vunpack.c.0.s8 %v3710
        %v3712 = vlaneseq
        %v3713 = vshrl.u32 %v3712, 7
        %v3714 = vsub.s32 %v3711, %v3713
        %v3715 = vrot.slane %v3707, %v3714
        %v3717 = vunpack.c.l.s4 1983009808
        %v3718 = vunpack.c.0.s8 %v3717
        %v3719 = vlaneseq
        %v3720 = vshrl.u32 %v3719, 7
        %v3721 = vsub.s32 %v3718, %v3720
        %v3722 = vrot.slane %v3708, %v3721
        %v3723 = vcombine.high %v3715, %v3715
        %v3724 = vcombine.high %v3722, %v3722
        %v3725 = vcombine.low %v2955, %v2957
        %v3726 = vcombine.high %v2955, %v2957
        %v3728 = vunpack.c.l.s4 1983009808
        %v3729 = vunpack.c.0.s8 %v3728
        %v3730 = vlaneseq
        %v3731 = vshrl.u32 %v3730, 7
        %v3732 = vsub.s32 %v3729, %v3731
        %v3733 = vrot.slane %v3725, %v3732
        %v3735 = vunpack.c.l.s4 1983009808
        %v3736 = vunpack.c.0.s8 %v3735
        %v3737 = vlaneseq
        %v3738 = vshrl.u32 %v3737, 7
        %v3739 = vsub.s32 %v3736, %v3738
        %v3740 = vrot.slane %v3726, %v3739
        %v3741 = vcombine.high %v3733, %v3733
        %v3742 = vcombine.high %v3740, %v3740
        %v3743 = vcombine.low %v2961, %v2963
        %v3744 = vcombine.high %v2961, %v2963
        %v3746 = vunpack.c.l.s4 1983009808
        %v3747 = vunpack.c.0.s8 %v3746
        %v3748 = vlaneseq
        %v3749 = vshrl.u32 %v3748, 7
        %v3750 = vsub.s32 %v3747, %v3749
        %v3751 = vrot.slane %v3743, %v3750
        %v3753 = vunpack.c.l.s4 1983009808
        %v3754 = vunpack.c.0.s8 %v3753
        %v3755 = vlaneseq
        %v3756 = vshrl.u32 %v3755, 7
        %v3757 = vsub.s32 %v3754, %v3756
        %v3758 = vrot.slane %v3744, %v3757
        %v3759 = vcombine.high %v3751, %v3751
        %v3760 = vcombine.high %v3758, %v3758
        %v3761 = vcombine.low %v2965, %v2967
        %v3762 = vcombine.high %v2965, %v2967
        %v3764 = vunpack.c.l.s4 1983009808
        %v3765 = vunpack.c.0.s8 %v3764
        %v3766 = vlaneseq
        %v3767 = vshrl.u32 %v3766, 7
        %v3768 = vsub.s32 %v3765, %v3767
        %v3769 = vrot.slane %v3761, %v3768
        %v3771 = vunpack.c.l.s4 1983009808
        %v3772 = vunpack.c.0.s8 %v3771
        %v3773 = vlaneseq
        %v3774 = vshrl.u32 %v3773, 7
        %v3775 = vsub.s32 %v3772, %v3774
        %v3776 = vrot.slane %v3762, %v3775
        %v3777 = vcombine.high %v3769, %v3769
        %v3778 = vcombine.high %v3776, %v3776
        %v3779 = vcombine.low %v2971, %v2973
        %v3781 = vunpack.c.l.s4 1983009808
        %v3782 = vunpack.c.0.s8 %v3781
        %v3783 = vlaneseq
        %v3784 = vshrl.u32 %v3783, 7
        %v3785 = vsub.s32 %v3782, %v3784
        %v3786 = vrot.slane %v3779, %v3785
        %v3787 = vcombine.high %v3786, %v3786
        %v3950 = vmax.f32 %v3067, 0.0
        %v3951 = vmax.f32 %v3075, 0.0
        %v3952 = vmax.f32 %v3074, 0.0
        %v3953 = vmax.f32 %v3076, 0.0
        %v3954 = vmax.f32 %v3085, 0.0
        %v3955 = vmax.f32 %v3093, 0.0
        %v3956 = vmax.f32 %v3092, 0.0
        %v3957 = vmax.f32 %v3094, 0.0
        %v3958 = vmax.f32 %v3103, 0.0
        %v3959 = vmax.f32 %v3111, 0.0
        %v3960 = vmax.f32 %v3110, 0.0
        %v3961 = vmax.f32 %v3112, 0.0
        %v3962 = vmax.f32 %v3121, 0.0
        %v3963 = vmax.f32 %v3129, 0.0
        %v3964 = vmax.f32 %v3128, 0.0
        %v3965 = vmax.f32 %v3130, 0.0
        %v3966 = vmax.f32 %v3139, 0.0
        %v3967 = vmax.f32 %v3147, 0.0
        %v3968 = vmax.f32 %v3146, 0.0
        %v3969 = vmax.f32 %v3148, 0.0
        %v3970 = vmax.f32 %v3157, 0.0
        %v3971 = vmax.f32 %v3165, 0.0
        %v3972 = vmax.f32 %v3164, 0.0
        %v3973 = vmax.f32 %v3166, 0.0
        %v3974 = vmax.f32 %v3175, 0.0
        %v3975 = vmax.f32 %v3183, 0.0
        %v3976 = vmax.f32 %v3182, 0.0
        %v3977 = vmax.f32 %v3184, 0.0
        %v3978 = vmax.f32 %v3193, 0.0
        %v3979 = vmax.f32 %v3201, 0.0
        %v3980 = vmax.f32 %v3200, 0.0
        %v3981 = vmax.f32 %v3202, 0.0
        %v3982 = vmax.f32 %v3211, 0.0
        %v3983 = vmax.f32 %v3219, 0.0
        %v3984 = vmax.f32 %v3218, 0.0
        %v3985 = vmax.f32 %v3220, 0.0
        %v3986 = vmax.f32 %v3229, 0.0
        %v3987 = vmax.f32 %v3237, 0.0
        %v3988 = vmax.f32 %v3236, 0.0
        %v3989 = vmax.f32 %v3238, 0.0
        %v3990 = vmax.f32 %v3247, 0.0
        %v3991 = vmax.f32 %v3255, 0.0
        %v3992 = vmax.f32 %v3254, 0.0
        %v3993 = vmax.f32 %v3256, 0.0
        %v3994 = vmax.f32 %v3265, 0.0
        %v3995 = vmax.f32 %v3273, 0.0
        %v3996 = vmax.f32 %v3272, 0.0
        %v3997 = vmax.f32 %v3274, 0.0
        %v3998 = vmax.f32 %v3283, 0.0
        %v3999 = vmax.f32 %v3291, 0.0
        %v4000 = vmax.f32 %v3290, 0.0
        %v4001 = vmax.f32 %v3292, 0.0
        %v4002 = vmax.f32 %v3301, 0.0
        %v4003 = vmax.f32 %v3309, 0.0
        %v4004 = vmax.f32 %v3308, 0.0
        %v4005 = vmax.f32 %v3310, 0.0
        %v4006 = vmax.f32 %v3319, 0.0
        %v4007 = vmax.f32 %v3327, 0.0
        %v4008 = vmax.f32 %v3326, 0.0
        %v4009 = vmax.f32 %v3328, 0.0
        %v4010 = vmax.f32 %v3337, 0.0
        %v4011 = vmax.f32 %v3345, 0.0
        %v4012 = vmax.f32 %v3344, 0.0
        %v4013 = vmax.f32 %v3346, 0.0
        %v4014 = vmax.f32 %v3355, 0.0
        %v4015 = vmax.f32 %v3363, 0.0
        %v4016 = vmax.f32 %v3362, 0.0
        %v4017 = vmax.f32 %v3364, 0.0
        %v4018 = vmax.f32 %v3373, 0.0
        %v4019 = vmax.f32 %v3381, 0.0
        %v4020 = vmax.f32 %v3380, 0.0
        %v4021 = vmax.f32 %v3382, 0.0
        %v4022 = vmax.f32 %v3391, 0.0
        %v4023 = vmax.f32 %v3399, 0.0
        %v4024 = vmax.f32 %v3398, 0.0
        %v4025 = vmax.f32 %v3400, 0.0
        %v4026 = vmax.f32 %v3409, 0.0
        %v4027 = vmax.f32 %v3417, 0.0
        %v4028 = vmax.f32 %v3416, 0.0
        %v4029 = vmax.f32 %v3418, 0.0
        %v4030 = vmax.f32 %v3427, 0.0
        %v4031 = vmax.f32 %v3435, 0.0
        %v4032 = vmax.f32 %v3434, 0.0
        %v4033 = vmax.f32 %v3436, 0.0
        %v4034 = vmax.f32 %v3445, 0.0
        %v4035 = vmax.f32 %v3453, 0.0
        %v4036 = vmax.f32 %v3452, 0.0
        %v4037 = vmax.f32 %v3454, 0.0
        %v4038 = vmax.f32 %v3463, 0.0
        %v4039 = vmax.f32 %v3471, 0.0
        %v4040 = vmax.f32 %v3470, 0.0
        %v4041 = vmax.f32 %v3472, 0.0
        %v4042 = vmax.f32 %v3481, 0.0
        %v4043 = vmax.f32 %v3489, 0.0
        %v4044 = vmax.f32 %v3488, 0.0
        %v4045 = vmax.f32 %v3490, 0.0
        %v4046 = vmax.f32 %v3499, 0.0
        %v4047 = vmax.f32 %v3507, 0.0
        %v4048 = vmax.f32 %v3506, 0.0
        %v4049 = vmax.f32 %v3508, 0.0
        %v4050 = vmax.f32 %v3517, 0.0
        %v4051 = vmax.f32 %v3525, 0.0
        %v4052 = vmax.f32 %v3524, 0.0
        %v4053 = vmax.f32 %v3526, 0.0
        %v4054 = vmax.f32 %v3535, 0.0
        %v4055 = vmax.f32 %v3543, 0.0
        %v4056 = vmax.f32 %v3542, 0.0
        %v4057 = vmax.f32 %v3544, 0.0
        %v4058 = vmax.f32 %v3553, 0.0
        %v4059 = vmax.f32 %v3561, 0.0
        %v4060 = vmax.f32 %v3560, 0.0
        %v4061 = vmax.f32 %v3562, 0.0
        %v4062 = vmax.f32 %v3571, 0.0
        %v4063 = vmax.f32 %v3579, 0.0
        %v4064 = vmax.f32 %v3578, 0.0
        %v4065 = vmax.f32 %v3580, 0.0
        %v4066 = vmax.f32 %v3589, 0.0
        %v4067 = vmax.f32 %v3597, 0.0
        %v4068 = vmax.f32 %v3596, 0.0
        %v4069 = vmax.f32 %v3598, 0.0
        %v4070 = vmax.f32 %v3607, 0.0
        %v4071 = vmax.f32 %v3615, 0.0
        %v4072 = vmax.f32 %v3614, 0.0
        %v4073 = vmax.f32 %v3616, 0.0
        %v4074 = vmax.f32 %v3625, 0.0
        %v4075 = vmax.f32 %v3633, 0.0
        %v4076 = vmax.f32 %v3632, 0.0
        %v4077 = vmax.f32 %v3634, 0.0
        %v4078 = vmax.f32 %v3643, 0.0
        %v4079 = vmax.f32 %v3651, 0.0
        %v4080 = vmax.f32 %v3650, 0.0
        %v4081 = vmax.f32 %v3652, 0.0
        %v4082 = vmax.f32 %v3661, 0.0
        %v4083 = vmax.f32 %v3669, 0.0
        %v4084 = vmax.f32 %v3668, 0.0
        %v4085 = vmax.f32 %v3670, 0.0
        %v4086 = vmax.f32 %v3679, 0.0
        %v4087 = vmax.f32 %v3687, 0.0
        %v4088 = vmax.f32 %v3686, 0.0
        %v4089 = vmax.f32 %v3688, 0.0
        %v4090 = vmax.f32 %v3697, 0.0
        %v4091 = vmax.f32 %v3705, 0.0
        %v4092 = vmax.f32 %v3704, 0.0
        %v4093 = vmax.f32 %v3706, 0.0
        %v4094 = vmax.f32 %v3715, 0.0
        %v4095 = vmax.f32 %v3723, 0.0
        %v4096 = vmax.f32 %v3722, 0.0
        %v4097 = vmax.f32 %v3724, 0.0
        %v4098 = vmax.f32 %v3733, 0.0
        %v4099 = vmax.f32 %v3741, 0.0
        %v4100 = vmax.f32 %v3740, 0.0
        %v4101 = vmax.f32 %v3742, 0.0
        %v4102 = vmax.f32 %v3751, 0.0
        %v4103 = vmax.f32 %v3759, 0.0
        %v4104 = vmax.f32 %v3758, 0.0
        %v4105 = vmax.f32 %v3760, 0.0
        %v4106 = vmax.f32 %v3769, 0.0
        %v4107 = vmax.f32 %v3777, 0.0
        %v4108 = vmax.f32 %v3776, 0.0
        %v4109 = vmax.f32 %v3778, 0.0
        %v4110 = vmax.f32 %v3786, 0.0
        %v4111 = vmax.f32 %v3787, 0.0
        %v4274 = vcombine.low %v3950, %v3951
        %v4275 = vcombine.low %v3952, %v3953
        %v4277 = vunpack.c.l.s4 1983009808
        %v4278 = vunpack.c.0.s8 %v4277
        %v4279 = vlaneseq
        %v4280 = vshrl.u32 %v4279, 7
        %v4281 = vsub.s32 %v4278, %v4280
        %v4282 = vrot.slane %v4274, %v4281
        %v4284 = vunpack.c.l.s4 1983009808
        %v4285 = vunpack.c.0.s8 %v4284
        %v4286 = vlaneseq
        %v4287 = vshrl.u32 %v4286, 7
        %v4288 = vsub.s32 %v4285, %v4287
        %v4289 = vrot.slane %v4275, %v4288
        %v4290 = vcombine.low %v4282, %v4289
        %v4291 = vcombine.high %v4282, %v4289
        %v4292 = vcombine.low %v3954, %v3955
        %v4293 = vcombine.low %v3956, %v3957
        %v4295 = vunpack.c.l.s4 1983009808
        %v4296 = vunpack.c.0.s8 %v4295
        %v4297 = vlaneseq
        %v4298 = vshrl.u32 %v4297, 7
        %v4299 = vsub.s32 %v4296, %v4298
        %v4300 = vrot.slane %v4292, %v4299
        %v4302 = vunpack.c.l.s4 1983009808
        %v4303 = vunpack.c.0.s8 %v4302
        %v4304 = vlaneseq
        %v4305 = vshrl.u32 %v4304, 7
        %v4306 = vsub.s32 %v4303, %v4305
        %v4307 = vrot.slane %v4293, %v4306
        %v4308 = vcombine.low %v4300, %v4307
        %v4309 = vcombine.high %v4300, %v4307
        %v4311 = vunpack.c.l.s4 1983009808
        %v4312 = vunpack.c.0.s8 %v4311
        %v4313 = vlaneseq
        %v4314 = vshrl.u32 %v4313, 7
        %v4315 = vsub.s32 %v4312, %v4314
        %v4316 = vrot.slane %v3958, %v4315
        %v4317 = vcombine.high %v4316, %v4316
        %v4318 = vcombine.low %v3959, %v3960
        %v4319 = vcombine.low %v3961, %v3962
        %v4321 = vunpack.c.l.s4 1983009808
        %v4322 = vunpack.c.0.s8 %v4321
        %v4323 = vlaneseq
        %v4324 = vshrl.u32 %v4323, 7
        %v4325 = vsub.s32 %v4322, %v4324
        %v4326 = vrot.slane %v4318, %v4325
        %v4328 = vunpack.c.l.s4 1983009808
        %v4329 = vunpack.c.0.s8 %v4328
        %v4330 = vlaneseq
        %v4331 = vshrl.u32 %v4330, 7
        %v4332 = vsub.s32 %v4329, %v4331
        %v4333 = vrot.slane %v4319, %v4332
        %v4334 = vcombine.low %v4326, %v4333
        %v4335 = vcombine.high %v4326, %v4333
        %v4336 = vcombine.low %v3963, %v3964
        %v4337 = vcombine.low %v3965, %v3966
        %v4339 = vunpack.c.l.s4 1983009808
        %v4340 = vunpack.c.0.s8 %v4339
        %v4341 = vlaneseq
        %v4342 = vshrl.u32 %v4341, 7
        %v4343 = vsub.s32 %v4340, %v4342
        %v4344 = vrot.slane %v4336, %v4343
        %v4346 = vunpack.c.l.s4 1983009808
        %v4347 = vunpack.c.0.s8 %v4346
        %v4348 = vlaneseq
        %v4349 = vshrl.u32 %v4348, 7
        %v4350 = vsub.s32 %v4347, %v4349
        %v4351 = vrot.slane %v4337, %v4350
        %v4352 = vcombine.low %v4344, %v4351
        %v4353 = vcombine.high %v4344, %v4351
        %v4355 = vunpack.c.l.s4 1983009808
        %v4356 = vunpack.c.0.s8 %v4355
        %v4357 = vlaneseq
        %v4358 = vshrl.u32 %v4357, 7
        %v4359 = vsub.s32 %v4356, %v4358
        %v4360 = vrot.slane %v3967, %v4359
        %v4361 = vcombine.high %v4360, %v4360
        %v4362 = vcombine.low %v3968, %v3969
        %v4363 = vcombine.low %v3970, %v3971
        %v4365 = vunpack.c.l.s4 1983009808
        %v4366 = vunpack.c.0.s8 %v4365
        %v4367 = vlaneseq
        %v4368 = vshrl.u32 %v4367, 7
        %v4369 = vsub.s32 %v4366, %v4368
        %v4370 = vrot.slane %v4362, %v4369
        %v4372 = vunpack.c.l.s4 1983009808
        %v4373 = vunpack.c.0.s8 %v4372
        %v4374 = vlaneseq
        %v4375 = vshrl.u32 %v4374, 7
        %v4376 = vsub.s32 %v4373, %v4375
        %v4377 = vrot.slane %v4363, %v4376
        %v4378 = vcombine.low %v4370, %v4377
        %v4379 = vcombine.high %v4370, %v4377
        %v4380 = vcombine.low %v3972, %v3973
        %v4381 = vcombine.low %v3974, %v3975
        %v4383 = vunpack.c.l.s4 1983009808
        %v4384 = vunpack.c.0.s8 %v4383
        %v4385 = vlaneseq
        %v4386 = vshrl.u32 %v4385, 7
        %v4387 = vsub.s32 %v4384, %v4386
        %v4388 = vrot.slane %v4380, %v4387
        %v4390 = vunpack.c.l.s4 1983009808
        %v4391 = vunpack.c.0.s8 %v4390
        %v4392 = vlaneseq
        %v4393 = vshrl.u32 %v4392, 7
        %v4394 = vsub.s32 %v4391, %v4393
        %v4395 = vrot.slane %v4381, %v4394
        %v4396 = vcombine.low %v4388, %v4395
        %v4397 = vcombine.high %v4388, %v4395
        %v4399 = vunpack.c.l.s4 1983009808
        %v4400 = vunpack.c.0.s8 %v4399
        %v4401 = vlaneseq
        %v4402 = vshrl.u32 %v4401, 7
        %v4403 = vsub.s32 %v4400, %v4402
        %v4404 = vrot.slane %v3976, %v4403
        %v4405 = vcombine.high %v4404, %v4404
        %v4406 = vcombine.low %v3977, %v3978
        %v4407 = vcombine.low %v3979, %v3980
        %v4409 = vunpack.c.l.s4 1983009808
        %v4410 = vunpack.c.0.s8 %v4409
        %v4411 = vlaneseq
        %v4412 = vshrl.u32 %v4411, 7
        %v4413 = vsub.s32 %v4410, %v4412
        %v4414 = vrot.slane %v4406, %v4413
        %v4416 = vunpack.c.l.s4 1983009808
        %v4417 = vunpack.c.0.s8 %v4416
        %v4418 = vlaneseq
        %v4419 = vshrl.u32 %v4418, 7
        %v4420 = vsub.s32 %v4417, %v4419
        %v4421 = vrot.slane %v4407, %v4420
        %v4422 = vcombine.low %v4414, %v4421
        %v4423 = vcombine.high %v4414, %v4421
        %v4424 = vcombine.low %v3981, %v3982
        %v4425 = vcombine.low %v3983, %v3984
        %v4427 = vunpack.c.l.s4 1983009808
        %v4428 = vunpack.c.0.s8 %v4427
        %v4429 = vlaneseq
        %v4430 = vshrl.u32 %v4429, 7
        %v4431 = vsub.s32 %v4428, %v4430
        %v4432 = vrot.slane %v4424, %v4431
        %v4434 = vunpack.c.l.s4 1983009808
        %v4435 = vunpack.c.0.s8 %v4434
        %v4436 = vlaneseq
        %v4437 = vshrl.u32 %v4436, 7
        %v4438 = vsub.s32 %v4435, %v4437
        %v4439 = vrot.slane %v4425, %v4438
        %v4440 = vcombine.low %v4432, %v4439
        %v4441 = vcombine.high %v4432, %v4439
        %v4443 = vunpack.c.l.s4 1983009808
        %v4444 = vunpack.c.0.s8 %v4443
        %v4445 = vlaneseq
        %v4446 = vshrl.u32 %v4445, 7
        %v4447 = vsub.s32 %v4444, %v4446
        %v4448 = vrot.slane %v3985, %v4447
        %v4449 = vcombine.high %v4448, %v4448
        %v4450 = vcombine.low %v3986, %v3987
        %v4451 = vcombine.low %v3988, %v3989
        %v4453 = vunpack.c.l.s4 1983009808
        %v4454 = vunpack.c.0.s8 %v4453
        %v4455 = vlaneseq
        %v4456 = vshrl.u32 %v4455, 7
        %v4457 = vsub.s32 %v4454, %v4456
        %v4458 = vrot.slane %v4450, %v4457
        %v4460 = vunpack.c.l.s4 1983009808
        %v4461 = vunpack.c.0.s8 %v4460
        %v4462 = vlaneseq
        %v4463 = vshrl.u32 %v4462, 7
        %v4464 = vsub.s32 %v4461, %v4463
        %v4465 = vrot.slane %v4451, %v4464
        %v4466 = vcombine.low %v4458, %v4465
        %v4467 = vcombine.high %v4458, %v4465
        %v4468 = vcombine.low %v3990, %v3991
        %v4469 = vcombine.low %v3992, %v3993
        %v4471 = vunpack.c.l.s4 1983009808
        %v4472 = vunpack.c.0.s8 %v4471
        %v4473 = vlaneseq
        %v4474 = vshrl.u32 %v4473, 7
        %v4475 = vsub.s32 %v4472, %v4474
        %v4476 = vrot.slane %v4468, %v4475
        %v4478 = vunpack.c.l.s4 1983009808
        %v4479 = vunpack.c.0.s8 %v4478
        %v4480 = vlaneseq
        %v4481 = vshrl.u32 %v4480, 7
        %v4482 = vsub.s32 %v4479, %v4481
        %v4483 = vrot.slane %v4469, %v4482
        %v4484 = vcombine.low %v4476, %v4483
        %v4485 = vcombine.high %v4476, %v4483
        %v4487 = vunpack.c.l.s4 1983009808
        %v4488 = vunpack.c.0.s8 %v4487
        %v4489 = vlaneseq
        %v4490 = vshrl.u32 %v4489, 7
        %v4491 = vsub.s32 %v4488, %v4490
        %v4492 = vrot.slane %v3994, %v4491
        %v4493 = vcombine.high %v4492, %v4492
        %v4494 = vcombine.low %v3995, %v3996
        %v4495 = vcombine.low %v3997, %v3998
        %v4497 = vunpack.c.l.s4 1983009808
        %v4498 = vunpack.c.0.s8 %v4497
        %v4499 = vlaneseq
        %v4500 = vshrl.u32 %v4499, 7
        %v4501 = vsub.s32 %v4498, %v4500
        %v4502 = vrot.slane %v4494, %v4501
        %v4504 = vunpack.c.l.s4 1983009808
        %v4505 = vunpack.c.0.s8 %v4504
        %v4506 = vlaneseq
        %v4507 = vshrl.u32 %v4506, 7
        %v4508 = vsub.s32 %v4505, %v4507
        %v4509 = vrot.slane %v4495, %v4508
        %v4510 = vcombine.low %v4502, %v4509
        %v4511 = vcombine.high %v4502, %v4509
        %v4512 = vcombine.low %v3999, %v4000
        %v4513 = vcombine.low %v4001, %v4002
        %v4515 = vunpack.c.l.s4 1983009808
        %v4516 = vunpack.c.0.s8 %v4515
        %v4517 = vlaneseq
        %v4518 = vshrl.u32 %v4517, 7
        %v4519 = vsub.s32 %v4516, %v4518
        %v4520 = vrot.slane %v4512, %v4519
        %v4522 = vunpack.c.l.s4 1983009808
        %v4523 = vunpack.c.0.s8 %v4522
        %v4524 = vlaneseq
        %v4525 = vshrl.u32 %v4524, 7
        %v4526 = vsub.s32 %v4523, %v4525
        %v4527 = vrot.slane %v4513, %v4526
        %v4528 = vcombine.low %v4520, %v4527
        %v4529 = vcombine.high %v4520, %v4527
        %v4531 = vunpack.c.l.s4 1983009808
        %v4532 = vunpack.c.0.s8 %v4531
        %v4533 = vlaneseq
        %v4534 = vshrl.u32 %v4533, 7
        %v4535 = vsub.s32 %v4532, %v4534
        %v4536 = vrot.slane %v4003, %v4535
        %v4537 = vcombine.high %v4536, %v4536
        %v4538 = vcombine.low %v4004, %v4005
        %v4539 = vcombine.low %v4006, %v4007
        %v4541 = vunpack.c.l.s4 1983009808
        %v4542 = vunpack.c.0.s8 %v4541
        %v4543 = vlaneseq
        %v4544 = vshrl.u32 %v4543, 7
        %v4545 = vsub.s32 %v4542, %v4544
        %v4546 = vrot.slane %v4538, %v4545
        %v4548 = vunpack.c.l.s4 1983009808
        %v4549 = vunpack.c.0.s8 %v4548
        %v4550 = vlaneseq
        %v4551 = vshrl.u32 %v4550, 7
        %v4552 = vsub.s32 %v4549, %v4551
        %v4553 = vrot.slane %v4539, %v4552
        %v4554 = vcombine.low %v4546, %v4553
        %v4555 = vcombine.high %v4546, %v4553
        %v4556 = vcombine.low %v4008, %v4009
        %v4557 = vcombine.low %v4010, %v4011
        %v4559 = vunpack.c.l.s4 1983009808
        %v4560 = vunpack.c.0.s8 %v4559
        %v4561 = vlaneseq
        %v4562 = vshrl.u32 %v4561, 7
        %v4563 = vsub.s32 %v4560, %v4562
        %v4564 = vrot.slane %v4556, %v4563
        %v4566 = vunpack.c.l.s4 1983009808
        %v4567 = vunpack.c.0.s8 %v4566
        %v4568 = vlaneseq
        %v4569 = vshrl.u32 %v4568, 7
        %v4570 = vsub.s32 %v4567, %v4569
        %v4571 = vrot.slane %v4557, %v4570
        %v4572 = vcombine.low %v4564, %v4571
        %v4573 = vcombine.high %v4564, %v4571
        %v4575 = vunpack.c.l.s4 1983009808
        %v4576 = vunpack.c.0.s8 %v4575
        %v4577 = vlaneseq
        %v4578 = vshrl.u32 %v4577, 7
        %v4579 = vsub.s32 %v4576, %v4578
        %v4580 = vrot.slane %v4012, %v4579
        %v4581 = vcombine.high %v4580, %v4580
        %v4582 = vcombine.low %v4013, %v4014
        %v4583 = vcombine.low %v4015, %v4016
        %v4585 = vunpack.c.l.s4 1983009808
        %v4586 = vunpack.c.0.s8 %v4585
        %v4587 = vlaneseq
        %v4588 = vshrl.u32 %v4587, 7
        %v4589 = vsub.s32 %v4586, %v4588
        %v4590 = vrot.slane %v4582, %v4589
        %v4592 = vunpack.c.l.s4 1983009808
        %v4593 = vunpack.c.0.s8 %v4592
        %v4594 = vlaneseq
        %v4595 = vshrl.u32 %v4594, 7
        %v4596 = vsub.s32 %v4593, %v4595
        %v4597 = vrot.slane %v4583, %v4596
        %v4598 = vcombine.low %v4590, %v4597
        %v4599 = vcombine.high %v4590, %v4597
        %v4600 = vcombine.low %v4017, %v4018
        %v4601 = vcombine.low %v4019, %v4020
        %v4603 = vunpack.c.l.s4 1983009808
        %v4604 = vunpack.c.0.s8 %v4603
        %v4605 = vlaneseq
        %v4606 = vshrl.u32 %v4605, 7
        %v4607 = vsub.s32 %v4604, %v4606
        %v4608 = vrot.slane %v4600, %v4607
        %v4610 = vunpack.c.l.s4 1983009808
        %v4611 = vunpack.c.0.s8 %v4610
        %v4612 = vlaneseq
        %v4613 = vshrl.u32 %v4612, 7
        %v4614 = vsub.s32 %v4611, %v4613
        %v4615 = vrot.slane %v4601, %v4614
        %v4616 = vcombine.low %v4608, %v4615
        %v4617 = vcombine.high %v4608, %v4615
        %v4619 = vunpack.c.l.s4 1983009808
        %v4620 = vunpack.c.0.s8 %v4619
        %v4621 = vlaneseq
        %v4622 = vshrl.u32 %v4621, 7
        %v4623 = vsub.s32 %v4620, %v4622
        %v4624 = vrot.slane %v4021, %v4623
        %v4625 = vcombine.high %v4624, %v4624
        %v4626 = vcombine.low %v4022, %v4023
        %v4627 = vcombine.low %v4024, %v4025
        %v4629 = vunpack.c.l.s4 1983009808
        %v4630 = vunpack.c.0.s8 %v4629
        %v4631 = vlaneseq
        %v4632 = vshrl.u32 %v4631, 7
        %v4633 = vsub.s32 %v4630, %v4632
        %v4634 = vrot.slane %v4626, %v4633
        %v4636 = vunpack.c.l.s4 1983009808
        %v4637 = vunpack.c.0.s8 %v4636
        %v4638 = vlaneseq
        %v4639 = vshrl.u32 %v4638, 7
        %v4640 = vsub.s32 %v4637, %v4639
        %v4641 = vrot.slane %v4627, %v4640
        %v4642 = vcombine.low %v4634, %v4641
        %v4643 = vcombine.high %v4634, %v4641
        %v4644 = vcombine.low %v4026, %v4027
        %v4645 = vcombine.low %v4028, %v4029
        %v4647 = vunpack.c.l.s4 1983009808
        %v4648 = vunpack.c.0.s8 %v4647
        %v4649 = vlaneseq
        %v4650 = vshrl.u32 %v4649, 7
        %v4651 = vsub.s32 %v4648, %v4650
        %v4652 = vrot.slane %v4644, %v4651
        %v4654 = vunpack.c.l.s4 1983009808
        %v4655 = vunpack.c.0.s8 %v4654
        %v4656 = vlaneseq
        %v4657 = vshrl.u32 %v4656, 7
        %v4658 = vsub.s32 %v4655, %v4657
        %v4659 = vrot.slane %v4645, %v4658
        %v4660 = vcombine.low %v4652, %v4659
        %v4661 = vcombine.high %v4652, %v4659
        %v4663 = vunpack.c.l.s4 1983009808
        %v4664 = vunpack.c.0.s8 %v4663
        %v4665 = vlaneseq
        %v4666 = vshrl.u32 %v4665, 7
        %v4667 = vsub.s32 %v4664, %v4666
        %v4668 = vrot.slane %v4030, %v4667
        %v4669 = vcombine.high %v4668, %v4668
        %v4670 = vcombine.low %v4031, %v4032
        %v4671 = vcombine.low %v4033, %v4034
        %v4673 = vunpack.c.l.s4 1983009808
        %v4674 = vunpack.c.0.s8 %v4673
        %v4675 = vlaneseq
        %v4676 = vshrl.u32 %v4675, 7
        %v4677 = vsub.s32 %v4674, %v4676
        %v4678 = vrot.slane %v4670, %v4677
        %v4680 = vunpack.c.l.s4 1983009808
        %v4681 = vunpack.c.0.s8 %v4680
        %v4682 = vlaneseq
        %v4683 = vshrl.u32 %v4682, 7
        %v4684 = vsub.s32 %v4681, %v4683
        %v4685 = vrot.slane %v4671, %v4684
        %v4686 = vcombine.low %v4678, %v4685
        %v4687 = vcombine.high %v4678, %v4685
        %v4688 = vcombine.low %v4035, %v4036
        %v4689 = vcombine.low %v4037, %v4038
        %v4691 = vunpack.c.l.s4 1983009808
        %v4692 = vunpack.c.0.s8 %v4691
        %v4693 = vlaneseq
        %v4694 = vshrl.u32 %v4693, 7
        %v4695 = vsub.s32 %v4692, %v4694
        %v4696 = vrot.slane %v4688, %v4695
        %v4698 = vunpack.c.l.s4 1983009808
        %v4699 = vunpack.c.0.s8 %v4698
        %v4700 = vlaneseq
        %v4701 = vshrl.u32 %v4700, 7
        %v4702 = vsub.s32 %v4699, %v4701
        %v4703 = vrot.slane %v4689, %v4702
        %v4704 = vcombine.low %v4696, %v4703
        %v4705 = vcombine.high %v4696, %v4703
        %v4707 = vunpack.c.l.s4 1983009808
        %v4708 = vunpack.c.0.s8 %v4707
        %v4709 = vlaneseq
        %v4710 = vshrl.u32 %v4709, 7
        %v4711 = vsub.s32 %v4708, %v4710
        %v4712 = vrot.slane %v4039, %v4711
        %v4713 = vcombine.high %v4712, %v4712
        %v4714 = vcombine.low %v4040, %v4041
        %v4715 = vcombine.low %v4042, %v4043
        %v4717 = vunpack.c.l.s4 1983009808
        %v4718 = vunpack.c.0.s8 %v4717
        %v4719 = vlaneseq
        %v4720 = vshrl.u32 %v4719, 7
        %v4721 = vsub.s32 %v4718, %v4720
        %v4722 = vrot.slane %v4714, %v4721
        %v4724 = vunpack.c.l.s4 1983009808
        %v4725 = vunpack.c.0.s8 %v4724
        %v4726 = vlaneseq
        %v4727 = vshrl.u32 %v4726, 7
        %v4728 = vsub.s32 %v4725, %v4727
        %v4729 = vrot.slane %v4715, %v4728
        %v4730 = vcombine.low %v4722, %v4729
        %v4731 = vcombine.high %v4722, %v4729
        %v4732 = vcombine.low %v4044, %v4045
        %v4733 = vcombine.low %v4046, %v4047
        %v4735 = vunpack.c.l.s4 1983009808
        %v4736 = vunpack.c.0.s8 %v4735
        %v4737 = vlaneseq
        %v4738 = vshrl.u32 %v4737, 7
        %v4739 = vsub.s32 %v4736, %v4738
        %v4740 = vrot.slane %v4732, %v4739
        %v4742 = vunpack.c.l.s4 1983009808
        %v4743 = vunpack.c.0.s8 %v4742
        %v4744 = vlaneseq
        %v4745 = vshrl.u32 %v4744, 7
        %v4746 = vsub.s32 %v4743, %v4745
        %v4747 = vrot.slane %v4733, %v4746
        %v4748 = vcombine.low %v4740, %v4747
        %v4749 = vcombine.high %v4740, %v4747
        %v4751 = vunpack.c.l.s4 1983009808
        %v4752 = vunpack.c.0.s8 %v4751
        %v4753 = vlaneseq
        %v4754 = vshrl.u32 %v4753, 7
        %v4755 = vsub.s32 %v4752, %v4754
        %v4756 = vrot.slane %v4048, %v4755
        %v4757 = vcombine.high %v4756, %v4756
        %v4758 = vcombine.low %v4049, %v4050
        %v4759 = vcombine.low %v4051, %v4052
        %v4761 = vunpack.c.l.s4 1983009808
        %v4762 = vunpack.c.0.s8 %v4761
        %v4763 = vlaneseq
        %v4764 = vshrl.u32 %v4763, 7
        %v4765 = vsub.s32 %v4762, %v4764
        %v4766 = vrot.slane %v4758, %v4765
        %v4768 = vunpack.c.l.s4 1983009808
        %v4769 = vunpack.c.0.s8 %v4768
        %v4770 = vlaneseq
        %v4771 = vshrl.u32 %v4770, 7
        %v4772 = vsub.s32 %v4769, %v4771
        %v4773 = vrot.slane %v4759, %v4772
        %v4774 = vcombine.low %v4766, %v4773
        %v4775 = vcombine.high %v4766, %v4773
        %v4776 = vcombine.low %v4053, %v4054
        %v4777 = vcombine.low %v4055, %v4056
        %v4779 = vunpack.c.l.s4 1983009808
        %v4780 = vunpack.c.0.s8 %v4779
        %v4781 = vlaneseq
        %v4782 = vshrl.u32 %v4781, 7
        %v4783 = vsub.s32 %v4780, %v4782
        %v4784 = vrot.slane %v4776, %v4783
        %v4786 = vunpack.c.l.s4 1983009808
        %v4787 = vunpack.c.0.s8 %v4786
        %v4788 = vlaneseq
        %v4789 = vshrl.u32 %v4788, 7
        %v4790 = vsub.s32 %v4787, %v4789
        %v4791 = vrot.slane %v4777, %v4790
        %v4792 = vcombine.low %v4784, %v4791
        %v4793 = vcombine.high %v4784, %v4791
        %v4795 = vunpack.c.l.s4 1983009808
        %v4796 = vunpack.c.0.s8 %v4795
        %v4797 = vlaneseq
        %v4798 = vshrl.u32 %v4797, 7
        %v4799 = vsub.s32 %v4796, %v4798
        %v4800 = vrot.slane %v4057, %v4799
        %v4801 = vcombine.high %v4800, %v4800
        %v4802 = vcombine.low %v4058, %v4059
        %v4803 = vcombine.low %v4060, %v4061
        %v4805 = vunpack.c.l.s4 1983009808
        %v4806 = vunpack.c.0.s8 %v4805
        %v4807 = vlaneseq
        %v4808 = vshrl.u32 %v4807, 7
        %v4809 = vsub.s32 %v4806, %v4808
        %v4810 = vrot.slane %v4802, %v4809
        %v4812 = vunpack.c.l.s4 1983009808
        %v4813 = vunpack.c.0.s8 %v4812
        %v4814 = vlaneseq
        %v4815 = vshrl.u32 %v4814, 7
        %v4816 = vsub.s32 %v4813, %v4815
        %v4817 = vrot.slane %v4803, %v4816
        %v4818 = vcombine.low %v4810, %v4817
        %v4819 = vcombine.high %v4810, %v4817
        %v4820 = vcombine.low %v4062, %v4063
        %v4821 = vcombine.low %v4064, %v4065
        %v4823 = vunpack.c.l.s4 1983009808
        %v4824 = vunpack.c.0.s8 %v4823
        %v4825 = vlaneseq
        %v4826 = vshrl.u32 %v4825, 7
        %v4827 = vsub.s32 %v4824, %v4826
        %v4828 = vrot.slane %v4820, %v4827
        %v4830 = vunpack.c.l.s4 1983009808
        %v4831 = vunpack.c.0.s8 %v4830
        %v4832 = vlaneseq
        %v4833 = vshrl.u32 %v4832, 7
        %v4834 = vsub.s32 %v4831, %v4833
        %v4835 = vrot.slane %v4821, %v4834
        %v4836 = vcombine.low %v4828, %v4835
        %v4837 = vcombine.high %v4828, %v4835
        %v4839 = vunpack.c.l.s4 1983009808
        %v4840 = vunpack.c.0.s8 %v4839
        %v4841 = vlaneseq
        %v4842 = vshrl.u32 %v4841, 7
        %v4843 = vsub.s32 %v4840, %v4842
        %v4844 = vrot.slane %v4066, %v4843
        %v4845 = vcombine.high %v4844, %v4844
        %v4846 = vcombine.low %v4067, %v4068
        %v4847 = vcombine.low %v4069, %v4070
        %v4849 = vunpack.c.l.s4 1983009808
        %v4850 = vunpack.c.0.s8 %v4849
        %v4851 = vlaneseq
        %v4852 = vshrl.u32 %v4851, 7
        %v4853 = vsub.s32 %v4850, %v4852
        %v4854 = vrot.slane %v4846, %v4853
        %v4856 = vunpack.c.l.s4 1983009808
        %v4857 = vunpack.c.0.s8 %v4856
        %v4858 = vlaneseq
        %v4859 = vshrl.u32 %v4858, 7
        %v4860 = vsub.s32 %v4857, %v4859
        %v4861 = vrot.slane %v4847, %v4860
        %v4862 = vcombine.low %v4854, %v4861
        %v4863 = vcombine.high %v4854, %v4861
        %v4864 = vcombine.low %v4071, %v4072
        %v4865 = vcombine.low %v4073, %v4074
        %v4867 = vunpack.c.l.s4 1983009808
        %v4868 = vunpack.c.0.s8 %v4867
        %v4869 = vlaneseq
        %v4870 = vshrl.u32 %v4869, 7
        %v4871 = vsub.s32 %v4868, %v4870
        %v4872 = vrot.slane %v4864, %v4871
        %v4874 = vunpack.c.l.s4 1983009808
        %v4875 = vunpack.c.0.s8 %v4874
        %v4876 = vlaneseq
        %v4877 = vshrl.u32 %v4876, 7
        %v4878 = vsub.s32 %v4875, %v4877
        %v4879 = vrot.slane %v4865, %v4878
        %v4880 = vcombine.low %v4872, %v4879
        %v4881 = vcombine.high %v4872, %v4879
        %v4883 = vunpack.c.l.s4 1983009808
        %v4884 = vunpack.c.0.s8 %v4883
        %v4885 = vlaneseq
        %v4886 = vshrl.u32 %v4885, 7
        %v4887 = vsub.s32 %v4884, %v4886
        %v4888 = vrot.slane %v4075, %v4887
        %v4889 = vcombine.high %v4888, %v4888
        %v4890 = vcombine.low %v4076, %v4077
        %v4891 = vcombine.low %v4078, %v4079
        %v4893 = vunpack.c.l.s4 1983009808
        %v4894 = vunpack.c.0.s8 %v4893
        %v4895 = vlaneseq
        %v4896 = vshrl.u32 %v4895, 7
        %v4897 = vsub.s32 %v4894, %v4896
        %v4898 = vrot.slane %v4890, %v4897
        %v4900 = vunpack.c.l.s4 1983009808
        %v4901 = vunpack.c.0.s8 %v4900
        %v4902 = vlaneseq
        %v4903 = vshrl.u32 %v4902, 7
        %v4904 = vsub.s32 %v4901, %v4903
        %v4905 = vrot.slane %v4891, %v4904
        %v4906 = vcombine.low %v4898, %v4905
        %v4907 = vcombine.high %v4898, %v4905
        %v4908 = vcombine.low %v4080, %v4081
        %v4909 = vcombine.low %v4082, %v4083
        %v4911 = vunpack.c.l.s4 1983009808
        %v4912 = vunpack.c.0.s8 %v4911
        %v4913 = vlaneseq
        %v4914 = vshrl.u32 %v4913, 7
        %v4915 = vsub.s32 %v4912, %v4914
        %v4916 = vrot.slane %v4908, %v4915
        %v4918 = vunpack.c.l.s4 1983009808
        %v4919 = vunpack.c.0.s8 %v4918
        %v4920 = vlaneseq
        %v4921 = vshrl.u32 %v4920, 7
        %v4922 = vsub.s32 %v4919, %v4921
        %v4923 = vrot.slane %v4909, %v4922
        %v4924 = vcombine.low %v4916, %v4923
        %v4925 = vcombine.high %v4916, %v4923
        %v4927 = vunpack.c.l.s4 1983009808
        %v4928 = vunpack.c.0.s8 %v4927
        %v4929 = vlaneseq
        %v4930 = vshrl.u32 %v4929, 7
        %v4931 = vsub.s32 %v4928, %v4930
        %v4932 = vrot.slane %v4084, %v4931
        %v4933 = vcombine.high %v4932, %v4932
        %v4934 = vcombine.low %v4085, %v4086
        %v4935 = vcombine.low %v4087, %v4088
        %v4937 = vunpack.c.l.s4 1983009808
        %v4938 = vunpack.c.0.s8 %v4937
        %v4939 = vlaneseq
        %v4940 = vshrl.u32 %v4939, 7
        %v4941 = vsub.s32 %v4938, %v4940
        %v4942 = vrot.slane %v4934, %v4941
        %v4944 = vunpack.c.l.s4 1983009808
        %v4945 = vunpack.c.0.s8 %v4944
        %v4946 = vlaneseq
        %v4947 = vshrl.u32 %v4946, 7
        %v4948 = vsub.s32 %v4945, %v4947
        %v4949 = vrot.slane %v4935, %v4948
        %v4950 = vcombine.low %v4942, %v4949
        %v4951 = vcombine.high %v4942, %v4949
        %v4952 = vcombine.low %v4089, %v4090
        %v4953 = vcombine.low %v4091, %v4092
        %v4955 = vunpack.c.l.s4 1983009808
        %v4956 = vunpack.c.0.s8 %v4955
        %v4957 = vlaneseq
        %v4958 = vshrl.u32 %v4957, 7
        %v4959 = vsub.s32 %v4956, %v4958
        %v4960 = vrot.slane %v4952, %v4959
        %v4962 = vunpack.c.l.s4 1983009808
        %v4963 = vunpack.c.0.s8 %v4962
        %v4964 = vlaneseq
        %v4965 = vshrl.u32 %v4964, 7
        %v4966 = vsub.s32 %v4963, %v4965
        %v4967 = vrot.slane %v4953, %v4966
        %v4968 = vcombine.low %v4960, %v4967
        %v4969 = vcombine.high %v4960, %v4967
        %v4971 = vunpack.c.l.s4 1983009808
        %v4972 = vunpack.c.0.s8 %v4971
        %v4973 = vlaneseq
        %v4974 = vshrl.u32 %v4973, 7
        %v4975 = vsub.s32 %v4972, %v4974
        %v4976 = vrot.slane %v4093, %v4975
        %v4977 = vcombine.high %v4976, %v4976
        %v4978 = vcombine.low %v4094, %v4095
        %v4979 = vcombine.low %v4096, %v4097
        %v4981 = vunpack.c.l.s4 1983009808
        %v4982 = vunpack.c.0.s8 %v4981
        %v4983 = vlaneseq
        %v4984 = vshrl.u32 %v4983, 7
        %v4985 = vsub.s32 %v4982, %v4984
        %v4986 = vrot.slane %v4978, %v4985
        %v4988 = vunpack.c.l.s4 1983009808
        %v4989 = vunpack.c.0.s8 %v4988
        %v4990 = vlaneseq
        %v4991 = vshrl.u32 %v4990, 7
        %v4992 = vsub.s32 %v4989, %v4991
        %v4993 = vrot.slane %v4979, %v4992
        %v4994 = vcombine.low %v4986, %v4993
        %v4995 = vcombine.high %v4986, %v4993
        %v4996 = vcombine.low %v4098, %v4099
        %v4997 = vcombine.low %v4100, %v4101
        %v4999 = vunpack.c.l.s4 1983009808
        %v5000 = vunpack.c.0.s8 %v4999
        %v5001 = vlaneseq
        %v5002 = vshrl.u32 %v5001, 7
        %v5003 = vsub.s32 %v5000, %v5002
        %v5004 = vrot.slane %v4996, %v5003
        %v5006 = vunpack.c.l.s4 1983009808
        %v5007 = vunpack.c.0.s8 %v5006
        %v5008 = vlaneseq
        %v5009 = vshrl.u32 %v5008, 7
        %v5010 = vsub.s32 %v5007, %v5009
        %v5011 = vrot.slane %v4997, %v5010
        %v5012 = vcombine.low %v5004, %v5011
        %v5013 = vcombine.high %v5004, %v5011
        %v5015 = vunpack.c.l.s4 1983009808
        %v5016 = vunpack.c.0.s8 %v5015
        %v5017 = vlaneseq
        %v5018 = vshrl.u32 %v5017, 7
        %v5019 = vsub.s32 %v5016, %v5018
        %v5020 = vrot.slane %v4102, %v5019
        %v5021 = vcombine.high %v5020, %v5020
        %v5022 = vcombine.low %v4103, %v4104
        %v5023 = vcombine.low %v4105, %v4106
        %v5025 = vunpack.c.l.s4 1983009808
        %v5026 = vunpack.c.0.s8 %v5025
        %v5027 = vlaneseq
        %v5028 = vshrl.u32 %v5027, 7
        %v5029 = vsub.s32 %v5026, %v5028
        %v5030 = vrot.slane %v5022, %v5029
        %v5032 = vunpack.c.l.s4 1983009808
        %v5033 = vunpack.c.0.s8 %v5032
        %v5034 = vlaneseq
        %v5035 = vshrl.u32 %v5034, 7
        %v5036 = vsub.s32 %v5033, %v5035
        %v5037 = vrot.slane %v5023, %v5036
        %v5038 = vcombine.low %v5030, %v5037
        %v5039 = vcombine.high %v5030, %v5037
        %v5040 = vcombine.low %v4107, %v4108
        %v5041 = vcombine.low %v4109, %v4110
        %v5043 = vunpack.c.l.s4 1983009808
        %v5044 = vunpack.c.0.s8 %v5043
        %v5045 = vlaneseq
        %v5046 = vshrl.u32 %v5045, 7
        %v5047 = vsub.s32 %v5044, %v5046
        %v5048 = vrot.slane %v5040, %v5047
        %v5050 = vunpack.c.l.s4 1983009808
        %v5051 = vunpack.c.0.s8 %v5050
        %v5052 = vlaneseq
        %v5053 = vshrl.u32 %v5052, 7
        %v5054 = vsub.s32 %v5051, %v5053
        %v5055 = vrot.slane %v5041, %v5054
        %v5056 = vcombine.low %v5048, %v5055
        %v5057 = vcombine.high %v5048, %v5055
        %v5059 = vunpack.c.l.s4 1983009808
        %v5060 = vunpack.c.0.s8 %v5059
        %v5061 = vlaneseq
        %v5062 = vshrl.u32 %v5061, 7
        %v5063 = vsub.s32 %v5060, %v5062
        %v5064 = vrot.slane %v4111, %v5063
        %v5065 = vcombine.high %v5064, %v5064
        %v5174 = vpack.c.bf16 %v4308, %v4290
        %v5175 = vpack.c.bf16 %v4309, %v4291
        %v5176 = vpack.c.bf16 %v4316, %v4316
        %v5177 = vpack.c.bf16 %v4317, %v4317
        %v5178 = vpack.c.bf16 %v4352, %v4334
        %v5179 = vpack.c.bf16 %v4353, %v4335
        %v5180 = vpack.c.bf16 %v4360, %v4360
        %v5181 = vpack.c.bf16 %v4361, %v4361
        %v5182 = vpack.c.bf16 %v4396, %v4378
        %v5183 = vpack.c.bf16 %v4397, %v4379
        %v5184 = vpack.c.bf16 %v4404, %v4404
        %v5185 = vpack.c.bf16 %v4405, %v4405
        %v5186 = vpack.c.bf16 %v4440, %v4422
        %v5187 = vpack.c.bf16 %v4441, %v4423
        %v5188 = vpack.c.bf16 %v4448, %v4448
        %v5189 = vpack.c.bf16 %v4449, %v4449
        %v5190 = vpack.c.bf16 %v4484, %v4466
        %v5191 = vpack.c.bf16 %v4485, %v4467
        %v5192 = vpack.c.bf16 %v4492, %v4492
        %v5193 = vpack.c.bf16 %v4493, %v4493
        %v5194 = vpack.c.bf16 %v4528, %v4510
        %v5195 = vpack.c.bf16 %v4529, %v4511
        %v5196 = vpack.c.bf16 %v4536, %v4536
        %v5197 = vpack.c.bf16 %v4537, %v4537
        %v5198 = vpack.c.bf16 %v4572, %v4554
        %v5199 = vpack.c.bf16 %v4573, %v4555
        %v5200 = vpack.c.bf16 %v4580, %v4580
        %v5201 = vpack.c.bf16 %v4581, %v4581
        %v5202 = vpack.c.bf16 %v4616, %v4598
        %v5203 = vpack.c.bf16 %v4617, %v4599
        %v5204 = vpack.c.bf16 %v4624, %v4624
        %v5205 = vpack.c.bf16 %v4625, %v4625
        %v5206 = vpack.c.bf16 %v4660, %v4642
        %v5207 = vpack.c.bf16 %v4661, %v4643
        %v5208 = vpack.c.bf16 %v4668, %v4668
        %v5209 = vpack.c.bf16 %v4669, %v4669
        %v5210 = vpack.c.bf16 %v4704, %v4686
        %v5211 = vpack.c.bf16 %v4705, %v4687
        %v5212 = vpack.c.bf16 %v4712, %v4712
        %v5213 = vpack.c.bf16 %v4713, %v4713
        %v5214 = vpack.c.bf16 %v4748, %v4730
        %v5215 = vpack.c.bf16 %v4749, %v4731
        %v5216 = vpack.c.bf16 %v4756, %v4756
        %v5217 = vpack.c.bf16 %v4757, %v4757
        %v5218 = vpack.c.bf16 %v4792, %v4774
        %v5219 = vpack.c.bf16 %v4793, %v4775
        %v5220 = vpack.c.bf16 %v4800, %v4800
        %v5221 = vpack.c.bf16 %v4801, %v4801
        %v5222 = vpack.c.bf16 %v4836, %v4818
        %v5223 = vpack.c.bf16 %v4837, %v4819
        %v5224 = vpack.c.bf16 %v4844, %v4844
        %v5225 = vpack.c.bf16 %v4845, %v4845
        %v5226 = vpack.c.bf16 %v4880, %v4862
        %v5227 = vpack.c.bf16 %v4881, %v4863
        %v5228 = vpack.c.bf16 %v4888, %v4888
        %v5229 = vpack.c.bf16 %v4889, %v4889
        %v5230 = vpack.c.bf16 %v4924, %v4906
        %v5231 = vpack.c.bf16 %v4925, %v4907
        %v5232 = vpack.c.bf16 %v4932, %v4932
        %v5233 = vpack.c.bf16 %v4933, %v4933
        %v5234 = vpack.c.bf16 %v4968, %v4950
        %v5235 = vpack.c.bf16 %v4969, %v4951
        %v5236 = vpack.c.bf16 %v4976, %v4976
        %v5237 = vpack.c.bf16 %v4977, %v4977
        %v5238 = vpack.c.bf16 %v5012, %v4994
        %v5239 = vpack.c.bf16 %v5013, %v4995
        %v5240 = vpack.c.bf16 %v5020, %v5020
        %v5241 = vpack.c.bf16 %v5021, %v5021
        %v5242 = vpack.c.bf16 %v5056, %v5038
        %v5243 = vpack.c.bf16 %v5057, %v5039
        %v5244 = vpack.c.bf16 %v5064, %v5064
        %v5245 = vpack.c.bf16 %v5065, %v5065
        %v5318 = vunpack.c.l.b16 %v5174
        %v5319 = vunpack.c.l.b16 %v5175
        %v5320 = vunpack.c.h.b16 %v5174
        %v5321 = vunpack.c.h.b16 %v5175
        %v5322 = vunpack.c.l.b16 %v5176
        %v5323 = vunpack.c.l.b16 %v5177
        %v5324 = vunpack.c.l.b16 %v5178
        %v5325 = vunpack.c.l.b16 %v5179
        %v5326 = vunpack.c.h.b16 %v5178
        %v5327 = vunpack.c.h.b16 %v5179
        %v5328 = vunpack.c.l.b16 %v5180
        %v5329 = vunpack.c.l.b16 %v5181
        %v5330 = vunpack.c.l.b16 %v5182
        %v5331 = vunpack.c.l.b16 %v5183
        %v5332 = vunpack.c.h.b16 %v5182
        %v5333 = vunpack.c.h.b16 %v5183
        %v5334 = vunpack.c.l.b16 %v5184
        %v5335 = vunpack.c.l.b16 %v5185
        %v5336 = vunpack.c.l.b16 %v5186
        %v5337 = vunpack.c.l.b16 %v5187
        %v5338 = vunpack.c.h.b16 %v5186
        %v5339 = vunpack.c.h.b16 %v5187
        %v5340 = vunpack.c.l.b16 %v5188
        %v5341 = vunpack.c.l.b16 %v5189
        %v5342 = vunpack.c.l.b16 %v5190
        %v5343 = vunpack.c.l.b16 %v5191
        %v5344 = vunpack.c.h.b16 %v5190
        %v5345 = vunpack.c.h.b16 %v5191
        %v5346 = vunpack.c.l.b16 %v5192
        %v5347 = vunpack.c.l.b16 %v5193
        %v5348 = vunpack.c.l.b16 %v5194
        %v5349 = vunpack.c.l.b16 %v5195
        %v5350 = vunpack.c.h.b16 %v5194
        %v5351 = vunpack.c.h.b16 %v5195
        %v5352 = vunpack.c.l.b16 %v5196
        %v5353 = vunpack.c.l.b16 %v5197
        %v5354 = vunpack.c.l.b16 %v5198
        %v5355 = vunpack.c.l.b16 %v5199
        %v5356 = vunpack.c.h.b16 %v5198
        %v5357 = vunpack.c.h.b16 %v5199
        %v5358 = vunpack.c.l.b16 %v5200
        %v5359 = vunpack.c.l.b16 %v5201
        %v5360 = vunpack.c.l.b16 %v5202
        %v5361 = vunpack.c.l.b16 %v5203
        %v5362 = vunpack.c.h.b16 %v5202
        %v5363 = vunpack.c.h.b16 %v5203
        %v5364 = vunpack.c.l.b16 %v5204
        %v5365 = vunpack.c.l.b16 %v5205
        %v5366 = vunpack.c.l.b16 %v5206
        %v5367 = vunpack.c.l.b16 %v5207
        %v5368 = vunpack.c.h.b16 %v5206
        %v5369 = vunpack.c.h.b16 %v5207
        %v5370 = vunpack.c.l.b16 %v5208
        %v5371 = vunpack.c.l.b16 %v5209
        %v5372 = vunpack.c.l.b16 %v5210
        %v5373 = vunpack.c.l.b16 %v5211
        %v5374 = vunpack.c.h.b16 %v5210
        %v5375 = vunpack.c.h.b16 %v5211
        %v5376 = vunpack.c.l.b16 %v5212
        %v5377 = vunpack.c.l.b16 %v5213
        %v5378 = vunpack.c.l.b16 %v5214
        %v5379 = vunpack.c.l.b16 %v5215
        %v5380 = vunpack.c.h.b16 %v5214
        %v5381 = vunpack.c.h.b16 %v5215
        %v5382 = vunpack.c.l.b16 %v5216
        %v5383 = vunpack.c.l.b16 %v5217
        %v5384 = vunpack.c.l.b16 %v5218
        %v5385 = vunpack.c.l.b16 %v5219
        %v5386 = vunpack.c.h.b16 %v5218
        %v5387 = vunpack.c.h.b16 %v5219
        %v5388 = vunpack.c.l.b16 %v5220
        %v5389 = vunpack.c.l.b16 %v5221
        %v5390 = vunpack.c.l.b16 %v5222
        %v5391 = vunpack.c.l.b16 %v5223
        %v5392 = vunpack.c.h.b16 %v5222
        %v5393 = vunpack.c.h.b16 %v5223
        %v5394 = vunpack.c.l.b16 %v5224
        %v5395 = vunpack.c.l.b16 %v5225
        %v5396 = vunpack.c.l.b16 %v5226
        %v5397 = vunpack.c.l.b16 %v5227
        %v5398 = vunpack.c.h.b16 %v5226
        %v5399 = vunpack.c.h.b16 %v5227
        %v5400 = vunpack.c.l.b16 %v5228
        %v5401 = vunpack.c.l.b16 %v5229
        %v5402 = vunpack.c.l.b16 %v5230
        %v5403 = vunpack.c.l.b16 %v5231
        %v5404 = vunpack.c.h.b16 %v5230
        %v5405 = vunpack.c.h.b16 %v5231
        %v5406 = vunpack.c.l.b16 %v5232
        %v5407 = vunpack.c.l.b16 %v5233
        %v5408 = vunpack.c.l.b16 %v5234
        %v5409 = vunpack.c.l.b16 %v5235
        %v5410 = vunpack.c.h.b16 %v5234
        %v5411 = vunpack.c.h.b16 %v5235
        %v5412 = vunpack.c.l.b16 %v5236
        %v5413 = vunpack.c.l.b16 %v5237
        %v5414 = vunpack.c.l.b16 %v5238
        %v5415 = vunpack.c.l.b16 %v5239
        %v5416 = vunpack.c.h.b16 %v5238
        %v5417 = vunpack.c.h.b16 %v5239
        %v5418 = vunpack.c.l.b16 %v5240
        %v5419 = vunpack.c.l.b16 %v5241
        %v5420 = vunpack.c.l.b16 %v5242
        %v5421 = vunpack.c.l.b16 %v5243
        %v5422 = vunpack.c.h.b16 %v5242
        %v5423 = vunpack.c.h.b16 %v5243
        %v5424 = vunpack.c.l.b16 %v5244
        %v5425 = vunpack.c.l.b16 %v5245
        %v5426 = vpack.c.b16 %v5319, %v5318
        %v5427 = vpack.c.b16 %v5321, %v5320
        %v5428 = vpack.c.b16 %v5323, %v5322
        %v5429 = vpack.c.b16 %v5325, %v5324
        %v5430 = vpack.c.b16 %v5327, %v5326
        %v5431 = vpack.c.b16 %v5329, %v5328
        %v5432 = vpack.c.b16 %v5331, %v5330
        %v5433 = vpack.c.b16 %v5333, %v5332
        %v5434 = vpack.c.b16 %v5335, %v5334
        %v5435 = vpack.c.b16 %v5337, %v5336
        %v5436 = vpack.c.b16 %v5339, %v5338
        %v5437 = vpack.c.b16 %v5341, %v5340
        %v5438 = vpack.c.b16 %v5343, %v5342
        %v5439 = vpack.c.b16 %v5345, %v5344
        %v5440 = vpack.c.b16 %v5347, %v5346
        %v5441 = vpack.c.b16 %v5349, %v5348
        %v5442 = vpack.c.b16 %v5351, %v5350
        %v5443 = vpack.c.b16 %v5353, %v5352
        %v5444 = vpack.c.b16 %v5355, %v5354
        %v5445 = vpack.c.b16 %v5357, %v5356
        %v5446 = vpack.c.b16 %v5359, %v5358
        %v5447 = vpack.c.b16 %v5361, %v5360
        %v5448 = vpack.c.b16 %v5363, %v5362
        %v5449 = vpack.c.b16 %v5365, %v5364
        %v5450 = vpack.c.b16 %v5367, %v5366
        %v5451 = vpack.c.b16 %v5369, %v5368
        %v5452 = vpack.c.b16 %v5371, %v5370
        %v5453 = vpack.c.b16 %v5373, %v5372
        %v5454 = vpack.c.b16 %v5375, %v5374
        %v5455 = vpack.c.b16 %v5377, %v5376
        %v5456 = vpack.c.b16 %v5379, %v5378
        %v5457 = vpack.c.b16 %v5381, %v5380
        %v5458 = vpack.c.b16 %v5383, %v5382
        %v5459 = vpack.c.b16 %v5385, %v5384
        %v5460 = vpack.c.b16 %v5387, %v5386
        %v5461 = vpack.c.b16 %v5389, %v5388
        %v5462 = vpack.c.b16 %v5391, %v5390
        %v5463 = vpack.c.b16 %v5393, %v5392
        %v5464 = vpack.c.b16 %v5395, %v5394
        %v5465 = vpack.c.b16 %v5397, %v5396
        %v5466 = vpack.c.b16 %v5399, %v5398
        %v5467 = vpack.c.b16 %v5401, %v5400
        %v5468 = vpack.c.b16 %v5403, %v5402
        %v5469 = vpack.c.b16 %v5405, %v5404
        %v5470 = vpack.c.b16 %v5407, %v5406
        %v5471 = vpack.c.b16 %v5409, %v5408
        %v5472 = vpack.c.b16 %v5411, %v5410
        %v5473 = vpack.c.b16 %v5413, %v5412
        %v5474 = vpack.c.b16 %v5415, %v5414
        %v5475 = vpack.c.b16 %v5417, %v5416
        %v5476 = vpack.c.b16 %v5419, %v5418
        %v5477 = vpack.c.b16 %v5421, %v5420
        %v5478 = vpack.c.b16 %v5423, %v5422
        %v5479 = vpack.c.b16 %v5425, %v5424
        %5534 = vst [vmem:[#allocation2] sm:$0xff] %v5426
        %5535 = vst [vmem:[#allocation2 + $0x8] sm:$0xff] %v5427
        %5536 = vst [vmem:[#allocation2 + $0x10] sm:$0x11] %v5428
        %5537 = vst [vmem:[#allocation2 + $0x18] sm:$0xff] %v5429
        %5538 = vst [vmem:[#allocation2 + $0x20] sm:$0xff] %v5430
        %5539 = vst [vmem:[#allocation2 + $0x28] sm:$0x11] %v5431
        %5540 = vst [vmem:[#allocation2 + $0x30] sm:$0xff] %v5432
        %5541 = vst [vmem:[#allocation2 + $0x38] sm:$0xff] %v5433
        %5542 = vst [vmem:[#allocation2 + $0x40] sm:$0x11] %v5434
        %5543 = vst [vmem:[#allocation2 + $0x48] sm:$0xff] %v5435
        %5544 = vst [vmem:[#allocation2 + $0x50] sm:$0xff] %v5436
        %5545 = vst [vmem:[#allocation2 + $0x58] sm:$0x11] %v5437
        %5546 = vst [vmem:[#allocation2 + $0x60] sm:$0xff] %v5438
        %5547 = vst [vmem:[#allocation2 + $0x68] sm:$0xff] %v5439
        %5548 = vst [vmem:[#allocation2 + $0x70] sm:$0x11] %v5440
        %5549 = vst [vmem:[#allocation2 + $0x78] sm:$0xff] %v5441
        %5550 = vst [vmem:[#allocation2 + $0x80] sm:$0xff] %v5442
        %5551 = vst [vmem:[#allocation2 + $0x88] sm:$0x11] %v5443
        %5552 = vst [vmem:[#allocation2 + $0x90] sm:$0xff] %v5444
        %5553 = vst [vmem:[#allocation2 + $0x98] sm:$0xff] %v5445
        %5554 = vst [vmem:[#allocation2 + $0xa0] sm:$0x11] %v5446
        %5555 = vst [vmem:[#allocation2 + $0xa8] sm:$0xff] %v5447
        %5556 = vst [vmem:[#allocation2 + $0xb0] sm:$0xff] %v5448
        %5557 = vst [vmem:[#allocation2 + $0xb8] sm:$0x11] %v5449
        %5558 = vst [vmem:[#allocation2 + $0xc0] sm:$0xff] %v5450
        %5559 = vst [vmem:[#allocation2 + $0xc8] sm:$0xff] %v5451
        %5560 = vst [vmem:[#allocation2 + $0xd0] sm:$0x11] %v5452
        %5561 = vst [vmem:[#allocation2 + $0xd8] sm:$0xff] %v5453
        %5562 = vst [vmem:[#allocation2 + $0xe0] sm:$0xff] %v5454
        %5563 = vst [vmem:[#allocation2 + $0xe8] sm:$0x11] %v5455
        %5564 = vst [vmem:[#allocation2 + $0xf0] sm:$0xff] %v5456
        %5565 = vst [vmem:[#allocation2 + $0xf8] sm:$0xff] %v5457
        %5566 = vst [vmem:[#allocation2 + $0x100] sm:$0x11] %v5458
        %5567 = vst [vmem:[#allocation2 + $0x108] sm:$0xff] %v5459
        %5568 = vst [vmem:[#allocation2 + $0x110] sm:$0xff] %v5460
        %5569 = vst [vmem:[#allocation2 + $0x118] sm:$0x11] %v5461
        %5570 = vst [vmem:[#allocation2 + $0x120] sm:$0xff] %v5462
        %5571 = vst [vmem:[#allocation2 + $0x128] sm:$0xff] %v5463
        %5572 = vst [vmem:[#allocation2 + $0x130] sm:$0x11] %v5464
        %5573 = vst [vmem:[#allocation2 + $0x138] sm:$0xff] %v5465
        %5574 = vst [vmem:[#allocation2 + $0x140] sm:$0xff] %v5466
        %5575 = vst [vmem:[#allocation2 + $0x148] sm:$0x11] %v5467
        %5576 = vst [vmem:[#allocation2 + $0x150] sm:$0xff] %v5468
        %5577 = vst [vmem:[#allocation2 + $0x158] sm:$0xff] %v5469
        %5578 = vst [vmem:[#allocation2 + $0x160] sm:$0x11] %v5470
        %5579 = vst [vmem:[#allocation2 + $0x168] sm:$0xff] %v5471
        %5580 = vst [vmem:[#allocation2 + $0x170] sm:$0xff] %v5472
        %5581 = vst [vmem:[#allocation2 + $0x178] sm:$0x11] %v5473
        %5582 = vst [vmem:[#allocation2 + $0x180] sm:$0xff] %v5474
        %5583 = vst [vmem:[#allocation2 + $0x188] sm:$0xff] %v5475
        %5584 = vst [vmem:[#allocation2 + $0x190] sm:$0x11] %v5476
        %5585 = vst [vmem:[#allocation2 + $0x198] sm:$0xff] %v5477
        %5586 = vst [vmem:[#allocation2 + $0x1a0] sm:$0xff] %v5478
        %5587 = vst [vmem:[#allocation2 + $0x1a8] sm:$0x11] %v5479
        %vm5588 = vcmask 1040384
        %vm5589 = vsmask.f32 256
        %vm5590 = vmand %vm5588, %vm5589
        %vm5591 = vcmask 1044484
        %vm5592 = vsmask.f32 4352
        %vm5593 = vmand %vm5591, %vm5592
        %vm5594 = vmor %vm5593, %vm5590
        %v5595 = vld [vmem:[#allocation2] sm:$0x11]
        %v5596 = vsel %vm5594, 0, %v5595
        %5597 = vst [vmem:[#allocation2] sm:$0x11] %v5596
        %v5598 = vld [vmem:[#allocation2 + $0x18] sm:$0x11]
        %v5599 = vsel %vm5594, 0, %v5598
        %5600 = vst [vmem:[#allocation2 + $0x18] sm:$0x11] %v5599
        %v5601 = vld [vmem:[#allocation2 + $0x30] sm:$0x11]
        %v5602 = vsel %vm5594, 0, %v5601
        %5603 = vst [vmem:[#allocation2 + $0x30] sm:$0x11] %v5602
        %v5604 = vld [vmem:[#allocation2 + $0x48] sm:$0x11]
        %v5605 = vsel %vm5594, 0, %v5604
        %5606 = vst [vmem:[#allocation2 + $0x48] sm:$0x11] %v5605
        %v5607 = vld [vmem:[#allocation2 + $0x60] sm:$0x11]
        %v5608 = vsel %vm5594, 0, %v5607
        %5609 = vst [vmem:[#allocation2 + $0x60] sm:$0x11] %v5608
        %v5610 = vld [vmem:[#allocation2 + $0x78] sm:$0x11]
        %v5611 = vsel %vm5594, 0, %v5610
        %5612 = vst [vmem:[#allocation2 + $0x78] sm:$0x11] %v5611
        %v5613 = vld [vmem:[#allocation2 + $0x90] sm:$0x11]
        %v5614 = vsel %vm5594, 0, %v5613
        %5615 = vst [vmem:[#allocation2 + $0x90] sm:$0x11] %v5614
        %v5616 = vld [vmem:[#allocation2 + $0xa8] sm:$0x11]
        %v5617 = vsel %vm5594, 0, %v5616
        %5618 = vst [vmem:[#allocation2 + $0xa8] sm:$0x11] %v5617
        %v5619 = vld [vmem:[#allocation2 + $0xc0] sm:$0x11]
        %v5620 = vsel %vm5594, 0, %v5619
        %5621 = vst [vmem:[#allocation2 + $0xc0] sm:$0x11] %v5620
        %v5622 = vld [vmem:[#allocation2 + $0xd8] sm:$0x11]
        %v5623 = vsel %vm5594, 0, %v5622
        %5624 = vst [vmem:[#allocation2 + $0xd8] sm:$0x11] %v5623
        %v5625 = vld [vmem:[#allocation2 + $0xf0] sm:$0x11]
        %v5626 = vsel %vm5594, 0, %v5625
        %5627 = vst [vmem:[#allocation2 + $0xf0] sm:$0x11] %v5626
        %v5628 = vld [vmem:[#allocation2 + $0x108] sm:$0x11]
        %v5629 = vsel %vm5594, 0, %v5628
        %5630 = vst [vmem:[#allocation2 + $0x108] sm:$0x11] %v5629
        %v5631 = vld [vmem:[#allocation2 + $0x120] sm:$0x11]
        %v5632 = vsel %vm5594, 0, %v5631
        %5633 = vst [vmem:[#allocation2 + $0x120] sm:$0x11] %v5632
        %v5634 = vld [vmem:[#allocation2 + $0x138] sm:$0x11]
        %v5635 = vsel %vm5594, 0, %v5634
        %5636 = vst [vmem:[#allocation2 + $0x138] sm:$0x11] %v5635
        %v5637 = vld [vmem:[#allocation2 + $0x150] sm:$0x11]
        %v5638 = vsel %vm5594, 0, %v5637
        %5639 = vst [vmem:[#allocation2 + $0x150] sm:$0x11] %v5638
        %v5640 = vld [vmem:[#allocation2 + $0x168] sm:$0x11]
        %v5641 = vsel %vm5594, 0, %v5640
        %5642 = vst [vmem:[#allocation2 + $0x168] sm:$0x11] %v5641
        %v5643 = vld [vmem:[#allocation2 + $0x180] sm:$0x11]
        %v5644 = vsel %vm5594, 0, %v5643
        %5645 = vst [vmem:[#allocation2 + $0x180] sm:$0x11] %v5644
        %v5646 = vld [vmem:[#allocation2 + $0x198] sm:$0x11]
        %v5647 = vsel %vm5594, 0, %v5646
        %5648 = vst [vmem:[#allocation2 + $0x198] sm:$0x11] %v5647
        %vm5649 = vsmask.f32 7938
        %vm5650 = vmand %vm5588, %vm5649
        %vm5651 = vsmask.f32 7954
        %vm5652 = vmand %vm5591, %vm5651
        %vm5653 = vmor %vm5652, %vm5650
        %v5654 = vld [vmem:[#allocation2 + $0x10] sm:$0x11]
        %v5655 = vsel %vm5653, 0, %v5654
        %5656 = vst [vmem:[#allocation2 + $0x10] sm:$0x11] %v5655
        %v5657 = vld [vmem:[#allocation2 + $0x28] sm:$0x11]
        %v5658 = vsel %vm5653, 0, %v5657
        %5659 = vst [vmem:[#allocation2 + $0x28] sm:$0x11] %v5658
        %v5660 = vld [vmem:[#allocation2 + $0x40] sm:$0x11]
        %v5661 = vsel %vm5653, 0, %v5660
        %5662 = vst [vmem:[#allocation2 + $0x40] sm:$0x11] %v5661
        %v5663 = vld [vmem:[#allocation2 + $0x58] sm:$0x11]
        %v5664 = vsel %vm5653, 0, %v5663
        %5665 = vst [vmem:[#allocation2 + $0x58] sm:$0x11] %v5664
        %v5666 = vld [vmem:[#allocation2 + $0x70] sm:$0x11]
        %v5667 = vsel %vm5653, 0, %v5666
        %5668 = vst [vmem:[#allocation2 + $0x70] sm:$0x11] %v5667
        %v5669 = vld [vmem:[#allocation2 + $0x88] sm:$0x11]
        %v5670 = vsel %vm5653, 0, %v5669
        %5671 = vst [vmem:[#allocation2 + $0x88] sm:$0x11] %v5670
        %v5672 = vld [vmem:[#allocation2 + $0xa0] sm:$0x11]
        %v5673 = vsel %vm5653, 0, %v5672
        %5674 = vst [vmem:[#allocation2 + $0xa0] sm:$0x11] %v5673
        %v5675 = vld [vmem:[#allocation2 + $0xb8] sm:$0x11]
        %v5676 = vsel %vm5653, 0, %v5675
        %5677 = vst [vmem:[#allocation2 + $0xb8] sm:$0x11] %v5676
        %v5678 = vld [vmem:[#allocation2 + $0xd0] sm:$0x11]
        %v5679 = vsel %vm5653, 0, %v5678
        %5680 = vst [vmem:[#allocation2 + $0xd0] sm:$0x11] %v5679
        %v5681 = vld [vmem:[#allocation2 + $0xe8] sm:$0x11]
        %v5682 = vsel %vm5653, 0, %v5681
        %5683 = vst [vmem:[#allocation2 + $0xe8] sm:$0x11] %v5682
        %v5684 = vld [vmem:[#allocation2 + $0x100] sm:$0x11]
        %v5685 = vsel %vm5653, 0, %v5684
        %5686 = vst [vmem:[#allocation2 + $0x100] sm:$0x11] %v5685
        %v5687 = vld [vmem:[#allocation2 + $0x118] sm:$0x11]
        %v5688 = vsel %vm5653, 0, %v5687
        %5689 = vst [vmem:[#allocation2 + $0x118] sm:$0x11] %v5688
        %v5690 = vld [vmem:[#allocation2 + $0x130] sm:$0x11]
        %v5691 = vsel %vm5653, 0, %v5690
        %5692 = vst [vmem:[#allocation2 + $0x130] sm:$0x11] %v5691
        %v5693 = vld [vmem:[#allocation2 + $0x148] sm:$0x11]
        %v5694 = vsel %vm5653, 0, %v5693
        %5695 = vst [vmem:[#allocation2 + $0x148] sm:$0x11] %v5694
        %v5696 = vld [vmem:[#allocation2 + $0x160] sm:$0x11]
        %v5697 = vsel %vm5653, 0, %v5696
        %5698 = vst [vmem:[#allocation2 + $0x160] sm:$0x11] %v5697
        %v5699 = vld [vmem:[#allocation2 + $0x178] sm:$0x11]
        %v5700 = vsel %vm5653, 0, %v5699
        %5701 = vst [vmem:[#allocation2 + $0x178] sm:$0x11] %v5700
        %v5702 = vld [vmem:[#allocation2 + $0x190] sm:$0x11]
        %v5703 = vsel %vm5653, 0, %v5702
        %5704 = vst [vmem:[#allocation2 + $0x190] sm:$0x11] %v5703
        %v5705 = vld [vmem:[#allocation2 + $0x1a8] sm:$0x11]
        %v5706 = vsel %vm5653, 0, %v5705
        %5707 = vst [vmem:[#allocation2 + $0x1a8] sm:$0x11] %v5706
        %p5708 = scmp.eq.s32.totalorder %s27, 0
        // Predicated region
        $region57: #{tpu_custom_call.1} parent=39 // pred_check
          %p5709 = pneg %p5708
        $region58: #{tpu_custom_call.1} parent=39 // pred_check_branch
          %5711 = sbr.rel (%p5709) target = $region60
        $region59: #{tpu_custom_call.1} parent=39 // pred_region
          %5712 = vst [vmem:[#allocation2] sm:$0xff] 0
          %5713 = vst [vmem:[#allocation2 + $0x8] sm:$0xff] 0
          %5714 = vst [vmem:[#allocation2 + $0x10] sm:$0x11] 0
          %s5715 = scalar_lea.vmem [#allocation2], 408
          %5716 = vst [vmem:[%s5715] sm:$0xff] 0
          %5717 = vst [vmem:[%s5715 + $0x8] sm:$0xff] 0
          %5718 = vst [vmem:[%s5715 + $0x10] sm:$0x11] 0
        $region60: #{tpu_custom_call.1} parent=39 // pred_fallthru
          _
        %v5719 = vld [vmem:[#allocation2] sm:$0xff]
        %v5720 = vld [vmem:[#allocation2 + $0x8] sm:$0xff]
        %v5721 = vld [vmem:[#allocation2 + $0x18] sm:$0xff]
        %v5722 = vld [vmem:[#allocation2 + $0x20] sm:$0xff]
        %v5723 = vld [vmem:[#allocation2 + $0x30] sm:$0xff]
        %v5724 = vld [vmem:[#allocation2 + $0x38] sm:$0xff]
        %v5725 = vld [vmem:[#allocation2 + $0x48] sm:$0xff]
        %v5726 = vld [vmem:[#allocation2 + $0x50] sm:$0xff]
        %v5727 = vld [vmem:[#allocation2 + $0x60] sm:$0xff]
        %v5728 = vld [vmem:[#allocation2 + $0x68] sm:$0xff]
        %v5729 = vld [vmem:[#allocation2 + $0x78] sm:$0xff]
        %v5730 = vld [vmem:[#allocation2 + $0x80] sm:$0xff]
        %v5731 = vld [vmem:[#allocation2 + $0x90] sm:$0xff]
        %v5732 = vld [vmem:[#allocation2 + $0x98] sm:$0xff]
        %v5733 = vld [vmem:[#allocation2 + $0xa8] sm:$0xff]
        %v5734 = vld [vmem:[#allocation2 + $0xb0] sm:$0xff]
        %v5735 = vld [vmem:[#allocation2 + $0xc0] sm:$0xff]
        %v5736 = vld [vmem:[#allocation2 + $0xc8] sm:$0xff]
        %v5737 = vld [vmem:[#allocation2 + $0xd8] sm:$0xff]
        %v5738 = vld [vmem:[#allocation2 + $0xe0] sm:$0xff]
        %v5739 = vld [vmem:[#allocation2 + $0xf0] sm:$0xff]
        %v5740 = vld [vmem:[#allocation2 + $0xf8] sm:$0xff]
        %v5741 = vld [vmem:[#allocation2 + $0x108] sm:$0xff]
        %v5742 = vld [vmem:[#allocation2 + $0x110] sm:$0xff]
        %v5743 = vld [vmem:[#allocation2 + $0x120] sm:$0xff]
        %v5744 = vld [vmem:[#allocation2 + $0x128] sm:$0xff]
        %v5745 = vld [vmem:[#allocation2 + $0x138] sm:$0xff]
        %v5746 = vld [vmem:[#allocation2 + $0x140] sm:$0xff]
        %v5747 = vld [vmem:[#allocation2 + $0x150] sm:$0xff]
        %v5748 = vld [vmem:[#allocation2 + $0x158] sm:$0xff]
        %v5749 = vld [vmem:[#allocation2 + $0x168] sm:$0xff]
        %v5750 = vld [vmem:[#allocation2 + $0x170] sm:$0xff]
        %v5751 = vld [vmem:[#allocation8] sm:$0xff]
        %v5752 = vld [vmem:[#allocation8 + $0x8] sm:$0xff]
        %v5753 = vld [vmem:[#allocation8 + $0x10] sm:$0xff]
        %v5754 = vld [vmem:[#allocation8 + $0x18] sm:$0xff]
        %v5755 = vld [vmem:[#allocation8 + $0x20] sm:$0xff]
        %v5756 = vld [vmem:[#allocation8 + $0x28] sm:$0xff]
        %v5757 = vld [vmem:[#allocation8 + $0x30] sm:$0xff]
        %v5758 = vld [vmem:[#allocation8 + $0x38] sm:$0xff]
        %v5759 = vld [vmem:[#allocation8 + $0x40] sm:$0xff]
        %v5760 = vld [vmem:[#allocation8 + $0x48] sm:$0xff]
        %v5761 = vld [vmem:[#allocation8 + $0x50] sm:$0xff]
        %v5762 = vld [vmem:[#allocation8 + $0x58] sm:$0xff]
        %v5763 = vld [vmem:[#allocation8 + $0x60] sm:$0xff]
        %v5764 = vld [vmem:[#allocation8 + $0x68] sm:$0xff]
        %v5765 = vld [vmem:[#allocation8 + $0x70] sm:$0xff]
        %v5766 = vld [vmem:[#allocation8 + $0x78] sm:$0xff]
        %v5767 = vld [vmem:[#allocation8 + $0x80] sm:$0xff]
        %v5768 = vld [vmem:[#allocation8 + $0x88] sm:$0xff]
        %v5769 = vld [vmem:[#allocation8 + $0x90] sm:$0xff]
        %v5770 = vld [vmem:[#allocation8 + $0x98] sm:$0xff]
        %v5771 = vld [vmem:[#allocation8 + $0xa0] sm:$0xff]
        %v5772 = vld [vmem:[#allocation8 + $0xa8] sm:$0xff]
        %v5773 = vld [vmem:[#allocation8 + $0xb0] sm:$0xff]
        %v5774 = vld [vmem:[#allocation8 + $0xb8] sm:$0xff]
        %v5775 = vld [vmem:[#allocation8 + $0xc0] sm:$0xff]
        %v5776 = vld [vmem:[#allocation8 + $0xc8] sm:$0xff]
        %v5777 = vld [vmem:[#allocation8 + $0xd0] sm:$0xff]
        %v5778 = vld [vmem:[#allocation8 + $0xd8] sm:$0xff]
        %v5779 = vld [vmem:[#allocation8 + $0xe0] sm:$0xff]
        %v5780 = vld [vmem:[#allocation8 + $0xe8] sm:$0xff]
        %v5781 = vld [vmem:[#allocation8 + $0xf0] sm:$0xff]
        %v5782 = vld [vmem:[#allocation8 + $0xf8] sm:$0xff]
        %v5783 = vld [vmem:[#allocation2 + $0x10] sm:$0x11]
        %v5784 = vld [vmem:[#allocation2 + $0x28] sm:$0x11]
        %v5785 = vld [vmem:[#allocation2 + $0x40] sm:$0x11]
        %v5786 = vld [vmem:[#allocation2 + $0x58] sm:$0x11]
        %v5787 = vld [vmem:[#allocation2 + $0x70] sm:$0x11]
        %v5788 = vld [vmem:[#allocation2 + $0x88] sm:$0x11]
        %v5789 = vld [vmem:[#allocation2 + $0xa0] sm:$0x11]
        %v5790 = vld [vmem:[#allocation2 + $0xb8] sm:$0x11]
        %v5791 = vld [vmem:[#allocation2 + $0xd0] sm:$0x11]
        %v5792 = vld [vmem:[#allocation2 + $0xe8] sm:$0x11]
        %v5793 = vld [vmem:[#allocation2 + $0x100] sm:$0x11]
        %v5794 = vld [vmem:[#allocation2 + $0x118] sm:$0x11]
        %v5795 = vld [vmem:[#allocation2 + $0x130] sm:$0x11]
        %v5796 = vld [vmem:[#allocation2 + $0x148] sm:$0x11]
        %v5797 = vld [vmem:[#allocation2 + $0x160] sm:$0x11]
        %v5798 = vld [vmem:[#allocation2 + $0x178] sm:$0x11]
        %s5799 = scalar_lea.vmem [#allocation8], 256
        %v5800 = vld [vmem:[%s5799] sm:$0xff]
        %v5801 = vld [vmem:[%s5799 + $0x8] sm:$0xff]
        %v5802 = vld [vmem:[%s5799 + $0x10] sm:$0xff]
        %v5803 = vld [vmem:[%s5799 + $0x18] sm:$0xff]
        %v5804 = vld [vmem:[%s5799 + $0x20] sm:$0xff]
        %v5805 = vld [vmem:[%s5799 + $0x28] sm:$0xff]
        %v5806 = vld [vmem:[%s5799 + $0x30] sm:$0xff]
        %v5807 = vld [vmem:[%s5799 + $0x38] sm:$0xff]
        %v5808 = vld [vmem:[%s5799 + $0x40] sm:$0xff]
        %v5809 = vld [vmem:[%s5799 + $0x48] sm:$0xff]
        %v5810 = vld [vmem:[%s5799 + $0x50] sm:$0xff]
        %v5811 = vld [vmem:[%s5799 + $0x58] sm:$0xff]
        %v5812 = vld [vmem:[%s5799 + $0x60] sm:$0xff]
        %v5813 = vld [vmem:[%s5799 + $0x68] sm:$0xff]
        %v5814 = vld [vmem:[%s5799 + $0x70] sm:$0xff]
        %v5815 = vld [vmem:[%s5799 + $0x78] sm:$0xff]
        %v5816 = vld [vmem:[%s5799 + $0x80] sm:$0xff]
        %v5817 = vld [vmem:[%s5799 + $0x88] sm:$0xff]
        %v5818 = vld [vmem:[%s5799 + $0x90] sm:$0xff]
        %v5819 = vld [vmem:[%s5799 + $0x98] sm:$0xff]
        %v5820 = vld [vmem:[%s5799 + $0xa0] sm:$0xff]
        %v5821 = vld [vmem:[%s5799 + $0xa8] sm:$0xff]
        %v5822 = vld [vmem:[%s5799 + $0xb0] sm:$0xff]
        %v5823 = vld [vmem:[%s5799 + $0xb8] sm:$0xff]
        %v5824 = vld [vmem:[%s5799 + $0xc0] sm:$0xff]
        %v5825 = vld [vmem:[%s5799 + $0xc8] sm:$0xff]
        %v5826 = vld [vmem:[%s5799 + $0xd0] sm:$0xff]
        %v5827 = vld [vmem:[%s5799 + $0xd8] sm:$0xff]
        %v5828 = vld [vmem:[%s5799 + $0xe0] sm:$0xff]
        %v5829 = vld [vmem:[%s5799 + $0xe8] sm:$0xff]
        %v5830 = vld [vmem:[%s5799 + $0xf0] sm:$0xff]
        %v5831 = vld [vmem:[%s5799 + $0xf8] sm:$0xff]
        %vm5832 = vsmask.f32 3328
        %vm5833 = vsmask.f32 7440
        %vm5834 = vmor %vm5832, %vm5833
        %v5836 = vshrl.u32 %v5719, 16
        %v5838 = vrot.slane %v5836, 4
        %v5839 = vshll.u32 %v5719, 16
        %v5841 = vrot.slane %v5839, 5
        %v5842 = vor.u32 %v5838, %v5841
        %v5843 = vrot.slane %v5842, 4
        %v5845 = vshll.u32 %v5720, 16
        %v5847 = vrot.slane %v5845, 5
        %v5848 = vsel %vm5834, %v5843, %v5847
        %v5849 = vshrl.u32 %v5720, 16
        %v5851 = vrot.slane %v5849, 4
        %v5852 = vor.u32 %v5851, %v5847
        %v5853 = vrot.slane %v5852, 4
        %v5855 = vshll.u32 %v5783, 16
        %v5857 = vrot.slane %v5855, 5
        %v5858 = vsel %vm5834, %v5853, %v5857
        %v5860 = vshrl.u32 %v5721, 16
        %v5862 = vrot.slane %v5860, 4
        %v5863 = vshll.u32 %v5721, 16
        %v5865 = vrot.slane %v5863, 5
        %v5866 = vor.u32 %v5862, %v5865
        %v5867 = vrot.slane %v5866, 4
        %v5869 = vshll.u32 %v5722, 16
        %v5871 = vrot.slane %v5869, 5
        %v5872 = vsel %vm5834, %v5867, %v5871
        %v5873 = vshrl.u32 %v5722, 16
        %v5875 = vrot.slane %v5873, 4
        %v5876 = vor.u32 %v5875, %v5871
        %v5877 = vrot.slane %v5876, 4
        %v5879 = vshll.u32 %v5784, 16
        %v5881 = vrot.slane %v5879, 5
        %v5882 = vsel %vm5834, %v5877, %v5881
        %v5884 = vshrl.u32 %v5723, 16
        %v5886 = vrot.slane %v5884, 4
        %v5887 = vshll.u32 %v5723, 16
        %v5889 = vrot.slane %v5887, 5
        %v5890 = vor.u32 %v5886, %v5889
        %v5891 = vrot.slane %v5890, 4
        %v5893 = vshll.u32 %v5724, 16
        %v5895 = vrot.slane %v5893, 5
        %v5896 = vsel %vm5834, %v5891, %v5895
        %v5897 = vshrl.u32 %v5724, 16
        %v5899 = vrot.slane %v5897, 4
        %v5900 = vor.u32 %v5899, %v5895
        %v5901 = vrot.slane %v5900, 4
        %v5903 = vshll.u32 %v5785, 16
        %v5905 = vrot.slane %v5903, 5
        %v5906 = vsel %vm5834, %v5901, %v5905
        %v5908 = vshrl.u32 %v5725, 16
        %v5910 = vrot.slane %v5908, 4
        %v5911 = vshll.u32 %v5725, 16
        %v5913 = vrot.slane %v5911, 5
        %v5914 = vor.u32 %v5910, %v5913
        %v5915 = vrot.slane %v5914, 4
        %v5917 = vshll.u32 %v5726, 16
        %v5919 = vrot.slane %v5917, 5
        %v5920 = vsel %vm5834, %v5915, %v5919
        %v5921 = vshrl.u32 %v5726, 16
        %v5923 = vrot.slane %v5921, 4
        %v5924 = vor.u32 %v5923, %v5919
        %v5925 = vrot.slane %v5924, 4
        %v5927 = vshll.u32 %v5786, 16
        %v5929 = vrot.slane %v5927, 5
        %v5930 = vsel %vm5834, %v5925, %v5929
        %v5932 = vshrl.u32 %v5727, 16
        %v5934 = vrot.slane %v5932, 4
        %v5935 = vshll.u32 %v5727, 16
        %v5937 = vrot.slane %v5935, 5
        %v5938 = vor.u32 %v5934, %v5937
        %v5939 = vrot.slane %v5938, 4
        %v5941 = vshll.u32 %v5728, 16
        %v5943 = vrot.slane %v5941, 5
        %v5944 = vsel %vm5834, %v5939, %v5943
        %v5945 = vshrl.u32 %v5728, 16
        %v5947 = vrot.slane %v5945, 4
        %v5948 = vor.u32 %v5947, %v5943
        %v5949 = vrot.slane %v5948, 4
        %v5951 = vshll.u32 %v5787, 16
        %v5953 = vrot.slane %v5951, 5
        %v5954 = vsel %vm5834, %v5949, %v5953
        %v5956 = vshrl.u32 %v5729, 16
        %v5958 = vrot.slane %v5956, 4
        %v5959 = vshll.u32 %v5729, 16
        %v5961 = vrot.slane %v5959, 5
        %v5962 = vor.u32 %v5958, %v5961
        %v5963 = vrot.slane %v5962, 4
        %v5965 = vshll.u32 %v5730, 16
        %v5967 = vrot.slane %v5965, 5
        %v5968 = vsel %vm5834, %v5963, %v5967
        %v5969 = vshrl.u32 %v5730, 16
        %v5971 = vrot.slane %v5969, 4
        %v5972 = vor.u32 %v5971, %v5967
        %v5973 = vrot.slane %v5972, 4
        %v5975 = vshll.u32 %v5788, 16
        %v5977 = vrot.slane %v5975, 5
        %v5978 = vsel %vm5834, %v5973, %v5977
        %v5980 = vshrl.u32 %v5731, 16
        %v5982 = vrot.slane %v5980, 4
        %v5983 = vshll.u32 %v5731, 16
        %v5985 = vrot.slane %v5983, 5
        %v5986 = vor.u32 %v5982, %v5985
        %v5987 = vrot.slane %v5986, 4
        %v5989 = vshll.u32 %v5732, 16
        %v5991 = vrot.slane %v5989, 5
        %v5992 = vsel %vm5834, %v5987, %v5991
        %v5993 = vshrl.u32 %v5732, 16
        %v5995 = vrot.slane %v5993, 4
        %v5996 = vor.u32 %v5995, %v5991
        %v5997 = vrot.slane %v5996, 4
        %v5999 = vshll.u32 %v5789, 16
        %v6001 = vrot.slane %v5999, 5
        %v6002 = vsel %vm5834, %v5997, %v6001
        %v6004 = vshrl.u32 %v5733, 16
        %v6006 = vrot.slane %v6004, 4
        %v6007 = vshll.u32 %v5733, 16
        %v6009 = vrot.slane %v6007, 5
        %v6010 = vor.u32 %v6006, %v6009
        %v6011 = vrot.slane %v6010, 4
        %v6013 = vshll.u32 %v5734, 16
        %v6015 = vrot.slane %v6013, 5
        %v6016 = vsel %vm5834, %v6011, %v6015
        %v6017 = vshrl.u32 %v5734, 16
        %v6019 = vrot.slane %v6017, 4
        %v6020 = vor.u32 %v6019, %v6015
        %v6021 = vrot.slane %v6020, 4
        %v6023 = vshll.u32 %v5790, 16
        %v6025 = vrot.slane %v6023, 5
        %v6026 = vsel %vm5834, %v6021, %v6025
        %v6028 = vshrl.u32 %v5735, 16
        %v6030 = vrot.slane %v6028, 4
        %v6031 = vshll.u32 %v5735, 16
        %v6033 = vrot.slane %v6031, 5
        %v6034 = vor.u32 %v6030, %v6033
        %v6035 = vrot.slane %v6034, 4
        %v6037 = vshll.u32 %v5736, 16
        %v6039 = vrot.slane %v6037, 5
        %v6040 = vsel %vm5834, %v6035, %v6039
        %v6041 = vshrl.u32 %v5736, 16
        %v6043 = vrot.slane %v6041, 4
        %v6044 = vor.u32 %v6043, %v6039
        %v6045 = vrot.slane %v6044, 4
        %v6047 = vshll.u32 %v5791, 16
        %v6049 = vrot.slane %v6047, 5
        %v6050 = vsel %vm5834, %v6045, %v6049
        %v6052 = vshrl.u32 %v5737, 16
        %v6054 = vrot.slane %v6052, 4
        %v6055 = vshll.u32 %v5737, 16
        %v6057 = vrot.slane %v6055, 5
        %v6058 = vor.u32 %v6054, %v6057
        %v6059 = vrot.slane %v6058, 4
        %v6061 = vshll.u32 %v5738, 16
        %v6063 = vrot.slane %v6061, 5
        %v6064 = vsel %vm5834, %v6059, %v6063
        %v6065 = vshrl.u32 %v5738, 16
        %v6067 = vrot.slane %v6065, 4
        %v6068 = vor.u32 %v6067, %v6063
        %v6069 = vrot.slane %v6068, 4
        %v6071 = vshll.u32 %v5792, 16
        %v6073 = vrot.slane %v6071, 5
        %v6074 = vsel %vm5834, %v6069, %v6073
        %v6076 = vshrl.u32 %v5739, 16
        %v6078 = vrot.slane %v6076, 4
        %v6079 = vshll.u32 %v5739, 16
        %v6081 = vrot.slane %v6079, 5
        %v6082 = vor.u32 %v6078, %v6081
        %v6083 = vrot.slane %v6082, 4
        %v6085 = vshll.u32 %v5740, 16
        %v6087 = vrot.slane %v6085, 5
        %v6088 = vsel %vm5834, %v6083, %v6087
        %v6089 = vshrl.u32 %v5740, 16
        %v6091 = vrot.slane %v6089, 4
        %v6092 = vor.u32 %v6091, %v6087
        %v6093 = vrot.slane %v6092, 4
        %v6095 = vshll.u32 %v5793, 16
        %v6097 = vrot.slane %v6095, 5
        %v6098 = vsel %vm5834, %v6093, %v6097
        %v6100 = vshrl.u32 %v5741, 16
        %v6102 = vrot.slane %v6100, 4
        %v6103 = vshll.u32 %v5741, 16
        %v6105 = vrot.slane %v6103, 5
        %v6106 = vor.u32 %v6102, %v6105
        %v6107 = vrot.slane %v6106, 4
        %v6109 = vshll.u32 %v5742, 16
        %v6111 = vrot.slane %v6109, 5
        %v6112 = vsel %vm5834, %v6107, %v6111
        %v6113 = vshrl.u32 %v5742, 16
        %v6115 = vrot.slane %v6113, 4
        %v6116 = vor.u32 %v6115, %v6111
        %v6117 = vrot.slane %v6116, 4
        %v6119 = vshll.u32 %v5794, 16
        %v6121 = vrot.slane %v6119, 5
        %v6122 = vsel %vm5834, %v6117, %v6121
        %v6124 = vshrl.u32 %v5743, 16
        %v6126 = vrot.slane %v6124, 4
        %v6127 = vshll.u32 %v5743, 16
        %v6129 = vrot.slane %v6127, 5
        %v6130 = vor.u32 %v6126, %v6129
        %v6131 = vrot.slane %v6130, 4
        %v6133 = vshll.u32 %v5744, 16
        %v6135 = vrot.slane %v6133, 5
        %v6136 = vsel %vm5834, %v6131, %v6135
        %v6137 = vshrl.u32 %v5744, 16
        %v6139 = vrot.slane %v6137, 4
        %v6140 = vor.u32 %v6139, %v6135
        %v6141 = vrot.slane %v6140, 4
        %v6143 = vshll.u32 %v5795, 16
        %v6145 = vrot.slane %v6143, 5
        %v6146 = vsel %vm5834, %v6141, %v6145
        %v6148 = vshrl.u32 %v5745, 16
        %v6150 = vrot.slane %v6148, 4
        %v6151 = vshll.u32 %v5745, 16
        %v6153 = vrot.slane %v6151, 5
        %v6154 = vor.u32 %v6150, %v6153
        %v6155 = vrot.slane %v6154, 4
        %v6157 = vshll.u32 %v5746, 16
        %v6159 = vrot.slane %v6157, 5
        %v6160 = vsel %vm5834, %v6155, %v6159
        %v6161 = vshrl.u32 %v5746, 16
        %v6163 = vrot.slane %v6161, 4
        %v6164 = vor.u32 %v6163, %v6159
        %v6165 = vrot.slane %v6164, 4
        %v6167 = vshll.u32 %v5796, 16
        %v6169 = vrot.slane %v6167, 5
        %v6170 = vsel %vm5834, %v6165, %v6169
        %v6172 = vshrl.u32 %v5747, 16
        %v6174 = vrot.slane %v6172, 4
        %v6175 = vshll.u32 %v5747, 16
        %v6177 = vrot.slane %v6175, 5
        %v6178 = vor.u32 %v6174, %v6177
        %v6179 = vrot.slane %v6178, 4
        %v6181 = vshll.u32 %v5748, 16
        %v6183 = vrot.slane %v6181, 5
        %v6184 = vsel %vm5834, %v6179, %v6183
        %v6185 = vshrl.u32 %v5748, 16
        %v6187 = vrot.slane %v6185, 4
        %v6188 = vor.u32 %v6187, %v6183
        %v6189 = vrot.slane %v6188, 4
        %v6191 = vshll.u32 %v5797, 16
        %v6193 = vrot.slane %v6191, 5
        %v6194 = vsel %vm5834, %v6189, %v6193
        %v6196 = vshrl.u32 %v5749, 16
        %v6198 = vrot.slane %v6196, 4
        %v6199 = vshll.u32 %v5749, 16
        %v6201 = vrot.slane %v6199, 5
        %v6202 = vor.u32 %v6198, %v6201
        %v6203 = vrot.slane %v6202, 4
        %v6205 = vshll.u32 %v5750, 16
        %v6207 = vrot.slane %v6205, 5
        %v6208 = vsel %vm5834, %v6203, %v6207
        %v6209 = vshrl.u32 %v5750, 16
        %v6211 = vrot.slane %v6209, 4
        %v6212 = vor.u32 %v6211, %v6207
        %v6213 = vrot.slane %v6212, 4
        %v6215 = vshll.u32 %v5798, 16
        %v6217 = vrot.slane %v6215, 5
        %v6218 = vsel %vm5834, %v6213, %v6217
        %v6219 = vunpack.c.l.b16 %v5848
        %v6220 = vunpack.c.h.b16 %v5848
        %v6221 = vunpack.c.l.b16 %v5858
        %v6222 = vunpack.c.h.b16 %v5858
        %v6223 = vunpack.c.l.b16 %v5872
        %v6224 = vunpack.c.h.b16 %v5872
        %v6225 = vunpack.c.l.b16 %v5882
        %v6226 = vunpack.c.h.b16 %v5882
        %v6227 = vunpack.c.l.b16 %v5896
        %v6228 = vunpack.c.h.b16 %v5896
        %v6229 = vunpack.c.l.b16 %v5906
        %v6230 = vunpack.c.h.b16 %v5906
        %v6231 = vunpack.c.l.b16 %v5920
        %v6232 = vunpack.c.h.b16 %v5920
        %v6233 = vunpack.c.l.b16 %v5930
        %v6234 = vunpack.c.h.b16 %v5930
        %v6235 = vunpack.c.l.b16 %v5944
        %v6236 = vunpack.c.h.b16 %v5944
        %v6237 = vunpack.c.l.b16 %v5954
        %v6238 = vunpack.c.h.b16 %v5954
        %v6239 = vunpack.c.l.b16 %v5968
        %v6240 = vunpack.c.h.b16 %v5968
        %v6241 = vunpack.c.l.b16 %v5978
        %v6242 = vunpack.c.h.b16 %v5978
        %v6243 = vunpack.c.l.b16 %v5992
        %v6244 = vunpack.c.h.b16 %v5992
        %v6245 = vunpack.c.l.b16 %v6002
        %v6246 = vunpack.c.h.b16 %v6002
        %v6247 = vunpack.c.l.b16 %v6016
        %v6248 = vunpack.c.h.b16 %v6016
        %v6249 = vunpack.c.l.b16 %v6026
        %v6250 = vunpack.c.h.b16 %v6026
        %v6251 = vunpack.c.l.b16 %v6040
        %v6252 = vunpack.c.h.b16 %v6040
        %v6253 = vunpack.c.l.b16 %v6050
        %v6254 = vunpack.c.h.b16 %v6050
        %v6255 = vunpack.c.l.b16 %v6064
        %v6256 = vunpack.c.h.b16 %v6064
        %v6257 = vunpack.c.l.b16 %v6074
        %v6258 = vunpack.c.h.b16 %v6074
        %v6259 = vunpack.c.l.b16 %v6088
        %v6260 = vunpack.c.h.b16 %v6088
        %v6261 = vunpack.c.l.b16 %v6098
        %v6262 = vunpack.c.h.b16 %v6098
        %v6263 = vunpack.c.l.b16 %v6112
        %v6264 = vunpack.c.h.b16 %v6112
        %v6265 = vunpack.c.l.b16 %v6122
        %v6266 = vunpack.c.h.b16 %v6122
        %v6267 = vunpack.c.l.b16 %v6136
        %v6268 = vunpack.c.h.b16 %v6136
        %v6269 = vunpack.c.l.b16 %v6146
        %v6270 = vunpack.c.h.b16 %v6146
        %v6271 = vunpack.c.l.b16 %v6160
        %v6272 = vunpack.c.h.b16 %v6160
        %v6273 = vunpack.c.l.b16 %v6170
        %v6274 = vunpack.c.h.b16 %v6170
        %v6275 = vunpack.c.l.b16 %v6184
        %v6276 = vunpack.c.h.b16 %v6184
        %v6277 = vunpack.c.l.b16 %v6194
        %v6278 = vunpack.c.h.b16 %v6194
        %v6279 = vunpack.c.l.b16 %v6208
        %v6280 = vunpack.c.h.b16 %v6208
        %v6281 = vunpack.c.l.b16 %v6218
        %v6282 = vunpack.c.h.b16 %v6218
        %v6283 = vpack.c.b16 %v6221, %v6219
        %v6284 = vpack.c.b16 %v6222, %v6220
        %v6285 = vpack.c.b16 %v6225, %v6223
        %v6286 = vpack.c.b16 %v6226, %v6224
        %v6287 = vpack.c.b16 %v6229, %v6227
        %v6288 = vpack.c.b16 %v6230, %v6228
        %v6289 = vpack.c.b16 %v6233, %v6231
        %v6290 = vpack.c.b16 %v6234, %v6232
        %v6291 = vpack.c.b16 %v6237, %v6235
        %v6292 = vpack.c.b16 %v6238, %v6236
        %v6293 = vpack.c.b16 %v6241, %v6239
        %v6294 = vpack.c.b16 %v6242, %v6240
        %v6295 = vpack.c.b16 %v6245, %v6243
        %v6296 = vpack.c.b16 %v6246, %v6244
        %v6297 = vpack.c.b16 %v6249, %v6247
        %v6298 = vpack.c.b16 %v6250, %v6248
        %v6299 = vpack.c.b16 %v6253, %v6251
        %v6300 = vpack.c.b16 %v6254, %v6252
        %v6301 = vpack.c.b16 %v6257, %v6255
        %v6302 = vpack.c.b16 %v6258, %v6256
        %v6303 = vpack.c.b16 %v6261, %v6259
        %v6304 = vpack.c.b16 %v6262, %v6260
        %v6305 = vpack.c.b16 %v6265, %v6263
        %v6306 = vpack.c.b16 %v6266, %v6264
        %v6307 = vpack.c.b16 %v6269, %v6267
        %v6308 = vpack.c.b16 %v6270, %v6268
        %v6309 = vpack.c.b16 %v6273, %v6271
        %v6310 = vpack.c.b16 %v6274, %v6272
        %v6311 = vpack.c.b16 %v6277, %v6275
        %v6312 = vpack.c.b16 %v6278, %v6276
        %v6313 = vpack.c.b16 %v6281, %v6279
        %v6314 = vpack.c.b16 %v6282, %v6280
        %v6379 = vunpack.c.l.b16 %v5800
        %v6380 = vunpack.c.h.b16 %v5800
        %v6381 = vunpack.c.l.b16 %v5801
        %v6382 = vunpack.c.h.b16 %v5801
        %v6383 = vunpack.c.l.b16 %v5802
        %v6384 = vunpack.c.h.b16 %v5802
        %v6385 = vunpack.c.l.b16 %v5803
        %v6386 = vunpack.c.h.b16 %v5803
        %v6387 = vunpack.c.l.b16 %v5804
        %v6388 = vunpack.c.h.b16 %v5804
        %v6389 = vunpack.c.l.b16 %v5805
        %v6390 = vunpack.c.h.b16 %v5805
        %v6391 = vunpack.c.l.b16 %v5806
        %v6392 = vunpack.c.h.b16 %v5806
        %v6393 = vunpack.c.l.b16 %v5807
        %v6394 = vunpack.c.h.b16 %v5807
        %v6395 = vunpack.c.l.b16 %v5808
        %v6396 = vunpack.c.h.b16 %v5808
        %v6397 = vunpack.c.l.b16 %v5809
        %v6398 = vunpack.c.h.b16 %v5809
        %v6399 = vunpack.c.l.b16 %v5810
        %v6400 = vunpack.c.h.b16 %v5810
        %v6401 = vunpack.c.l.b16 %v5811
        %v6402 = vunpack.c.h.b16 %v5811
        %v6403 = vunpack.c.l.b16 %v5812
        %v6404 = vunpack.c.h.b16 %v5812
        %v6405 = vunpack.c.l.b16 %v5813
        %v6406 = vunpack.c.h.b16 %v5813
        %v6407 = vunpack.c.l.b16 %v5814
        %v6408 = vunpack.c.h.b16 %v5814
        %v6409 = vunpack.c.l.b16 %v5815
        %v6410 = vunpack.c.h.b16 %v5815
        %v6411 = vunpack.c.l.b16 %v5816
        %v6412 = vunpack.c.h.b16 %v5816
        %v6413 = vunpack.c.l.b16 %v5817
        %v6414 = vunpack.c.h.b16 %v5817
        %v6415 = vunpack.c.l.b16 %v5818
        %v6416 = vunpack.c.h.b16 %v5818
        %v6417 = vunpack.c.l.b16 %v5819
        %v6418 = vunpack.c.h.b16 %v5819
        %v6419 = vunpack.c.l.b16 %v5820
        %v6420 = vunpack.c.h.b16 %v5820
        %v6421 = vunpack.c.l.b16 %v5821
        %v6422 = vunpack.c.h.b16 %v5821
        %v6423 = vunpack.c.l.b16 %v5822
        %v6424 = vunpack.c.h.b16 %v5822
        %v6425 = vunpack.c.l.b16 %v5823
        %v6426 = vunpack.c.h.b16 %v5823
        %v6427 = vunpack.c.l.b16 %v5824
        %v6428 = vunpack.c.h.b16 %v5824
        %v6429 = vunpack.c.l.b16 %v5825
        %v6430 = vunpack.c.h.b16 %v5825
        %v6431 = vunpack.c.l.b16 %v5826
        %v6432 = vunpack.c.h.b16 %v5826
        %v6433 = vunpack.c.l.b16 %v5827
        %v6434 = vunpack.c.h.b16 %v5827
        %v6435 = vunpack.c.l.b16 %v5828
        %v6436 = vunpack.c.h.b16 %v5828
        %v6437 = vunpack.c.l.b16 %v5829
        %v6438 = vunpack.c.h.b16 %v5829
        %v6439 = vunpack.c.l.b16 %v5830
        %v6440 = vunpack.c.h.b16 %v5830
        %v6441 = vunpack.c.l.b16 %v5831
        %v6442 = vunpack.c.h.b16 %v5831
        %v6443 = vpack.c.b16 %v6381, %v6379
        %v6444 = vpack.c.b16 %v6382, %v6380
        %v6445 = vpack.c.b16 %v6385, %v6383
        %v6446 = vpack.c.b16 %v6386, %v6384
        %v6447 = vpack.c.b16 %v6389, %v6387
        %v6448 = vpack.c.b16 %v6390, %v6388
        %v6449 = vpack.c.b16 %v6393, %v6391
        %v6450 = vpack.c.b16 %v6394, %v6392
        %v6451 = vpack.c.b16 %v6397, %v6395
        %v6452 = vpack.c.b16 %v6398, %v6396
        %v6453 = vpack.c.b16 %v6401, %v6399
        %v6454 = vpack.c.b16 %v6402, %v6400
        %v6455 = vpack.c.b16 %v6405, %v6403
        %v6456 = vpack.c.b16 %v6406, %v6404
        %v6457 = vpack.c.b16 %v6409, %v6407
        %v6458 = vpack.c.b16 %v6410, %v6408
        %v6459 = vpack.c.b16 %v6413, %v6411
        %v6460 = vpack.c.b16 %v6414, %v6412
        %v6461 = vpack.c.b16 %v6417, %v6415
        %v6462 = vpack.c.b16 %v6418, %v6416
        %v6463 = vpack.c.b16 %v6421, %v6419
        %v6464 = vpack.c.b16 %v6422, %v6420
        %v6465 = vpack.c.b16 %v6425, %v6423
        %v6466 = vpack.c.b16 %v6426, %v6424
        %v6467 = vpack.c.b16 %v6429, %v6427
        %v6468 = vpack.c.b16 %v6430, %v6428
        %v6469 = vpack.c.b16 %v6433, %v6431
        %v6470 = vpack.c.b16 %v6434, %v6432
        %v6471 = vpack.c.b16 %v6437, %v6435
        %v6472 = vpack.c.b16 %v6438, %v6436
        %v6473 = vpack.c.b16 %v6441, %v6439
        %v6474 = vpack.c.b16 %v6442, %v6440
        %6507 = vmatprep.subr.bf16.mxu0 %v6458
        %6508 = vmatpush1.bf16.msra.mxu0 %v6457
        %6509 = vmatprep.subr.bf16.mxu0 %v6456
        %6510 = vmatpush1.bf16.msra.mxu0 %v6455
        %6511 = vmatprep.subr.bf16.mxu0 %v6454
        %6512 = vmatpush1.bf16.msra.mxu0 %v6453
        %6513 = vmatprep.subr.bf16.mxu0 %v6452
        %6514 = vmatpush1.bf16.msra.mxu0 %v6451
        %6515 = vmatprep.subr.bf16.mxu0 %v6450
        %6516 = vmatpush1.bf16.msra.mxu0 %v6449
        %6517 = vmatprep.subr.bf16.mxu0 %v6448
        %6518 = vmatpush1.bf16.msra.mxu0 %v6447
        %6519 = vmatprep.subr.bf16.mxu0 %v6446
        %6520 = vmatpush1.bf16.msra.mxu0 %v6445
        %6521 = vmatprep.subr.bf16.mxu0 %v6444
        %6522 = vmatpush1.bf16.msra.mxu0 %v6443
        %6523 = vmatprep.subr.bf16.mxu0 %v6474
        %6524 = vmatpush2.bf16.msra.mxu0 %v6473
        %6525 = vmatprep.subr.bf16.mxu0 %v6472
        %6526 = vmatpush2.bf16.msra.mxu0 %v6471
        %6527 = vmatprep.subr.bf16.mxu0 %v6470
        %6528 = vmatpush2.bf16.msra.mxu0 %v6469
        %6529 = vmatprep.subr.bf16.mxu0 %v6468
        %6530 = vmatpush2.bf16.msra.mxu0 %v6467
        %6531 = vmatprep.subr.bf16.mxu0 %v6466
        %6532 = vmatpush2.bf16.msra.mxu0 %v6465
        %6533 = vmatprep.subr.bf16.mxu0 %v6464
        %6534 = vmatpush2.bf16.msra.mxu0 %v6463
        %6535 = vmatprep.subr.bf16.mxu0 %v6462
        %6536 = vmatpush2.bf16.msra.mxu0 %v6461
        %6537 = vmatprep.subr.bf16.mxu0 %v6460
        %6538 = vmatpush2.bf16.msra.mxu0 %v6459
        %6539 = vmatprep.mubr.bf16.mxu0 %v6284
        %6540 = vmatmul.mubr.bf16.gmra.mxu0 %v6283
        %v6541 = vpop.f32.mrf.mxu0
        %v6542 = vadd.f32 0.0, %v6541
        %v6543 = vpop.f32.mrf.mxu0
        %v6544 = vadd.f32 0.0, %v6543
        %v6545 = vpop.f32.mrf.mxu0
        %v6546 = vadd.f32 0.0, %v6545
        %v6547 = vpop.f32.mrf.mxu0
        %v6548 = vadd.f32 0.0, %v6547
        %6549 = vmatprep.mubr.bf16.mxu0 %v6286
        %6550 = vmatmul.mubr.bf16.gmra.mxu0 %v6285
        %v6551 = vpop.f32.mrf.mxu0
        %v6552 = vadd.f32 0.0, %v6551
        %v6553 = vpop.f32.mrf.mxu0
        %v6554 = vadd.f32 0.0, %v6553
        %v6555 = vpop.f32.mrf.mxu0
        %v6556 = vadd.f32 0.0, %v6555
        %v6557 = vpop.f32.mrf.mxu0
        %v6558 = vadd.f32 0.0, %v6557
        %6559 = vmatprep.mubr.bf16.mxu0 %v6288
        %6560 = vmatmul.mubr.bf16.gmra.mxu0 %v6287
        %v6561 = vpop.f32.mrf.mxu0
        %v6562 = vadd.f32 0.0, %v6561
        %v6563 = vpop.f32.mrf.mxu0
        %v6564 = vadd.f32 0.0, %v6563
        %v6565 = vpop.f32.mrf.mxu0
        %v6566 = vadd.f32 0.0, %v6565
        %v6567 = vpop.f32.mrf.mxu0
        %v6568 = vadd.f32 0.0, %v6567
        %6569 = vmatprep.mubr.bf16.mxu0 %v6290
        %6570 = vmatmul.mubr.bf16.gmra.mxu0 %v6289
        %v6571 = vpop.f32.mrf.mxu0
        %v6572 = vadd.f32 0.0, %v6571
        %v6573 = vpop.f32.mrf.mxu0
        %v6574 = vadd.f32 0.0, %v6573
        %v6575 = vpop.f32.mrf.mxu0
        %v6576 = vadd.f32 0.0, %v6575
        %v6577 = vpop.f32.mrf.mxu0
        %v6578 = vadd.f32 0.0, %v6577
        %6579 = vmatprep.mubr.bf16.mxu0 %v6292
        %6580 = vmatmul.mubr.bf16.gmra.mxu0 %v6291
        %v6581 = vpop.f32.mrf.mxu0
        %v6582 = vadd.f32 0.0, %v6581
        %v6583 = vpop.f32.mrf.mxu0
        %v6584 = vadd.f32 0.0, %v6583
        %v6585 = vpop.f32.mrf.mxu0
        %v6586 = vadd.f32 0.0, %v6585
        %v6587 = vpop.f32.mrf.mxu0
        %v6588 = vadd.f32 0.0, %v6587
        %6589 = vmatprep.mubr.bf16.mxu0 %v6294
        %6590 = vmatmul.mubr.bf16.gmra.mxu0 %v6293
        %v6591 = vpop.f32.mrf.mxu0
        %v6592 = vadd.f32 0.0, %v6591
        %v6593 = vpop.f32.mrf.mxu0
        %v6594 = vadd.f32 0.0, %v6593
        %v6595 = vpop.f32.mrf.mxu0
        %v6596 = vadd.f32 0.0, %v6595
        %v6597 = vpop.f32.mrf.mxu0
        %v6598 = vadd.f32 0.0, %v6597
        %6599 = vmatprep.mubr.bf16.mxu0 %v6296
        %6600 = vmatmul.mubr.bf16.gmra.mxu0 %v6295
        %v6601 = vpop.f32.mrf.mxu0
        %v6602 = vadd.f32 0.0, %v6601
        %v6603 = vpop.f32.mrf.mxu0
        %v6604 = vadd.f32 0.0, %v6603
        %v6605 = vpop.f32.mrf.mxu0
        %v6606 = vadd.f32 0.0, %v6605
        %v6607 = vpop.f32.mrf.mxu0
        %v6608 = vadd.f32 0.0, %v6607
        %6609 = vmatprep.mubr.bf16.mxu0 %v6298
        %6610 = vmatmul.mubr.bf16.gmra.mxu0 %v6297
        %v6611 = vpop.f32.mrf.mxu0
        %v6612 = vadd.f32 0.0, %v6611
        %v6613 = vpop.f32.mrf.mxu0
        %v6614 = vadd.f32 0.0, %v6613
        %v6615 = vpop.f32.mrf.mxu0
        %v6616 = vadd.f32 0.0, %v6615
        %v6617 = vpop.f32.mrf.mxu0
        %v6618 = vadd.f32 0.0, %v6617
        %6619 = vmatprep.mubr.bf16.mxu0 %v6300
        %6620 = vmatmul.mubr.bf16.gmra.mxu0 %v6299
        %v6621 = vpop.f32.mrf.mxu0
        %v6622 = vadd.f32 0.0, %v6621
        %v6623 = vpop.f32.mrf.mxu0
        %v6624 = vadd.f32 0.0, %v6623
        %v6625 = vpop.f32.mrf.mxu0
        %v6626 = vadd.f32 0.0, %v6625
        %v6627 = vpop.f32.mrf.mxu0
        %v6628 = vadd.f32 0.0, %v6627
        %6629 = vmatprep.mubr.bf16.mxu0 %v6302
        %6630 = vmatmul.mubr.bf16.gmra.mxu0 %v6301
        %v6631 = vpop.f32.mrf.mxu0
        %v6632 = vadd.f32 0.0, %v6631
        %v6633 = vpop.f32.mrf.mxu0
        %v6634 = vadd.f32 0.0, %v6633
        %v6635 = vpop.f32.mrf.mxu0
        %v6636 = vadd.f32 0.0, %v6635
        %v6637 = vpop.f32.mrf.mxu0
        %v6638 = vadd.f32 0.0, %v6637
        %6639 = vmatprep.mubr.bf16.mxu0 %v6304
        %6640 = vmatmul.mubr.bf16.gmra.mxu0 %v6303
        %v6641 = vpop.f32.mrf.mxu0
        %v6642 = vadd.f32 0.0, %v6641
        %v6643 = vpop.f32.mrf.mxu0
        %v6644 = vadd.f32 0.0, %v6643
        %v6645 = vpop.f32.mrf.mxu0
        %v6646 = vadd.f32 0.0, %v6645
        %v6647 = vpop.f32.mrf.mxu0
        %v6648 = vadd.f32 0.0, %v6647
        %6649 = vmatprep.mubr.bf16.mxu0 %v6306
        %6650 = vmatmul.mubr.bf16.gmra.mxu0 %v6305
        %v6651 = vpop.f32.mrf.mxu0
        %v6652 = vadd.f32 0.0, %v6651
        %v6653 = vpop.f32.mrf.mxu0
        %v6654 = vadd.f32 0.0, %v6653
        %v6655 = vpop.f32.mrf.mxu0
        %v6656 = vadd.f32 0.0, %v6655
        %v6657 = vpop.f32.mrf.mxu0
        %v6658 = vadd.f32 0.0, %v6657
        %6659 = vmatprep.mubr.bf16.mxu0 %v6308
        %6660 = vmatmul.mubr.bf16.gmra.mxu0 %v6307
        %v6661 = vpop.f32.mrf.mxu0
        %v6662 = vadd.f32 0.0, %v6661
        %v6663 = vpop.f32.mrf.mxu0
        %v6664 = vadd.f32 0.0, %v6663
        %v6665 = vpop.f32.mrf.mxu0
        %v6666 = vadd.f32 0.0, %v6665
        %v6667 = vpop.f32.mrf.mxu0
        %v6668 = vadd.f32 0.0, %v6667
        %6669 = vmatprep.mubr.bf16.mxu0 %v6310
        %6670 = vmatmul.mubr.bf16.gmra.mxu0 %v6309
        %v6671 = vpop.f32.mrf.mxu0
        %v6672 = vadd.f32 0.0, %v6671
        %v6673 = vpop.f32.mrf.mxu0
        %v6674 = vadd.f32 0.0, %v6673
        %v6675 = vpop.f32.mrf.mxu0
        %v6676 = vadd.f32 0.0, %v6675
        %v6677 = vpop.f32.mrf.mxu0
        %v6678 = vadd.f32 0.0, %v6677
        %6679 = vmatprep.mubr.bf16.mxu0 %v6312
        %6680 = vmatmul.mubr.bf16.gmra.mxu0 %v6311
        %v6681 = vpop.f32.mrf.mxu0
        %v6682 = vadd.f32 0.0, %v6681
        %v6683 = vpop.f32.mrf.mxu0
        %v6684 = vadd.f32 0.0, %v6683
        %v6685 = vpop.f32.mrf.mxu0
        %v6686 = vadd.f32 0.0, %v6685
        %v6687 = vpop.f32.mrf.mxu0
        %v6688 = vadd.f32 0.0, %v6687
        %6689 = vmatprep.mubr.bf16.mxu0 %v6314
        %6690 = vmatmul.mubr.bf16.gmra.mxu0 %v6313
        %v6691 = vpop.f32.mrf.mxu0
        %v6692 = vadd.f32 0.0, %v6691
        %v6693 = vpop.f32.mrf.mxu0
        %v6694 = vadd.f32 0.0, %v6693
        %v6695 = vpop.f32.mrf.mxu0
        %v6696 = vadd.f32 0.0, %v6695
        %v6697 = vpop.f32.mrf.mxu0
        %v6698 = vadd.f32 0.0, %v6697
        %6699 = vdwg.mxu0
        %v6732 = vunpack.c.l.b16 %v5719
        %v6733 = vunpack.c.h.b16 %v5719
        %v6734 = vunpack.c.l.b16 %v5720
        %v6735 = vunpack.c.h.b16 %v5720
        %v6736 = vunpack.c.l.b16 %v5721
        %v6737 = vunpack.c.h.b16 %v5721
        %v6738 = vunpack.c.l.b16 %v5722
        %v6739 = vunpack.c.h.b16 %v5722
        %v6740 = vunpack.c.l.b16 %v5723
        %v6741 = vunpack.c.h.b16 %v5723
        %v6742 = vunpack.c.l.b16 %v5724
        %v6743 = vunpack.c.h.b16 %v5724
        %v6744 = vunpack.c.l.b16 %v5725
        %v6745 = vunpack.c.h.b16 %v5725
        %v6746 = vunpack.c.l.b16 %v5726
        %v6747 = vunpack.c.h.b16 %v5726
        %v6748 = vunpack.c.l.b16 %v5727
        %v6749 = vunpack.c.h.b16 %v5727
        %v6750 = vunpack.c.l.b16 %v5728
        %v6751 = vunpack.c.h.b16 %v5728
        %v6752 = vunpack.c.l.b16 %v5729
        %v6753 = vunpack.c.h.b16 %v5729
        %v6754 = vunpack.c.l.b16 %v5730
        %v6755 = vunpack.c.h.b16 %v5730
        %v6756 = vunpack.c.l.b16 %v5731
        %v6757 = vunpack.c.h.b16 %v5731
        %v6758 = vunpack.c.l.b16 %v5732
        %v6759 = vunpack.c.h.b16 %v5732
        %v6760 = vunpack.c.l.b16 %v5733
        %v6761 = vunpack.c.h.b16 %v5733
        %v6762 = vunpack.c.l.b16 %v5734
        %v6763 = vunpack.c.h.b16 %v5734
        %v6764 = vunpack.c.l.b16 %v5735
        %v6765 = vunpack.c.h.b16 %v5735
        %v6766 = vunpack.c.l.b16 %v5736
        %v6767 = vunpack.c.h.b16 %v5736
        %v6768 = vunpack.c.l.b16 %v5737
        %v6769 = vunpack.c.h.b16 %v5737
        %v6770 = vunpack.c.l.b16 %v5738
        %v6771 = vunpack.c.h.b16 %v5738
        %v6772 = vunpack.c.l.b16 %v5739
        %v6773 = vunpack.c.h.b16 %v5739
        %v6774 = vunpack.c.l.b16 %v5740
        %v6775 = vunpack.c.h.b16 %v5740
        %v6776 = vunpack.c.l.b16 %v5741
        %v6777 = vunpack.c.h.b16 %v5741
        %v6778 = vunpack.c.l.b16 %v5742
        %v6779 = vunpack.c.h.b16 %v5742
        %v6780 = vunpack.c.l.b16 %v5743
        %v6781 = vunpack.c.h.b16 %v5743
        %v6782 = vunpack.c.l.b16 %v5744
        %v6783 = vunpack.c.h.b16 %v5744
        %v6784 = vunpack.c.l.b16 %v5745
        %v6785 = vunpack.c.h.b16 %v5745
        %v6786 = vunpack.c.l.b16 %v5746
        %v6787 = vunpack.c.h.b16 %v5746
        %v6788 = vunpack.c.l.b16 %v5747
        %v6789 = vunpack.c.h.b16 %v5747
        %v6790 = vunpack.c.l.b16 %v5748
        %v6791 = vunpack.c.h.b16 %v5748
        %v6792 = vunpack.c.l.b16 %v5749
        %v6793 = vunpack.c.h.b16 %v5749
        %v6794 = vunpack.c.l.b16 %v5750
        %v6795 = vunpack.c.h.b16 %v5750
        %v6796 = vpack.c.b16 %v6734, %v6732
        %v6797 = vpack.c.b16 %v6735, %v6733
        %v6798 = vpack.c.b16 %v6738, %v6736
        %v6799 = vpack.c.b16 %v6739, %v6737
        %v6800 = vpack.c.b16 %v6742, %v6740
        %v6801 = vpack.c.b16 %v6743, %v6741
        %v6802 = vpack.c.b16 %v6746, %v6744
        %v6803 = vpack.c.b16 %v6747, %v6745
        %v6804 = vpack.c.b16 %v6750, %v6748
        %v6805 = vpack.c.b16 %v6751, %v6749
        %v6806 = vpack.c.b16 %v6754, %v6752
        %v6807 = vpack.c.b16 %v6755, %v6753
        %v6808 = vpack.c.b16 %v6758, %v6756
        %v6809 = vpack.c.b16 %v6759, %v6757
        %v6810 = vpack.c.b16 %v6762, %v6760
        %v6811 = vpack.c.b16 %v6763, %v6761
        %v6812 = vpack.c.b16 %v6766, %v6764
        %v6813 = vpack.c.b16 %v6767, %v6765
        %v6814 = vpack.c.b16 %v6770, %v6768
        %v6815 = vpack.c.b16 %v6771, %v6769
        %v6816 = vpack.c.b16 %v6774, %v6772
        %v6817 = vpack.c.b16 %v6775, %v6773
        %v6818 = vpack.c.b16 %v6778, %v6776
        %v6819 = vpack.c.b16 %v6779, %v6777
        %v6820 = vpack.c.b16 %v6782, %v6780
        %v6821 = vpack.c.b16 %v6783, %v6781
        %v6822 = vpack.c.b16 %v6786, %v6784
        %v6823 = vpack.c.b16 %v6787, %v6785
        %v6824 = vpack.c.b16 %v6790, %v6788
        %v6825 = vpack.c.b16 %v6791, %v6789
        %v6826 = vpack.c.b16 %v6794, %v6792
        %v6827 = vpack.c.b16 %v6795, %v6793
        %v6892 = vunpack.c.l.b16 %v5751
        %v6893 = vunpack.c.h.b16 %v5751
        %v6894 = vunpack.c.l.b16 %v5752
        %v6895 = vunpack.c.h.b16 %v5752
        %v6896 = vunpack.c.l.b16 %v5753
        %v6897 = vunpack.c.h.b16 %v5753
        %v6898 = vunpack.c.l.b16 %v5754
        %v6899 = vunpack.c.h.b16 %v5754
        %v6900 = vunpack.c.l.b16 %v5755
        %v6901 = vunpack.c.h.b16 %v5755
        %v6902 = vunpack.c.l.b16 %v5756
        %v6903 = vunpack.c.h.b16 %v5756
        %v6904 = vunpack.c.l.b16 %v5757
        %v6905 = vunpack.c.h.b16 %v5757
        %v6906 = vunpack.c.l.b16 %v5758
        %v6907 = vunpack.c.h.b16 %v5758
        %v6908 = vunpack.c.l.b16 %v5759
        %v6909 = vunpack.c.h.b16 %v5759
        %v6910 = vunpack.c.l.b16 %v5760
        %v6911 = vunpack.c.h.b16 %v5760
        %v6912 = vunpack.c.l.b16 %v5761
        %v6913 = vunpack.c.h.b16 %v5761
        %v6914 = vunpack.c.l.b16 %v5762
        %v6915 = vunpack.c.h.b16 %v5762
        %v6916 = vunpack.c.l.b16 %v5763
        %v6917 = vunpack.c.h.b16 %v5763
        %v6918 = vunpack.c.l.b16 %v5764
        %v6919 = vunpack.c.h.b16 %v5764
        %v6920 = vunpack.c.l.b16 %v5765
        %v6921 = vunpack.c.h.b16 %v5765
        %v6922 = vunpack.c.l.b16 %v5766
        %v6923 = vunpack.c.h.b16 %v5766
        %v6924 = vunpack.c.l.b16 %v5767
        %v6925 = vunpack.c.h.b16 %v5767
        %v6926 = vunpack.c.l.b16 %v5768
        %v6927 = vunpack.c.h.b16 %v5768
        %v6928 = vunpack.c.l.b16 %v5769
        %v6929 = vunpack.c.h.b16 %v5769
        %v6930 = vunpack.c.l.b16 %v5770
        %v6931 = vunpack.c.h.b16 %v5770
        %v6932 = vunpack.c.l.b16 %v5771
        %v6933 = vunpack.c.h.b16 %v5771
        %v6934 = vunpack.c.l.b16 %v5772
        %v6935 = vunpack.c.h.b16 %v5772
        %v6936 = vunpack.c.l.b16 %v5773
        %v6937 = vunpack.c.h.b16 %v5773
        %v6938 = vunpack.c.l.b16 %v5774
        %v6939 = vunpack.c.h.b16 %v5774
        %v6940 = vunpack.c.l.b16 %v5775
        %v6941 = vunpack.c.h.b16 %v5775
        %v6942 = vunpack.c.l.b16 %v5776
        %v6943 = vunpack.c.h.b16 %v5776
        %v6944 = vunpack.c.l.b16 %v5777
        %v6945 = vunpack.c.h.b16 %v5777
        %v6946 = vunpack.c.l.b16 %v5778
        %v6947 = vunpack.c.h.b16 %v5778
        %v6948 = vunpack.c.l.b16 %v5779
        %v6949 = vunpack.c.h.b16 %v5779
        %v6950 = vunpack.c.l.b16 %v5780
        %v6951 = vunpack.c.h.b16 %v5780
        %v6952 = vunpack.c.l.b16 %v5781
        %v6953 = vunpack.c.h.b16 %v5781
        %v6954 = vunpack.c.l.b16 %v5782
        %v6955 = vunpack.c.h.b16 %v5782
        %v6956 = vpack.c.b16 %v6894, %v6892
        %v6957 = vpack.c.b16 %v6895, %v6893
        %v6958 = vpack.c.b16 %v6898, %v6896
        %v6959 = vpack.c.b16 %v6899, %v6897
        %v6960 = vpack.c.b16 %v6902, %v6900
        %v6961 = vpack.c.b16 %v6903, %v6901
        %v6962 = vpack.c.b16 %v6906, %v6904
        %v6963 = vpack.c.b16 %v6907, %v6905
        %v6964 = vpack.c.b16 %v6910, %v6908
        %v6965 = vpack.c.b16 %v6911, %v6909
        %v6966 = vpack.c.b16 %v6914, %v6912
        %v6967 = vpack.c.b16 %v6915, %v6913
        %v6968 = vpack.c.b16 %v6918, %v6916
        %v6969 = vpack.c.b16 %v6919, %v6917
        %v6970 = vpack.c.b16 %v6922, %v6920
        %v6971 = vpack.c.b16 %v6923, %v6921
        %v6972 = vpack.c.b16 %v6926, %v6924
        %v6973 = vpack.c.b16 %v6927, %v6925
        %v6974 = vpack.c.b16 %v6930, %v6928
        %v6975 = vpack.c.b16 %v6931, %v6929
        %v6976 = vpack.c.b16 %v6934, %v6932
        %v6977 = vpack.c.b16 %v6935, %v6933
        %v6978 = vpack.c.b16 %v6938, %v6936
        %v6979 = vpack.c.b16 %v6939, %v6937
        %v6980 = vpack.c.b16 %v6942, %v6940
        %v6981 = vpack.c.b16 %v6943, %v6941
        %v6982 = vpack.c.b16 %v6946, %v6944
        %v6983 = vpack.c.b16 %v6947, %v6945
        %v6984 = vpack.c.b16 %v6950, %v6948
        %v6985 = vpack.c.b16 %v6951, %v6949
        %v6986 = vpack.c.b16 %v6954, %v6952
        %v6987 = vpack.c.b16 %v6955, %v6953
        %7020 = vmatprep.subr.bf16.mxu0 %v6971
        %7021 = vmatpush1.bf16.msra.mxu0 %v6970
        %7022 = vmatprep.subr.bf16.mxu0 %v6969
        %7023 = vmatpush1.bf16.msra.mxu0 %v6968
        %7024 = vmatprep.subr.bf16.mxu0 %v6967
        %7025 = vmatpush1.bf16.msra.mxu0 %v6966
        %7026 = vmatprep.subr.bf16.mxu0 %v6965
        %7027 = vmatpush1.bf16.msra.mxu0 %v6964
        %7028 = vmatprep.subr.bf16.mxu0 %v6963
        %7029 = vmatpush1.bf16.msra.mxu0 %v6962
        %7030 = vmatprep.subr.bf16.mxu0 %v6961
        %7031 = vmatpush1.bf16.msra.mxu0 %v6960
        %7032 = vmatprep.subr.bf16.mxu0 %v6959
        %7033 = vmatpush1.bf16.msra.mxu0 %v6958
        %7034 = vmatprep.subr.bf16.mxu0 %v6957
        %7035 = vmatpush1.bf16.msra.mxu0 %v6956
        %7036 = vmatprep.subr.bf16.mxu0 %v6987
        %7037 = vmatpush2.bf16.msra.mxu0 %v6986
        %7038 = vmatprep.subr.bf16.mxu0 %v6985
        %7039 = vmatpush2.bf16.msra.mxu0 %v6984
        %7040 = vmatprep.subr.bf16.mxu0 %v6983
        %7041 = vmatpush2.bf16.msra.mxu0 %v6982
        %7042 = vmatprep.subr.bf16.mxu0 %v6981
        %7043 = vmatpush2.bf16.msra.mxu0 %v6980
        %7044 = vmatprep.subr.bf16.mxu0 %v6979
        %7045 = vmatpush2.bf16.msra.mxu0 %v6978
        %7046 = vmatprep.subr.bf16.mxu0 %v6977
        %7047 = vmatpush2.bf16.msra.mxu0 %v6976
        %7048 = vmatprep.subr.bf16.mxu0 %v6975
        %7049 = vmatpush2.bf16.msra.mxu0 %v6974
        %7050 = vmatprep.subr.bf16.mxu0 %v6973
        %7051 = vmatpush2.bf16.msra.mxu0 %v6972
        %7052 = vmatprep.mubr.bf16.mxu0 %v6797
        %7053 = vmatmul.mubr.bf16.gmra.mxu0 %v6796
        %v7054 = vpop.f32.mrf.mxu0
        %v7055 = vadd.f32 %v6542, %v7054
        %v7056 = vpop.f32.mrf.mxu0
        %v7057 = vadd.f32 %v6544, %v7056
        %v7058 = vpop.f32.mrf.mxu0
        %v7059 = vadd.f32 %v6546, %v7058
        %v7060 = vpop.f32.mrf.mxu0
        %v7061 = vadd.f32 %v6548, %v7060
        %7062 = vmatprep.mubr.bf16.mxu0 %v6799
        %7063 = vmatmul.mubr.bf16.gmra.mxu0 %v6798
        %v7064 = vpop.f32.mrf.mxu0
        %v7065 = vadd.f32 %v6552, %v7064
        %v7066 = vpop.f32.mrf.mxu0
        %v7067 = vadd.f32 %v6554, %v7066
        %v7068 = vpop.f32.mrf.mxu0
        %v7069 = vadd.f32 %v6556, %v7068
        %v7070 = vpop.f32.mrf.mxu0
        %v7071 = vadd.f32 %v6558, %v7070
        %7072 = vmatprep.mubr.bf16.mxu0 %v6801
        %7073 = vmatmul.mubr.bf16.gmra.mxu0 %v6800
        %v7074 = vpop.f32.mrf.mxu0
        %v7075 = vadd.f32 %v6562, %v7074
        %v7076 = vpop.f32.mrf.mxu0
        %v7077 = vadd.f32 %v6564, %v7076
        %v7078 = vpop.f32.mrf.mxu0
        %v7079 = vadd.f32 %v6566, %v7078
        %v7080 = vpop.f32.mrf.mxu0
        %v7081 = vadd.f32 %v6568, %v7080
        %7082 = vmatprep.mubr.bf16.mxu0 %v6803
        %7083 = vmatmul.mubr.bf16.gmra.mxu0 %v6802
        %v7084 = vpop.f32.mrf.mxu0
        %v7085 = vadd.f32 %v6572, %v7084
        %v7086 = vpop.f32.mrf.mxu0
        %v7087 = vadd.f32 %v6574, %v7086
        %v7088 = vpop.f32.mrf.mxu0
        %v7089 = vadd.f32 %v6576, %v7088
        %v7090 = vpop.f32.mrf.mxu0
        %v7091 = vadd.f32 %v6578, %v7090
        %7092 = vmatprep.mubr.bf16.mxu0 %v6805
        %7093 = vmatmul.mubr.bf16.gmra.mxu0 %v6804
        %v7094 = vpop.f32.mrf.mxu0
        %v7095 = vadd.f32 %v6582, %v7094
        %v7096 = vpop.f32.mrf.mxu0
        %v7097 = vadd.f32 %v6584, %v7096
        %v7098 = vpop.f32.mrf.mxu0
        %v7099 = vadd.f32 %v6586, %v7098
        %v7100 = vpop.f32.mrf.mxu0
        %v7101 = vadd.f32 %v6588, %v7100
        %7102 = vmatprep.mubr.bf16.mxu0 %v6807
        %7103 = vmatmul.mubr.bf16.gmra.mxu0 %v6806
        %v7104 = vpop.f32.mrf.mxu0
        %v7105 = vadd.f32 %v6592, %v7104
        %v7106 = vpop.f32.mrf.mxu0
        %v7107 = vadd.f32 %v6594, %v7106
        %v7108 = vpop.f32.mrf.mxu0
        %v7109 = vadd.f32 %v6596, %v7108
        %v7110 = vpop.f32.mrf.mxu0
        %v7111 = vadd.f32 %v6598, %v7110
        %7112 = vmatprep.mubr.bf16.mxu0 %v6809
        %7113 = vmatmul.mubr.bf16.gmra.mxu0 %v6808
        %v7114 = vpop.f32.mrf.mxu0
        %v7115 = vadd.f32 %v6602, %v7114
        %v7116 = vpop.f32.mrf.mxu0
        %v7117 = vadd.f32 %v6604, %v7116
        %v7118 = vpop.f32.mrf.mxu0
        %v7119 = vadd.f32 %v6606, %v7118
        %v7120 = vpop.f32.mrf.mxu0
        %v7121 = vadd.f32 %v6608, %v7120
        %7122 = vmatprep.mubr.bf16.mxu0 %v6811
        %7123 = vmatmul.mubr.bf16.gmra.mxu0 %v6810
        %v7124 = vpop.f32.mrf.mxu0
        %v7125 = vadd.f32 %v6612, %v7124
        %v7126 = vpop.f32.mrf.mxu0
        %v7127 = vadd.f32 %v6614, %v7126
        %v7128 = vpop.f32.mrf.mxu0
        %v7129 = vadd.f32 %v6616, %v7128
        %v7130 = vpop.f32.mrf.mxu0
        %v7131 = vadd.f32 %v6618, %v7130
        %7132 = vmatprep.mubr.bf16.mxu0 %v6813
        %7133 = vmatmul.mubr.bf16.gmra.mxu0 %v6812
        %v7134 = vpop.f32.mrf.mxu0
        %v7135 = vadd.f32 %v6622, %v7134
        %v7136 = vpop.f32.mrf.mxu0
        %v7137 = vadd.f32 %v6624, %v7136
        %v7138 = vpop.f32.mrf.mxu0
        %v7139 = vadd.f32 %v6626, %v7138
        %v7140 = vpop.f32.mrf.mxu0
        %v7141 = vadd.f32 %v6628, %v7140
        %7142 = vmatprep.mubr.bf16.mxu0 %v6815
        %7143 = vmatmul.mubr.bf16.gmra.mxu0 %v6814
        %v7144 = vpop.f32.mrf.mxu0
        %v7145 = vadd.f32 %v6632, %v7144
        %v7146 = vpop.f32.mrf.mxu0
        %v7147 = vadd.f32 %v6634, %v7146
        %v7148 = vpop.f32.mrf.mxu0
        %v7149 = vadd.f32 %v6636, %v7148
        %v7150 = vpop.f32.mrf.mxu0
        %v7151 = vadd.f32 %v6638, %v7150
        %7152 = vmatprep.mubr.bf16.mxu0 %v6817
        %7153 = vmatmul.mubr.bf16.gmra.mxu0 %v6816
        %v7154 = vpop.f32.mrf.mxu0
        %v7155 = vadd.f32 %v6642, %v7154
        %v7156 = vpop.f32.mrf.mxu0
        %v7157 = vadd.f32 %v6644, %v7156
        %v7158 = vpop.f32.mrf.mxu0
        %v7159 = vadd.f32 %v6646, %v7158
        %v7160 = vpop.f32.mrf.mxu0
        %v7161 = vadd.f32 %v6648, %v7160
        %7162 = vmatprep.mubr.bf16.mxu0 %v6819
        %7163 = vmatmul.mubr.bf16.gmra.mxu0 %v6818
        %v7164 = vpop.f32.mrf.mxu0
        %v7165 = vadd.f32 %v6652, %v7164
        %v7166 = vpop.f32.mrf.mxu0
        %v7167 = vadd.f32 %v6654, %v7166
        %v7168 = vpop.f32.mrf.mxu0
        %v7169 = vadd.f32 %v6656, %v7168
        %v7170 = vpop.f32.mrf.mxu0
        %v7171 = vadd.f32 %v6658, %v7170
        %7172 = vmatprep.mubr.bf16.mxu0 %v6821
        %7173 = vmatmul.mubr.bf16.gmra.mxu0 %v6820
        %v7174 = vpop.f32.mrf.mxu0
        %v7175 = vadd.f32 %v6662, %v7174
        %v7176 = vpop.f32.mrf.mxu0
        %v7177 = vadd.f32 %v6664, %v7176
        %v7178 = vpop.f32.mrf.mxu0
        %v7179 = vadd.f32 %v6666, %v7178
        %v7180 = vpop.f32.mrf.mxu0
        %v7181 = vadd.f32 %v6668, %v7180
        %7182 = vmatprep.mubr.bf16.mxu0 %v6823
        %7183 = vmatmul.mubr.bf16.gmra.mxu0 %v6822
        %v7184 = vpop.f32.mrf.mxu0
        %v7185 = vadd.f32 %v6672, %v7184
        %v7186 = vpop.f32.mrf.mxu0
        %v7187 = vadd.f32 %v6674, %v7186
        %v7188 = vpop.f32.mrf.mxu0
        %v7189 = vadd.f32 %v6676, %v7188
        %v7190 = vpop.f32.mrf.mxu0
        %v7191 = vadd.f32 %v6678, %v7190
        %7192 = vmatprep.mubr.bf16.mxu0 %v6825
        %7193 = vmatmul.mubr.bf16.gmra.mxu0 %v6824
        %v7194 = vpop.f32.mrf.mxu0
        %v7195 = vadd.f32 %v6682, %v7194
        %v7196 = vpop.f32.mrf.mxu0
        %v7197 = vadd.f32 %v6684, %v7196
        %v7198 = vpop.f32.mrf.mxu0
        %v7199 = vadd.f32 %v6686, %v7198
        %v7200 = vpop.f32.mrf.mxu0
        %v7201 = vadd.f32 %v6688, %v7200
        %7202 = vmatprep.mubr.bf16.mxu0 %v6827
        %7203 = vmatmul.mubr.bf16.gmra.mxu0 %v6826
        %v7204 = vpop.f32.mrf.mxu0
        %v7205 = vadd.f32 %v6692, %v7204
        %v7206 = vpop.f32.mrf.mxu0
        %v7207 = vadd.f32 %v6694, %v7206
        %v7208 = vpop.f32.mrf.mxu0
        %v7209 = vadd.f32 %v6696, %v7208
        %v7210 = vpop.f32.mrf.mxu0
        %v7211 = vadd.f32 %v6698, %v7210
        %7212 = vdwg.mxu0
        %v7213 = vld [vmem:[#allocation2] sm:$0xee]
        %v7214 = vld [vmem:[#allocation2 + $0x18] sm:$0xee]
        %v7215 = vld [vmem:[#allocation2 + $0x30] sm:$0xee]
        %v7216 = vld [vmem:[#allocation2 + $0x48] sm:$0xee]
        %v7217 = vld [vmem:[#allocation2 + $0x60] sm:$0xee]
        %v7218 = vld [vmem:[#allocation2 + $0x78] sm:$0xee]
        %v7219 = vld [vmem:[#allocation2 + $0x90] sm:$0xee]
        %v7220 = vld [vmem:[#allocation2 + $0xa8] sm:$0xee]
        %v7221 = vld [vmem:[#allocation2 + $0xc0] sm:$0xee]
        %v7222 = vld [vmem:[#allocation2 + $0xd8] sm:$0xee]
        %v7223 = vld [vmem:[#allocation2 + $0xf0] sm:$0xee]
        %v7224 = vld [vmem:[#allocation2 + $0x108] sm:$0xee]
        %v7225 = vld [vmem:[#allocation2 + $0x120] sm:$0xee]
        %v7226 = vld [vmem:[#allocation2 + $0x138] sm:$0xee]
        %v7227 = vld [vmem:[#allocation2 + $0x150] sm:$0xee]
        %v7228 = vld [vmem:[#allocation2 + $0x168] sm:$0xee]
        %s7229 = scalar_lea.vmem [#allocation8], 512
        %v7230 = vld [vmem:[%s7229] sm:$0xff]
        %v7231 = vld [vmem:[%s7229 + $0x8] sm:$0xff]
        %v7232 = vld [vmem:[%s7229 + $0x10] sm:$0xff]
        %v7233 = vld [vmem:[%s7229 + $0x18] sm:$0xff]
        %v7234 = vld [vmem:[%s7229 + $0x20] sm:$0xff]
        %v7235 = vld [vmem:[%s7229 + $0x28] sm:$0xff]
        %v7236 = vld [vmem:[%s7229 + $0x30] sm:$0xff]
        %v7237 = vld [vmem:[%s7229 + $0x38] sm:$0xff]
        %v7238 = vld [vmem:[%s7229 + $0x40] sm:$0xff]
        %v7239 = vld [vmem:[%s7229 + $0x48] sm:$0xff]
        %v7240 = vld [vmem:[%s7229 + $0x50] sm:$0xff]
        %v7241 = vld [vmem:[%s7229 + $0x58] sm:$0xff]
        %v7242 = vld [vmem:[%s7229 + $0x60] sm:$0xff]
        %v7243 = vld [vmem:[%s7229 + $0x68] sm:$0xff]
        %v7244 = vld [vmem:[%s7229 + $0x70] sm:$0xff]
        %v7245 = vld [vmem:[%s7229 + $0x78] sm:$0xff]
        %v7246 = vld [vmem:[%s7229 + $0x80] sm:$0xff]
        %v7247 = vld [vmem:[%s7229 + $0x88] sm:$0xff]
        %v7248 = vld [vmem:[%s7229 + $0x90] sm:$0xff]
        %v7249 = vld [vmem:[%s7229 + $0x98] sm:$0xff]
        %v7250 = vld [vmem:[%s7229 + $0xa0] sm:$0xff]
        %v7251 = vld [vmem:[%s7229 + $0xa8] sm:$0xff]
        %v7252 = vld [vmem:[%s7229 + $0xb0] sm:$0xff]
        %v7253 = vld [vmem:[%s7229 + $0xb8] sm:$0xff]
        %v7254 = vld [vmem:[%s7229 + $0xc0] sm:$0xff]
        %v7255 = vld [vmem:[%s7229 + $0xc8] sm:$0xff]
        %v7256 = vld [vmem:[%s7229 + $0xd0] sm:$0xff]
        %v7257 = vld [vmem:[%s7229 + $0xd8] sm:$0xff]
        %v7258 = vld [vmem:[%s7229 + $0xe0] sm:$0xff]
        %v7259 = vld [vmem:[%s7229 + $0xe8] sm:$0xff]
        %v7260 = vld [vmem:[%s7229 + $0xf0] sm:$0xff]
        %v7261 = vld [vmem:[%s7229 + $0xf8] sm:$0xff]
        %vm7294 = vcmask 1042432
        %vm7295 = vcmask 1046532
        %vm7296 = vmor %vm7294, %vm7295
        %v7297 = vrot.slane %v7213, 5
        %v7298 = vrot.slane %v7297, 4
        %v7299 = vrot.slane %v5720, 5
        %v7300 = vsel %vm7296, %v7298, %v7299
        %v7301 = vrot.slane %v7299, 4
        %v7302 = vrot.slane %v5783, 5
        %v7303 = vsel %vm7296, %v7301, %v7302
        %v7304 = vrot.slane %v7214, 5
        %v7305 = vrot.slane %v7304, 4
        %v7306 = vrot.slane %v5722, 5
        %v7307 = vsel %vm7296, %v7305, %v7306
        %v7308 = vrot.slane %v7306, 4
        %v7309 = vrot.slane %v5784, 5
        %v7310 = vsel %vm7296, %v7308, %v7309
        %v7311 = vrot.slane %v7215, 5
        %v7312 = vrot.slane %v7311, 4
        %v7313 = vrot.slane %v5724, 5
        %v7314 = vsel %vm7296, %v7312, %v7313
        %v7315 = vrot.slane %v7313, 4
        %v7316 = vrot.slane %v5785, 5
        %v7317 = vsel %vm7296, %v7315, %v7316
        %v7318 = vrot.slane %v7216, 5
        %v7319 = vrot.slane %v7318, 4
        %v7320 = vrot.slane %v5726, 5
        %v7321 = vsel %vm7296, %v7319, %v7320
        %v7322 = vrot.slane %v7320, 4
        %v7323 = vrot.slane %v5786, 5
        %v7324 = vsel %vm7296, %v7322, %v7323
        %v7325 = vrot.slane %v7217, 5
        %v7326 = vrot.slane %v7325, 4
        %v7327 = vrot.slane %v5728, 5
        %v7328 = vsel %vm7296, %v7326, %v7327
        %v7329 = vrot.slane %v7327, 4
        %v7330 = vrot.slane %v5787, 5
        %v7331 = vsel %vm7296, %v7329, %v7330
        %v7332 = vrot.slane %v7218, 5
        %v7333 = vrot.slane %v7332, 4
        %v7334 = vrot.slane %v5730, 5
        %v7335 = vsel %vm7296, %v7333, %v7334
        %v7336 = vrot.slane %v7334, 4
        %v7337 = vrot.slane %v5788, 5
        %v7338 = vsel %vm7296, %v7336, %v7337
        %v7339 = vrot.slane %v7219, 5
        %v7340 = vrot.slane %v7339, 4
        %v7341 = vrot.slane %v5732, 5
        %v7342 = vsel %vm7296, %v7340, %v7341
        %v7343 = vrot.slane %v7341, 4
        %v7344 = vrot.slane %v5789, 5
        %v7345 = vsel %vm7296, %v7343, %v7344
        %v7346 = vrot.slane %v7220, 5
        %v7347 = vrot.slane %v7346, 4
        %v7348 = vrot.slane %v5734, 5
        %v7349 = vsel %vm7296, %v7347, %v7348
        %v7350 = vrot.slane %v7348, 4
        %v7351 = vrot.slane %v5790, 5
        %v7352 = vsel %vm7296, %v7350, %v7351
        %v7353 = vrot.slane %v7221, 5
        %v7354 = vrot.slane %v7353, 4
        %v7355 = vrot.slane %v5736, 5
        %v7356 = vsel %vm7296, %v7354, %v7355
        %v7357 = vrot.slane %v7355, 4
        %v7358 = vrot.slane %v5791, 5
        %v7359 = vsel %vm7296, %v7357, %v7358
        %v7360 = vrot.slane %v7222, 5
        %v7361 = vrot.slane %v7360, 4
        %v7362 = vrot.slane %v5738, 5
        %v7363 = vsel %vm7296, %v7361, %v7362
        %v7364 = vrot.slane %v7362, 4
        %v7365 = vrot.slane %v5792, 5
        %v7366 = vsel %vm7296, %v7364, %v7365
        %v7367 = vrot.slane %v7223, 5
        %v7368 = vrot.slane %v7367, 4
        %v7369 = vrot.slane %v5740, 5
        %v7370 = vsel %vm7296, %v7368, %v7369
        %v7371 = vrot.slane %v7369, 4
        %v7372 = vrot.slane %v5793, 5
        %v7373 = vsel %vm7296, %v7371, %v7372
        %v7374 = vrot.slane %v7224, 5
        %v7375 = vrot.slane %v7374, 4
        %v7376 = vrot.slane %v5742, 5
        %v7377 = vsel %vm7296, %v7375, %v7376
        %v7378 = vrot.slane %v7376, 4
        %v7379 = vrot.slane %v5794, 5
        %v7380 = vsel %vm7296, %v7378, %v7379
        %v7381 = vrot.slane %v7225, 5
        %v7382 = vrot.slane %v7381, 4
        %v7383 = vrot.slane %v5744, 5
        %v7384 = vsel %vm7296, %v7382, %v7383
        %v7385 = vrot.slane %v7383, 4
        %v7386 = vrot.slane %v5795, 5
        %v7387 = vsel %vm7296, %v7385, %v7386
        %v7388 = vrot.slane %v7226, 5
        %v7389 = vrot.slane %v7388, 4
        %v7390 = vrot.slane %v5746, 5
        %v7391 = vsel %vm7296, %v7389, %v7390
        %v7392 = vrot.slane %v7390, 4
        %v7393 = vrot.slane %v5796, 5
        %v7394 = vsel %vm7296, %v7392, %v7393
        %v7395 = vrot.slane %v7227, 5
        %v7396 = vrot.slane %v7395, 4
        %v7397 = vrot.slane %v5748, 5
        %v7398 = vsel %vm7296, %v7396, %v7397
        %v7399 = vrot.slane %v7397, 4
        %v7400 = vrot.slane %v5797, 5
        %v7401 = vsel %vm7296, %v7399, %v7400
        %v7402 = vrot.slane %v7228, 5
        %v7403 = vrot.slane %v7402, 4
        %v7404 = vrot.slane %v5750, 5
        %v7405 = vsel %vm7296, %v7403, %v7404
        %v7406 = vrot.slane %v7404, 4
        %v7407 = vrot.slane %v5798, 5
        %v7408 = vsel %vm7296, %v7406, %v7407
        %v7409 = vunpack.c.l.b16 %v7300
        %v7410 = vunpack.c.h.b16 %v7300
        %v7411 = vunpack.c.l.b16 %v7303
        %v7412 = vunpack.c.h.b16 %v7303
        %v7413 = vunpack.c.l.b16 %v7307
        %v7414 = vunpack.c.h.b16 %v7307
        %v7415 = vunpack.c.l.b16 %v7310
        %v7416 = vunpack.c.h.b16 %v7310
        %v7417 = vunpack.c.l.b16 %v7314
        %v7418 = vunpack.c.h.b16 %v7314
        %v7419 = vunpack.c.l.b16 %v7317
        %v7420 = vunpack.c.h.b16 %v7317
        %v7421 = vunpack.c.l.b16 %v7321
        %v7422 = vunpack.c.h.b16 %v7321
        %v7423 = vunpack.c.l.b16 %v7324
        %v7424 = vunpack.c.h.b16 %v7324
        %v7425 = vunpack.c.l.b16 %v7328
        %v7426 = vunpack.c.h.b16 %v7328
        %v7427 = vunpack.c.l.b16 %v7331
        %v7428 = vunpack.c.h.b16 %v7331
        %v7429 = vunpack.c.l.b16 %v7335
        %v7430 = vunpack.c.h.b16 %v7335
        %v7431 = vunpack.c.l.b16 %v7338
        %v7432 = vunpack.c.h.b16 %v7338
        %v7433 = vunpack.c.l.b16 %v7342
        %v7434 = vunpack.c.h.b16 %v7342
        %v7435 = vunpack.c.l.b16 %v7345
        %v7436 = vunpack.c.h.b16 %v7345
        %v7437 = vunpack.c.l.b16 %v7349
        %v7438 = vunpack.c.h.b16 %v7349
        %v7439 = vunpack.c.l.b16 %v7352
        %v7440 = vunpack.c.h.b16 %v7352
        %v7441 = vunpack.c.l.b16 %v7356
        %v7442 = vunpack.c.h.b16 %v7356
        %v7443 = vunpack.c.l.b16 %v7359
        %v7444 = vunpack.c.h.b16 %v7359
        %v7445 = vunpack.c.l.b16 %v7363
        %v7446 = vunpack.c.h.b16 %v7363
        %v7447 = vunpack.c.l.b16 %v7366
        %v7448 = vunpack.c.h.b16 %v7366
        %v7449 = vunpack.c.l.b16 %v7370
        %v7450 = vunpack.c.h.b16 %v7370
        %v7451 = vunpack.c.l.b16 %v7373
        %v7452 = vunpack.c.h.b16 %v7373
        %v7453 = vunpack.c.l.b16 %v7377
        %v7454 = vunpack.c.h.b16 %v7377
        %v7455 = vunpack.c.l.b16 %v7380
        %v7456 = vunpack.c.h.b16 %v7380
        %v7457 = vunpack.c.l.b16 %v7384
        %v7458 = vunpack.c.h.b16 %v7384
        %v7459 = vunpack.c.l.b16 %v7387
        %v7460 = vunpack.c.h.b16 %v7387
        %v7461 = vunpack.c.l.b16 %v7391
        %v7462 = vunpack.c.h.b16 %v7391
        %v7463 = vunpack.c.l.b16 %v7394
        %v7464 = vunpack.c.h.b16 %v7394
        %v7465 = vunpack.c.l.b16 %v7398
        %v7466 = vunpack.c.h.b16 %v7398
        %v7467 = vunpack.c.l.b16 %v7401
        %v7468 = vunpack.c.h.b16 %v7401
        %v7469 = vunpack.c.l.b16 %v7405
        %v7470 = vunpack.c.h.b16 %v7405
        %v7471 = vunpack.c.l.b16 %v7408
        %v7472 = vunpack.c.h.b16 %v7408
        %v7473 = vpack.c.b16 %v7411, %v7409
        %v7474 = vpack.c.b16 %v7412, %v7410
        %v7475 = vpack.c.b16 %v7415, %v7413
        %v7476 = vpack.c.b16 %v7416, %v7414
        %v7477 = vpack.c.b16 %v7419, %v7417
        %v7478 = vpack.c.b16 %v7420, %v7418
        %v7479 = vpack.c.b16 %v7423, %v7421
        %v7480 = vpack.c.b16 %v7424, %v7422
        %v7481 = vpack.c.b16 %v7427, %v7425
        %v7482 = vpack.c.b16 %v7428, %v7426
        %v7483 = vpack.c.b16 %v7431, %v7429
        %v7484 = vpack.c.b16 %v7432, %v7430
        %v7485 = vpack.c.b16 %v7435, %v7433
        %v7486 = vpack.c.b16 %v7436, %v7434
        %v7487 = vpack.c.b16 %v7439, %v7437
        %v7488 = vpack.c.b16 %v7440, %v7438
        %v7489 = vpack.c.b16 %v7443, %v7441
        %v7490 = vpack.c.b16 %v7444, %v7442
        %v7491 = vpack.c.b16 %v7447, %v7445
        %v7492 = vpack.c.b16 %v7448, %v7446
        %v7493 = vpack.c.b16 %v7451, %v7449
        %v7494 = vpack.c.b16 %v7452, %v7450
        %v7495 = vpack.c.b16 %v7455, %v7453
        %v7496 = vpack.c.b16 %v7456, %v7454
        %v7497 = vpack.c.b16 %v7459, %v7457
        %v7498 = vpack.c.b16 %v7460, %v7458
        %v7499 = vpack.c.b16 %v7463, %v7461
        %v7500 = vpack.c.b16 %v7464, %v7462
        %v7501 = vpack.c.b16 %v7467, %v7465
        %v7502 = vpack.c.b16 %v7468, %v7466
        %v7503 = vpack.c.b16 %v7471, %v7469
        %v7504 = vpack.c.b16 %v7472, %v7470
        %v7569 = vunpack.c.l.b16 %v7230
        %v7570 = vunpack.c.h.b16 %v7230
        %v7571 = vunpack.c.l.b16 %v7231
        %v7572 = vunpack.c.h.b16 %v7231
        %v7573 = vunpack.c.l.b16 %v7232
        %v7574 = vunpack.c.h.b16 %v7232
        %v7575 = vunpack.c.l.b16 %v7233
        %v7576 = vunpack.c.h.b16 %v7233
        %v7577 = vunpack.c.l.b16 %v7234
        %v7578 = vunpack.c.h.b16 %v7234
        %v7579 = vunpack.c.l.b16 %v7235
        %v7580 = vunpack.c.h.b16 %v7235
        %v7581 = vunpack.c.l.b16 %v7236
        %v7582 = vunpack.c.h.b16 %v7236
        %v7583 = vunpack.c.l.b16 %v7237
        %v7584 = vunpack.c.h.b16 %v7237
        %v7585 = vunpack.c.l.b16 %v7238
        %v7586 = vunpack.c.h.b16 %v7238
        %v7587 = vunpack.c.l.b16 %v7239
        %v7588 = vunpack.c.h.b16 %v7239
        %v7589 = vunpack.c.l.b16 %v7240
        %v7590 = vunpack.c.h.b16 %v7240
        %v7591 = vunpack.c.l.b16 %v7241
        %v7592 = vunpack.c.h.b16 %v7241
        %v7593 = vunpack.c.l.b16 %v7242
        %v7594 = vunpack.c.h.b16 %v7242
        %v7595 = vunpack.c.l.b16 %v7243
        %v7596 = vunpack.c.h.b16 %v7243
        %v7597 = vunpack.c.l.b16 %v7244
        %v7598 = vunpack.c.h.b16 %v7244
        %v7599 = vunpack.c.l.b16 %v7245
        %v7600 = vunpack.c.h.b16 %v7245
        %v7601 = vunpack.c.l.b16 %v7246
        %v7602 = vunpack.c.h.b16 %v7246
        %v7603 = vunpack.c.l.b16 %v7247
        %v7604 = vunpack.c.h.b16 %v7247
        %v7605 = vunpack.c.l.b16 %v7248
        %v7606 = vunpack.c.h.b16 %v7248
        %v7607 = vunpack.c.l.b16 %v7249
        %v7608 = vunpack.c.h.b16 %v7249
        %v7609 = vunpack.c.l.b16 %v7250
        %v7610 = vunpack.c.h.b16 %v7250
        %v7611 = vunpack.c.l.b16 %v7251
        %v7612 = vunpack.c.h.b16 %v7251
        %v7613 = vunpack.c.l.b16 %v7252
        %v7614 = vunpack.c.h.b16 %v7252
        %v7615 = vunpack.c.l.b16 %v7253
        %v7616 = vunpack.c.h.b16 %v7253
        %v7617 = vunpack.c.l.b16 %v7254
        %v7618 = vunpack.c.h.b16 %v7254
        %v7619 = vunpack.c.l.b16 %v7255
        %v7620 = vunpack.c.h.b16 %v7255
        %v7621 = vunpack.c.l.b16 %v7256
        %v7622 = vunpack.c.h.b16 %v7256
        %v7623 = vunpack.c.l.b16 %v7257
        %v7624 = vunpack.c.h.b16 %v7257
        %v7625 = vunpack.c.l.b16 %v7258
        %v7626 = vunpack.c.h.b16 %v7258
        %v7627 = vunpack.c.l.b16 %v7259
        %v7628 = vunpack.c.h.b16 %v7259
        %v7629 = vunpack.c.l.b16 %v7260
        %v7630 = vunpack.c.h.b16 %v7260
        %v7631 = vunpack.c.l.b16 %v7261
        %v7632 = vunpack.c.h.b16 %v7261
        %v7633 = vpack.c.b16 %v7571, %v7569
        %v7634 = vpack.c.b16 %v7572, %v7570
        %v7635 = vpack.c.b16 %v7575, %v7573
        %v7636 = vpack.c.b16 %v7576, %v7574
        %v7637 = vpack.c.b16 %v7579, %v7577
        %v7638 = vpack.c.b16 %v7580, %v7578
        %v7639 = vpack.c.b16 %v7583, %v7581
        %v7640 = vpack.c.b16 %v7584, %v7582
        %v7641 = vpack.c.b16 %v7587, %v7585
        %v7642 = vpack.c.b16 %v7588, %v7586
        %v7643 = vpack.c.b16 %v7591, %v7589
        %v7644 = vpack.c.b16 %v7592, %v7590
        %v7645 = vpack.c.b16 %v7595, %v7593
        %v7646 = vpack.c.b16 %v7596, %v7594
        %v7647 = vpack.c.b16 %v7599, %v7597
        %v7648 = vpack.c.b16 %v7600, %v7598
        %v7649 = vpack.c.b16 %v7603, %v7601
        %v7650 = vpack.c.b16 %v7604, %v7602
        %v7651 = vpack.c.b16 %v7607, %v7605
        %v7652 = vpack.c.b16 %v7608, %v7606
        %v7653 = vpack.c.b16 %v7611, %v7609
        %v7654 = vpack.c.b16 %v7612, %v7610
        %v7655 = vpack.c.b16 %v7615, %v7613
        %v7656 = vpack.c.b16 %v7616, %v7614
        %v7657 = vpack.c.b16 %v7619, %v7617
        %v7658 = vpack.c.b16 %v7620, %v7618
        %v7659 = vpack.c.b16 %v7623, %v7621
        %v7660 = vpack.c.b16 %v7624, %v7622
        %v7661 = vpack.c.b16 %v7627, %v7625
        %v7662 = vpack.c.b16 %v7628, %v7626
        %v7663 = vpack.c.b16 %v7631, %v7629
        %v7664 = vpack.c.b16 %v7632, %v7630
        %7697 = vmatprep.subr.bf16.mxu0 %v7648
        %7698 = vmatpush1.bf16.msra.mxu0 %v7647
        %7699 = vmatprep.subr.bf16.mxu0 %v7646
        %7700 = vmatpush1.bf16.msra.mxu0 %v7645
        %7701 = vmatprep.subr.bf16.mxu0 %v7644
        %7702 = vmatpush1.bf16.msra.mxu0 %v7643
        %7703 = vmatprep.subr.bf16.mxu0 %v7642
        %7704 = vmatpush1.bf16.msra.mxu0 %v7641
        %7705 = vmatprep.subr.bf16.mxu0 %v7640
        %7706 = vmatpush1.bf16.msra.mxu0 %v7639
        %7707 = vmatprep.subr.bf16.mxu0 %v7638
        %7708 = vmatpush1.bf16.msra.mxu0 %v7637
        %7709 = vmatprep.subr.bf16.mxu0 %v7636
        %7710 = vmatpush1.bf16.msra.mxu0 %v7635
        %7711 = vmatprep.subr.bf16.mxu0 %v7634
        %7712 = vmatpush1.bf16.msra.mxu0 %v7633
        %7713 = vmatprep.subr.bf16.mxu0 %v7664
        %7714 = vmatpush2.bf16.msra.mxu0 %v7663
        %7715 = vmatprep.subr.bf16.mxu0 %v7662
        %7716 = vmatpush2.bf16.msra.mxu0 %v7661
        %7717 = vmatprep.subr.bf16.mxu0 %v7660
        %7718 = vmatpush2.bf16.msra.mxu0 %v7659
        %7719 = vmatprep.subr.bf16.mxu0 %v7658
        %7720 = vmatpush2.bf16.msra.mxu0 %v7657
        %7721 = vmatprep.subr.bf16.mxu0 %v7656
        %7722 = vmatpush2.bf16.msra.mxu0 %v7655
        %7723 = vmatprep.subr.bf16.mxu0 %v7654
        %7724 = vmatpush2.bf16.msra.mxu0 %v7653
        %7725 = vmatprep.subr.bf16.mxu0 %v7652
        %7726 = vmatpush2.bf16.msra.mxu0 %v7651
        %7727 = vmatprep.subr.bf16.mxu0 %v7650
        %7728 = vmatpush2.bf16.msra.mxu0 %v7649
        %7729 = vmatprep.mubr.bf16.mxu0 %v7474
        %7730 = vmatmul.mubr.bf16.gmra.mxu0 %v7473
        %v7731 = vpop.f32.mrf.mxu0
        %v7732 = vadd.f32 0.0, %v7731
        %v7733 = vpop.f32.mrf.mxu0
        %v7734 = vadd.f32 0.0, %v7733
        %v7735 = vpop.f32.mrf.mxu0
        %v7736 = vadd.f32 0.0, %v7735
        %v7737 = vpop.f32.mrf.mxu0
        %v7738 = vadd.f32 0.0, %v7737
        %7739 = vmatprep.mubr.bf16.mxu0 %v7476
        %7740 = vmatmul.mubr.bf16.gmra.mxu0 %v7475
        %v7741 = vpop.f32.mrf.mxu0
        %v7742 = vadd.f32 0.0, %v7741
        %v7743 = vpop.f32.mrf.mxu0
        %v7744 = vadd.f32 0.0, %v7743
        %v7745 = vpop.f32.mrf.mxu0
        %v7746 = vadd.f32 0.0, %v7745
        %v7747 = vpop.f32.mrf.mxu0
        %v7748 = vadd.f32 0.0, %v7747
        %7749 = vmatprep.mubr.bf16.mxu0 %v7478
        %7750 = vmatmul.mubr.bf16.gmra.mxu0 %v7477
        %v7751 = vpop.f32.mrf.mxu0
        %v7752 = vadd.f32 0.0, %v7751
        %v7753 = vpop.f32.mrf.mxu0
        %v7754 = vadd.f32 0.0, %v7753
        %v7755 = vpop.f32.mrf.mxu0
        %v7756 = vadd.f32 0.0, %v7755
        %v7757 = vpop.f32.mrf.mxu0
        %v7758 = vadd.f32 0.0, %v7757
        %7759 = vmatprep.mubr.bf16.mxu0 %v7480
        %7760 = vmatmul.mubr.bf16.gmra.mxu0 %v7479
        %v7761 = vpop.f32.mrf.mxu0
        %v7762 = vadd.f32 0.0, %v7761
        %v7763 = vpop.f32.mrf.mxu0
        %v7764 = vadd.f32 0.0, %v7763
        %v7765 = vpop.f32.mrf.mxu0
        %v7766 = vadd.f32 0.0, %v7765
        %v7767 = vpop.f32.mrf.mxu0
        %v7768 = vadd.f32 0.0, %v7767
        %7769 = vmatprep.mubr.bf16.mxu0 %v7482
        %7770 = vmatmul.mubr.bf16.gmra.mxu0 %v7481
        %v7771 = vpop.f32.mrf.mxu0
        %v7772 = vadd.f32 0.0, %v7771
        %v7773 = vpop.f32.mrf.mxu0
        %v7774 = vadd.f32 0.0, %v7773
        %v7775 = vpop.f32.mrf.mxu0
        %v7776 = vadd.f32 0.0, %v7775
        %v7777 = vpop.f32.mrf.mxu0
        %v7778 = vadd.f32 0.0, %v7777
        %7779 = vmatprep.mubr.bf16.mxu0 %v7484
        %7780 = vmatmul.mubr.bf16.gmra.mxu0 %v7483
        %v7781 = vpop.f32.mrf.mxu0
        %v7782 = vadd.f32 0.0, %v7781
        %v7783 = vpop.f32.mrf.mxu0
        %v7784 = vadd.f32 0.0, %v7783
        %v7785 = vpop.f32.mrf.mxu0
        %v7786 = vadd.f32 0.0, %v7785
        %v7787 = vpop.f32.mrf.mxu0
        %v7788 = vadd.f32 0.0, %v7787
        %7789 = vmatprep.mubr.bf16.mxu0 %v7486
        %7790 = vmatmul.mubr.bf16.gmra.mxu0 %v7485
        %v7791 = vpop.f32.mrf.mxu0
        %v7792 = vadd.f32 0.0, %v7791
        %v7793 = vpop.f32.mrf.mxu0
        %v7794 = vadd.f32 0.0, %v7793
        %v7795 = vpop.f32.mrf.mxu0
        %v7796 = vadd.f32 0.0, %v7795
        %v7797 = vpop.f32.mrf.mxu0
        %v7798 = vadd.f32 0.0, %v7797
        %7799 = vmatprep.mubr.bf16.mxu0 %v7488
        %7800 = vmatmul.mubr.bf16.gmra.mxu0 %v7487
        %v7801 = vpop.f32.mrf.mxu0
        %v7802 = vadd.f32 0.0, %v7801
        %v7803 = vpop.f32.mrf.mxu0
        %v7804 = vadd.f32 0.0, %v7803
        %v7805 = vpop.f32.mrf.mxu0
        %v7806 = vadd.f32 0.0, %v7805
        %v7807 = vpop.f32.mrf.mxu0
        %v7808 = vadd.f32 0.0, %v7807
        %7809 = vmatprep.mubr.bf16.mxu0 %v7490
        %7810 = vmatmul.mubr.bf16.gmra.mxu0 %v7489
        %v7811 = vpop.f32.mrf.mxu0
        %v7812 = vadd.f32 0.0, %v7811
        %v7813 = vpop.f32.mrf.mxu0
        %v7814 = vadd.f32 0.0, %v7813
        %v7815 = vpop.f32.mrf.mxu0
        %v7816 = vadd.f32 0.0, %v7815
        %v7817 = vpop.f32.mrf.mxu0
        %v7818 = vadd.f32 0.0, %v7817
        %7819 = vmatprep.mubr.bf16.mxu0 %v7492
        %7820 = vmatmul.mubr.bf16.gmra.mxu0 %v7491
        %v7821 = vpop.f32.mrf.mxu0
        %v7822 = vadd.f32 0.0, %v7821
        %v7823 = vpop.f32.mrf.mxu0
        %v7824 = vadd.f32 0.0, %v7823
        %v7825 = vpop.f32.mrf.mxu0
        %v7826 = vadd.f32 0.0, %v7825
        %v7827 = vpop.f32.mrf.mxu0
        %v7828 = vadd.f32 0.0, %v7827
        %7829 = vmatprep.mubr.bf16.mxu0 %v7494
        %7830 = vmatmul.mubr.bf16.gmra.mxu0 %v7493
        %v7831 = vpop.f32.mrf.mxu0
        %v7832 = vadd.f32 0.0, %v7831
        %v7833 = vpop.f32.mrf.mxu0
        %v7834 = vadd.f32 0.0, %v7833
        %v7835 = vpop.f32.mrf.mxu0
        %v7836 = vadd.f32 0.0, %v7835
        %v7837 = vpop.f32.mrf.mxu0
        %v7838 = vadd.f32 0.0, %v7837
        %7839 = vmatprep.mubr.bf16.mxu0 %v7496
        %7840 = vmatmul.mubr.bf16.gmra.mxu0 %v7495
        %v7841 = vpop.f32.mrf.mxu0
        %v7842 = vadd.f32 0.0, %v7841
        %v7843 = vpop.f32.mrf.mxu0
        %v7844 = vadd.f32 0.0, %v7843
        %v7845 = vpop.f32.mrf.mxu0
        %v7846 = vadd.f32 0.0, %v7845
        %v7847 = vpop.f32.mrf.mxu0
        %v7848 = vadd.f32 0.0, %v7847
        %7849 = vmatprep.mubr.bf16.mxu0 %v7498
        %7850 = vmatmul.mubr.bf16.gmra.mxu0 %v7497
        %v7851 = vpop.f32.mrf.mxu0
        %v7852 = vadd.f32 0.0, %v7851
        %v7853 = vpop.f32.mrf.mxu0
        %v7854 = vadd.f32 0.0, %v7853
        %v7855 = vpop.f32.mrf.mxu0
        %v7856 = vadd.f32 0.0, %v7855
        %v7857 = vpop.f32.mrf.mxu0
        %v7858 = vadd.f32 0.0, %v7857
        %7859 = vmatprep.mubr.bf16.mxu0 %v7500
        %7860 = vmatmul.mubr.bf16.gmra.mxu0 %v7499
        %v7861 = vpop.f32.mrf.mxu0
        %v7862 = vadd.f32 0.0, %v7861
        %v7863 = vpop.f32.mrf.mxu0
        %v7864 = vadd.f32 0.0, %v7863
        %v7865 = vpop.f32.mrf.mxu0
        %v7866 = vadd.f32 0.0, %v7865
        %v7867 = vpop.f32.mrf.mxu0
        %v7868 = vadd.f32 0.0, %v7867
        %7869 = vmatprep.mubr.bf16.mxu0 %v7502
        %7870 = vmatmul.mubr.bf16.gmra.mxu0 %v7501
        %v7871 = vpop.f32.mrf.mxu0
        %v7872 = vadd.f32 0.0, %v7871
        %v7873 = vpop.f32.mrf.mxu0
        %v7874 = vadd.f32 0.0, %v7873
        %v7875 = vpop.f32.mrf.mxu0
        %v7876 = vadd.f32 0.0, %v7875
        %v7877 = vpop.f32.mrf.mxu0
        %v7878 = vadd.f32 0.0, %v7877
        %7879 = vmatprep.mubr.bf16.mxu0 %v7504
        %7880 = vmatmul.mubr.bf16.gmra.mxu0 %v7503
        %v7881 = vpop.f32.mrf.mxu0
        %v7882 = vadd.f32 0.0, %v7881
        %v7883 = vpop.f32.mrf.mxu0
        %v7884 = vadd.f32 0.0, %v7883
        %v7885 = vpop.f32.mrf.mxu0
        %v7886 = vadd.f32 0.0, %v7885
        %v7887 = vpop.f32.mrf.mxu0
        %v7888 = vadd.f32 0.0, %v7887
        %7889 = vdwg.mxu0
        %v7890 = vadd.f32 %v7055, %v7732
        %v7891 = vadd.f32 %v7057, %v7734
        %v7892 = vadd.f32 %v7059, %v7736
        %v7893 = vadd.f32 %v7061, %v7738
        %v7894 = vadd.f32 %v7065, %v7742
        %v7895 = vadd.f32 %v7067, %v7744
        %v7896 = vadd.f32 %v7069, %v7746
        %v7897 = vadd.f32 %v7071, %v7748
        %v7898 = vadd.f32 %v7075, %v7752
        %v7899 = vadd.f32 %v7077, %v7754
        %v7900 = vadd.f32 %v7079, %v7756
        %v7901 = vadd.f32 %v7081, %v7758
        %v7902 = vadd.f32 %v7085, %v7762
        %v7903 = vadd.f32 %v7087, %v7764
        %v7904 = vadd.f32 %v7089, %v7766
        %v7905 = vadd.f32 %v7091, %v7768
        %v7906 = vadd.f32 %v7095, %v7772
        %v7907 = vadd.f32 %v7097, %v7774
        %v7908 = vadd.f32 %v7099, %v7776
        %v7909 = vadd.f32 %v7101, %v7778
        %v7910 = vadd.f32 %v7105, %v7782
        %v7911 = vadd.f32 %v7107, %v7784
        %v7912 = vadd.f32 %v7109, %v7786
        %v7913 = vadd.f32 %v7111, %v7788
        %v7914 = vadd.f32 %v7115, %v7792
        %v7915 = vadd.f32 %v7117, %v7794
        %v7916 = vadd.f32 %v7119, %v7796
        %v7917 = vadd.f32 %v7121, %v7798
        %v7918 = vadd.f32 %v7125, %v7802
        %v7919 = vadd.f32 %v7127, %v7804
        %v7920 = vadd.f32 %v7129, %v7806
        %v7921 = vadd.f32 %v7131, %v7808
        %v7922 = vadd.f32 %v7135, %v7812
        %v7923 = vadd.f32 %v7137, %v7814
        %v7924 = vadd.f32 %v7139, %v7816
        %v7925 = vadd.f32 %v7141, %v7818
        %v7926 = vadd.f32 %v7145, %v7822
        %v7927 = vadd.f32 %v7147, %v7824
        %v7928 = vadd.f32 %v7149, %v7826
        %v7929 = vadd.f32 %v7151, %v7828
        %v7930 = vadd.f32 %v7155, %v7832
        %v7931 = vadd.f32 %v7157, %v7834
        %v7932 = vadd.f32 %v7159, %v7836
        %v7933 = vadd.f32 %v7161, %v7838
        %v7934 = vadd.f32 %v7165, %v7842
        %v7935 = vadd.f32 %v7167, %v7844
        %v7936 = vadd.f32 %v7169, %v7846
        %v7937 = vadd.f32 %v7171, %v7848
        %v7938 = vadd.f32 %v7175, %v7852
        %v7939 = vadd.f32 %v7177, %v7854
        %v7940 = vadd.f32 %v7179, %v7856
        %v7941 = vadd.f32 %v7181, %v7858
        %v7942 = vadd.f32 %v7185, %v7862
        %v7943 = vadd.f32 %v7187, %v7864
        %v7944 = vadd.f32 %v7189, %v7866
        %v7945 = vadd.f32 %v7191, %v7868
        %v7946 = vadd.f32 %v7195, %v7872
        %v7947 = vadd.f32 %v7197, %v7874
        %v7948 = vadd.f32 %v7199, %v7876
        %v7949 = vadd.f32 %v7201, %v7878
        %v7950 = vadd.f32 %v7205, %v7882
        %v7951 = vadd.f32 %v7207, %v7884
        %v7952 = vadd.f32 %v7209, %v7886
        %v7953 = vadd.f32 %v7211, %v7888
        %s7954 = scalar_lea.vmem [#allocation2], 24
        %v7955 = vld [vmem:[%s7954] sm:$0xff]
        %v7956 = vld [vmem:[%s7954 + $0x8] sm:$0xff]
        %v7957 = vld [vmem:[%s7954 + $0x18] sm:$0xff]
        %v7958 = vld [vmem:[%s7954 + $0x20] sm:$0xff]
        %v7959 = vld [vmem:[%s7954 + $0x30] sm:$0xff]
        %v7960 = vld [vmem:[%s7954 + $0x38] sm:$0xff]
        %v7961 = vld [vmem:[%s7954 + $0x48] sm:$0xff]
        %v7962 = vld [vmem:[%s7954 + $0x50] sm:$0xff]
        %v7963 = vld [vmem:[%s7954 + $0x60] sm:$0xff]
        %v7964 = vld [vmem:[%s7954 + $0x68] sm:$0xff]
        %v7965 = vld [vmem:[%s7954 + $0x78] sm:$0xff]
        %v7966 = vld [vmem:[%s7954 + $0x80] sm:$0xff]
        %v7967 = vld [vmem:[%s7954 + $0x90] sm:$0xff]
        %v7968 = vld [vmem:[%s7954 + $0x98] sm:$0xff]
        %v7969 = vld [vmem:[%s7954 + $0xa8] sm:$0xff]
        %v7970 = vld [vmem:[%s7954 + $0xb0] sm:$0xff]
        %v7971 = vld [vmem:[%s7954 + $0xc0] sm:$0xff]
        %v7972 = vld [vmem:[%s7954 + $0xc8] sm:$0xff]
        %v7973 = vld [vmem:[%s7954 + $0xd8] sm:$0xff]
        %v7974 = vld [vmem:[%s7954 + $0xe0] sm:$0xff]
        %v7975 = vld [vmem:[%s7954 + $0xf0] sm:$0xff]
        %v7976 = vld [vmem:[%s7954 + $0xf8] sm:$0xff]
        %v7977 = vld [vmem:[%s7954 + $0x108] sm:$0xff]
        %v7978 = vld [vmem:[%s7954 + $0x110] sm:$0xff]
        %v7979 = vld [vmem:[%s7954 + $0x120] sm:$0xff]
        %v7980 = vld [vmem:[%s7954 + $0x128] sm:$0xff]
        %v7981 = vld [vmem:[%s7954 + $0x138] sm:$0xff]
        %v7982 = vld [vmem:[%s7954 + $0x140] sm:$0xff]
        %v7983 = vld [vmem:[%s7954 + $0x150] sm:$0xff]
        %v7984 = vld [vmem:[%s7954 + $0x158] sm:$0xff]
        %v7985 = vld [vmem:[%s7954 + $0x168] sm:$0xff]
        %v7986 = vld [vmem:[%s7954 + $0x170] sm:$0xff]
        %s7987 = scalar_lea.vmem [#allocation8], 768
        %v7988 = vld [vmem:[%s7987] sm:$0xff]
        %v7989 = vld [vmem:[%s7987 + $0x8] sm:$0xff]
        %v7990 = vld [vmem:[%s7987 + $0x10] sm:$0xff]
        %v7991 = vld [vmem:[%s7987 + $0x18] sm:$0xff]
        %v7992 = vld [vmem:[%s7987 + $0x20] sm:$0xff]
        %v7993 = vld [vmem:[%s7987 + $0x28] sm:$0xff]
        %v7994 = vld [vmem:[%s7987 + $0x30] sm:$0xff]
        %v7995 = vld [vmem:[%s7987 + $0x38] sm:$0xff]
        %v7996 = vld [vmem:[%s7987 + $0x40] sm:$0xff]
        %v7997 = vld [vmem:[%s7987 + $0x48] sm:$0xff]
        %v7998 = vld [vmem:[%s7987 + $0x50] sm:$0xff]
        %v7999 = vld [vmem:[%s7987 + $0x58] sm:$0xff]
        %v8000 = vld [vmem:[%s7987 + $0x60] sm:$0xff]
        %v8001 = vld [vmem:[%s7987 + $0x68] sm:$0xff]
        %v8002 = vld [vmem:[%s7987 + $0x70] sm:$0xff]
        %v8003 = vld [vmem:[%s7987 + $0x78] sm:$0xff]
        %v8004 = vld [vmem:[%s7987 + $0x80] sm:$0xff]
        %v8005 = vld [vmem:[%s7987 + $0x88] sm:$0xff]
        %v8006 = vld [vmem:[%s7987 + $0x90] sm:$0xff]
        %v8007 = vld [vmem:[%s7987 + $0x98] sm:$0xff]
        %v8008 = vld [vmem:[%s7987 + $0xa0] sm:$0xff]
        %v8009 = vld [vmem:[%s7987 + $0xa8] sm:$0xff]
        %v8010 = vld [vmem:[%s7987 + $0xb0] sm:$0xff]
        %v8011 = vld [vmem:[%s7987 + $0xb8] sm:$0xff]
        %v8012 = vld [vmem:[%s7987 + $0xc0] sm:$0xff]
        %v8013 = vld [vmem:[%s7987 + $0xc8] sm:$0xff]
        %v8014 = vld [vmem:[%s7987 + $0xd0] sm:$0xff]
        %v8015 = vld [vmem:[%s7987 + $0xd8] sm:$0xff]
        %v8016 = vld [vmem:[%s7987 + $0xe0] sm:$0xff]
        %v8017 = vld [vmem:[%s7987 + $0xe8] sm:$0xff]
        %v8018 = vld [vmem:[%s7987 + $0xf0] sm:$0xff]
        %v8019 = vld [vmem:[%s7987 + $0xf8] sm:$0xff]
        %v8052 = vunpack.c.l.b16 %v7955
        %v8053 = vunpack.c.h.b16 %v7955
        %v8054 = vunpack.c.l.b16 %v7956
        %v8055 = vunpack.c.h.b16 %v7956
        %v8056 = vunpack.c.l.b16 %v7957
        %v8057 = vunpack.c.h.b16 %v7957
        %v8058 = vunpack.c.l.b16 %v7958
        %v8059 = vunpack.c.h.b16 %v7958
        %v8060 = vunpack.c.l.b16 %v7959
        %v8061 = vunpack.c.h.b16 %v7959
        %v8062 = vunpack.c.l.b16 %v7960
        %v8063 = vunpack.c.h.b16 %v7960
        %v8064 = vunpack.c.l.b16 %v7961
        %v8065 = vunpack.c.h.b16 %v7961
        %v8066 = vunpack.c.l.b16 %v7962
        %v8067 = vunpack.c.h.b16 %v7962
        %v8068 = vunpack.c.l.b16 %v7963
        %v8069 = vunpack.c.h.b16 %v7963
        %v8070 = vunpack.c.l.b16 %v7964
        %v8071 = vunpack.c.h.b16 %v7964
        %v8072 = vunpack.c.l.b16 %v7965
        %v8073 = vunpack.c.h.b16 %v7965
        %v8074 = vunpack.c.l.b16 %v7966
        %v8075 = vunpack.c.h.b16 %v7966
        %v8076 = vunpack.c.l.b16 %v7967
        %v8077 = vunpack.c.h.b16 %v7967
        %v8078 = vunpack.c.l.b16 %v7968
        %v8079 = vunpack.c.h.b16 %v7968
        %v8080 = vunpack.c.l.b16 %v7969
        %v8081 = vunpack.c.h.b16 %v7969
        %v8082 = vunpack.c.l.b16 %v7970
        %v8083 = vunpack.c.h.b16 %v7970
        %v8084 = vunpack.c.l.b16 %v7971
        %v8085 = vunpack.c.h.b16 %v7971
        %v8086 = vunpack.c.l.b16 %v7972
        %v8087 = vunpack.c.h.b16 %v7972
        %v8088 = vunpack.c.l.b16 %v7973
        %v8089 = vunpack.c.h.b16 %v7973
        %v8090 = vunpack.c.l.b16 %v7974
        %v8091 = vunpack.c.h.b16 %v7974
        %v8092 = vunpack.c.l.b16 %v7975
        %v8093 = vunpack.c.h.b16 %v7975
        %v8094 = vunpack.c.l.b16 %v7976
        %v8095 = vunpack.c.h.b16 %v7976
        %v8096 = vunpack.c.l.b16 %v7977
        %v8097 = vunpack.c.h.b16 %v7977
        %v8098 = vunpack.c.l.b16 %v7978
        %v8099 = vunpack.c.h.b16 %v7978
        %v8100 = vunpack.c.l.b16 %v7979
        %v8101 = vunpack.c.h.b16 %v7979
        %v8102 = vunpack.c.l.b16 %v7980
        %v8103 = vunpack.c.h.b16 %v7980
        %v8104 = vunpack.c.l.b16 %v7981
        %v8105 = vunpack.c.h.b16 %v7981
        %v8106 = vunpack.c.l.b16 %v7982
        %v8107 = vunpack.c.h.b16 %v7982
        %v8108 = vunpack.c.l.b16 %v7983
        %v8109 = vunpack.c.h.b16 %v7983
        %v8110 = vunpack.c.l.b16 %v7984
        %v8111 = vunpack.c.h.b16 %v7984
        %v8112 = vunpack.c.l.b16 %v7985
        %v8113 = vunpack.c.h.b16 %v7985
        %v8114 = vunpack.c.l.b16 %v7986
        %v8115 = vunpack.c.h.b16 %v7986
        %v8116 = vpack.c.b16 %v8054, %v8052
        %v8117 = vpack.c.b16 %v8055, %v8053
        %v8118 = vpack.c.b16 %v8058, %v8056
        %v8119 = vpack.c.b16 %v8059, %v8057
        %v8120 = vpack.c.b16 %v8062, %v8060
        %v8121 = vpack.c.b16 %v8063, %v8061
        %v8122 = vpack.c.b16 %v8066, %v8064
        %v8123 = vpack.c.b16 %v8067, %v8065
        %v8124 = vpack.c.b16 %v8070, %v8068
        %v8125 = vpack.c.b16 %v8071, %v8069
        %v8126 = vpack.c.b16 %v8074, %v8072
        %v8127 = vpack.c.b16 %v8075, %v8073
        %v8128 = vpack.c.b16 %v8078, %v8076
        %v8129 = vpack.c.b16 %v8079, %v8077
        %v8130 = vpack.c.b16 %v8082, %v8080
        %v8131 = vpack.c.b16 %v8083, %v8081
        %v8132 = vpack.c.b16 %v8086, %v8084
        %v8133 = vpack.c.b16 %v8087, %v8085
        %v8134 = vpack.c.b16 %v8090, %v8088
        %v8135 = vpack.c.b16 %v8091, %v8089
        %v8136 = vpack.c.b16 %v8094, %v8092
        %v8137 = vpack.c.b16 %v8095, %v8093
        %v8138 = vpack.c.b16 %v8098, %v8096
        %v8139 = vpack.c.b16 %v8099, %v8097
        %v8140 = vpack.c.b16 %v8102, %v8100
        %v8141 = vpack.c.b16 %v8103, %v8101
        %v8142 = vpack.c.b16 %v8106, %v8104
        %v8143 = vpack.c.b16 %v8107, %v8105
        %v8144 = vpack.c.b16 %v8110, %v8108
        %v8145 = vpack.c.b16 %v8111, %v8109
        %v8146 = vpack.c.b16 %v8114, %v8112
        %v8147 = vpack.c.b16 %v8115, %v8113
        %v8212 = vunpack.c.l.b16 %v7988
        %v8213 = vunpack.c.h.b16 %v7988
        %v8214 = vunpack.c.l.b16 %v7989
        %v8215 = vunpack.c.h.b16 %v7989
        %v8216 = vunpack.c.l.b16 %v7990
        %v8217 = vunpack.c.h.b16 %v7990
        %v8218 = vunpack.c.l.b16 %v7991
        %v8219 = vunpack.c.h.b16 %v7991
        %v8220 = vunpack.c.l.b16 %v7992
        %v8221 = vunpack.c.h.b16 %v7992
        %v8222 = vunpack.c.l.b16 %v7993
        %v8223 = vunpack.c.h.b16 %v7993
        %v8224 = vunpack.c.l.b16 %v7994
        %v8225 = vunpack.c.h.b16 %v7994
        %v8226 = vunpack.c.l.b16 %v7995
        %v8227 = vunpack.c.h.b16 %v7995
        %v8228 = vunpack.c.l.b16 %v7996
        %v8229 = vunpack.c.h.b16 %v7996
        %v8230 = vunpack.c.l.b16 %v7997
        %v8231 = vunpack.c.h.b16 %v7997
        %v8232 = vunpack.c.l.b16 %v7998
        %v8233 = vunpack.c.h.b16 %v7998
        %v8234 = vunpack.c.l.b16 %v7999
        %v8235 = vunpack.c.h.b16 %v7999
        %v8236 = vunpack.c.l.b16 %v8000
        %v8237 = vunpack.c.h.b16 %v8000
        %v8238 = vunpack.c.l.b16 %v8001
        %v8239 = vunpack.c.h.b16 %v8001
        %v8240 = vunpack.c.l.b16 %v8002
        %v8241 = vunpack.c.h.b16 %v8002
        %v8242 = vunpack.c.l.b16 %v8003
        %v8243 = vunpack.c.h.b16 %v8003
        %v8244 = vunpack.c.l.b16 %v8004
        %v8245 = vunpack.c.h.b16 %v8004
        %v8246 = vunpack.c.l.b16 %v8005
        %v8247 = vunpack.c.h.b16 %v8005
        %v8248 = vunpack.c.l.b16 %v8006
        %v8249 = vunpack.c.h.b16 %v8006
        %v8250 = vunpack.c.l.b16 %v8007
        %v8251 = vunpack.c.h.b16 %v8007
        %v8252 = vunpack.c.l.b16 %v8008
        %v8253 = vunpack.c.h.b16 %v8008
        %v8254 = vunpack.c.l.b16 %v8009
        %v8255 = vunpack.c.h.b16 %v8009
        %v8256 = vunpack.c.l.b16 %v8010
        %v8257 = vunpack.c.h.b16 %v8010
        %v8258 = vunpack.c.l.b16 %v8011
        %v8259 = vunpack.c.h.b16 %v8011
        %v8260 = vunpack.c.l.b16 %v8012
        %v8261 = vunpack.c.h.b16 %v8012
        %v8262 = vunpack.c.l.b16 %v8013
        %v8263 = vunpack.c.h.b16 %v8013
        %v8264 = vunpack.c.l.b16 %v8014
        %v8265 = vunpack.c.h.b16 %v8014
        %v8266 = vunpack.c.l.b16 %v8015
        %v8267 = vunpack.c.h.b16 %v8015
        %v8268 = vunpack.c.l.b16 %v8016
        %v8269 = vunpack.c.h.b16 %v8016
        %v8270 = vunpack.c.l.b16 %v8017
        %v8271 = vunpack.c.h.b16 %v8017
        %v8272 = vunpack.c.l.b16 %v8018
        %v8273 = vunpack.c.h.b16 %v8018
        %v8274 = vunpack.c.l.b16 %v8019
        %v8275 = vunpack.c.h.b16 %v8019
        %v8276 = vpack.c.b16 %v8214, %v8212
        %v8277 = vpack.c.b16 %v8215, %v8213
        %v8278 = vpack.c.b16 %v8218, %v8216
        %v8279 = vpack.c.b16 %v8219, %v8217
        %v8280 = vpack.c.b16 %v8222, %v8220
        %v8281 = vpack.c.b16 %v8223, %v8221
        %v8282 = vpack.c.b16 %v8226, %v8224
        %v8283 = vpack.c.b16 %v8227, %v8225
        %v8284 = vpack.c.b16 %v8230, %v8228
        %v8285 = vpack.c.b16 %v8231, %v8229
        %v8286 = vpack.c.b16 %v8234, %v8232
        %v8287 = vpack.c.b16 %v8235, %v8233
        %v8288 = vpack.c.b16 %v8238, %v8236
        %v8289 = vpack.c.b16 %v8239, %v8237
        %v8290 = vpack.c.b16 %v8242, %v8240
        %v8291 = vpack.c.b16 %v8243, %v8241
        %v8292 = vpack.c.b16 %v8246, %v8244
        %v8293 = vpack.c.b16 %v8247, %v8245
        %v8294 = vpack.c.b16 %v8250, %v8248
        %v8295 = vpack.c.b16 %v8251, %v8249
        %v8296 = vpack.c.b16 %v8254, %v8252
        %v8297 = vpack.c.b16 %v8255, %v8253
        %v8298 = vpack.c.b16 %v8258, %v8256
        %v8299 = vpack.c.b16 %v8259, %v8257
        %v8300 = vpack.c.b16 %v8262, %v8260
        %v8301 = vpack.c.b16 %v8263, %v8261
        %v8302 = vpack.c.b16 %v8266, %v8264
        %v8303 = vpack.c.b16 %v8267, %v8265
        %v8304 = vpack.c.b16 %v8270, %v8268
        %v8305 = vpack.c.b16 %v8271, %v8269
        %v8306 = vpack.c.b16 %v8274, %v8272
        %v8307 = vpack.c.b16 %v8275, %v8273
        %8340 = vmatprep.subr.bf16.mxu0 %v8291
        %8341 = vmatpush1.bf16.msra.mxu0 %v8290
        %8342 = vmatprep.subr.bf16.mxu0 %v8289
        %8343 = vmatpush1.bf16.msra.mxu0 %v8288
        %8344 = vmatprep.subr.bf16.mxu0 %v8287
        %8345 = vmatpush1.bf16.msra.mxu0 %v8286
        %8346 = vmatprep.subr.bf16.mxu0 %v8285
        %8347 = vmatpush1.bf16.msra.mxu0 %v8284
        %8348 = vmatprep.subr.bf16.mxu0 %v8283
        %8349 = vmatpush1.bf16.msra.mxu0 %v8282
        %8350 = vmatprep.subr.bf16.mxu0 %v8281
        %8351 = vmatpush1.bf16.msra.mxu0 %v8280
        %8352 = vmatprep.subr.bf16.mxu0 %v8279
        %8353 = vmatpush1.bf16.msra.mxu0 %v8278
        %8354 = vmatprep.subr.bf16.mxu0 %v8277
        %8355 = vmatpush1.bf16.msra.mxu0 %v8276
        %8356 = vmatprep.subr.bf16.mxu0 %v8307
        %8357 = vmatpush2.bf16.msra.mxu0 %v8306
        %8358 = vmatprep.subr.bf16.mxu0 %v8305
        %8359 = vmatpush2.bf16.msra.mxu0 %v8304
        %8360 = vmatprep.subr.bf16.mxu0 %v8303
        %8361 = vmatpush2.bf16.msra.mxu0 %v8302
        %8362 = vmatprep.subr.bf16.mxu0 %v8301
        %8363 = vmatpush2.bf16.msra.mxu0 %v8300
        %8364 = vmatprep.subr.bf16.mxu0 %v8299
        %8365 = vmatpush2.bf16.msra.mxu0 %v8298
        %8366 = vmatprep.subr.bf16.mxu0 %v8297
        %8367 = vmatpush2.bf16.msra.mxu0 %v8296
        %8368 = vmatprep.subr.bf16.mxu0 %v8295
        %8369 = vmatpush2.bf16.msra.mxu0 %v8294
        %8370 = vmatprep.subr.bf16.mxu0 %v8293
        %8371 = vmatpush2.bf16.msra.mxu0 %v8292
        %8372 = vmatprep.mubr.bf16.mxu0 %v8117
        %8373 = vmatmul.mubr.bf16.gmra.mxu0 %v8116
        %v8374 = vpop.f32.mrf.mxu0
        %v8375 = vadd.f32 0.0, %v8374
        %v8376 = vpop.f32.mrf.mxu0
        %v8377 = vadd.f32 0.0, %v8376
        %v8378 = vpop.f32.mrf.mxu0
        %v8379 = vadd.f32 0.0, %v8378
        %v8380 = vpop.f32.mrf.mxu0
        %v8381 = vadd.f32 0.0, %v8380
        %8382 = vmatprep.mubr.bf16.mxu0 %v8119
        %8383 = vmatmul.mubr.bf16.gmra.mxu0 %v8118
        %v8384 = vpop.f32.mrf.mxu0
        %v8385 = vadd.f32 0.0, %v8384
        %v8386 = vpop.f32.mrf.mxu0
        %v8387 = vadd.f32 0.0, %v8386
        %v8388 = vpop.f32.mrf.mxu0
        %v8389 = vadd.f32 0.0, %v8388
        %v8390 = vpop.f32.mrf.mxu0
        %v8391 = vadd.f32 0.0, %v8390
        %8392 = vmatprep.mubr.bf16.mxu0 %v8121
        %8393 = vmatmul.mubr.bf16.gmra.mxu0 %v8120
        %v8394 = vpop.f32.mrf.mxu0
        %v8395 = vadd.f32 0.0, %v8394
        %v8396 = vpop.f32.mrf.mxu0
        %v8397 = vadd.f32 0.0, %v8396
        %v8398 = vpop.f32.mrf.mxu0
        %v8399 = vadd.f32 0.0, %v8398
        %v8400 = vpop.f32.mrf.mxu0
        %v8401 = vadd.f32 0.0, %v8400
        %8402 = vmatprep.mubr.bf16.mxu0 %v8123
        %8403 = vmatmul.mubr.bf16.gmra.mxu0 %v8122
        %v8404 = vpop.f32.mrf.mxu0
        %v8405 = vadd.f32 0.0, %v8404
        %v8406 = vpop.f32.mrf.mxu0
        %v8407 = vadd.f32 0.0, %v8406
        %v8408 = vpop.f32.mrf.mxu0
        %v8409 = vadd.f32 0.0, %v8408
        %v8410 = vpop.f32.mrf.mxu0
        %v8411 = vadd.f32 0.0, %v8410
        %8412 = vmatprep.mubr.bf16.mxu0 %v8125
        %8413 = vmatmul.mubr.bf16.gmra.mxu0 %v8124
        %v8414 = vpop.f32.mrf.mxu0
        %v8415 = vadd.f32 0.0, %v8414
        %v8416 = vpop.f32.mrf.mxu0
        %v8417 = vadd.f32 0.0, %v8416
        %v8418 = vpop.f32.mrf.mxu0
        %v8419 = vadd.f32 0.0, %v8418
        %v8420 = vpop.f32.mrf.mxu0
        %v8421 = vadd.f32 0.0, %v8420
        %8422 = vmatprep.mubr.bf16.mxu0 %v8127
        %8423 = vmatmul.mubr.bf16.gmra.mxu0 %v8126
        %v8424 = vpop.f32.mrf.mxu0
        %v8425 = vadd.f32 0.0, %v8424
        %v8426 = vpop.f32.mrf.mxu0
        %v8427 = vadd.f32 0.0, %v8426
        %v8428 = vpop.f32.mrf.mxu0
        %v8429 = vadd.f32 0.0, %v8428
        %v8430 = vpop.f32.mrf.mxu0
        %v8431 = vadd.f32 0.0, %v8430
        %8432 = vmatprep.mubr.bf16.mxu0 %v8129
        %8433 = vmatmul.mubr.bf16.gmra.mxu0 %v8128
        %v8434 = vpop.f32.mrf.mxu0
        %v8435 = vadd.f32 0.0, %v8434
        %v8436 = vpop.f32.mrf.mxu0
        %v8437 = vadd.f32 0.0, %v8436
        %v8438 = vpop.f32.mrf.mxu0
        %v8439 = vadd.f32 0.0, %v8438
        %v8440 = vpop.f32.mrf.mxu0
        %v8441 = vadd.f32 0.0, %v8440
        %8442 = vmatprep.mubr.bf16.mxu0 %v8131
        %8443 = vmatmul.mubr.bf16.gmra.mxu0 %v8130
        %v8444 = vpop.f32.mrf.mxu0
        %v8445 = vadd.f32 0.0, %v8444
        %v8446 = vpop.f32.mrf.mxu0
        %v8447 = vadd.f32 0.0, %v8446
        %v8448 = vpop.f32.mrf.mxu0
        %v8449 = vadd.f32 0.0, %v8448
        %v8450 = vpop.f32.mrf.mxu0
        %v8451 = vadd.f32 0.0, %v8450
        %8452 = vmatprep.mubr.bf16.mxu0 %v8133
        %8453 = vmatmul.mubr.bf16.gmra.mxu0 %v8132
        %v8454 = vpop.f32.mrf.mxu0
        %v8455 = vadd.f32 0.0, %v8454
        %v8456 = vpop.f32.mrf.mxu0
        %v8457 = vadd.f32 0.0, %v8456
        %v8458 = vpop.f32.mrf.mxu0
        %v8459 = vadd.f32 0.0, %v8458
        %v8460 = vpop.f32.mrf.mxu0
        %v8461 = vadd.f32 0.0, %v8460
        %8462 = vmatprep.mubr.bf16.mxu0 %v8135
        %8463 = vmatmul.mubr.bf16.gmra.mxu0 %v8134
        %v8464 = vpop.f32.mrf.mxu0
        %v8465 = vadd.f32 0.0, %v8464
        %v8466 = vpop.f32.mrf.mxu0
        %v8467 = vadd.f32 0.0, %v8466
        %v8468 = vpop.f32.mrf.mxu0
        %v8469 = vadd.f32 0.0, %v8468
        %v8470 = vpop.f32.mrf.mxu0
        %v8471 = vadd.f32 0.0, %v8470
        %8472 = vmatprep.mubr.bf16.mxu0 %v8137
        %8473 = vmatmul.mubr.bf16.gmra.mxu0 %v8136
        %v8474 = vpop.f32.mrf.mxu0
        %v8475 = vadd.f32 0.0, %v8474
        %v8476 = vpop.f32.mrf.mxu0
        %v8477 = vadd.f32 0.0, %v8476
        %v8478 = vpop.f32.mrf.mxu0
        %v8479 = vadd.f32 0.0, %v8478
        %v8480 = vpop.f32.mrf.mxu0
        %v8481 = vadd.f32 0.0, %v8480
        %8482 = vmatprep.mubr.bf16.mxu0 %v8139
        %8483 = vmatmul.mubr.bf16.gmra.mxu0 %v8138
        %v8484 = vpop.f32.mrf.mxu0
        %v8485 = vadd.f32 0.0, %v8484
        %v8486 = vpop.f32.mrf.mxu0
        %v8487 = vadd.f32 0.0, %v8486
        %v8488 = vpop.f32.mrf.mxu0
        %v8489 = vadd.f32 0.0, %v8488
        %v8490 = vpop.f32.mrf.mxu0
        %v8491 = vadd.f32 0.0, %v8490
        %8492 = vmatprep.mubr.bf16.mxu0 %v8141
        %8493 = vmatmul.mubr.bf16.gmra.mxu0 %v8140
        %v8494 = vpop.f32.mrf.mxu0
        %v8495 = vadd.f32 0.0, %v8494
        %v8496 = vpop.f32.mrf.mxu0
        %v8497 = vadd.f32 0.0, %v8496
        %v8498 = vpop.f32.mrf.mxu0
        %v8499 = vadd.f32 0.0, %v8498
        %v8500 = vpop.f32.mrf.mxu0
        %v8501 = vadd.f32 0.0, %v8500
        %8502 = vmatprep.mubr.bf16.mxu0 %v8143
        %8503 = vmatmul.mubr.bf16.gmra.mxu0 %v8142
        %v8504 = vpop.f32.mrf.mxu0
        %v8505 = vadd.f32 0.0, %v8504
        %v8506 = vpop.f32.mrf.mxu0
        %v8507 = vadd.f32 0.0, %v8506
        %v8508 = vpop.f32.mrf.mxu0
        %v8509 = vadd.f32 0.0, %v8508
        %v8510 = vpop.f32.mrf.mxu0
        %v8511 = vadd.f32 0.0, %v8510
        %8512 = vmatprep.mubr.bf16.mxu0 %v8145
        %8513 = vmatmul.mubr.bf16.gmra.mxu0 %v8144
        %v8514 = vpop.f32.mrf.mxu0
        %v8515 = vadd.f32 0.0, %v8514
        %v8516 = vpop.f32.mrf.mxu0
        %v8517 = vadd.f32 0.0, %v8516
        %v8518 = vpop.f32.mrf.mxu0
        %v8519 = vadd.f32 0.0, %v8518
        %v8520 = vpop.f32.mrf.mxu0
        %v8521 = vadd.f32 0.0, %v8520
        %8522 = vmatprep.mubr.bf16.mxu0 %v8147
        %8523 = vmatmul.mubr.bf16.gmra.mxu0 %v8146
        %v8524 = vpop.f32.mrf.mxu0
        %v8525 = vadd.f32 0.0, %v8524
        %v8526 = vpop.f32.mrf.mxu0
        %v8527 = vadd.f32 0.0, %v8526
        %v8528 = vpop.f32.mrf.mxu0
        %v8529 = vadd.f32 0.0, %v8528
        %v8530 = vpop.f32.mrf.mxu0
        %v8531 = vadd.f32 0.0, %v8530
        %8532 = vdwg.mxu0
        %v8533 = vadd.f32 %v7890, %v8375
        %v8534 = vadd.f32 %v7891, %v8377
        %v8535 = vadd.f32 %v7892, %v8379
        %v8536 = vadd.f32 %v7893, %v8381
        %v8537 = vadd.f32 %v7894, %v8385
        %v8538 = vadd.f32 %v7895, %v8387
        %v8539 = vadd.f32 %v7896, %v8389
        %v8540 = vadd.f32 %v7897, %v8391
        %v8541 = vadd.f32 %v7898, %v8395
        %v8542 = vadd.f32 %v7899, %v8397
        %v8543 = vadd.f32 %v7900, %v8399
        %v8544 = vadd.f32 %v7901, %v8401
        %v8545 = vadd.f32 %v7902, %v8405
        %v8546 = vadd.f32 %v7903, %v8407
        %v8547 = vadd.f32 %v7904, %v8409
        %v8548 = vadd.f32 %v7905, %v8411
        %v8549 = vadd.f32 %v7906, %v8415
        %v8550 = vadd.f32 %v7907, %v8417
        %v8551 = vadd.f32 %v7908, %v8419
        %v8552 = vadd.f32 %v7909, %v8421
        %v8553 = vadd.f32 %v7910, %v8425
        %v8554 = vadd.f32 %v7911, %v8427
        %v8555 = vadd.f32 %v7912, %v8429
        %v8556 = vadd.f32 %v7913, %v8431
        %v8557 = vadd.f32 %v7914, %v8435
        %v8558 = vadd.f32 %v7915, %v8437
        %v8559 = vadd.f32 %v7916, %v8439
        %v8560 = vadd.f32 %v7917, %v8441
        %v8561 = vadd.f32 %v7918, %v8445
        %v8562 = vadd.f32 %v7919, %v8447
        %v8563 = vadd.f32 %v7920, %v8449
        %v8564 = vadd.f32 %v7921, %v8451
        %v8565 = vadd.f32 %v7922, %v8455
        %v8566 = vadd.f32 %v7923, %v8457
        %v8567 = vadd.f32 %v7924, %v8459
        %v8568 = vadd.f32 %v7925, %v8461
        %v8569 = vadd.f32 %v7926, %v8465
        %v8570 = vadd.f32 %v7927, %v8467
        %v8571 = vadd.f32 %v7928, %v8469
        %v8572 = vadd.f32 %v7929, %v8471
        %v8573 = vadd.f32 %v7930, %v8475
        %v8574 = vadd.f32 %v7931, %v8477
        %v8575 = vadd.f32 %v7932, %v8479
        %v8576 = vadd.f32 %v7933, %v8481
        %v8577 = vadd.f32 %v7934, %v8485
        %v8578 = vadd.f32 %v7935, %v8487
        %v8579 = vadd.f32 %v7936, %v8489
        %v8580 = vadd.f32 %v7937, %v8491
        %v8581 = vadd.f32 %v7938, %v8495
        %v8582 = vadd.f32 %v7939, %v8497
        %v8583 = vadd.f32 %v7940, %v8499
        %v8584 = vadd.f32 %v7941, %v8501
        %v8585 = vadd.f32 %v7942, %v8505
        %v8586 = vadd.f32 %v7943, %v8507
        %v8587 = vadd.f32 %v7944, %v8509
        %v8588 = vadd.f32 %v7945, %v8511
        %v8589 = vadd.f32 %v7946, %v8515
        %v8590 = vadd.f32 %v7947, %v8517
        %v8591 = vadd.f32 %v7948, %v8519
        %v8592 = vadd.f32 %v7949, %v8521
        %v8593 = vadd.f32 %v7950, %v8525
        %v8594 = vadd.f32 %v7951, %v8527
        %v8595 = vadd.f32 %v7952, %v8529
        %v8596 = vadd.f32 %v7953, %v8531
        %v8597 = vld [vmem:[%s7954] sm:$0xff]
        %v8598 = vld [vmem:[%s7954 + $0x8] sm:$0xff]
        %v8599 = vld [vmem:[%s7954 + $0x10] sm:$0x11]
        %v8600 = vld [vmem:[%s7954 + $0x18] sm:$0xff]
        %v8601 = vld [vmem:[%s7954 + $0x20] sm:$0xff]
        %v8602 = vld [vmem:[%s7954 + $0x28] sm:$0x11]
        %v8603 = vld [vmem:[%s7954 + $0x30] sm:$0xff]
        %v8604 = vld [vmem:[%s7954 + $0x38] sm:$0xff]
        %v8605 = vld [vmem:[%s7954 + $0x40] sm:$0x11]
        %v8606 = vld [vmem:[%s7954 + $0x48] sm:$0xff]
        %v8607 = vld [vmem:[%s7954 + $0x50] sm:$0xff]
        %v8608 = vld [vmem:[%s7954 + $0x58] sm:$0x11]
        %v8609 = vld [vmem:[%s7954 + $0x60] sm:$0xff]
        %v8610 = vld [vmem:[%s7954 + $0x68] sm:$0xff]
        %v8611 = vld [vmem:[%s7954 + $0x70] sm:$0x11]
        %v8612 = vld [vmem:[%s7954 + $0x78] sm:$0xff]
        %v8613 = vld [vmem:[%s7954 + $0x80] sm:$0xff]
        %v8614 = vld [vmem:[%s7954 + $0x88] sm:$0x11]
        %v8615 = vld [vmem:[%s7954 + $0x90] sm:$0xff]
        %v8616 = vld [vmem:[%s7954 + $0x98] sm:$0xff]
        %v8617 = vld [vmem:[%s7954 + $0xa0] sm:$0x11]
        %v8618 = vld [vmem:[%s7954 + $0xa8] sm:$0xff]
        %v8619 = vld [vmem:[%s7954 + $0xb0] sm:$0xff]
        %v8620 = vld [vmem:[%s7954 + $0xb8] sm:$0x11]
        %v8621 = vld [vmem:[%s7954 + $0xc0] sm:$0xff]
        %v8622 = vld [vmem:[%s7954 + $0xc8] sm:$0xff]
        %v8623 = vld [vmem:[%s7954 + $0xd0] sm:$0x11]
        %v8624 = vld [vmem:[%s7954 + $0xd8] sm:$0xff]
        %v8625 = vld [vmem:[%s7954 + $0xe0] sm:$0xff]
        %v8626 = vld [vmem:[%s7954 + $0xe8] sm:$0x11]
        %v8627 = vld [vmem:[%s7954 + $0xf0] sm:$0xff]
        %v8628 = vld [vmem:[%s7954 + $0xf8] sm:$0xff]
        %v8629 = vld [vmem:[%s7954 + $0x100] sm:$0x11]
        %v8630 = vld [vmem:[%s7954 + $0x108] sm:$0xff]
        %v8631 = vld [vmem:[%s7954 + $0x110] sm:$0xff]
        %v8632 = vld [vmem:[%s7954 + $0x118] sm:$0x11]
        %v8633 = vld [vmem:[%s7954 + $0x120] sm:$0xff]
        %v8634 = vld [vmem:[%s7954 + $0x128] sm:$0xff]
        %v8635 = vld [vmem:[%s7954 + $0x130] sm:$0x11]
        %v8636 = vld [vmem:[%s7954 + $0x138] sm:$0xff]
        %v8637 = vld [vmem:[%s7954 + $0x140] sm:$0xff]
        %v8638 = vld [vmem:[%s7954 + $0x148] sm:$0x11]
        %v8639 = vld [vmem:[%s7954 + $0x150] sm:$0xff]
        %v8640 = vld [vmem:[%s7954 + $0x158] sm:$0xff]
        %v8641 = vld [vmem:[%s7954 + $0x160] sm:$0x11]
        %v8642 = vld [vmem:[%s7954 + $0x168] sm:$0xff]
        %v8643 = vld [vmem:[%s7954 + $0x170] sm:$0xff]
        %v8644 = vld [vmem:[%s7954 + $0x178] sm:$0x11]
        %s8645 = scalar_lea.vmem [#allocation8], 1024
        %v8646 = vld [vmem:[%s8645] sm:$0xff]
        %v8647 = vld [vmem:[%s8645 + $0x8] sm:$0xff]
        %v8648 = vld [vmem:[%s8645 + $0x10] sm:$0xff]
        %v8649 = vld [vmem:[%s8645 + $0x18] sm:$0xff]
        %v8650 = vld [vmem:[%s8645 + $0x20] sm:$0xff]
        %v8651 = vld [vmem:[%s8645 + $0x28] sm:$0xff]
        %v8652 = vld [vmem:[%s8645 + $0x30] sm:$0xff]
        %v8653 = vld [vmem:[%s8645 + $0x38] sm:$0xff]
        %v8654 = vld [vmem:[%s8645 + $0x40] sm:$0xff]
        %v8655 = vld [vmem:[%s8645 + $0x48] sm:$0xff]
        %v8656 = vld [vmem:[%s8645 + $0x50] sm:$0xff]
        %v8657 = vld [vmem:[%s8645 + $0x58] sm:$0xff]
        %v8658 = vld [vmem:[%s8645 + $0x60] sm:$0xff]
        %v8659 = vld [vmem:[%s8645 + $0x68] sm:$0xff]
        %v8660 = vld [vmem:[%s8645 + $0x70] sm:$0xff]
        %v8661 = vld [vmem:[%s8645 + $0x78] sm:$0xff]
        %v8662 = vld [vmem:[%s8645 + $0x80] sm:$0xff]
        %v8663 = vld [vmem:[%s8645 + $0x88] sm:$0xff]
        %v8664 = vld [vmem:[%s8645 + $0x90] sm:$0xff]
        %v8665 = vld [vmem:[%s8645 + $0x98] sm:$0xff]
        %v8666 = vld [vmem:[%s8645 + $0xa0] sm:$0xff]
        %v8667 = vld [vmem:[%s8645 + $0xa8] sm:$0xff]
        %v8668 = vld [vmem:[%s8645 + $0xb0] sm:$0xff]
        %v8669 = vld [vmem:[%s8645 + $0xb8] sm:$0xff]
        %v8670 = vld [vmem:[%s8645 + $0xc0] sm:$0xff]
        %v8671 = vld [vmem:[%s8645 + $0xc8] sm:$0xff]
        %v8672 = vld [vmem:[%s8645 + $0xd0] sm:$0xff]
        %v8673 = vld [vmem:[%s8645 + $0xd8] sm:$0xff]
        %v8674 = vld [vmem:[%s8645 + $0xe0] sm:$0xff]
        %v8675 = vld [vmem:[%s8645 + $0xe8] sm:$0xff]
        %v8676 = vld [vmem:[%s8645 + $0xf0] sm:$0xff]
        %v8677 = vld [vmem:[%s8645 + $0xf8] sm:$0xff]
        %v8679 = vshrl.u32 %v8597, 16
        %v8681 = vrot.slane %v8679, 4
        %v8682 = vshll.u32 %v8597, 16
        %v8684 = vrot.slane %v8682, 5
        %v8685 = vor.u32 %v8681, %v8684
        %v8686 = vrot.slane %v8685, 4
        %v8688 = vshll.u32 %v8598, 16
        %v8690 = vrot.slane %v8688, 5
        %v8691 = vsel %vm5834, %v8686, %v8690
        %v8692 = vshrl.u32 %v8598, 16
        %v8694 = vrot.slane %v8692, 4
        %v8695 = vor.u32 %v8694, %v8690
        %v8696 = vrot.slane %v8695, 4
        %v8698 = vshll.u32 %v8599, 16
        %v8700 = vrot.slane %v8698, 5
        %v8701 = vsel %vm5834, %v8696, %v8700
        %v8703 = vshrl.u32 %v8600, 16
        %v8705 = vrot.slane %v8703, 4
        %v8706 = vshll.u32 %v8600, 16
        %v8708 = vrot.slane %v8706, 5
        %v8709 = vor.u32 %v8705, %v8708
        %v8710 = vrot.slane %v8709, 4
        %v8712 = vshll.u32 %v8601, 16
        %v8714 = vrot.slane %v8712, 5
        %v8715 = vsel %vm5834, %v8710, %v8714
        %v8716 = vshrl.u32 %v8601, 16
        %v8718 = vrot.slane %v8716, 4
        %v8719 = vor.u32 %v8718, %v8714
        %v8720 = vrot.slane %v8719, 4
        %v8722 = vshll.u32 %v8602, 16
        %v8724 = vrot.slane %v8722, 5
        %v8725 = vsel %vm5834, %v8720, %v8724
        %v8727 = vshrl.u32 %v8603, 16
        %v8729 = vrot.slane %v8727, 4
        %v8730 = vshll.u32 %v8603, 16
        %v8732 = vrot.slane %v8730, 5
        %v8733 = vor.u32 %v8729, %v8732
        %v8734 = vrot.slane %v8733, 4
        %v8736 = vshll.u32 %v8604, 16
        %v8738 = vrot.slane %v8736, 5
        %v8739 = vsel %vm5834, %v8734, %v8738
        %v8740 = vshrl.u32 %v8604, 16
        %v8742 = vrot.slane %v8740, 4
        %v8743 = vor.u32 %v8742, %v8738
        %v8744 = vrot.slane %v8743, 4
        %v8746 = vshll.u32 %v8605, 16
        %v8748 = vrot.slane %v8746, 5
        %v8749 = vsel %vm5834, %v8744, %v8748
        %v8751 = vshrl.u32 %v8606, 16
        %v8753 = vrot.slane %v8751, 4
        %v8754 = vshll.u32 %v8606, 16
        %v8756 = vrot.slane %v8754, 5
        %v8757 = vor.u32 %v8753, %v8756
        %v8758 = vrot.slane %v8757, 4
        %v8760 = vshll.u32 %v8607, 16
        %v8762 = vrot.slane %v8760, 5
        %v8763 = vsel %vm5834, %v8758, %v8762
        %v8764 = vshrl.u32 %v8607, 16
        %v8766 = vrot.slane %v8764, 4
        %v8767 = vor.u32 %v8766, %v8762
        %v8768 = vrot.slane %v8767, 4
        %v8770 = vshll.u32 %v8608, 16
        %v8772 = vrot.slane %v8770, 5
        %v8773 = vsel %vm5834, %v8768, %v8772
        %v8775 = vshrl.u32 %v8609, 16
        %v8777 = vrot.slane %v8775, 4
        %v8778 = vshll.u32 %v8609, 16
        %v8780 = vrot.slane %v8778, 5
        %v8781 = vor.u32 %v8777, %v8780
        %v8782 = vrot.slane %v8781, 4
        %v8784 = vshll.u32 %v8610, 16
        %v8786 = vrot.slane %v8784, 5
        %v8787 = vsel %vm5834, %v8782, %v8786
        %v8788 = vshrl.u32 %v8610, 16
        %v8790 = vrot.slane %v8788, 4
        %v8791 = vor.u32 %v8790, %v8786
        %v8792 = vrot.slane %v8791, 4
        %v8794 = vshll.u32 %v8611, 16
        %v8796 = vrot.slane %v8794, 5
        %v8797 = vsel %vm5834, %v8792, %v8796
        %v8799 = vshrl.u32 %v8612, 16
        %v8801 = vrot.slane %v8799, 4
        %v8802 = vshll.u32 %v8612, 16
        %v8804 = vrot.slane %v8802, 5
        %v8805 = vor.u32 %v8801, %v8804
        %v8806 = vrot.slane %v8805, 4
        %v8808 = vshll.u32 %v8613, 16
        %v8810 = vrot.slane %v8808, 5
        %v8811 = vsel %vm5834, %v8806, %v8810
        %v8812 = vshrl.u32 %v8613, 16
        %v8814 = vrot.slane %v8812, 4
        %v8815 = vor.u32 %v8814, %v8810
        %v8816 = vrot.slane %v8815, 4
        %v8818 = vshll.u32 %v8614, 16
        %v8820 = vrot.slane %v8818, 5
        %v8821 = vsel %vm5834, %v8816, %v8820
        %v8823 = vshrl.u32 %v8615, 16
        %v8825 = vrot.slane %v8823, 4
        %v8826 = vshll.u32 %v8615, 16
        %v8828 = vrot.slane %v8826, 5
        %v8829 = vor.u32 %v8825, %v8828
        %v8830 = vrot.slane %v8829, 4
        %v8832 = vshll.u32 %v8616, 16
        %v8834 = vrot.slane %v8832, 5
        %v8835 = vsel %vm5834, %v8830, %v8834
        %v8836 = vshrl.u32 %v8616, 16
        %v8838 = vrot.slane %v8836, 4
        %v8839 = vor.u32 %v8838, %v8834
        %v8840 = vrot.slane %v8839, 4
        %v8842 = vshll.u32 %v8617, 16
        %v8844 = vrot.slane %v8842, 5
        %v8845 = vsel %vm5834, %v8840, %v8844
        %v8847 = vshrl.u32 %v8618, 16
        %v8849 = vrot.slane %v8847, 4
        %v8850 = vshll.u32 %v8618, 16
        %v8852 = vrot.slane %v8850, 5
        %v8853 = vor.u32 %v8849, %v8852
        %v8854 = vrot.slane %v8853, 4
        %v8856 = vshll.u32 %v8619, 16
        %v8858 = vrot.slane %v8856, 5
        %v8859 = vsel %vm5834, %v8854, %v8858
        %v8860 = vshrl.u32 %v8619, 16
        %v8862 = vrot.slane %v8860, 4
        %v8863 = vor.u32 %v8862, %v8858
        %v8864 = vrot.slane %v8863, 4
        %v8866 = vshll.u32 %v8620, 16
        %v8868 = vrot.slane %v8866, 5
        %v8869 = vsel %vm5834, %v8864, %v8868
        %v8871 = vshrl.u32 %v8621, 16
        %v8873 = vrot.slane %v8871, 4
        %v8874 = vshll.u32 %v8621, 16
        %v8876 = vrot.slane %v8874, 5
        %v8877 = vor.u32 %v8873, %v8876
        %v8878 = vrot.slane %v8877, 4
        %v8880 = vshll.u32 %v8622, 16
        %v8882 = vrot.slane %v8880, 5
        %v8883 = vsel %vm5834, %v8878, %v8882
        %v8884 = vshrl.u32 %v8622, 16
        %v8886 = vrot.slane %v8884, 4
        %v8887 = vor.u32 %v8886, %v8882
        %v8888 = vrot.slane %v8887, 4
        %v8890 = vshll.u32 %v8623, 16
        %v8892 = vrot.slane %v8890, 5
        %v8893 = vsel %vm5834, %v8888, %v8892
        %v8895 = vshrl.u32 %v8624, 16
        %v8897 = vrot.slane %v8895, 4
        %v8898 = vshll.u32 %v8624, 16
        %v8900 = vrot.slane %v8898, 5
        %v8901 = vor.u32 %v8897, %v8900
        %v8902 = vrot.slane %v8901, 4
        %v8904 = vshll.u32 %v8625, 16
        %v8906 = vrot.slane %v8904, 5
        %v8907 = vsel %vm5834, %v8902, %v8906
        %v8908 = vshrl.u32 %v8625, 16
        %v8910 = vrot.slane %v8908, 4
        %v8911 = vor.u32 %v8910, %v8906
        %v8912 = vrot.slane %v8911, 4
        %v8914 = vshll.u32 %v8626, 16
        %v8916 = vrot.slane %v8914, 5
        %v8917 = vsel %vm5834, %v8912, %v8916
        %v8919 = vshrl.u32 %v8627, 16
        %v8921 = vrot.slane %v8919, 4
        %v8922 = vshll.u32 %v8627, 16
        %v8924 = vrot.slane %v8922, 5
        %v8925 = vor.u32 %v8921, %v8924
        %v8926 = vrot.slane %v8925, 4
        %v8928 = vshll.u32 %v8628, 16
        %v8930 = vrot.slane %v8928, 5
        %v8931 = vsel %vm5834, %v8926, %v8930
        %v8932 = vshrl.u32 %v8628, 16
        %v8934 = vrot.slane %v8932, 4
        %v8935 = vor.u32 %v8934, %v8930
        %v8936 = vrot.slane %v8935, 4
        %v8938 = vshll.u32 %v8629, 16
        %v8940 = vrot.slane %v8938, 5
        %v8941 = vsel %vm5834, %v8936, %v8940
        %v8943 = vshrl.u32 %v8630, 16
        %v8945 = vrot.slane %v8943, 4
        %v8946 = vshll.u32 %v8630, 16
        %v8948 = vrot.slane %v8946, 5
        %v8949 = vor.u32 %v8945, %v8948
        %v8950 = vrot.slane %v8949, 4
        %v8952 = vshll.u32 %v8631, 16
        %v8954 = vrot.slane %v8952, 5
        %v8955 = vsel %vm5834, %v8950, %v8954
        %v8956 = vshrl.u32 %v8631, 16
        %v8958 = vrot.slane %v8956, 4
        %v8959 = vor.u32 %v8958, %v8954
        %v8960 = vrot.slane %v8959, 4
        %v8962 = vshll.u32 %v8632, 16
        %v8964 = vrot.slane %v8962, 5
        %v8965 = vsel %vm5834, %v8960, %v8964
        %v8967 = vshrl.u32 %v8633, 16
        %v8969 = vrot.slane %v8967, 4
        %v8970 = vshll.u32 %v8633, 16
        %v8972 = vrot.slane %v8970, 5
        %v8973 = vor.u32 %v8969, %v8972
        %v8974 = vrot.slane %v8973, 4
        %v8976 = vshll.u32 %v8634, 16
        %v8978 = vrot.slane %v8976, 5
        %v8979 = vsel %vm5834, %v8974, %v8978
        %v8980 = vshrl.u32 %v8634, 16
        %v8982 = vrot.slane %v8980, 4
        %v8983 = vor.u32 %v8982, %v8978
        %v8984 = vrot.slane %v8983, 4
        %v8986 = vshll.u32 %v8635, 16
        %v8988 = vrot.slane %v8986, 5
        %v8989 = vsel %vm5834, %v8984, %v8988
        %v8991 = vshrl.u32 %v8636, 16
        %v8993 = vrot.slane %v8991, 4
        %v8994 = vshll.u32 %v8636, 16
        %v8996 = vrot.slane %v8994, 5
        %v8997 = vor.u32 %v8993, %v8996
        %v8998 = vrot.slane %v8997, 4
        %v9000 = vshll.u32 %v8637, 16
        %v9002 = vrot.slane %v9000, 5
        %v9003 = vsel %vm5834, %v8998, %v9002
        %v9004 = vshrl.u32 %v8637, 16
        %v9006 = vrot.slane %v9004, 4
        %v9007 = vor.u32 %v9006, %v9002
        %v9008 = vrot.slane %v9007, 4
        %v9010 = vshll.u32 %v8638, 16
        %v9012 = vrot.slane %v9010, 5
        %v9013 = vsel %vm5834, %v9008, %v9012
        %v9015 = vshrl.u32 %v8639, 16
        %v9017 = vrot.slane %v9015, 4
        %v9018 = vshll.u32 %v8639, 16
        %v9020 = vrot.slane %v9018, 5
        %v9021 = vor.u32 %v9017, %v9020
        %v9022 = vrot.slane %v9021, 4
        %v9024 = vshll.u32 %v8640, 16
        %v9026 = vrot.slane %v9024, 5
        %v9027 = vsel %vm5834, %v9022, %v9026
        %v9028 = vshrl.u32 %v8640, 16
        %v9030 = vrot.slane %v9028, 4
        %v9031 = vor.u32 %v9030, %v9026
        %v9032 = vrot.slane %v9031, 4
        %v9034 = vshll.u32 %v8641, 16
        %v9036 = vrot.slane %v9034, 5
        %v9037 = vsel %vm5834, %v9032, %v9036
        %v9039 = vshrl.u32 %v8642, 16
        %v9041 = vrot.slane %v9039, 4
        %v9042 = vshll.u32 %v8642, 16
        %v9044 = vrot.slane %v9042, 5
        %v9045 = vor.u32 %v9041, %v9044
        %v9046 = vrot.slane %v9045, 4
        %v9048 = vshll.u32 %v8643, 16
        %v9050 = vrot.slane %v9048, 5
        %v9051 = vsel %vm5834, %v9046, %v9050
        %v9052 = vshrl.u32 %v8643, 16
        %v9054 = vrot.slane %v9052, 4
        %v9055 = vor.u32 %v9054, %v9050
        %v9056 = vrot.slane %v9055, 4
        %v9058 = vshll.u32 %v8644, 16
        %v9060 = vrot.slane %v9058, 5
        %v9061 = vsel %vm5834, %v9056, %v9060
        %v9062 = vunpack.c.l.b16 %v8691
        %v9063 = vunpack.c.h.b16 %v8691
        %v9064 = vunpack.c.l.b16 %v8701
        %v9065 = vunpack.c.h.b16 %v8701
        %v9066 = vunpack.c.l.b16 %v8715
        %v9067 = vunpack.c.h.b16 %v8715
        %v9068 = vunpack.c.l.b16 %v8725
        %v9069 = vunpack.c.h.b16 %v8725
        %v9070 = vunpack.c.l.b16 %v8739
        %v9071 = vunpack.c.h.b16 %v8739
        %v9072 = vunpack.c.l.b16 %v8749
        %v9073 = vunpack.c.h.b16 %v8749
        %v9074 = vunpack.c.l.b16 %v8763
        %v9075 = vunpack.c.h.b16 %v8763
        %v9076 = vunpack.c.l.b16 %v8773
        %v9077 = vunpack.c.h.b16 %v8773
        %v9078 = vunpack.c.l.b16 %v8787
        %v9079 = vunpack.c.h.b16 %v8787
        %v9080 = vunpack.c.l.b16 %v8797
        %v9081 = vunpack.c.h.b16 %v8797
        %v9082 = vunpack.c.l.b16 %v8811
        %v9083 = vunpack.c.h.b16 %v8811
        %v9084 = vunpack.c.l.b16 %v8821
        %v9085 = vunpack.c.h.b16 %v8821
        %v9086 = vunpack.c.l.b16 %v8835
        %v9087 = vunpack.c.h.b16 %v8835
        %v9088 = vunpack.c.l.b16 %v8845
        %v9089 = vunpack.c.h.b16 %v8845
        %v9090 = vunpack.c.l.b16 %v8859
        %v9091 = vunpack.c.h.b16 %v8859
        %v9092 = vunpack.c.l.b16 %v8869
        %v9093 = vunpack.c.h.b16 %v8869
        %v9094 = vunpack.c.l.b16 %v8883
        %v9095 = vunpack.c.h.b16 %v8883
        %v9096 = vunpack.c.l.b16 %v8893
        %v9097 = vunpack.c.h.b16 %v8893
        %v9098 = vunpack.c.l.b16 %v8907
        %v9099 = vunpack.c.h.b16 %v8907
        %v9100 = vunpack.c.l.b16 %v8917
        %v9101 = vunpack.c.h.b16 %v8917
        %v9102 = vunpack.c.l.b16 %v8931
        %v9103 = vunpack.c.h.b16 %v8931
        %v9104 = vunpack.c.l.b16 %v8941
        %v9105 = vunpack.c.h.b16 %v8941
        %v9106 = vunpack.c.l.b16 %v8955
        %v9107 = vunpack.c.h.b16 %v8955
        %v9108 = vunpack.c.l.b16 %v8965
        %v9109 = vunpack.c.h.b16 %v8965
        %v9110 = vunpack.c.l.b16 %v8979
        %v9111 = vunpack.c.h.b16 %v8979
        %v9112 = vunpack.c.l.b16 %v8989
        %v9113 = vunpack.c.h.b16 %v8989
        %v9114 = vunpack.c.l.b16 %v9003
        %v9115 = vunpack.c.h.b16 %v9003
        %v9116 = vunpack.c.l.b16 %v9013
        %v9117 = vunpack.c.h.b16 %v9013
        %v9118 = vunpack.c.l.b16 %v9027
        %v9119 = vunpack.c.h.b16 %v9027
        %v9120 = vunpack.c.l.b16 %v9037
        %v9121 = vunpack.c.h.b16 %v9037
        %v9122 = vunpack.c.l.b16 %v9051
        %v9123 = vunpack.c.h.b16 %v9051
        %v9124 = vunpack.c.l.b16 %v9061
        %v9125 = vunpack.c.h.b16 %v9061
        %v9126 = vpack.c.b16 %v9064, %v9062
        %v9127 = vpack.c.b16 %v9065, %v9063
        %v9128 = vpack.c.b16 %v9068, %v9066
        %v9129 = vpack.c.b16 %v9069, %v9067
        %v9130 = vpack.c.b16 %v9072, %v9070
        %v9131 = vpack.c.b16 %v9073, %v9071
        %v9132 = vpack.c.b16 %v9076, %v9074
        %v9133 = vpack.c.b16 %v9077, %v9075
        %v9134 = vpack.c.b16 %v9080, %v9078
        %v9135 = vpack.c.b16 %v9081, %v9079
        %v9136 = vpack.c.b16 %v9084, %v9082
        %v9137 = vpack.c.b16 %v9085, %v9083
        %v9138 = vpack.c.b16 %v9088, %v9086
        %v9139 = vpack.c.b16 %v9089, %v9087
        %v9140 = vpack.c.b16 %v9092, %v9090
        %v9141 = vpack.c.b16 %v9093, %v9091
        %v9142 = vpack.c.b16 %v9096, %v9094
        %v9143 = vpack.c.b16 %v9097, %v9095
        %v9144 = vpack.c.b16 %v9100, %v9098
        %v9145 = vpack.c.b16 %v9101, %v9099
        %v9146 = vpack.c.b16 %v9104, %v9102
        %v9147 = vpack.c.b16 %v9105, %v9103
        %v9148 = vpack.c.b16 %v9108, %v9106
        %v9149 = vpack.c.b16 %v9109, %v9107
        %v9150 = vpack.c.b16 %v9112, %v9110
        %v9151 = vpack.c.b16 %v9113, %v9111
        %v9152 = vpack.c.b16 %v9116, %v9114
        %v9153 = vpack.c.b16 %v9117, %v9115
        %v9154 = vpack.c.b16 %v9120, %v9118
        %v9155 = vpack.c.b16 %v9121, %v9119
        %v9156 = vpack.c.b16 %v9124, %v9122
        %v9157 = vpack.c.b16 %v9125, %v9123
        %v9222 = vunpack.c.l.b16 %v8646
        %v9223 = vunpack.c.h.b16 %v8646
        %v9224 = vunpack.c.l.b16 %v8647
        %v9225 = vunpack.c.h.b16 %v8647
        %v9226 = vunpack.c.l.b16 %v8648
        %v9227 = vunpack.c.h.b16 %v8648
        %v9228 = vunpack.c.l.b16 %v8649
        %v9229 = vunpack.c.h.b16 %v8649
        %v9230 = vunpack.c.l.b16 %v8650
        %v9231 = vunpack.c.h.b16 %v8650
        %v9232 = vunpack.c.l.b16 %v8651
        %v9233 = vunpack.c.h.b16 %v8651
        %v9234 = vunpack.c.l.b16 %v8652
        %v9235 = vunpack.c.h.b16 %v8652
        %v9236 = vunpack.c.l.b16 %v8653
        %v9237 = vunpack.c.h.b16 %v8653
        %v9238 = vunpack.c.l.b16 %v8654
        %v9239 = vunpack.c.h.b16 %v8654
        %v9240 = vunpack.c.l.b16 %v8655
        %v9241 = vunpack.c.h.b16 %v8655
        %v9242 = vunpack.c.l.b16 %v8656
        %v9243 = vunpack.c.h.b16 %v8656
        %v9244 = vunpack.c.l.b16 %v8657
        %v9245 = vunpack.c.h.b16 %v8657
        %v9246 = vunpack.c.l.b16 %v8658
        %v9247 = vunpack.c.h.b16 %v8658
        %v9248 = vunpack.c.l.b16 %v8659
        %v9249 = vunpack.c.h.b16 %v8659
        %v9250 = vunpack.c.l.b16 %v8660
        %v9251 = vunpack.c.h.b16 %v8660
        %v9252 = vunpack.c.l.b16 %v8661
        %v9253 = vunpack.c.h.b16 %v8661
        %v9254 = vunpack.c.l.b16 %v8662
        %v9255 = vunpack.c.h.b16 %v8662
        %v9256 = vunpack.c.l.b16 %v8663
        %v9257 = vunpack.c.h.b16 %v8663
        %v9258 = vunpack.c.l.b16 %v8664
        %v9259 = vunpack.c.h.b16 %v8664
        %v9260 = vunpack.c.l.b16 %v8665
        %v9261 = vunpack.c.h.b16 %v8665
        %v9262 = vunpack.c.l.b16 %v8666
        %v9263 = vunpack.c.h.b16 %v8666
        %v9264 = vunpack.c.l.b16 %v8667
        %v9265 = vunpack.c.h.b16 %v8667
        %v9266 = vunpack.c.l.b16 %v8668
        %v9267 = vunpack.c.h.b16 %v8668
        %v9268 = vunpack.c.l.b16 %v8669
        %v9269 = vunpack.c.h.b16 %v8669
        %v9270 = vunpack.c.l.b16 %v8670
        %v9271 = vunpack.c.h.b16 %v8670
        %v9272 = vunpack.c.l.b16 %v8671
        %v9273 = vunpack.c.h.b16 %v8671
        %v9274 = vunpack.c.l.b16 %v8672
        %v9275 = vunpack.c.h.b16 %v8672
        %v9276 = vunpack.c.l.b16 %v8673
        %v9277 = vunpack.c.h.b16 %v8673
        %v9278 = vunpack.c.l.b16 %v8674
        %v9279 = vunpack.c.h.b16 %v8674
        %v9280 = vunpack.c.l.b16 %v8675
        %v9281 = vunpack.c.h.b16 %v8675
        %v9282 = vunpack.c.l.b16 %v8676
        %v9283 = vunpack.c.h.b16 %v8676
        %v9284 = vunpack.c.l.b16 %v8677
        %v9285 = vunpack.c.h.b16 %v8677
        %v9286 = vpack.c.b16 %v9224, %v9222
        %v9287 = vpack.c.b16 %v9225, %v9223
        %v9288 = vpack.c.b16 %v9228, %v9226
        %v9289 = vpack.c.b16 %v9229, %v9227
        %v9290 = vpack.c.b16 %v9232, %v9230
        %v9291 = vpack.c.b16 %v9233, %v9231
        %v9292 = vpack.c.b16 %v9236, %v9234
        %v9293 = vpack.c.b16 %v9237, %v9235
        %v9294 = vpack.c.b16 %v9240, %v9238
        %v9295 = vpack.c.b16 %v9241, %v9239
        %v9296 = vpack.c.b16 %v9244, %v9242
        %v9297 = vpack.c.b16 %v9245, %v9243
        %v9298 = vpack.c.b16 %v9248, %v9246
        %v9299 = vpack.c.b16 %v9249, %v9247
        %v9300 = vpack.c.b16 %v9252, %v9250
        %v9301 = vpack.c.b16 %v9253, %v9251
        %v9302 = vpack.c.b16 %v9256, %v9254
        %v9303 = vpack.c.b16 %v9257, %v9255
        %v9304 = vpack.c.b16 %v9260, %v9258
        %v9305 = vpack.c.b16 %v9261, %v9259
        %v9306 = vpack.c.b16 %v9264, %v9262
        %v9307 = vpack.c.b16 %v9265, %v9263
        %v9308 = vpack.c.b16 %v9268, %v9266
        %v9309 = vpack.c.b16 %v9269, %v9267
        %v9310 = vpack.c.b16 %v9272, %v9270
        %v9311 = vpack.c.b16 %v9273, %v9271
        %v9312 = vpack.c.b16 %v9276, %v9274
        %v9313 = vpack.c.b16 %v9277, %v9275
        %v9314 = vpack.c.b16 %v9280, %v9278
        %v9315 = vpack.c.b16 %v9281, %v9279
        %v9316 = vpack.c.b16 %v9284, %v9282
        %v9317 = vpack.c.b16 %v9285, %v9283
        %9350 = vmatprep.subr.bf16.mxu0 %v9301
        %9351 = vmatpush1.bf16.msra.mxu0 %v9300
        %9352 = vmatprep.subr.bf16.mxu0 %v9299
        %9353 = vmatpush1.bf16.msra.mxu0 %v9298
        %9354 = vmatprep.subr.bf16.mxu0 %v9297
        %9355 = vmatpush1.bf16.msra.mxu0 %v9296
        %9356 = vmatprep.subr.bf16.mxu0 %v9295
        %9357 = vmatpush1.bf16.msra.mxu0 %v9294
        %9358 = vmatprep.subr.bf16.mxu0 %v9293
        %9359 = vmatpush1.bf16.msra.mxu0 %v9292
        %9360 = vmatprep.subr.bf16.mxu0 %v9291
        %9361 = vmatpush1.bf16.msra.mxu0 %v9290
        %9362 = vmatprep.subr.bf16.mxu0 %v9289
        %9363 = vmatpush1.bf16.msra.mxu0 %v9288
        %9364 = vmatprep.subr.bf16.mxu0 %v9287
        %9365 = vmatpush1.bf16.msra.mxu0 %v9286
        %9366 = vmatprep.subr.bf16.mxu0 %v9317
        %9367 = vmatpush2.bf16.msra.mxu0 %v9316
        %9368 = vmatprep.subr.bf16.mxu0 %v9315
        %9369 = vmatpush2.bf16.msra.mxu0 %v9314
        %9370 = vmatprep.subr.bf16.mxu0 %v9313
        %9371 = vmatpush2.bf16.msra.mxu0 %v9312
        %9372 = vmatprep.subr.bf16.mxu0 %v9311
        %9373 = vmatpush2.bf16.msra.mxu0 %v9310
        %9374 = vmatprep.subr.bf16.mxu0 %v9309
        %9375 = vmatpush2.bf16.msra.mxu0 %v9308
        %9376 = vmatprep.subr.bf16.mxu0 %v9307
        %9377 = vmatpush2.bf16.msra.mxu0 %v9306
        %9378 = vmatprep.subr.bf16.mxu0 %v9305
        %9379 = vmatpush2.bf16.msra.mxu0 %v9304
        %9380 = vmatprep.subr.bf16.mxu0 %v9303
        %9381 = vmatpush2.bf16.msra.mxu0 %v9302
        %9382 = vmatprep.mubr.bf16.mxu0 %v9127
        %9383 = vmatmul.mubr.bf16.gmra.mxu0 %v9126
        %v9384 = vpop.f32.mrf.mxu0
        %v9385 = vadd.f32 0.0, %v9384
        %v9386 = vpop.f32.mrf.mxu0
        %v9387 = vadd.f32 0.0, %v9386
        %v9388 = vpop.f32.mrf.mxu0
        %v9389 = vadd.f32 0.0, %v9388
        %v9390 = vpop.f32.mrf.mxu0
        %v9391 = vadd.f32 0.0, %v9390
        %9392 = vmatprep.mubr.bf16.mxu0 %v9129
        %9393 = vmatmul.mubr.bf16.gmra.mxu0 %v9128
        %v9394 = vpop.f32.mrf.mxu0
        %v9395 = vadd.f32 0.0, %v9394
        %v9396 = vpop.f32.mrf.mxu0
        %v9397 = vadd.f32 0.0, %v9396
        %v9398 = vpop.f32.mrf.mxu0
        %v9399 = vadd.f32 0.0, %v9398
        %v9400 = vpop.f32.mrf.mxu0
        %v9401 = vadd.f32 0.0, %v9400
        %9402 = vmatprep.mubr.bf16.mxu0 %v9131
        %9403 = vmatmul.mubr.bf16.gmra.mxu0 %v9130
        %v9404 = vpop.f32.mrf.mxu0
        %v9405 = vadd.f32 0.0, %v9404
        %v9406 = vpop.f32.mrf.mxu0
        %v9407 = vadd.f32 0.0, %v9406
        %v9408 = vpop.f32.mrf.mxu0
        %v9409 = vadd.f32 0.0, %v9408
        %v9410 = vpop.f32.mrf.mxu0
        %v9411 = vadd.f32 0.0, %v9410
        %9412 = vmatprep.mubr.bf16.mxu0 %v9133
        %9413 = vmatmul.mubr.bf16.gmra.mxu0 %v9132
        %v9414 = vpop.f32.mrf.mxu0
        %v9415 = vadd.f32 0.0, %v9414
        %v9416 = vpop.f32.mrf.mxu0
        %v9417 = vadd.f32 0.0, %v9416
        %v9418 = vpop.f32.mrf.mxu0
        %v9419 = vadd.f32 0.0, %v9418
        %v9420 = vpop.f32.mrf.mxu0
        %v9421 = vadd.f32 0.0, %v9420
        %9422 = vmatprep.mubr.bf16.mxu0 %v9135
        %9423 = vmatmul.mubr.bf16.gmra.mxu0 %v9134
        %v9424 = vpop.f32.mrf.mxu0
        %v9425 = vadd.f32 0.0, %v9424
        %v9426 = vpop.f32.mrf.mxu0
        %v9427 = vadd.f32 0.0, %v9426
        %v9428 = vpop.f32.mrf.mxu0
        %v9429 = vadd.f32 0.0, %v9428
        %v9430 = vpop.f32.mrf.mxu0
        %v9431 = vadd.f32 0.0, %v9430
        %9432 = vmatprep.mubr.bf16.mxu0 %v9137
        %9433 = vmatmul.mubr.bf16.gmra.mxu0 %v9136
        %v9434 = vpop.f32.mrf.mxu0
        %v9435 = vadd.f32 0.0, %v9434
        %v9436 = vpop.f32.mrf.mxu0
        %v9437 = vadd.f32 0.0, %v9436
        %v9438 = vpop.f32.mrf.mxu0
        %v9439 = vadd.f32 0.0, %v9438
        %v9440 = vpop.f32.mrf.mxu0
        %v9441 = vadd.f32 0.0, %v9440
        %9442 = vmatprep.mubr.bf16.mxu0 %v9139
        %9443 = vmatmul.mubr.bf16.gmra.mxu0 %v9138
        %v9444 = vpop.f32.mrf.mxu0
        %v9445 = vadd.f32 0.0, %v9444
        %v9446 = vpop.f32.mrf.mxu0
        %v9447 = vadd.f32 0.0, %v9446
        %v9448 = vpop.f32.mrf.mxu0
        %v9449 = vadd.f32 0.0, %v9448
        %v9450 = vpop.f32.mrf.mxu0
        %v9451 = vadd.f32 0.0, %v9450
        %9452 = vmatprep.mubr.bf16.mxu0 %v9141
        %9453 = vmatmul.mubr.bf16.gmra.mxu0 %v9140
        %v9454 = vpop.f32.mrf.mxu0
        %v9455 = vadd.f32 0.0, %v9454
        %v9456 = vpop.f32.mrf.mxu0
        %v9457 = vadd.f32 0.0, %v9456
        %v9458 = vpop.f32.mrf.mxu0
        %v9459 = vadd.f32 0.0, %v9458
        %v9460 = vpop.f32.mrf.mxu0
        %v9461 = vadd.f32 0.0, %v9460
        %9462 = vmatprep.mubr.bf16.mxu0 %v9143
        %9463 = vmatmul.mubr.bf16.gmra.mxu0 %v9142
        %v9464 = vpop.f32.mrf.mxu0
        %v9465 = vadd.f32 0.0, %v9464
        %v9466 = vpop.f32.mrf.mxu0
        %v9467 = vadd.f32 0.0, %v9466
        %v9468 = vpop.f32.mrf.mxu0
        %v9469 = vadd.f32 0.0, %v9468
        %v9470 = vpop.f32.mrf.mxu0
        %v9471 = vadd.f32 0.0, %v9470
        %9472 = vmatprep.mubr.bf16.mxu0 %v9145
        %9473 = vmatmul.mubr.bf16.gmra.mxu0 %v9144
        %v9474 = vpop.f32.mrf.mxu0
        %v9475 = vadd.f32 0.0, %v9474
        %v9476 = vpop.f32.mrf.mxu0
        %v9477 = vadd.f32 0.0, %v9476
        %v9478 = vpop.f32.mrf.mxu0
        %v9479 = vadd.f32 0.0, %v9478
        %v9480 = vpop.f32.mrf.mxu0
        %v9481 = vadd.f32 0.0, %v9480
        %9482 = vmatprep.mubr.bf16.mxu0 %v9147
        %9483 = vmatmul.mubr.bf16.gmra.mxu0 %v9146
        %v9484 = vpop.f32.mrf.mxu0
        %v9485 = vadd.f32 0.0, %v9484
        %v9486 = vpop.f32.mrf.mxu0
        %v9487 = vadd.f32 0.0, %v9486
        %v9488 = vpop.f32.mrf.mxu0
        %v9489 = vadd.f32 0.0, %v9488
        %v9490 = vpop.f32.mrf.mxu0
        %v9491 = vadd.f32 0.0, %v9490
        %9492 = vmatprep.mubr.bf16.mxu0 %v9149
        %9493 = vmatmul.mubr.bf16.gmra.mxu0 %v9148
        %v9494 = vpop.f32.mrf.mxu0
        %v9495 = vadd.f32 0.0, %v9494
        %v9496 = vpop.f32.mrf.mxu0
        %v9497 = vadd.f32 0.0, %v9496
        %v9498 = vpop.f32.mrf.mxu0
        %v9499 = vadd.f32 0.0, %v9498
        %v9500 = vpop.f32.mrf.mxu0
        %v9501 = vadd.f32 0.0, %v9500
        %9502 = vmatprep.mubr.bf16.mxu0 %v9151
        %9503 = vmatmul.mubr.bf16.gmra.mxu0 %v9150
        %v9504 = vpop.f32.mrf.mxu0
        %v9505 = vadd.f32 0.0, %v9504
        %v9506 = vpop.f32.mrf.mxu0
        %v9507 = vadd.f32 0.0, %v9506
        %v9508 = vpop.f32.mrf.mxu0
        %v9509 = vadd.f32 0.0, %v9508
        %v9510 = vpop.f32.mrf.mxu0
        %v9511 = vadd.f32 0.0, %v9510
        %9512 = vmatprep.mubr.bf16.mxu0 %v9153
        %9513 = vmatmul.mubr.bf16.gmra.mxu0 %v9152
        %v9514 = vpop.f32.mrf.mxu0
        %v9515 = vadd.f32 0.0, %v9514
        %v9516 = vpop.f32.mrf.mxu0
        %v9517 = vadd.f32 0.0, %v9516
        %v9518 = vpop.f32.mrf.mxu0
        %v9519 = vadd.f32 0.0, %v9518
        %v9520 = vpop.f32.mrf.mxu0
        %v9521 = vadd.f32 0.0, %v9520
        %9522 = vmatprep.mubr.bf16.mxu0 %v9155
        %9523 = vmatmul.mubr.bf16.gmra.mxu0 %v9154
        %v9524 = vpop.f32.mrf.mxu0
        %v9525 = vadd.f32 0.0, %v9524
        %v9526 = vpop.f32.mrf.mxu0
        %v9527 = vadd.f32 0.0, %v9526
        %v9528 = vpop.f32.mrf.mxu0
        %v9529 = vadd.f32 0.0, %v9528
        %v9530 = vpop.f32.mrf.mxu0
        %v9531 = vadd.f32 0.0, %v9530
        %9532 = vmatprep.mubr.bf16.mxu0 %v9157
        %9533 = vmatmul.mubr.bf16.gmra.mxu0 %v9156
        %v9534 = vpop.f32.mrf.mxu0
        %v9535 = vadd.f32 0.0, %v9534
        %v9536 = vpop.f32.mrf.mxu0
        %v9537 = vadd.f32 0.0, %v9536
        %v9538 = vpop.f32.mrf.mxu0
        %v9539 = vadd.f32 0.0, %v9538
        %v9540 = vpop.f32.mrf.mxu0
        %v9541 = vadd.f32 0.0, %v9540
        %9542 = vdwg.mxu0
        %v9543 = vadd.f32 %v8533, %v9385
        %v9544 = vadd.f32 %v8534, %v9387
        %v9545 = vadd.f32 %v8535, %v9389
        %v9546 = vadd.f32 %v8536, %v9391
        %v9547 = vadd.f32 %v8537, %v9395
        %v9548 = vadd.f32 %v8538, %v9397
        %v9549 = vadd.f32 %v8539, %v9399
        %v9550 = vadd.f32 %v8540, %v9401
        %v9551 = vadd.f32 %v8541, %v9405
        %v9552 = vadd.f32 %v8542, %v9407
        %v9553 = vadd.f32 %v8543, %v9409
        %v9554 = vadd.f32 %v8544, %v9411
        %v9555 = vadd.f32 %v8545, %v9415
        %v9556 = vadd.f32 %v8546, %v9417
        %v9557 = vadd.f32 %v8547, %v9419
        %v9558 = vadd.f32 %v8548, %v9421
        %v9559 = vadd.f32 %v8549, %v9425
        %v9560 = vadd.f32 %v8550, %v9427
        %v9561 = vadd.f32 %v8551, %v9429
        %v9562 = vadd.f32 %v8552, %v9431
        %v9563 = vadd.f32 %v8553, %v9435
        %v9564 = vadd.f32 %v8554, %v9437
        %v9565 = vadd.f32 %v8555, %v9439
        %v9566 = vadd.f32 %v8556, %v9441
        %v9567 = vadd.f32 %v8557, %v9445
        %v9568 = vadd.f32 %v8558, %v9447
        %v9569 = vadd.f32 %v8559, %v9449
        %v9570 = vadd.f32 %v8560, %v9451
        %v9571 = vadd.f32 %v8561, %v9455
        %v9572 = vadd.f32 %v8562, %v9457
        %v9573 = vadd.f32 %v8563, %v9459
        %v9574 = vadd.f32 %v8564, %v9461
        %v9575 = vadd.f32 %v8565, %v9465
        %v9576 = vadd.f32 %v8566, %v9467
        %v9577 = vadd.f32 %v8567, %v9469
        %v9578 = vadd.f32 %v8568, %v9471
        %v9579 = vadd.f32 %v8569, %v9475
        %v9580 = vadd.f32 %v8570, %v9477
        %v9581 = vadd.f32 %v8571, %v9479
        %v9582 = vadd.f32 %v8572, %v9481
        %v9583 = vadd.f32 %v8573, %v9485
        %v9584 = vadd.f32 %v8574, %v9487
        %v9585 = vadd.f32 %v8575, %v9489
        %v9586 = vadd.f32 %v8576, %v9491
        %v9587 = vadd.f32 %v8577, %v9495
        %v9588 = vadd.f32 %v8578, %v9497
        %v9589 = vadd.f32 %v8579, %v9499
        %v9590 = vadd.f32 %v8580, %v9501
        %v9591 = vadd.f32 %v8581, %v9505
        %v9592 = vadd.f32 %v8582, %v9507
        %v9593 = vadd.f32 %v8583, %v9509
        %v9594 = vadd.f32 %v8584, %v9511
        %v9595 = vadd.f32 %v8585, %v9515
        %v9596 = vadd.f32 %v8586, %v9517
        %v9597 = vadd.f32 %v8587, %v9519
        %v9598 = vadd.f32 %v8588, %v9521
        %v9599 = vadd.f32 %v8589, %v9525
        %v9600 = vadd.f32 %v8590, %v9527
        %v9601 = vadd.f32 %v8591, %v9529
        %v9602 = vadd.f32 %v8592, %v9531
        %v9603 = vadd.f32 %v8593, %v9535
        %v9604 = vadd.f32 %v8594, %v9537
        %v9605 = vadd.f32 %v8595, %v9539
        %v9606 = vadd.f32 %v8596, %v9541
        %v9607 = vld [vmem:[%s7954] sm:$0xee]
        %v9608 = vld [vmem:[%s7954 + $0x18] sm:$0xee]
        %v9609 = vld [vmem:[%s7954 + $0x30] sm:$0xee]
        %v9610 = vld [vmem:[%s7954 + $0x48] sm:$0xee]
        %v9611 = vld [vmem:[%s7954 + $0x60] sm:$0xee]
        %v9612 = vld [vmem:[%s7954 + $0x78] sm:$0xee]
        %v9613 = vld [vmem:[%s7954 + $0x90] sm:$0xee]
        %v9614 = vld [vmem:[%s7954 + $0xa8] sm:$0xee]
        %v9615 = vld [vmem:[%s7954 + $0xc0] sm:$0xee]
        %v9616 = vld [vmem:[%s7954 + $0xd8] sm:$0xee]
        %v9617 = vld [vmem:[%s7954 + $0xf0] sm:$0xee]
        %v9618 = vld [vmem:[%s7954 + $0x108] sm:$0xee]
        %v9619 = vld [vmem:[%s7954 + $0x120] sm:$0xee]
        %v9620 = vld [vmem:[%s7954 + $0x138] sm:$0xee]
        %v9621 = vld [vmem:[%s7954 + $0x150] sm:$0xee]
        %v9622 = vld [vmem:[%s7954 + $0x168] sm:$0xee]
        %s9623 = scalar_lea.vmem [#allocation8], 1280
        %v9624 = vld [vmem:[%s9623] sm:$0xff]
        %v9625 = vld [vmem:[%s9623 + $0x8] sm:$0xff]
        %v9626 = vld [vmem:[%s9623 + $0x10] sm:$0xff]
        %v9627 = vld [vmem:[%s9623 + $0x18] sm:$0xff]
        %v9628 = vld [vmem:[%s9623 + $0x20] sm:$0xff]
        %v9629 = vld [vmem:[%s9623 + $0x28] sm:$0xff]
        %v9630 = vld [vmem:[%s9623 + $0x30] sm:$0xff]
        %v9631 = vld [vmem:[%s9623 + $0x38] sm:$0xff]
        %v9632 = vld [vmem:[%s9623 + $0x40] sm:$0xff]
        %v9633 = vld [vmem:[%s9623 + $0x48] sm:$0xff]
        %v9634 = vld [vmem:[%s9623 + $0x50] sm:$0xff]
        %v9635 = vld [vmem:[%s9623 + $0x58] sm:$0xff]
        %v9636 = vld [vmem:[%s9623 + $0x60] sm:$0xff]
        %v9637 = vld [vmem:[%s9623 + $0x68] sm:$0xff]
        %v9638 = vld [vmem:[%s9623 + $0x70] sm:$0xff]
        %v9639 = vld [vmem:[%s9623 + $0x78] sm:$0xff]
        %v9640 = vld [vmem:[%s9623 + $0x80] sm:$0xff]
        %v9641 = vld [vmem:[%s9623 + $0x88] sm:$0xff]
        %v9642 = vld [vmem:[%s9623 + $0x90] sm:$0xff]
        %v9643 = vld [vmem:[%s9623 + $0x98] sm:$0xff]
        %v9644 = vld [vmem:[%s9623 + $0xa0] sm:$0xff]
        %v9645 = vld [vmem:[%s9623 + $0xa8] sm:$0xff]
        %v9646 = vld [vmem:[%s9623 + $0xb0] sm:$0xff]
        %v9647 = vld [vmem:[%s9623 + $0xb8] sm:$0xff]
        %v9648 = vld [vmem:[%s9623 + $0xc0] sm:$0xff]
        %v9649 = vld [vmem:[%s9623 + $0xc8] sm:$0xff]
        %v9650 = vld [vmem:[%s9623 + $0xd0] sm:$0xff]
        %v9651 = vld [vmem:[%s9623 + $0xd8] sm:$0xff]
        %v9652 = vld [vmem:[%s9623 + $0xe0] sm:$0xff]
        %v9653 = vld [vmem:[%s9623 + $0xe8] sm:$0xff]
        %v9654 = vld [vmem:[%s9623 + $0xf0] sm:$0xff]
        %v9655 = vld [vmem:[%s9623 + $0xf8] sm:$0xff]
        %v9704 = vrot.slane %v9607, 5
        %v9705 = vrot.slane %v9704, 4
        %v9706 = vrot.slane %v8598, 5
        %v9707 = vsel %vm7296, %v9705, %v9706
        %v9708 = vrot.slane %v9706, 4
        %v9709 = vrot.slane %v8599, 5
        %v9710 = vsel %vm7296, %v9708, %v9709
        %v9711 = vrot.slane %v9608, 5
        %v9712 = vrot.slane %v9711, 4
        %v9713 = vrot.slane %v8601, 5
        %v9714 = vsel %vm7296, %v9712, %v9713
        %v9715 = vrot.slane %v9713, 4
        %v9716 = vrot.slane %v8602, 5
        %v9717 = vsel %vm7296, %v9715, %v9716
        %v9718 = vrot.slane %v9609, 5
        %v9719 = vrot.slane %v9718, 4
        %v9720 = vrot.slane %v8604, 5
        %v9721 = vsel %vm7296, %v9719, %v9720
        %v9722 = vrot.slane %v9720, 4
        %v9723 = vrot.slane %v8605, 5
        %v9724 = vsel %vm7296, %v9722, %v9723
        %v9725 = vrot.slane %v9610, 5
        %v9726 = vrot.slane %v9725, 4
        %v9727 = vrot.slane %v8607, 5
        %v9728 = vsel %vm7296, %v9726, %v9727
        %v9729 = vrot.slane %v9727, 4
        %v9730 = vrot.slane %v8608, 5
        %v9731 = vsel %vm7296, %v9729, %v9730
        %v9732 = vrot.slane %v9611, 5
        %v9733 = vrot.slane %v9732, 4
        %v9734 = vrot.slane %v8610, 5
        %v9735 = vsel %vm7296, %v9733, %v9734
        %v9736 = vrot.slane %v9734, 4
        %v9737 = vrot.slane %v8611, 5
        %v9738 = vsel %vm7296, %v9736, %v9737
        %v9739 = vrot.slane %v9612, 5
        %v9740 = vrot.slane %v9739, 4
        %v9741 = vrot.slane %v8613, 5
        %v9742 = vsel %vm7296, %v9740, %v9741
        %v9743 = vrot.slane %v9741, 4
        %v9744 = vrot.slane %v8614, 5
        %v9745 = vsel %vm7296, %v9743, %v9744
        %v9746 = vrot.slane %v9613, 5
        %v9747 = vrot.slane %v9746, 4
        %v9748 = vrot.slane %v8616, 5
        %v9749 = vsel %vm7296, %v9747, %v9748
        %v9750 = vrot.slane %v9748, 4
        %v9751 = vrot.slane %v8617, 5
        %v9752 = vsel %vm7296, %v9750, %v9751
        %v9753 = vrot.slane %v9614, 5
        %v9754 = vrot.slane %v9753, 4
        %v9755 = vrot.slane %v8619, 5
        %v9756 = vsel %vm7296, %v9754, %v9755
        %v9757 = vrot.slane %v9755, 4
        %v9758 = vrot.slane %v8620, 5
        %v9759 = vsel %vm7296, %v9757, %v9758
        %v9760 = vrot.slane %v9615, 5
        %v9761 = vrot.slane %v9760, 4
        %v9762 = vrot.slane %v8622, 5
        %v9763 = vsel %vm7296, %v9761, %v9762
        %v9764 = vrot.slane %v9762, 4
        %v9765 = vrot.slane %v8623, 5
        %v9766 = vsel %vm7296, %v9764, %v9765
        %v9767 = vrot.slane %v9616, 5
        %v9768 = vrot.slane %v9767, 4
        %v9769 = vrot.slane %v8625, 5
        %v9770 = vsel %vm7296, %v9768, %v9769
        %v9771 = vrot.slane %v9769, 4
        %v9772 = vrot.slane %v8626, 5
        %v9773 = vsel %vm7296, %v9771, %v9772
        %v9774 = vrot.slane %v9617, 5
        %v9775 = vrot.slane %v9774, 4
        %v9776 = vrot.slane %v8628, 5
        %v9777 = vsel %vm7296, %v9775, %v9776
        %v9778 = vrot.slane %v9776, 4
        %v9779 = vrot.slane %v8629, 5
        %v9780 = vsel %vm7296, %v9778, %v9779
        %v9781 = vrot.slane %v9618, 5
        %v9782 = vrot.slane %v9781, 4
        %v9783 = vrot.slane %v8631, 5
        %v9784 = vsel %vm7296, %v9782, %v9783
        %v9785 = vrot.slane %v9783, 4
        %v9786 = vrot.slane %v8632, 5
        %v9787 = vsel %vm7296, %v9785, %v9786
        %v9788 = vrot.slane %v9619, 5
        %v9789 = vrot.slane %v9788, 4
        %v9790 = vrot.slane %v8634, 5
        %v9791 = vsel %vm7296, %v9789, %v9790
        %v9792 = vrot.slane %v9790, 4
        %v9793 = vrot.slane %v8635, 5
        %v9794 = vsel %vm7296, %v9792, %v9793
        %v9795 = vrot.slane %v9620, 5
        %v9796 = vrot.slane %v9795, 4
        %v9797 = vrot.slane %v8637, 5
        %v9798 = vsel %vm7296, %v9796, %v9797
        %v9799 = vrot.slane %v9797, 4
        %v9800 = vrot.slane %v8638, 5
        %v9801 = vsel %vm7296, %v9799, %v9800
        %v9802 = vrot.slane %v9621, 5
        %v9803 = vrot.slane %v9802, 4
        %v9804 = vrot.slane %v8640, 5
        %v9805 = vsel %vm7296, %v9803, %v9804
        %v9806 = vrot.slane %v9804, 4
        %v9807 = vrot.slane %v8641, 5
        %v9808 = vsel %vm7296, %v9806, %v9807
        %v9809 = vrot.slane %v9622, 5
        %v9810 = vrot.slane %v9809, 4
        %v9811 = vrot.slane %v8643, 5
        %v9812 = vsel %vm7296, %v9810, %v9811
        %v9813 = vrot.slane %v9811, 4
        %v9814 = vrot.slane %v8644, 5
        %v9815 = vsel %vm7296, %v9813, %v9814
        %v9816 = vunpack.c.l.b16 %v9707
        %v9817 = vunpack.c.h.b16 %v9707
        %v9818 = vunpack.c.l.b16 %v9710
        %v9819 = vunpack.c.h.b16 %v9710
        %v9820 = vunpack.c.l.b16 %v9714
        %v9821 = vunpack.c.h.b16 %v9714
        %v9822 = vunpack.c.l.b16 %v9717
        %v9823 = vunpack.c.h.b16 %v9717
        %v9824 = vunpack.c.l.b16 %v9721
        %v9825 = vunpack.c.h.b16 %v9721
        %v9826 = vunpack.c.l.b16 %v9724
        %v9827 = vunpack.c.h.b16 %v9724
        %v9828 = vunpack.c.l.b16 %v9728
        %v9829 = vunpack.c.h.b16 %v9728
        %v9830 = vunpack.c.l.b16 %v9731
        %v9831 = vunpack.c.h.b16 %v9731
        %v9832 = vunpack.c.l.b16 %v9735
        %v9833 = vunpack.c.h.b16 %v9735
        %v9834 = vunpack.c.l.b16 %v9738
        %v9835 = vunpack.c.h.b16 %v9738
        %v9836 = vunpack.c.l.b16 %v9742
        %v9837 = vunpack.c.h.b16 %v9742
        %v9838 = vunpack.c.l.b16 %v9745
        %v9839 = vunpack.c.h.b16 %v9745
        %v9840 = vunpack.c.l.b16 %v9749
        %v9841 = vunpack.c.h.b16 %v9749
        %v9842 = vunpack.c.l.b16 %v9752
        %v9843 = vunpack.c.h.b16 %v9752
        %v9844 = vunpack.c.l.b16 %v9756
        %v9845 = vunpack.c.h.b16 %v9756
        %v9846 = vunpack.c.l.b16 %v9759
        %v9847 = vunpack.c.h.b16 %v9759
        %v9848 = vunpack.c.l.b16 %v9763
        %v9849 = vunpack.c.h.b16 %v9763
        %v9850 = vunpack.c.l.b16 %v9766
        %v9851 = vunpack.c.h.b16 %v9766
        %v9852 = vunpack.c.l.b16 %v9770
        %v9853 = vunpack.c.h.b16 %v9770
        %v9854 = vunpack.c.l.b16 %v9773
        %v9855 = vunpack.c.h.b16 %v9773
        %v9856 = vunpack.c.l.b16 %v9777
        %v9857 = vunpack.c.h.b16 %v9777
        %v9858 = vunpack.c.l.b16 %v9780
        %v9859 = vunpack.c.h.b16 %v9780
        %v9860 = vunpack.c.l.b16 %v9784
        %v9861 = vunpack.c.h.b16 %v9784
        %v9862 = vunpack.c.l.b16 %v9787
        %v9863 = vunpack.c.h.b16 %v9787
        %v9864 = vunpack.c.l.b16 %v9791
        %v9865 = vunpack.c.h.b16 %v9791
        %v9866 = vunpack.c.l.b16 %v9794
        %v9867 = vunpack.c.h.b16 %v9794
        %v9868 = vunpack.c.l.b16 %v9798
        %v9869 = vunpack.c.h.b16 %v9798
        %v9870 = vunpack.c.l.b16 %v9801
        %v9871 = vunpack.c.h.b16 %v9801
        %v9872 = vunpack.c.l.b16 %v9805
        %v9873 = vunpack.c.h.b16 %v9805
        %v9874 = vunpack.c.l.b16 %v9808
        %v9875 = vunpack.c.h.b16 %v9808
        %v9876 = vunpack.c.l.b16 %v9812
        %v9877 = vunpack.c.h.b16 %v9812
        %v9878 = vunpack.c.l.b16 %v9815
        %v9879 = vunpack.c.h.b16 %v9815
        %v9880 = vpack.c.b16 %v9818, %v9816
        %v9881 = vpack.c.b16 %v9819, %v9817
        %v9882 = vpack.c.b16 %v9822, %v9820
        %v9883 = vpack.c.b16 %v9823, %v9821
        %v9884 = vpack.c.b16 %v9826, %v9824
        %v9885 = vpack.c.b16 %v9827, %v9825
        %v9886 = vpack.c.b16 %v9830, %v9828
        %v9887 = vpack.c.b16 %v9831, %v9829
        %v9888 = vpack.c.b16 %v9834, %v9832
        %v9889 = vpack.c.b16 %v9835, %v9833
        %v9890 = vpack.c.b16 %v9838, %v9836
        %v9891 = vpack.c.b16 %v9839, %v9837
        %v9892 = vpack.c.b16 %v9842, %v9840
        %v9893 = vpack.c.b16 %v9843, %v9841
        %v9894 = vpack.c.b16 %v9846, %v9844
        %v9895 = vpack.c.b16 %v9847, %v9845
        %v9896 = vpack.c.b16 %v9850, %v9848
        %v9897 = vpack.c.b16 %v9851, %v9849
        %v9898 = vpack.c.b16 %v9854, %v9852
        %v9899 = vpack.c.b16 %v9855, %v9853
        %v9900 = vpack.c.b16 %v9858, %v9856
        %v9901 = vpack.c.b16 %v9859, %v9857
        %v9902 = vpack.c.b16 %v9862, %v9860
        %v9903 = vpack.c.b16 %v9863, %v9861
        %v9904 = vpack.c.b16 %v9866, %v9864
        %v9905 = vpack.c.b16 %v9867, %v9865
        %v9906 = vpack.c.b16 %v9870, %v9868
        %v9907 = vpack.c.b16 %v9871, %v9869
        %v9908 = vpack.c.b16 %v9874, %v9872
        %v9909 = vpack.c.b16 %v9875, %v9873
        %v9910 = vpack.c.b16 %v9878, %v9876
        %v9911 = vpack.c.b16 %v9879, %v9877
        %v9976 = vunpack.c.l.b16 %v9624
        %v9977 = vunpack.c.h.b16 %v9624
        %v9978 = vunpack.c.l.b16 %v9625
        %v9979 = vunpack.c.h.b16 %v9625
        %v9980 = vunpack.c.l.b16 %v9626
        %v9981 = vunpack.c.h.b16 %v9626
        %v9982 = vunpack.c.l.b16 %v9627
        %v9983 = vunpack.c.h.b16 %v9627
        %v9984 = vunpack.c.l.b16 %v9628
        %v9985 = vunpack.c.h.b16 %v9628
        %v9986 = vunpack.c.l.b16 %v9629
        %v9987 = vunpack.c.h.b16 %v9629
        %v9988 = vunpack.c.l.b16 %v9630
        %v9989 = vunpack.c.h.b16 %v9630
        %v9990 = vunpack.c.l.b16 %v9631
        %v9991 = vunpack.c.h.b16 %v9631
        %v9992 = vunpack.c.l.b16 %v9632
        %v9993 = vunpack.c.h.b16 %v9632
        %v9994 = vunpack.c.l.b16 %v9633
        %v9995 = vunpack.c.h.b16 %v9633
        %v9996 = vunpack.c.l.b16 %v9634
        %v9997 = vunpack.c.h.b16 %v9634
        %v9998 = vunpack.c.l.b16 %v9635
        %v9999 = vunpack.c.h.b16 %v9635
        %v10000 = vunpack.c.l.b16 %v9636
        %v10001 = vunpack.c.h.b16 %v9636
        %v10002 = vunpack.c.l.b16 %v9637
        %v10003 = vunpack.c.h.b16 %v9637
        %v10004 = vunpack.c.l.b16 %v9638
        %v10005 = vunpack.c.h.b16 %v9638
        %v10006 = vunpack.c.l.b16 %v9639
        %v10007 = vunpack.c.h.b16 %v9639
        %v10008 = vunpack.c.l.b16 %v9640
        %v10009 = vunpack.c.h.b16 %v9640
        %v10010 = vunpack.c.l.b16 %v9641
        %v10011 = vunpack.c.h.b16 %v9641
        %v10012 = vunpack.c.l.b16 %v9642
        %v10013 = vunpack.c.h.b16 %v9642
        %v10014 = vunpack.c.l.b16 %v9643
        %v10015 = vunpack.c.h.b16 %v9643
        %v10016 = vunpack.c.l.b16 %v9644
        %v10017 = vunpack.c.h.b16 %v9644
        %v10018 = vunpack.c.l.b16 %v9645
        %v10019 = vunpack.c.h.b16 %v9645
        %v10020 = vunpack.c.l.b16 %v9646
        %v10021 = vunpack.c.h.b16 %v9646
        %v10022 = vunpack.c.l.b16 %v9647
        %v10023 = vunpack.c.h.b16 %v9647
        %v10024 = vunpack.c.l.b16 %v9648
        %v10025 = vunpack.c.h.b16 %v9648
        %v10026 = vunpack.c.l.b16 %v9649
        %v10027 = vunpack.c.h.b16 %v9649
        %v10028 = vunpack.c.l.b16 %v9650
        %v10029 = vunpack.c.h.b16 %v9650
        %v10030 = vunpack.c.l.b16 %v9651
        %v10031 = vunpack.c.h.b16 %v9651
        %v10032 = vunpack.c.l.b16 %v9652
        %v10033 = vunpack.c.h.b16 %v9652
        %v10034 = vunpack.c.l.b16 %v9653
        %v10035 = vunpack.c.h.b16 %v9653
        %v10036 = vunpack.c.l.b16 %v9654
        %v10037 = vunpack.c.h.b16 %v9654
        %v10038 = vunpack.c.l.b16 %v9655
        %v10039 = vunpack.c.h.b16 %v9655
        %v10040 = vpack.c.b16 %v9978, %v9976
        %v10041 = vpack.c.b16 %v9979, %v9977
        %v10042 = vpack.c.b16 %v9982, %v9980
        %v10043 = vpack.c.b16 %v9983, %v9981
        %v10044 = vpack.c.b16 %v9986, %v9984
        %v10045 = vpack.c.b16 %v9987, %v9985
        %v10046 = vpack.c.b16 %v9990, %v9988
        %v10047 = vpack.c.b16 %v9991, %v9989
        %v10048 = vpack.c.b16 %v9994, %v9992
        %v10049 = vpack.c.b16 %v9995, %v9993
        %v10050 = vpack.c.b16 %v9998, %v9996
        %v10051 = vpack.c.b16 %v9999, %v9997
        %v10052 = vpack.c.b16 %v10002, %v10000
        %v10053 = vpack.c.b16 %v10003, %v10001
        %v10054 = vpack.c.b16 %v10006, %v10004
        %v10055 = vpack.c.b16 %v10007, %v10005
        %v10056 = vpack.c.b16 %v10010, %v10008
        %v10057 = vpack.c.b16 %v10011, %v10009
        %v10058 = vpack.c.b16 %v10014, %v10012
        %v10059 = vpack.c.b16 %v10015, %v10013
        %v10060 = vpack.c.b16 %v10018, %v10016
        %v10061 = vpack.c.b16 %v10019, %v10017
        %v10062 = vpack.c.b16 %v10022, %v10020
        %v10063 = vpack.c.b16 %v10023, %v10021
        %v10064 = vpack.c.b16 %v10026, %v10024
        %v10065 = vpack.c.b16 %v10027, %v10025
        %v10066 = vpack.c.b16 %v10030, %v10028
        %v10067 = vpack.c.b16 %v10031, %v10029
        %v10068 = vpack.c.b16 %v10034, %v10032
        %v10069 = vpack.c.b16 %v10035, %v10033
        %v10070 = vpack.c.b16 %v10038, %v10036
        %v10071 = vpack.c.b16 %v10039, %v10037
        %10104 = vmatprep.subr.bf16.mxu0 %v10055
        %10105 = vmatpush1.bf16.msra.mxu0 %v10054
        %10106 = vmatprep.subr.bf16.mxu0 %v10053
        %10107 = vmatpush1.bf16.msra.mxu0 %v10052
        %10108 = vmatprep.subr.bf16.mxu0 %v10051
        %10109 = vmatpush1.bf16.msra.mxu0 %v10050
        %10110 = vmatprep.subr.bf16.mxu0 %v10049
        %10111 = vmatpush1.bf16.msra.mxu0 %v10048
        %10112 = vmatprep.subr.bf16.mxu0 %v10047
        %10113 = vmatpush1.bf16.msra.mxu0 %v10046
        %10114 = vmatprep.subr.bf16.mxu0 %v10045
        %10115 = vmatpush1.bf16.msra.mxu0 %v10044
        %10116 = vmatprep.subr.bf16.mxu0 %v10043
        %10117 = vmatpush1.bf16.msra.mxu0 %v10042
        %10118 = vmatprep.subr.bf16.mxu0 %v10041
        %10119 = vmatpush1.bf16.msra.mxu0 %v10040
        %10120 = vmatprep.subr.bf16.mxu0 %v10071
        %10121 = vmatpush2.bf16.msra.mxu0 %v10070
        %10122 = vmatprep.subr.bf16.mxu0 %v10069
        %10123 = vmatpush2.bf16.msra.mxu0 %v10068
        %10124 = vmatprep.subr.bf16.mxu0 %v10067
        %10125 = vmatpush2.bf16.msra.mxu0 %v10066
        %10126 = vmatprep.subr.bf16.mxu0 %v10065
        %10127 = vmatpush2.bf16.msra.mxu0 %v10064
        %10128 = vmatprep.subr.bf16.mxu0 %v10063
        %10129 = vmatpush2.bf16.msra.mxu0 %v10062
        %10130 = vmatprep.subr.bf16.mxu0 %v10061
        %10131 = vmatpush2.bf16.msra.mxu0 %v10060
        %10132 = vmatprep.subr.bf16.mxu0 %v10059
        %10133 = vmatpush2.bf16.msra.mxu0 %v10058
        %10134 = vmatprep.subr.bf16.mxu0 %v10057
        %10135 = vmatpush2.bf16.msra.mxu0 %v10056
        %10136 = vmatprep.mubr.bf16.mxu0 %v9881
        %10137 = vmatmul.mubr.bf16.gmra.mxu0 %v9880
        %v10138 = vpop.f32.mrf.mxu0
        %v10139 = vadd.f32 0.0, %v10138
        %v10140 = vpop.f32.mrf.mxu0
        %v10141 = vadd.f32 0.0, %v10140
        %v10142 = vpop.f32.mrf.mxu0
        %v10143 = vadd.f32 0.0, %v10142
        %v10144 = vpop.f32.mrf.mxu0
        %v10145 = vadd.f32 0.0, %v10144
        %10146 = vmatprep.mubr.bf16.mxu0 %v9883
        %10147 = vmatmul.mubr.bf16.gmra.mxu0 %v9882
        %v10148 = vpop.f32.mrf.mxu0
        %v10149 = vadd.f32 0.0, %v10148
        %v10150 = vpop.f32.mrf.mxu0
        %v10151 = vadd.f32 0.0, %v10150
        %v10152 = vpop.f32.mrf.mxu0
        %v10153 = vadd.f32 0.0, %v10152
        %v10154 = vpop.f32.mrf.mxu0
        %v10155 = vadd.f32 0.0, %v10154
        %10156 = vmatprep.mubr.bf16.mxu0 %v9885
        %10157 = vmatmul.mubr.bf16.gmra.mxu0 %v9884
        %v10158 = vpop.f32.mrf.mxu0
        %v10159 = vadd.f32 0.0, %v10158
        %v10160 = vpop.f32.mrf.mxu0
        %v10161 = vadd.f32 0.0, %v10160
        %v10162 = vpop.f32.mrf.mxu0
        %v10163 = vadd.f32 0.0, %v10162
        %v10164 = vpop.f32.mrf.mxu0
        %v10165 = vadd.f32 0.0, %v10164
        %10166 = vmatprep.mubr.bf16.mxu0 %v9887
        %10167 = vmatmul.mubr.bf16.gmra.mxu0 %v9886
        %v10168 = vpop.f32.mrf.mxu0
        %v10169 = vadd.f32 0.0, %v10168
        %v10170 = vpop.f32.mrf.mxu0
        %v10171 = vadd.f32 0.0, %v10170
        %v10172 = vpop.f32.mrf.mxu0
        %v10173 = vadd.f32 0.0, %v10172
        %v10174 = vpop.f32.mrf.mxu0
        %v10175 = vadd.f32 0.0, %v10174
        %10176 = vmatprep.mubr.bf16.mxu0 %v9889
        %10177 = vmatmul.mubr.bf16.gmra.mxu0 %v9888
        %v10178 = vpop.f32.mrf.mxu0
        %v10179 = vadd.f32 0.0, %v10178
        %v10180 = vpop.f32.mrf.mxu0
        %v10181 = vadd.f32 0.0, %v10180
        %v10182 = vpop.f32.mrf.mxu0
        %v10183 = vadd.f32 0.0, %v10182
        %v10184 = vpop.f32.mrf.mxu0
        %v10185 = vadd.f32 0.0, %v10184
        %10186 = vmatprep.mubr.bf16.mxu0 %v9891
        %10187 = vmatmul.mubr.bf16.gmra.mxu0 %v9890
        %v10188 = vpop.f32.mrf.mxu0
        %v10189 = vadd.f32 0.0, %v10188
        %v10190 = vpop.f32.mrf.mxu0
        %v10191 = vadd.f32 0.0, %v10190
        %v10192 = vpop.f32.mrf.mxu0
        %v10193 = vadd.f32 0.0, %v10192
        %v10194 = vpop.f32.mrf.mxu0
        %v10195 = vadd.f32 0.0, %v10194
        %10196 = vmatprep.mubr.bf16.mxu0 %v9893
        %10197 = vmatmul.mubr.bf16.gmra.mxu0 %v9892
        %v10198 = vpop.f32.mrf.mxu0
        %v10199 = vadd.f32 0.0, %v10198
        %v10200 = vpop.f32.mrf.mxu0
        %v10201 = vadd.f32 0.0, %v10200
        %v10202 = vpop.f32.mrf.mxu0
        %v10203 = vadd.f32 0.0, %v10202
        %v10204 = vpop.f32.mrf.mxu0
        %v10205 = vadd.f32 0.0, %v10204
        %10206 = vmatprep.mubr.bf16.mxu0 %v9895
        %10207 = vmatmul.mubr.bf16.gmra.mxu0 %v9894
        %v10208 = vpop.f32.mrf.mxu0
        %v10209 = vadd.f32 0.0, %v10208
        %v10210 = vpop.f32.mrf.mxu0
        %v10211 = vadd.f32 0.0, %v10210
        %v10212 = vpop.f32.mrf.mxu0
        %v10213 = vadd.f32 0.0, %v10212
        %v10214 = vpop.f32.mrf.mxu0
        %v10215 = vadd.f32 0.0, %v10214
        %10216 = vmatprep.mubr.bf16.mxu0 %v9897
        %10217 = vmatmul.mubr.bf16.gmra.mxu0 %v9896
        %v10218 = vpop.f32.mrf.mxu0
        %v10219 = vadd.f32 0.0, %v10218
        %v10220 = vpop.f32.mrf.mxu0
        %v10221 = vadd.f32 0.0, %v10220
        %v10222 = vpop.f32.mrf.mxu0
        %v10223 = vadd.f32 0.0, %v10222
        %v10224 = vpop.f32.mrf.mxu0
        %v10225 = vadd.f32 0.0, %v10224
        %10226 = vmatprep.mubr.bf16.mxu0 %v9899
        %10227 = vmatmul.mubr.bf16.gmra.mxu0 %v9898
        %v10228 = vpop.f32.mrf.mxu0
        %v10229 = vadd.f32 0.0, %v10228
        %v10230 = vpop.f32.mrf.mxu0
        %v10231 = vadd.f32 0.0, %v10230
        %v10232 = vpop.f32.mrf.mxu0
        %v10233 = vadd.f32 0.0, %v10232
        %v10234 = vpop.f32.mrf.mxu0
        %v10235 = vadd.f32 0.0, %v10234
        %10236 = vmatprep.mubr.bf16.mxu0 %v9901
        %10237 = vmatmul.mubr.bf16.gmra.mxu0 %v9900
        %v10238 = vpop.f32.mrf.mxu0
        %v10239 = vadd.f32 0.0, %v10238
        %v10240 = vpop.f32.mrf.mxu0
        %v10241 = vadd.f32 0.0, %v10240
        %v10242 = vpop.f32.mrf.mxu0
        %v10243 = vadd.f32 0.0, %v10242
        %v10244 = vpop.f32.mrf.mxu0
        %v10245 = vadd.f32 0.0, %v10244
        %10246 = vmatprep.mubr.bf16.mxu0 %v9903
        %10247 = vmatmul.mubr.bf16.gmra.mxu0 %v9902
        %v10248 = vpop.f32.mrf.mxu0
        %v10249 = vadd.f32 0.0, %v10248
        %v10250 = vpop.f32.mrf.mxu0
        %v10251 = vadd.f32 0.0, %v10250
        %v10252 = vpop.f32.mrf.mxu0
        %v10253 = vadd.f32 0.0, %v10252
        %v10254 = vpop.f32.mrf.mxu0
        %v10255 = vadd.f32 0.0, %v10254
        %10256 = vmatprep.mubr.bf16.mxu0 %v9905
        %10257 = vmatmul.mubr.bf16.gmra.mxu0 %v9904
        %v10258 = vpop.f32.mrf.mxu0
        %v10259 = vadd.f32 0.0, %v10258
        %v10260 = vpop.f32.mrf.mxu0
        %v10261 = vadd.f32 0.0, %v10260
        %v10262 = vpop.f32.mrf.mxu0
        %v10263 = vadd.f32 0.0, %v10262
        %v10264 = vpop.f32.mrf.mxu0
        %v10265 = vadd.f32 0.0, %v10264
        %10266 = vmatprep.mubr.bf16.mxu0 %v9907
        %10267 = vmatmul.mubr.bf16.gmra.mxu0 %v9906
        %v10268 = vpop.f32.mrf.mxu0
        %v10269 = vadd.f32 0.0, %v10268
        %v10270 = vpop.f32.mrf.mxu0
        %v10271 = vadd.f32 0.0, %v10270
        %v10272 = vpop.f32.mrf.mxu0
        %v10273 = vadd.f32 0.0, %v10272
        %v10274 = vpop.f32.mrf.mxu0
        %v10275 = vadd.f32 0.0, %v10274
        %10276 = vmatprep.mubr.bf16.mxu0 %v9909
        %10277 = vmatmul.mubr.bf16.gmra.mxu0 %v9908
        %v10278 = vpop.f32.mrf.mxu0
        %v10279 = vadd.f32 0.0, %v10278
        %v10280 = vpop.f32.mrf.mxu0
        %v10281 = vadd.f32 0.0, %v10280
        %v10282 = vpop.f32.mrf.mxu0
        %v10283 = vadd.f32 0.0, %v10282
        %v10284 = vpop.f32.mrf.mxu0
        %v10285 = vadd.f32 0.0, %v10284
        %10286 = vmatprep.mubr.bf16.mxu0 %v9911
        %10287 = vmatmul.mubr.bf16.gmra.mxu0 %v9910
        %v10288 = vpop.f32.mrf.mxu0
        %v10289 = vadd.f32 0.0, %v10288
        %v10290 = vpop.f32.mrf.mxu0
        %v10291 = vadd.f32 0.0, %v10290
        %v10292 = vpop.f32.mrf.mxu0
        %v10293 = vadd.f32 0.0, %v10292
        %v10294 = vpop.f32.mrf.mxu0
        %v10295 = vadd.f32 0.0, %v10294
        %10296 = vdwg.mxu0
        %v10297 = vadd.f32 %v9543, %v10139
        %v10298 = vadd.f32 %v9544, %v10141
        %v10299 = vadd.f32 %v9545, %v10143
        %v10300 = vadd.f32 %v9546, %v10145
        %v10301 = vadd.f32 %v9547, %v10149
        %v10302 = vadd.f32 %v9548, %v10151
        %v10303 = vadd.f32 %v9549, %v10153
        %v10304 = vadd.f32 %v9550, %v10155
        %v10305 = vadd.f32 %v9551, %v10159
        %v10306 = vadd.f32 %v9552, %v10161
        %v10307 = vadd.f32 %v9553, %v10163
        %v10308 = vadd.f32 %v9554, %v10165
        %v10309 = vadd.f32 %v9555, %v10169
        %v10310 = vadd.f32 %v9556, %v10171
        %v10311 = vadd.f32 %v9557, %v10173
        %v10312 = vadd.f32 %v9558, %v10175
        %v10313 = vadd.f32 %v9559, %v10179
        %v10314 = vadd.f32 %v9560, %v10181
        %v10315 = vadd.f32 %v9561, %v10183
        %v10316 = vadd.f32 %v9562, %v10185
        %v10317 = vadd.f32 %v9563, %v10189
        %v10318 = vadd.f32 %v9564, %v10191
        %v10319 = vadd.f32 %v9565, %v10193
        %v10320 = vadd.f32 %v9566, %v10195
        %v10321 = vadd.f32 %v9567, %v10199
        %v10322 = vadd.f32 %v9568, %v10201
        %v10323 = vadd.f32 %v9569, %v10203
        %v10324 = vadd.f32 %v9570, %v10205
        %v10325 = vadd.f32 %v9571, %v10209
        %v10326 = vadd.f32 %v9572, %v10211
        %v10327 = vadd.f32 %v9573, %v10213
        %v10328 = vadd.f32 %v9574, %v10215
        %v10329 = vadd.f32 %v9575, %v10219
        %v10330 = vadd.f32 %v9576, %v10221
        %v10331 = vadd.f32 %v9577, %v10223
        %v10332 = vadd.f32 %v9578, %v10225
        %v10333 = vadd.f32 %v9579, %v10229
        %v10334 = vadd.f32 %v9580, %v10231
        %v10335 = vadd.f32 %v9581, %v10233
        %v10336 = vadd.f32 %v9582, %v10235
        %v10337 = vadd.f32 %v9583, %v10239
        %v10338 = vadd.f32 %v9584, %v10241
        %v10339 = vadd.f32 %v9585, %v10243
        %v10340 = vadd.f32 %v9586, %v10245
        %v10341 = vadd.f32 %v9587, %v10249
        %v10342 = vadd.f32 %v9588, %v10251
        %v10343 = vadd.f32 %v9589, %v10253
        %v10344 = vadd.f32 %v9590, %v10255
        %v10345 = vadd.f32 %v9591, %v10259
        %v10346 = vadd.f32 %v9592, %v10261
        %v10347 = vadd.f32 %v9593, %v10263
        %v10348 = vadd.f32 %v9594, %v10265
        %v10349 = vadd.f32 %v9595, %v10269
        %v10350 = vadd.f32 %v9596, %v10271
        %v10351 = vadd.f32 %v9597, %v10273
        %v10352 = vadd.f32 %v9598, %v10275
        %v10353 = vadd.f32 %v9599, %v10279
        %v10354 = vadd.f32 %v9600, %v10281
        %v10355 = vadd.f32 %v9601, %v10283
        %v10356 = vadd.f32 %v9602, %v10285
        %v10357 = vadd.f32 %v9603, %v10289
        %v10358 = vadd.f32 %v9604, %v10291
        %v10359 = vadd.f32 %v9605, %v10293
        %v10360 = vadd.f32 %v9606, %v10295
        %s10361 = scalar_lea.vmem [#allocation2], 48
        %v10362 = vld [vmem:[%s10361] sm:$0xff]
        %v10363 = vld [vmem:[%s10361 + $0x8] sm:$0xff]
        %v10364 = vld [vmem:[%s10361 + $0x18] sm:$0xff]
        %v10365 = vld [vmem:[%s10361 + $0x20] sm:$0xff]
        %v10366 = vld [vmem:[%s10361 + $0x30] sm:$0xff]
        %v10367 = vld [vmem:[%s10361 + $0x38] sm:$0xff]
        %v10368 = vld [vmem:[%s10361 + $0x48] sm:$0xff]
        %v10369 = vld [vmem:[%s10361 + $0x50] sm:$0xff]
        %v10370 = vld [vmem:[%s10361 + $0x60] sm:$0xff]
        %v10371 = vld [vmem:[%s10361 + $0x68] sm:$0xff]
        %v10372 = vld [vmem:[%s10361 + $0x78] sm:$0xff]
        %v10373 = vld [vmem:[%s10361 + $0x80] sm:$0xff]
        %v10374 = vld [vmem:[%s10361 + $0x90] sm:$0xff]
        %v10375 = vld [vmem:[%s10361 + $0x98] sm:$0xff]
        %v10376 = vld [vmem:[%s10361 + $0xa8] sm:$0xff]
        %v10377 = vld [vmem:[%s10361 + $0xb0] sm:$0xff]
        %v10378 = vld [vmem:[%s10361 + $0xc0] sm:$0xff]
        %v10379 = vld [vmem:[%s10361 + $0xc8] sm:$0xff]
        %v10380 = vld [vmem:[%s10361 + $0xd8] sm:$0xff]
        %v10381 = vld [vmem:[%s10361 + $0xe0] sm:$0xff]
        %v10382 = vld [vmem:[%s10361 + $0xf0] sm:$0xff]
        %v10383 = vld [vmem:[%s10361 + $0xf8] sm:$0xff]
        %v10384 = vld [vmem:[%s10361 + $0x108] sm:$0xff]
        %v10385 = vld [vmem:[%s10361 + $0x110] sm:$0xff]
        %v10386 = vld [vmem:[%s10361 + $0x120] sm:$0xff]
        %v10387 = vld [vmem:[%s10361 + $0x128] sm:$0xff]
        %v10388 = vld [vmem:[%s10361 + $0x138] sm:$0xff]
        %v10389 = vld [vmem:[%s10361 + $0x140] sm:$0xff]
        %v10390 = vld [vmem:[%s10361 + $0x150] sm:$0xff]
        %v10391 = vld [vmem:[%s10361 + $0x158] sm:$0xff]
        %v10392 = vld [vmem:[%s10361 + $0x168] sm:$0xff]
        %v10393 = vld [vmem:[%s10361 + $0x170] sm:$0xff]
        %s10394 = scalar_lea.vmem [#allocation8], 1536
        %v10395 = vld [vmem:[%s10394] sm:$0xff]
        %v10396 = vld [vmem:[%s10394 + $0x8] sm:$0xff]
        %v10397 = vld [vmem:[%s10394 + $0x10] sm:$0xff]
        %v10398 = vld [vmem:[%s10394 + $0x18] sm:$0xff]
        %v10399 = vld [vmem:[%s10394 + $0x20] sm:$0xff]
        %v10400 = vld [vmem:[%s10394 + $0x28] sm:$0xff]
        %v10401 = vld [vmem:[%s10394 + $0x30] sm:$0xff]
        %v10402 = vld [vmem:[%s10394 + $0x38] sm:$0xff]
        %v10403 = vld [vmem:[%s10394 + $0x40] sm:$0xff]
        %v10404 = vld [vmem:[%s10394 + $0x48] sm:$0xff]
        %v10405 = vld [vmem:[%s10394 + $0x50] sm:$0xff]
        %v10406 = vld [vmem:[%s10394 + $0x58] sm:$0xff]
        %v10407 = vld [vmem:[%s10394 + $0x60] sm:$0xff]
        %v10408 = vld [vmem:[%s10394 + $0x68] sm:$0xff]
        %v10409 = vld [vmem:[%s10394 + $0x70] sm:$0xff]
        %v10410 = vld [vmem:[%s10394 + $0x78] sm:$0xff]
        %v10411 = vld [vmem:[%s10394 + $0x80] sm:$0xff]
        %v10412 = vld [vmem:[%s10394 + $0x88] sm:$0xff]
        %v10413 = vld [vmem:[%s10394 + $0x90] sm:$0xff]
        %v10414 = vld [vmem:[%s10394 + $0x98] sm:$0xff]
        %v10415 = vld [vmem:[%s10394 + $0xa0] sm:$0xff]
        %v10416 = vld [vmem:[%s10394 + $0xa8] sm:$0xff]
        %v10417 = vld [vmem:[%s10394 + $0xb0] sm:$0xff]
        %v10418 = vld [vmem:[%s10394 + $0xb8] sm:$0xff]
        %v10419 = vld [vmem:[%s10394 + $0xc0] sm:$0xff]
        %v10420 = vld [vmem:[%s10394 + $0xc8] sm:$0xff]
        %v10421 = vld [vmem:[%s10394 + $0xd0] sm:$0xff]
        %v10422 = vld [vmem:[%s10394 + $0xd8] sm:$0xff]
        %v10423 = vld [vmem:[%s10394 + $0xe0] sm:$0xff]
        %v10424 = vld [vmem:[%s10394 + $0xe8] sm:$0xff]
        %v10425 = vld [vmem:[%s10394 + $0xf0] sm:$0xff]
        %v10426 = vld [vmem:[%s10394 + $0xf8] sm:$0xff]
        %v10459 = vunpack.c.l.b16 %v10362
        %v10460 = vunpack.c.h.b16 %v10362
        %v10461 = vunpack.c.l.b16 %v10363
        %v10462 = vunpack.c.h.b16 %v10363
        %v10463 = vunpack.c.l.b16 %v10364
        %v10464 = vunpack.c.h.b16 %v10364
        %v10465 = vunpack.c.l.b16 %v10365
        %v10466 = vunpack.c.h.b16 %v10365
        %v10467 = vunpack.c.l.b16 %v10366
        %v10468 = vunpack.c.h.b16 %v10366
        %v10469 = vunpack.c.l.b16 %v10367
        %v10470 = vunpack.c.h.b16 %v10367
        %v10471 = vunpack.c.l.b16 %v10368
        %v10472 = vunpack.c.h.b16 %v10368
        %v10473 = vunpack.c.l.b16 %v10369
        %v10474 = vunpack.c.h.b16 %v10369
        %v10475 = vunpack.c.l.b16 %v10370
        %v10476 = vunpack.c.h.b16 %v10370
        %v10477 = vunpack.c.l.b16 %v10371
        %v10478 = vunpack.c.h.b16 %v10371
        %v10479 = vunpack.c.l.b16 %v10372
        %v10480 = vunpack.c.h.b16 %v10372
        %v10481 = vunpack.c.l.b16 %v10373
        %v10482 = vunpack.c.h.b16 %v10373
        %v10483 = vunpack.c.l.b16 %v10374
        %v10484 = vunpack.c.h.b16 %v10374
        %v10485 = vunpack.c.l.b16 %v10375
        %v10486 = vunpack.c.h.b16 %v10375
        %v10487 = vunpack.c.l.b16 %v10376
        %v10488 = vunpack.c.h.b16 %v10376
        %v10489 = vunpack.c.l.b16 %v10377
        %v10490 = vunpack.c.h.b16 %v10377
        %v10491 = vunpack.c.l.b16 %v10378
        %v10492 = vunpack.c.h.b16 %v10378
        %v10493 = vunpack.c.l.b16 %v10379
        %v10494 = vunpack.c.h.b16 %v10379
        %v10495 = vunpack.c.l.b16 %v10380
        %v10496 = vunpack.c.h.b16 %v10380
        %v10497 = vunpack.c.l.b16 %v10381
        %v10498 = vunpack.c.h.b16 %v10381
        %v10499 = vunpack.c.l.b16 %v10382
        %v10500 = vunpack.c.h.b16 %v10382
        %v10501 = vunpack.c.l.b16 %v10383
        %v10502 = vunpack.c.h.b16 %v10383
        %v10503 = vunpack.c.l.b16 %v10384
        %v10504 = vunpack.c.h.b16 %v10384
        %v10505 = vunpack.c.l.b16 %v10385
        %v10506 = vunpack.c.h.b16 %v10385
        %v10507 = vunpack.c.l.b16 %v10386
        %v10508 = vunpack.c.h.b16 %v10386
        %v10509 = vunpack.c.l.b16 %v10387
        %v10510 = vunpack.c.h.b16 %v10387
        %v10511 = vunpack.c.l.b16 %v10388
        %v10512 = vunpack.c.h.b16 %v10388
        %v10513 = vunpack.c.l.b16 %v10389
        %v10514 = vunpack.c.h.b16 %v10389
        %v10515 = vunpack.c.l.b16 %v10390
        %v10516 = vunpack.c.h.b16 %v10390
        %v10517 = vunpack.c.l.b16 %v10391
        %v10518 = vunpack.c.h.b16 %v10391
        %v10519 = vunpack.c.l.b16 %v10392
        %v10520 = vunpack.c.h.b16 %v10392
        %v10521 = vunpack.c.l.b16 %v10393
        %v10522 = vunpack.c.h.b16 %v10393
        %v10523 = vpack.c.b16 %v10461, %v10459
        %v10524 = vpack.c.b16 %v10462, %v10460
        %v10525 = vpack.c.b16 %v10465, %v10463
        %v10526 = vpack.c.b16 %v10466, %v10464
        %v10527 = vpack.c.b16 %v10469, %v10467
        %v10528 = vpack.c.b16 %v10470, %v10468
        %v10529 = vpack.c.b16 %v10473, %v10471
        %v10530 = vpack.c.b16 %v10474, %v10472
        %v10531 = vpack.c.b16 %v10477, %v10475
        %v10532 = vpack.c.b16 %v10478, %v10476
        %v10533 = vpack.c.b16 %v10481, %v10479
        %v10534 = vpack.c.b16 %v10482, %v10480
        %v10535 = vpack.c.b16 %v10485, %v10483
        %v10536 = vpack.c.b16 %v10486, %v10484
        %v10537 = vpack.c.b16 %v10489, %v10487
        %v10538 = vpack.c.b16 %v10490, %v10488
        %v10539 = vpack.c.b16 %v10493, %v10491
        %v10540 = vpack.c.b16 %v10494, %v10492
        %v10541 = vpack.c.b16 %v10497, %v10495
        %v10542 = vpack.c.b16 %v10498, %v10496
        %v10543 = vpack.c.b16 %v10501, %v10499
        %v10544 = vpack.c.b16 %v10502, %v10500
        %v10545 = vpack.c.b16 %v10505, %v10503
        %v10546 = vpack.c.b16 %v10506, %v10504
        %v10547 = vpack.c.b16 %v10509, %v10507
        %v10548 = vpack.c.b16 %v10510, %v10508
        %v10549 = vpack.c.b16 %v10513, %v10511
        %v10550 = vpack.c.b16 %v10514, %v10512
        %v10551 = vpack.c.b16 %v10517, %v10515
        %v10552 = vpack.c.b16 %v10518, %v10516
        %v10553 = vpack.c.b16 %v10521, %v10519
        %v10554 = vpack.c.b16 %v10522, %v10520
        %v10619 = vunpack.c.l.b16 %v10395
        %v10620 = vunpack.c.h.b16 %v10395
        %v10621 = vunpack.c.l.b16 %v10396
        %v10622 = vunpack.c.h.b16 %v10396
        %v10623 = vunpack.c.l.b16 %v10397
        %v10624 = vunpack.c.h.b16 %v10397
        %v10625 = vunpack.c.l.b16 %v10398
        %v10626 = vunpack.c.h.b16 %v10398
        %v10627 = vunpack.c.l.b16 %v10399
        %v10628 = vunpack.c.h.b16 %v10399
        %v10629 = vunpack.c.l.b16 %v10400
        %v10630 = vunpack.c.h.b16 %v10400
        %v10631 = vunpack.c.l.b16 %v10401
        %v10632 = vunpack.c.h.b16 %v10401
        %v10633 = vunpack.c.l.b16 %v10402
        %v10634 = vunpack.c.h.b16 %v10402
        %v10635 = vunpack.c.l.b16 %v10403
        %v10636 = vunpack.c.h.b16 %v10403
        %v10637 = vunpack.c.l.b16 %v10404
        %v10638 = vunpack.c.h.b16 %v10404
        %v10639 = vunpack.c.l.b16 %v10405
        %v10640 = vunpack.c.h.b16 %v10405
        %v10641 = vunpack.c.l.b16 %v10406
        %v10642 = vunpack.c.h.b16 %v10406
        %v10643 = vunpack.c.l.b16 %v10407
        %v10644 = vunpack.c.h.b16 %v10407
        %v10645 = vunpack.c.l.b16 %v10408
        %v10646 = vunpack.c.h.b16 %v10408
        %v10647 = vunpack.c.l.b16 %v10409
        %v10648 = vunpack.c.h.b16 %v10409
        %v10649 = vunpack.c.l.b16 %v10410
        %v10650 = vunpack.c.h.b16 %v10410
        %v10651 = vunpack.c.l.b16 %v10411
        %v10652 = vunpack.c.h.b16 %v10411
        %v10653 = vunpack.c.l.b16 %v10412
        %v10654 = vunpack.c.h.b16 %v10412
        %v10655 = vunpack.c.l.b16 %v10413
        %v10656 = vunpack.c.h.b16 %v10413
        %v10657 = vunpack.c.l.b16 %v10414
        %v10658 = vunpack.c.h.b16 %v10414
        %v10659 = vunpack.c.l.b16 %v10415
        %v10660 = vunpack.c.h.b16 %v10415
        %v10661 = vunpack.c.l.b16 %v10416
        %v10662 = vunpack.c.h.b16 %v10416
        %v10663 = vunpack.c.l.b16 %v10417
        %v10664 = vunpack.c.h.b16 %v10417
        %v10665 = vunpack.c.l.b16 %v10418
        %v10666 = vunpack.c.h.b16 %v10418
        %v10667 = vunpack.c.l.b16 %v10419
        %v10668 = vunpack.c.h.b16 %v10419
        %v10669 = vunpack.c.l.b16 %v10420
        %v10670 = vunpack.c.h.b16 %v10420
        %v10671 = vunpack.c.l.b16 %v10421
        %v10672 = vunpack.c.h.b16 %v10421
        %v10673 = vunpack.c.l.b16 %v10422
        %v10674 = vunpack.c.h.b16 %v10422
        %v10675 = vunpack.c.l.b16 %v10423
        %v10676 = vunpack.c.h.b16 %v10423
        %v10677 = vunpack.c.l.b16 %v10424
        %v10678 = vunpack.c.h.b16 %v10424
        %v10679 = vunpack.c.l.b16 %v10425
        %v10680 = vunpack.c.h.b16 %v10425
        %v10681 = vunpack.c.l.b16 %v10426
        %v10682 = vunpack.c.h.b16 %v10426
        %v10683 = vpack.c.b16 %v10621, %v10619
        %v10684 = vpack.c.b16 %v10622, %v10620
        %v10685 = vpack.c.b16 %v10625, %v10623
        %v10686 = vpack.c.b16 %v10626, %v10624
        %v10687 = vpack.c.b16 %v10629, %v10627
        %v10688 = vpack.c.b16 %v10630, %v10628
        %v10689 = vpack.c.b16 %v10633, %v10631
        %v10690 = vpack.c.b16 %v10634, %v10632
        %v10691 = vpack.c.b16 %v10637, %v10635
        %v10692 = vpack.c.b16 %v10638, %v10636
        %v10693 = vpack.c.b16 %v10641, %v10639
        %v10694 = vpack.c.b16 %v10642, %v10640
        %v10695 = vpack.c.b16 %v10645, %v10643
        %v10696 = vpack.c.b16 %v10646, %v10644
        %v10697 = vpack.c.b16 %v10649, %v10647
        %v10698 = vpack.c.b16 %v10650, %v10648
        %v10699 = vpack.c.b16 %v10653, %v10651
        %v10700 = vpack.c.b16 %v10654, %v10652
        %v10701 = vpack.c.b16 %v10657, %v10655
        %v10702 = vpack.c.b16 %v10658, %v10656
        %v10703 = vpack.c.b16 %v10661, %v10659
        %v10704 = vpack.c.b16 %v10662, %v10660
        %v10705 = vpack.c.b16 %v10665, %v10663
        %v10706 = vpack.c.b16 %v10666, %v10664
        %v10707 = vpack.c.b16 %v10669, %v10667
        %v10708 = vpack.c.b16 %v10670, %v10668
        %v10709 = vpack.c.b16 %v10673, %v10671
        %v10710 = vpack.c.b16 %v10674, %v10672
        %v10711 = vpack.c.b16 %v10677, %v10675
        %v10712 = vpack.c.b16 %v10678, %v10676
        %v10713 = vpack.c.b16 %v10681, %v10679
        %v10714 = vpack.c.b16 %v10682, %v10680
        %10747 = vmatprep.subr.bf16.mxu0 %v10698
        %10748 = vmatpush1.bf16.msra.mxu0 %v10697
        %10749 = vmatprep.subr.bf16.mxu0 %v10696
        %10750 = vmatpush1.bf16.msra.mxu0 %v10695
        %10751 = vmatprep.subr.bf16.mxu0 %v10694
        %10752 = vmatpush1.bf16.msra.mxu0 %v10693
        %10753 = vmatprep.subr.bf16.mxu0 %v10692
        %10754 = vmatpush1.bf16.msra.mxu0 %v10691
        %10755 = vmatprep.subr.bf16.mxu0 %v10690
        %10756 = vmatpush1.bf16.msra.mxu0 %v10689
        %10757 = vmatprep.subr.bf16.mxu0 %v10688
        %10758 = vmatpush1.bf16.msra.mxu0 %v10687
        %10759 = vmatprep.subr.bf16.mxu0 %v10686
        %10760 = vmatpush1.bf16.msra.mxu0 %v10685
        %10761 = vmatprep.subr.bf16.mxu0 %v10684
        %10762 = vmatpush1.bf16.msra.mxu0 %v10683
        %10763 = vmatprep.subr.bf16.mxu0 %v10714
        %10764 = vmatpush2.bf16.msra.mxu0 %v10713
        %10765 = vmatprep.subr.bf16.mxu0 %v10712
        %10766 = vmatpush2.bf16.msra.mxu0 %v10711
        %10767 = vmatprep.subr.bf16.mxu0 %v10710
        %10768 = vmatpush2.bf16.msra.mxu0 %v10709
        %10769 = vmatprep.subr.bf16.mxu0 %v10708
        %10770 = vmatpush2.bf16.msra.mxu0 %v10707
        %10771 = vmatprep.subr.bf16.mxu0 %v10706
        %10772 = vmatpush2.bf16.msra.mxu0 %v10705
        %10773 = vmatprep.subr.bf16.mxu0 %v10704
        %10774 = vmatpush2.bf16.msra.mxu0 %v10703
        %10775 = vmatprep.subr.bf16.mxu0 %v10702
        %10776 = vmatpush2.bf16.msra.mxu0 %v10701
        %10777 = vmatprep.subr.bf16.mxu0 %v10700
        %10778 = vmatpush2.bf16.msra.mxu0 %v10699
        %10779 = vmatprep.mubr.bf16.mxu0 %v10524
        %10780 = vmatmul.mubr.bf16.gmra.mxu0 %v10523
        %v10781 = vpop.f32.mrf.mxu0
        %v10782 = vadd.f32 0.0, %v10781
        %v10783 = vpop.f32.mrf.mxu0
        %v10784 = vadd.f32 0.0, %v10783
        %v10785 = vpop.f32.mrf.mxu0
        %v10786 = vadd.f32 0.0, %v10785
        %v10787 = vpop.f32.mrf.mxu0
        %v10788 = vadd.f32 0.0, %v10787
        %10789 = vmatprep.mubr.bf16.mxu0 %v10526
        %10790 = vmatmul.mubr.bf16.gmra.mxu0 %v10525
        %v10791 = vpop.f32.mrf.mxu0
        %v10792 = vadd.f32 0.0, %v10791
        %v10793 = vpop.f32.mrf.mxu0
        %v10794 = vadd.f32 0.0, %v10793
        %v10795 = vpop.f32.mrf.mxu0
        %v10796 = vadd.f32 0.0, %v10795
        %v10797 = vpop.f32.mrf.mxu0
        %v10798 = vadd.f32 0.0, %v10797
        %10799 = vmatprep.mubr.bf16.mxu0 %v10528
        %10800 = vmatmul.mubr.bf16.gmra.mxu0 %v10527
        %v10801 = vpop.f32.mrf.mxu0
        %v10802 = vadd.f32 0.0, %v10801
        %v10803 = vpop.f32.mrf.mxu0
        %v10804 = vadd.f32 0.0, %v10803
        %v10805 = vpop.f32.mrf.mxu0
        %v10806 = vadd.f32 0.0, %v10805
        %v10807 = vpop.f32.mrf.mxu0
        %v10808 = vadd.f32 0.0, %v10807
        %10809 = vmatprep.mubr.bf16.mxu0 %v10530
        %10810 = vmatmul.mubr.bf16.gmra.mxu0 %v10529
        %v10811 = vpop.f32.mrf.mxu0
        %v10812 = vadd.f32 0.0, %v10811
        %v10813 = vpop.f32.mrf.mxu0
        %v10814 = vadd.f32 0.0, %v10813
        %v10815 = vpop.f32.mrf.mxu0
        %v10816 = vadd.f32 0.0, %v10815
        %v10817 = vpop.f32.mrf.mxu0
        %v10818 = vadd.f32 0.0, %v10817
        %10819 = vmatprep.mubr.bf16.mxu0 %v10532
        %10820 = vmatmul.mubr.bf16.gmra.mxu0 %v10531
        %v10821 = vpop.f32.mrf.mxu0
        %v10822 = vadd.f32 0.0, %v10821
        %v10823 = vpop.f32.mrf.mxu0
        %v10824 = vadd.f32 0.0, %v10823
        %v10825 = vpop.f32.mrf.mxu0
        %v10826 = vadd.f32 0.0, %v10825
        %v10827 = vpop.f32.mrf.mxu0
        %v10828 = vadd.f32 0.0, %v10827
        %10829 = vmatprep.mubr.bf16.mxu0 %v10534
        %10830 = vmatmul.mubr.bf16.gmra.mxu0 %v10533
        %v10831 = vpop.f32.mrf.mxu0
        %v10832 = vadd.f32 0.0, %v10831
        %v10833 = vpop.f32.mrf.mxu0
        %v10834 = vadd.f32 0.0, %v10833
        %v10835 = vpop.f32.mrf.mxu0
        %v10836 = vadd.f32 0.0, %v10835
        %v10837 = vpop.f32.mrf.mxu0
        %v10838 = vadd.f32 0.0, %v10837
        %10839 = vmatprep.mubr.bf16.mxu0 %v10536
        %10840 = vmatmul.mubr.bf16.gmra.mxu0 %v10535
        %v10841 = vpop.f32.mrf.mxu0
        %v10842 = vadd.f32 0.0, %v10841
        %v10843 = vpop.f32.mrf.mxu0
        %v10844 = vadd.f32 0.0, %v10843
        %v10845 = vpop.f32.mrf.mxu0
        %v10846 = vadd.f32 0.0, %v10845
        %v10847 = vpop.f32.mrf.mxu0
        %v10848 = vadd.f32 0.0, %v10847
        %10849 = vmatprep.mubr.bf16.mxu0 %v10538
        %10850 = vmatmul.mubr.bf16.gmra.mxu0 %v10537
        %v10851 = vpop.f32.mrf.mxu0
        %v10852 = vadd.f32 0.0, %v10851
        %v10853 = vpop.f32.mrf.mxu0
        %v10854 = vadd.f32 0.0, %v10853
        %v10855 = vpop.f32.mrf.mxu0
        %v10856 = vadd.f32 0.0, %v10855
        %v10857 = vpop.f32.mrf.mxu0
        %v10858 = vadd.f32 0.0, %v10857
        %10859 = vmatprep.mubr.bf16.mxu0 %v10540
        %10860 = vmatmul.mubr.bf16.gmra.mxu0 %v10539
        %v10861 = vpop.f32.mrf.mxu0
        %v10862 = vadd.f32 0.0, %v10861
        %v10863 = vpop.f32.mrf.mxu0
        %v10864 = vadd.f32 0.0, %v10863
        %v10865 = vpop.f32.mrf.mxu0
        %v10866 = vadd.f32 0.0, %v10865
        %v10867 = vpop.f32.mrf.mxu0
        %v10868 = vadd.f32 0.0, %v10867
        %10869 = vmatprep.mubr.bf16.mxu0 %v10542
        %10870 = vmatmul.mubr.bf16.gmra.mxu0 %v10541
        %v10871 = vpop.f32.mrf.mxu0
        %v10872 = vadd.f32 0.0, %v10871
        %v10873 = vpop.f32.mrf.mxu0
        %v10874 = vadd.f32 0.0, %v10873
        %v10875 = vpop.f32.mrf.mxu0
        %v10876 = vadd.f32 0.0, %v10875
        %v10877 = vpop.f32.mrf.mxu0
        %v10878 = vadd.f32 0.0, %v10877
        %10879 = vmatprep.mubr.bf16.mxu0 %v10544
        %10880 = vmatmul.mubr.bf16.gmra.mxu0 %v10543
        %v10881 = vpop.f32.mrf.mxu0
        %v10882 = vadd.f32 0.0, %v10881
        %v10883 = vpop.f32.mrf.mxu0
        %v10884 = vadd.f32 0.0, %v10883
        %v10885 = vpop.f32.mrf.mxu0
        %v10886 = vadd.f32 0.0, %v10885
        %v10887 = vpop.f32.mrf.mxu0
        %v10888 = vadd.f32 0.0, %v10887
        %10889 = vmatprep.mubr.bf16.mxu0 %v10546
        %10890 = vmatmul.mubr.bf16.gmra.mxu0 %v10545
        %v10891 = vpop.f32.mrf.mxu0
        %v10892 = vadd.f32 0.0, %v10891
        %v10893 = vpop.f32.mrf.mxu0
        %v10894 = vadd.f32 0.0, %v10893
        %v10895 = vpop.f32.mrf.mxu0
        %v10896 = vadd.f32 0.0, %v10895
        %v10897 = vpop.f32.mrf.mxu0
        %v10898 = vadd.f32 0.0, %v10897
        %10899 = vmatprep.mubr.bf16.mxu0 %v10548
        %10900 = vmatmul.mubr.bf16.gmra.mxu0 %v10547
        %v10901 = vpop.f32.mrf.mxu0
        %v10902 = vadd.f32 0.0, %v10901
        %v10903 = vpop.f32.mrf.mxu0
        %v10904 = vadd.f32 0.0, %v10903
        %v10905 = vpop.f32.mrf.mxu0
        %v10906 = vadd.f32 0.0, %v10905
        %v10907 = vpop.f32.mrf.mxu0
        %v10908 = vadd.f32 0.0, %v10907
        %10909 = vmatprep.mubr.bf16.mxu0 %v10550
        %10910 = vmatmul.mubr.bf16.gmra.mxu0 %v10549
        %v10911 = vpop.f32.mrf.mxu0
        %v10912 = vadd.f32 0.0, %v10911
        %v10913 = vpop.f32.mrf.mxu0
        %v10914 = vadd.f32 0.0, %v10913
        %v10915 = vpop.f32.mrf.mxu0
        %v10916 = vadd.f32 0.0, %v10915
        %v10917 = vpop.f32.mrf.mxu0
        %v10918 = vadd.f32 0.0, %v10917
        %10919 = vmatprep.mubr.bf16.mxu0 %v10552
        %10920 = vmatmul.mubr.bf16.gmra.mxu0 %v10551
        %v10921 = vpop.f32.mrf.mxu0
        %v10922 = vadd.f32 0.0, %v10921
        %v10923 = vpop.f32.mrf.mxu0
        %v10924 = vadd.f32 0.0, %v10923
        %v10925 = vpop.f32.mrf.mxu0
        %v10926 = vadd.f32 0.0, %v10925
        %v10927 = vpop.f32.mrf.mxu0
        %v10928 = vadd.f32 0.0, %v10927
        %10929 = vmatprep.mubr.bf16.mxu0 %v10554
        %10930 = vmatmul.mubr.bf16.gmra.mxu0 %v10553
        %v10931 = vpop.f32.mrf.mxu0
        %v10932 = vadd.f32 0.0, %v10931
        %v10933 = vpop.f32.mrf.mxu0
        %v10934 = vadd.f32 0.0, %v10933
        %v10935 = vpop.f32.mrf.mxu0
        %v10936 = vadd.f32 0.0, %v10935
        %v10937 = vpop.f32.mrf.mxu0
        %v10938 = vadd.f32 0.0, %v10937
        %10939 = vdwg.mxu0
        %v10940 = vadd.f32 %v10297, %v10782
        %v10941 = vadd.f32 %v10298, %v10784
        %v10942 = vadd.f32 %v10299, %v10786
        %v10943 = vadd.f32 %v10300, %v10788
        %v10944 = vadd.f32 %v10301, %v10792
        %v10945 = vadd.f32 %v10302, %v10794
        %v10946 = vadd.f32 %v10303, %v10796
        %v10947 = vadd.f32 %v10304, %v10798
        %v10948 = vadd.f32 %v10305, %v10802
        %v10949 = vadd.f32 %v10306, %v10804
        %v10950 = vadd.f32 %v10307, %v10806
        %v10951 = vadd.f32 %v10308, %v10808
        %v10952 = vadd.f32 %v10309, %v10812
        %v10953 = vadd.f32 %v10310, %v10814
        %v10954 = vadd.f32 %v10311, %v10816
        %v10955 = vadd.f32 %v10312, %v10818
        %v10956 = vadd.f32 %v10313, %v10822
        %v10957 = vadd.f32 %v10314, %v10824
        %v10958 = vadd.f32 %v10315, %v10826
        %v10959 = vadd.f32 %v10316, %v10828
        %v10960 = vadd.f32 %v10317, %v10832
        %v10961 = vadd.f32 %v10318, %v10834
        %v10962 = vadd.f32 %v10319, %v10836
        %v10963 = vadd.f32 %v10320, %v10838
        %v10964 = vadd.f32 %v10321, %v10842
        %v10965 = vadd.f32 %v10322, %v10844
        %v10966 = vadd.f32 %v10323, %v10846
        %v10967 = vadd.f32 %v10324, %v10848
        %v10968 = vadd.f32 %v10325, %v10852
        %v10969 = vadd.f32 %v10326, %v10854
        %v10970 = vadd.f32 %v10327, %v10856
        %v10971 = vadd.f32 %v10328, %v10858
        %v10972 = vadd.f32 %v10329, %v10862
        %v10973 = vadd.f32 %v10330, %v10864
        %v10974 = vadd.f32 %v10331, %v10866
        %v10975 = vadd.f32 %v10332, %v10868
        %v10976 = vadd.f32 %v10333, %v10872
        %v10977 = vadd.f32 %v10334, %v10874
        %v10978 = vadd.f32 %v10335, %v10876
        %v10979 = vadd.f32 %v10336, %v10878
        %v10980 = vadd.f32 %v10337, %v10882
        %v10981 = vadd.f32 %v10338, %v10884
        %v10982 = vadd.f32 %v10339, %v10886
        %v10983 = vadd.f32 %v10340, %v10888
        %v10984 = vadd.f32 %v10341, %v10892
        %v10985 = vadd.f32 %v10342, %v10894
        %v10986 = vadd.f32 %v10343, %v10896
        %v10987 = vadd.f32 %v10344, %v10898
        %v10988 = vadd.f32 %v10345, %v10902
        %v10989 = vadd.f32 %v10346, %v10904
        %v10990 = vadd.f32 %v10347, %v10906
        %v10991 = vadd.f32 %v10348, %v10908
        %v10992 = vadd.f32 %v10349, %v10912
        %v10993 = vadd.f32 %v10350, %v10914
        %v10994 = vadd.f32 %v10351, %v10916
        %v10995 = vadd.f32 %v10352, %v10918
        %v10996 = vadd.f32 %v10353, %v10922
        %v10997 = vadd.f32 %v10354, %v10924
        %v10998 = vadd.f32 %v10355, %v10926
        %v10999 = vadd.f32 %v10356, %v10928
        %v11000 = vadd.f32 %v10357, %v10932
        %v11001 = vadd.f32 %v10358, %v10934
        %v11002 = vadd.f32 %v10359, %v10936
        %v11003 = vadd.f32 %v10360, %v10938
        %v11004 = vld [vmem:[%s10361] sm:$0xff]
        %v11005 = vld [vmem:[%s10361 + $0x8] sm:$0xff]
        %v11006 = vld [vmem:[%s10361 + $0x10] sm:$0x11]
        %v11007 = vld [vmem:[%s10361 + $0x18] sm:$0xff]
        %v11008 = vld [vmem:[%s10361 + $0x20] sm:$0xff]
        %v11009 = vld [vmem:[%s10361 + $0x28] sm:$0x11]
        %v11010 = vld [vmem:[%s10361 + $0x30] sm:$0xff]
        %v11011 = vld [vmem:[%s10361 + $0x38] sm:$0xff]
        %v11012 = vld [vmem:[%s10361 + $0x40] sm:$0x11]
        %v11013 = vld [vmem:[%s10361 + $0x48] sm:$0xff]
        %v11014 = vld [vmem:[%s10361 + $0x50] sm:$0xff]
        %v11015 = vld [vmem:[%s10361 + $0x58] sm:$0x11]
        %v11016 = vld [vmem:[%s10361 + $0x60] sm:$0xff]
        %v11017 = vld [vmem:[%s10361 + $0x68] sm:$0xff]
        %v11018 = vld [vmem:[%s10361 + $0x70] sm:$0x11]
        %v11019 = vld [vmem:[%s10361 + $0x78] sm:$0xff]
        %v11020 = vld [vmem:[%s10361 + $0x80] sm:$0xff]
        %v11021 = vld [vmem:[%s10361 + $0x88] sm:$0x11]
        %v11022 = vld [vmem:[%s10361 + $0x90] sm:$0xff]
        %v11023 = vld [vmem:[%s10361 + $0x98] sm:$0xff]
        %v11024 = vld [vmem:[%s10361 + $0xa0] sm:$0x11]
        %v11025 = vld [vmem:[%s10361 + $0xa8] sm:$0xff]
        %v11026 = vld [vmem:[%s10361 + $0xb0] sm:$0xff]
        %v11027 = vld [vmem:[%s10361 + $0xb8] sm:$0x11]
        %v11028 = vld [vmem:[%s10361 + $0xc0] sm:$0xff]
        %v11029 = vld [vmem:[%s10361 + $0xc8] sm:$0xff]
        %v11030 = vld [vmem:[%s10361 + $0xd0] sm:$0x11]
        %v11031 = vld [vmem:[%s10361 + $0xd8] sm:$0xff]
        %v11032 = vld [vmem:[%s10361 + $0xe0] sm:$0xff]
        %v11033 = vld [vmem:[%s10361 + $0xe8] sm:$0x11]
        %v11034 = vld [vmem:[%s10361 + $0xf0] sm:$0xff]
        %v11035 = vld [vmem:[%s10361 + $0xf8] sm:$0xff]
        %v11036 = vld [vmem:[%s10361 + $0x100] sm:$0x11]
        %v11037 = vld [vmem:[%s10361 + $0x108] sm:$0xff]
        %v11038 = vld [vmem:[%s10361 + $0x110] sm:$0xff]
        %v11039 = vld [vmem:[%s10361 + $0x118] sm:$0x11]
        %v11040 = vld [vmem:[%s10361 + $0x120] sm:$0xff]
        %v11041 = vld [vmem:[%s10361 + $0x128] sm:$0xff]
        %v11042 = vld [vmem:[%s10361 + $0x130] sm:$0x11]
        %v11043 = vld [vmem:[%s10361 + $0x138] sm:$0xff]
        %v11044 = vld [vmem:[%s10361 + $0x140] sm:$0xff]
        %v11045 = vld [vmem:[%s10361 + $0x148] sm:$0x11]
        %v11046 = vld [vmem:[%s10361 + $0x150] sm:$0xff]
        %v11047 = vld [vmem:[%s10361 + $0x158] sm:$0xff]
        %v11048 = vld [vmem:[%s10361 + $0x160] sm:$0x11]
        %v11049 = vld [vmem:[%s10361 + $0x168] sm:$0xff]
        %v11050 = vld [vmem:[%s10361 + $0x170] sm:$0xff]
        %v11051 = vld [vmem:[%s10361 + $0x178] sm:$0x11]
        %s11052 = scalar_lea.vmem [#allocation8], 1792
        %v11053 = vld [vmem:[%s11052] sm:$0xff]
        %v11054 = vld [vmem:[%s11052 + $0x8] sm:$0xff]
        %v11055 = vld [vmem:[%s11052 + $0x10] sm:$0xff]
        %v11056 = vld [vmem:[%s11052 + $0x18] sm:$0xff]
        %v11057 = vld [vmem:[%s11052 + $0x20] sm:$0xff]
        %v11058 = vld [vmem:[%s11052 + $0x28] sm:$0xff]
        %v11059 = vld [vmem:[%s11052 + $0x30] sm:$0xff]
        %v11060 = vld [vmem:[%s11052 + $0x38] sm:$0xff]
        %v11061 = vld [vmem:[%s11052 + $0x40] sm:$0xff]
        %v11062 = vld [vmem:[%s11052 + $0x48] sm:$0xff]
        %v11063 = vld [vmem:[%s11052 + $0x50] sm:$0xff]
        %v11064 = vld [vmem:[%s11052 + $0x58] sm:$0xff]
        %v11065 = vld [vmem:[%s11052 + $0x60] sm:$0xff]
        %v11066 = vld [vmem:[%s11052 + $0x68] sm:$0xff]
        %v11067 = vld [vmem:[%s11052 + $0x70] sm:$0xff]
        %v11068 = vld [vmem:[%s11052 + $0x78] sm:$0xff]
        %v11069 = vld [vmem:[%s11052 + $0x80] sm:$0xff]
        %v11070 = vld [vmem:[%s11052 + $0x88] sm:$0xff]
        %v11071 = vld [vmem:[%s11052 + $0x90] sm:$0xff]
        %v11072 = vld [vmem:[%s11052 + $0x98] sm:$0xff]
        %v11073 = vld [vmem:[%s11052 + $0xa0] sm:$0xff]
        %v11074 = vld [vmem:[%s11052 + $0xa8] sm:$0xff]
        %v11075 = vld [vmem:[%s11052 + $0xb0] sm:$0xff]
        %v11076 = vld [vmem:[%s11052 + $0xb8] sm:$0xff]
        %v11077 = vld [vmem:[%s11052 + $0xc0] sm:$0xff]
        %v11078 = vld [vmem:[%s11052 + $0xc8] sm:$0xff]
        %v11079 = vld [vmem:[%s11052 + $0xd0] sm:$0xff]
        %v11080 = vld [vmem:[%s11052 + $0xd8] sm:$0xff]
        %v11081 = vld [vmem:[%s11052 + $0xe0] sm:$0xff]
        %v11082 = vld [vmem:[%s11052 + $0xe8] sm:$0xff]
        %v11083 = vld [vmem:[%s11052 + $0xf0] sm:$0xff]
        %v11084 = vld [vmem:[%s11052 + $0xf8] sm:$0xff]
        %v11086 = vshrl.u32 %v11004, 16
        %v11088 = vrot.slane %v11086, 4
        %v11089 = vshll.u32 %v11004, 16
        %v11091 = vrot.slane %v11089, 5
        %v11092 = vor.u32 %v11088, %v11091
        %v11093 = vrot.slane %v11092, 4
        %v11095 = vshll.u32 %v11005, 16
        %v11097 = vrot.slane %v11095, 5
        %v11098 = vsel %vm5834, %v11093, %v11097
        %v11099 = vshrl.u32 %v11005, 16
        %v11101 = vrot.slane %v11099, 4
        %v11102 = vor.u32 %v11101, %v11097
        %v11103 = vrot.slane %v11102, 4
        %v11105 = vshll.u32 %v11006, 16
        %v11107 = vrot.slane %v11105, 5
        %v11108 = vsel %vm5834, %v11103, %v11107
        %v11110 = vshrl.u32 %v11007, 16
        %v11112 = vrot.slane %v11110, 4
        %v11113 = vshll.u32 %v11007, 16
        %v11115 = vrot.slane %v11113, 5
        %v11116 = vor.u32 %v11112, %v11115
        %v11117 = vrot.slane %v11116, 4
        %v11119 = vshll.u32 %v11008, 16
        %v11121 = vrot.slane %v11119, 5
        %v11122 = vsel %vm5834, %v11117, %v11121
        %v11123 = vshrl.u32 %v11008, 16
        %v11125 = vrot.slane %v11123, 4
        %v11126 = vor.u32 %v11125, %v11121
        %v11127 = vrot.slane %v11126, 4
        %v11129 = vshll.u32 %v11009, 16
        %v11131 = vrot.slane %v11129, 5
        %v11132 = vsel %vm5834, %v11127, %v11131
        %v11134 = vshrl.u32 %v11010, 16
        %v11136 = vrot.slane %v11134, 4
        %v11137 = vshll.u32 %v11010, 16
        %v11139 = vrot.slane %v11137, 5
        %v11140 = vor.u32 %v11136, %v11139
        %v11141 = vrot.slane %v11140, 4
        %v11143 = vshll.u32 %v11011, 16
        %v11145 = vrot.slane %v11143, 5
        %v11146 = vsel %vm5834, %v11141, %v11145
        %v11147 = vshrl.u32 %v11011, 16
        %v11149 = vrot.slane %v11147, 4
        %v11150 = vor.u32 %v11149, %v11145
        %v11151 = vrot.slane %v11150, 4
        %v11153 = vshll.u32 %v11012, 16
        %v11155 = vrot.slane %v11153, 5
        %v11156 = vsel %vm5834, %v11151, %v11155
        %v11158 = vshrl.u32 %v11013, 16
        %v11160 = vrot.slane %v11158, 4
        %v11161 = vshll.u32 %v11013, 16
        %v11163 = vrot.slane %v11161, 5
        %v11164 = vor.u32 %v11160, %v11163
        %v11165 = vrot.slane %v11164, 4
        %v11167 = vshll.u32 %v11014, 16
        %v11169 = vrot.slane %v11167, 5
        %v11170 = vsel %vm5834, %v11165, %v11169
        %v11171 = vshrl.u32 %v11014, 16
        %v11173 = vrot.slane %v11171, 4
        %v11174 = vor.u32 %v11173, %v11169
        %v11175 = vrot.slane %v11174, 4
        %v11177 = vshll.u32 %v11015, 16
        %v11179 = vrot.slane %v11177, 5
        %v11180 = vsel %vm5834, %v11175, %v11179
        %v11182 = vshrl.u32 %v11016, 16
        %v11184 = vrot.slane %v11182, 4
        %v11185 = vshll.u32 %v11016, 16
        %v11187 = vrot.slane %v11185, 5
        %v11188 = vor.u32 %v11184, %v11187
        %v11189 = vrot.slane %v11188, 4
        %v11191 = vshll.u32 %v11017, 16
        %v11193 = vrot.slane %v11191, 5
        %v11194 = vsel %vm5834, %v11189, %v11193
        %v11195 = vshrl.u32 %v11017, 16
        %v11197 = vrot.slane %v11195, 4
        %v11198 = vor.u32 %v11197, %v11193
        %v11199 = vrot.slane %v11198, 4
        %v11201 = vshll.u32 %v11018, 16
        %v11203 = vrot.slane %v11201, 5
        %v11204 = vsel %vm5834, %v11199, %v11203
        %v11206 = vshrl.u32 %v11019, 16
        %v11208 = vrot.slane %v11206, 4
        %v11209 = vshll.u32 %v11019, 16
        %v11211 = vrot.slane %v11209, 5
        %v11212 = vor.u32 %v11208, %v11211
        %v11213 = vrot.slane %v11212, 4
        %v11215 = vshll.u32 %v11020, 16
        %v11217 = vrot.slane %v11215, 5
        %v11218 = vsel %vm5834, %v11213, %v11217
        %v11219 = vshrl.u32 %v11020, 16
        %v11221 = vrot.slane %v11219, 4
        %v11222 = vor.u32 %v11221, %v11217
        %v11223 = vrot.slane %v11222, 4
        %v11225 = vshll.u32 %v11021, 16
        %v11227 = vrot.slane %v11225, 5
        %v11228 = vsel %vm5834, %v11223, %v11227
        %v11230 = vshrl.u32 %v11022, 16
        %v11232 = vrot.slane %v11230, 4
        %v11233 = vshll.u32 %v11022, 16
        %v11235 = vrot.slane %v11233, 5
        %v11236 = vor.u32 %v11232, %v11235
        %v11237 = vrot.slane %v11236, 4
        %v11239 = vshll.u32 %v11023, 16
        %v11241 = vrot.slane %v11239, 5
        %v11242 = vsel %vm5834, %v11237, %v11241
        %v11243 = vshrl.u32 %v11023, 16
        %v11245 = vrot.slane %v11243, 4
        %v11246 = vor.u32 %v11245, %v11241
        %v11247 = vrot.slane %v11246, 4
        %v11249 = vshll.u32 %v11024, 16
        %v11251 = vrot.slane %v11249, 5
        %v11252 = vsel %vm5834, %v11247, %v11251
        %v11254 = vshrl.u32 %v11025, 16
        %v11256 = vrot.slane %v11254, 4
        %v11257 = vshll.u32 %v11025, 16
        %v11259 = vrot.slane %v11257, 5
        %v11260 = vor.u32 %v11256, %v11259
        %v11261 = vrot.slane %v11260, 4
        %v11263 = vshll.u32 %v11026, 16
        %v11265 = vrot.slane %v11263, 5
        %v11266 = vsel %vm5834, %v11261, %v11265
        %v11267 = vshrl.u32 %v11026, 16
        %v11269 = vrot.slane %v11267, 4
        %v11270 = vor.u32 %v11269, %v11265
        %v11271 = vrot.slane %v11270, 4
        %v11273 = vshll.u32 %v11027, 16
        %v11275 = vrot.slane %v11273, 5
        %v11276 = vsel %vm5834, %v11271, %v11275
        %v11278 = vshrl.u32 %v11028, 16
        %v11280 = vrot.slane %v11278, 4
        %v11281 = vshll.u32 %v11028, 16
        %v11283 = vrot.slane %v11281, 5
        %v11284 = vor.u32 %v11280, %v11283
        %v11285 = vrot.slane %v11284, 4
        %v11287 = vshll.u32 %v11029, 16
        %v11289 = vrot.slane %v11287, 5
        %v11290 = vsel %vm5834, %v11285, %v11289
        %v11291 = vshrl.u32 %v11029, 16
        %v11293 = vrot.slane %v11291, 4
        %v11294 = vor.u32 %v11293, %v11289
        %v11295 = vrot.slane %v11294, 4
        %v11297 = vshll.u32 %v11030, 16
        %v11299 = vrot.slane %v11297, 5
        %v11300 = vsel %vm5834, %v11295, %v11299
        %v11302 = vshrl.u32 %v11031, 16
        %v11304 = vrot.slane %v11302, 4
        %v11305 = vshll.u32 %v11031, 16
        %v11307 = vrot.slane %v11305, 5
        %v11308 = vor.u32 %v11304, %v11307
        %v11309 = vrot.slane %v11308, 4
        %v11311 = vshll.u32 %v11032, 16
        %v11313 = vrot.slane %v11311, 5
        %v11314 = vsel %vm5834, %v11309, %v11313
        %v11315 = vshrl.u32 %v11032, 16
        %v11317 = vrot.slane %v11315, 4
        %v11318 = vor.u32 %v11317, %v11313
        %v11319 = vrot.slane %v11318, 4
        %v11321 = vshll.u32 %v11033, 16
        %v11323 = vrot.slane %v11321, 5
        %v11324 = vsel %vm5834, %v11319, %v11323
        %v11326 = vshrl.u32 %v11034, 16
        %v11328 = vrot.slane %v11326, 4
        %v11329 = vshll.u32 %v11034, 16
        %v11331 = vrot.slane %v11329, 5
        %v11332 = vor.u32 %v11328, %v11331
        %v11333 = vrot.slane %v11332, 4
        %v11335 = vshll.u32 %v11035, 16
        %v11337 = vrot.slane %v11335, 5
        %v11338 = vsel %vm5834, %v11333, %v11337
        %v11339 = vshrl.u32 %v11035, 16
        %v11341 = vrot.slane %v11339, 4
        %v11342 = vor.u32 %v11341, %v11337
        %v11343 = vrot.slane %v11342, 4
        %v11345 = vshll.u32 %v11036, 16
        %v11347 = vrot.slane %v11345, 5
        %v11348 = vsel %vm5834, %v11343, %v11347
        %v11350 = vshrl.u32 %v11037, 16
        %v11352 = vrot.slane %v11350, 4
        %v11353 = vshll.u32 %v11037, 16
        %v11355 = vrot.slane %v11353, 5
        %v11356 = vor.u32 %v11352, %v11355
        %v11357 = vrot.slane %v11356, 4
        %v11359 = vshll.u32 %v11038, 16
        %v11361 = vrot.slane %v11359, 5
        %v11362 = vsel %vm5834, %v11357, %v11361
        %v11363 = vshrl.u32 %v11038, 16
        %v11365 = vrot.slane %v11363, 4
        %v11366 = vor.u32 %v11365, %v11361
        %v11367 = vrot.slane %v11366, 4
        %v11369 = vshll.u32 %v11039, 16
        %v11371 = vrot.slane %v11369, 5
        %v11372 = vsel %vm5834, %v11367, %v11371
        %v11374 = vshrl.u32 %v11040, 16
        %v11376 = vrot.slane %v11374, 4
        %v11377 = vshll.u32 %v11040, 16
        %v11379 = vrot.slane %v11377, 5
        %v11380 = vor.u32 %v11376, %v11379
        %v11381 = vrot.slane %v11380, 4
        %v11383 = vshll.u32 %v11041, 16
        %v11385 = vrot.slane %v11383, 5
        %v11386 = vsel %vm5834, %v11381, %v11385
        %v11387 = vshrl.u32 %v11041, 16
        %v11389 = vrot.slane %v11387, 4
        %v11390 = vor.u32 %v11389, %v11385
        %v11391 = vrot.slane %v11390, 4
        %v11393 = vshll.u32 %v11042, 16
        %v11395 = vrot.slane %v11393, 5
        %v11396 = vsel %vm5834, %v11391, %v11395
        %v11398 = vshrl.u32 %v11043, 16
        %v11400 = vrot.slane %v11398, 4
        %v11401 = vshll.u32 %v11043, 16
        %v11403 = vrot.slane %v11401, 5
        %v11404 = vor.u32 %v11400, %v11403
        %v11405 = vrot.slane %v11404, 4
        %v11407 = vshll.u32 %v11044, 16
        %v11409 = vrot.slane %v11407, 5
        %v11410 = vsel %vm5834, %v11405, %v11409
        %v11411 = vshrl.u32 %v11044, 16
        %v11413 = vrot.slane %v11411, 4
        %v11414 = vor.u32 %v11413, %v11409
        %v11415 = vrot.slane %v11414, 4
        %v11417 = vshll.u32 %v11045, 16
        %v11419 = vrot.slane %v11417, 5
        %v11420 = vsel %vm5834, %v11415, %v11419
        %v11422 = vshrl.u32 %v11046, 16
        %v11424 = vrot.slane %v11422, 4
        %v11425 = vshll.u32 %v11046, 16
        %v11427 = vrot.slane %v11425, 5
        %v11428 = vor.u32 %v11424, %v11427
        %v11429 = vrot.slane %v11428, 4
        %v11431 = vshll.u32 %v11047, 16
        %v11433 = vrot.slane %v11431, 5
        %v11434 = vsel %vm5834, %v11429, %v11433
        %v11435 = vshrl.u32 %v11047, 16
        %v11437 = vrot.slane %v11435, 4
        %v11438 = vor.u32 %v11437, %v11433
        %v11439 = vrot.slane %v11438, 4
        %v11441 = vshll.u32 %v11048, 16
        %v11443 = vrot.slane %v11441, 5
        %v11444 = vsel %vm5834, %v11439, %v11443
        %v11446 = vshrl.u32 %v11049, 16
        %v11448 = vrot.slane %v11446, 4
        %v11449 = vshll.u32 %v11049, 16
        %v11451 = vrot.slane %v11449, 5
        %v11452 = vor.u32 %v11448, %v11451
        %v11453 = vrot.slane %v11452, 4
        %v11455 = vshll.u32 %v11050, 16
        %v11457 = vrot.slane %v11455, 5
        %v11458 = vsel %vm5834, %v11453, %v11457
        %v11459 = vshrl.u32 %v11050, 16
        %v11461 = vrot.slane %v11459, 4
        %v11462 = vor.u32 %v11461, %v11457
        %v11463 = vrot.slane %v11462, 4
        %v11465 = vshll.u32 %v11051, 16
        %v11467 = vrot.slane %v11465, 5
        %v11468 = vsel %vm5834, %v11463, %v11467
        %v11469 = vunpack.c.l.b16 %v11098
        %v11470 = vunpack.c.h.b16 %v11098
        %v11471 = vunpack.c.l.b16 %v11108
        %v11472 = vunpack.c.h.b16 %v11108
        %v11473 = vunpack.c.l.b16 %v11122
        %v11474 = vunpack.c.h.b16 %v11122
        %v11475 = vunpack.c.l.b16 %v11132
        %v11476 = vunpack.c.h.b16 %v11132
        %v11477 = vunpack.c.l.b16 %v11146
        %v11478 = vunpack.c.h.b16 %v11146
        %v11479 = vunpack.c.l.b16 %v11156
        %v11480 = vunpack.c.h.b16 %v11156
        %v11481 = vunpack.c.l.b16 %v11170
        %v11482 = vunpack.c.h.b16 %v11170
        %v11483 = vunpack.c.l.b16 %v11180
        %v11484 = vunpack.c.h.b16 %v11180
        %v11485 = vunpack.c.l.b16 %v11194
        %v11486 = vunpack.c.h.b16 %v11194
        %v11487 = vunpack.c.l.b16 %v11204
        %v11488 = vunpack.c.h.b16 %v11204
        %v11489 = vunpack.c.l.b16 %v11218
        %v11490 = vunpack.c.h.b16 %v11218
        %v11491 = vunpack.c.l.b16 %v11228
        %v11492 = vunpack.c.h.b16 %v11228
        %v11493 = vunpack.c.l.b16 %v11242
        %v11494 = vunpack.c.h.b16 %v11242
        %v11495 = vunpack.c.l.b16 %v11252
        %v11496 = vunpack.c.h.b16 %v11252
        %v11497 = vunpack.c.l.b16 %v11266
        %v11498 = vunpack.c.h.b16 %v11266
        %v11499 = vunpack.c.l.b16 %v11276
        %v11500 = vunpack.c.h.b16 %v11276
        %v11501 = vunpack.c.l.b16 %v11290
        %v11502 = vunpack.c.h.b16 %v11290
        %v11503 = vunpack.c.l.b16 %v11300
        %v11504 = vunpack.c.h.b16 %v11300
        %v11505 = vunpack.c.l.b16 %v11314
        %v11506 = vunpack.c.h.b16 %v11314
        %v11507 = vunpack.c.l.b16 %v11324
        %v11508 = vunpack.c.h.b16 %v11324
        %v11509 = vunpack.c.l.b16 %v11338
        %v11510 = vunpack.c.h.b16 %v11338
        %v11511 = vunpack.c.l.b16 %v11348
        %v11512 = vunpack.c.h.b16 %v11348
        %v11513 = vunpack.c.l.b16 %v11362
        %v11514 = vunpack.c.h.b16 %v11362
        %v11515 = vunpack.c.l.b16 %v11372
        %v11516 = vunpack.c.h.b16 %v11372
        %v11517 = vunpack.c.l.b16 %v11386
        %v11518 = vunpack.c.h.b16 %v11386
        %v11519 = vunpack.c.l.b16 %v11396
        %v11520 = vunpack.c.h.b16 %v11396
        %v11521 = vunpack.c.l.b16 %v11410
        %v11522 = vunpack.c.h.b16 %v11410
        %v11523 = vunpack.c.l.b16 %v11420
        %v11524 = vunpack.c.h.b16 %v11420
        %v11525 = vunpack.c.l.b16 %v11434
        %v11526 = vunpack.c.h.b16 %v11434
        %v11527 = vunpack.c.l.b16 %v11444
        %v11528 = vunpack.c.h.b16 %v11444
        %v11529 = vunpack.c.l.b16 %v11458
        %v11530 = vunpack.c.h.b16 %v11458
        %v11531 = vunpack.c.l.b16 %v11468
        %v11532 = vunpack.c.h.b16 %v11468
        %v11533 = vpack.c.b16 %v11471, %v11469
        %v11534 = vpack.c.b16 %v11472, %v11470
        %v11535 = vpack.c.b16 %v11475, %v11473
        %v11536 = vpack.c.b16 %v11476, %v11474
        %v11537 = vpack.c.b16 %v11479, %v11477
        %v11538 = vpack.c.b16 %v11480, %v11478
        %v11539 = vpack.c.b16 %v11483, %v11481
        %v11540 = vpack.c.b16 %v11484, %v11482
        %v11541 = vpack.c.b16 %v11487, %v11485
        %v11542 = vpack.c.b16 %v11488, %v11486
        %v11543 = vpack.c.b16 %v11491, %v11489
        %v11544 = vpack.c.b16 %v11492, %v11490
        %v11545 = vpack.c.b16 %v11495, %v11493
        %v11546 = vpack.c.b16 %v11496, %v11494
        %v11547 = vpack.c.b16 %v11499, %v11497
        %v11548 = vpack.c.b16 %v11500, %v11498
        %v11549 = vpack.c.b16 %v11503, %v11501
        %v11550 = vpack.c.b16 %v11504, %v11502
        %v11551 = vpack.c.b16 %v11507, %v11505
        %v11552 = vpack.c.b16 %v11508, %v11506
        %v11553 = vpack.c.b16 %v11511, %v11509
        %v11554 = vpack.c.b16 %v11512, %v11510
        %v11555 = vpack.c.b16 %v11515, %v11513
        %v11556 = vpack.c.b16 %v11516, %v11514
        %v11557 = vpack.c.b16 %v11519, %v11517
        %v11558 = vpack.c.b16 %v11520, %v11518
        %v11559 = vpack.c.b16 %v11523, %v11521
        %v11560 = vpack.c.b16 %v11524, %v11522
        %v11561 = vpack.c.b16 %v11527, %v11525
        %v11562 = vpack.c.b16 %v11528, %v11526
        %v11563 = vpack.c.b16 %v11531, %v11529
        %v11564 = vpack.c.b16 %v11532, %v11530
        %v11629 = vunpack.c.l.b16 %v11053
        %v11630 = vunpack.c.h.b16 %v11053
        %v11631 = vunpack.c.l.b16 %v11054
        %v11632 = vunpack.c.h.b16 %v11054
        %v11633 = vunpack.c.l.b16 %v11055
        %v11634 = vunpack.c.h.b16 %v11055
        %v11635 = vunpack.c.l.b16 %v11056
        %v11636 = vunpack.c.h.b16 %v11056
        %v11637 = vunpack.c.l.b16 %v11057
        %v11638 = vunpack.c.h.b16 %v11057
        %v11639 = vunpack.c.l.b16 %v11058
        %v11640 = vunpack.c.h.b16 %v11058
        %v11641 = vunpack.c.l.b16 %v11059
        %v11642 = vunpack.c.h.b16 %v11059
        %v11643 = vunpack.c.l.b16 %v11060
        %v11644 = vunpack.c.h.b16 %v11060
        %v11645 = vunpack.c.l.b16 %v11061
        %v11646 = vunpack.c.h.b16 %v11061
        %v11647 = vunpack.c.l.b16 %v11062
        %v11648 = vunpack.c.h.b16 %v11062
        %v11649 = vunpack.c.l.b16 %v11063
        %v11650 = vunpack.c.h.b16 %v11063
        %v11651 = vunpack.c.l.b16 %v11064
        %v11652 = vunpack.c.h.b16 %v11064
        %v11653 = vunpack.c.l.b16 %v11065
        %v11654 = vunpack.c.h.b16 %v11065
        %v11655 = vunpack.c.l.b16 %v11066
        %v11656 = vunpack.c.h.b16 %v11066
        %v11657 = vunpack.c.l.b16 %v11067
        %v11658 = vunpack.c.h.b16 %v11067
        %v11659 = vunpack.c.l.b16 %v11068
        %v11660 = vunpack.c.h.b16 %v11068
        %v11661 = vunpack.c.l.b16 %v11069
        %v11662 = vunpack.c.h.b16 %v11069
        %v11663 = vunpack.c.l.b16 %v11070
        %v11664 = vunpack.c.h.b16 %v11070
        %v11665 = vunpack.c.l.b16 %v11071
        %v11666 = vunpack.c.h.b16 %v11071
        %v11667 = vunpack.c.l.b16 %v11072
        %v11668 = vunpack.c.h.b16 %v11072
        %v11669 = vunpack.c.l.b16 %v11073
        %v11670 = vunpack.c.h.b16 %v11073
        %v11671 = vunpack.c.l.b16 %v11074
        %v11672 = vunpack.c.h.b16 %v11074
        %v11673 = vunpack.c.l.b16 %v11075
        %v11674 = vunpack.c.h.b16 %v11075
        %v11675 = vunpack.c.l.b16 %v11076
        %v11676 = vunpack.c.h.b16 %v11076
        %v11677 = vunpack.c.l.b16 %v11077
        %v11678 = vunpack.c.h.b16 %v11077
        %v11679 = vunpack.c.l.b16 %v11078
        %v11680 = vunpack.c.h.b16 %v11078
        %v11681 = vunpack.c.l.b16 %v11079
        %v11682 = vunpack.c.h.b16 %v11079
        %v11683 = vunpack.c.l.b16 %v11080
        %v11684 = vunpack.c.h.b16 %v11080
        %v11685 = vunpack.c.l.b16 %v11081
        %v11686 = vunpack.c.h.b16 %v11081
        %v11687 = vunpack.c.l.b16 %v11082
        %v11688 = vunpack.c.h.b16 %v11082
        %v11689 = vunpack.c.l.b16 %v11083
        %v11690 = vunpack.c.h.b16 %v11083
        %v11691 = vunpack.c.l.b16 %v11084
        %v11692 = vunpack.c.h.b16 %v11084
        %v11693 = vpack.c.b16 %v11631, %v11629
        %v11694 = vpack.c.b16 %v11632, %v11630
        %v11695 = vpack.c.b16 %v11635, %v11633
        %v11696 = vpack.c.b16 %v11636, %v11634
        %v11697 = vpack.c.b16 %v11639, %v11637
        %v11698 = vpack.c.b16 %v11640, %v11638
        %v11699 = vpack.c.b16 %v11643, %v11641
        %v11700 = vpack.c.b16 %v11644, %v11642
        %v11701 = vpack.c.b16 %v11647, %v11645
        %v11702 = vpack.c.b16 %v11648, %v11646
        %v11703 = vpack.c.b16 %v11651, %v11649
        %v11704 = vpack.c.b16 %v11652, %v11650
        %v11705 = vpack.c.b16 %v11655, %v11653
        %v11706 = vpack.c.b16 %v11656, %v11654
        %v11707 = vpack.c.b16 %v11659, %v11657
        %v11708 = vpack.c.b16 %v11660, %v11658
        %v11709 = vpack.c.b16 %v11663, %v11661
        %v11710 = vpack.c.b16 %v11664, %v11662
        %v11711 = vpack.c.b16 %v11667, %v11665
        %v11712 = vpack.c.b16 %v11668, %v11666
        %v11713 = vpack.c.b16 %v11671, %v11669
        %v11714 = vpack.c.b16 %v11672, %v11670
        %v11715 = vpack.c.b16 %v11675, %v11673
        %v11716 = vpack.c.b16 %v11676, %v11674
        %v11717 = vpack.c.b16 %v11679, %v11677
        %v11718 = vpack.c.b16 %v11680, %v11678
        %v11719 = vpack.c.b16 %v11683, %v11681
        %v11720 = vpack.c.b16 %v11684, %v11682
        %v11721 = vpack.c.b16 %v11687, %v11685
        %v11722 = vpack.c.b16 %v11688, %v11686
        %v11723 = vpack.c.b16 %v11691, %v11689
        %v11724 = vpack.c.b16 %v11692, %v11690
        %11757 = vmatprep.subr.bf16.mxu0 %v11708
        %11758 = vmatpush1.bf16.msra.mxu0 %v11707
        %11759 = vmatprep.subr.bf16.mxu0 %v11706
        %11760 = vmatpush1.bf16.msra.mxu0 %v11705
        %11761 = vmatprep.subr.bf16.mxu0 %v11704
        %11762 = vmatpush1.bf16.msra.mxu0 %v11703
        %11763 = vmatprep.subr.bf16.mxu0 %v11702
        %11764 = vmatpush1.bf16.msra.mxu0 %v11701
        %11765 = vmatprep.subr.bf16.mxu0 %v11700
        %11766 = vmatpush1.bf16.msra.mxu0 %v11699
        %11767 = vmatprep.subr.bf16.mxu0 %v11698
        %11768 = vmatpush1.bf16.msra.mxu0 %v11697
        %11769 = vmatprep.subr.bf16.mxu0 %v11696
        %11770 = vmatpush1.bf16.msra.mxu0 %v11695
        %11771 = vmatprep.subr.bf16.mxu0 %v11694
        %11772 = vmatpush1.bf16.msra.mxu0 %v11693
        %11773 = vmatprep.subr.bf16.mxu0 %v11724
        %11774 = vmatpush2.bf16.msra.mxu0 %v11723
        %11775 = vmatprep.subr.bf16.mxu0 %v11722
        %11776 = vmatpush2.bf16.msra.mxu0 %v11721
        %11777 = vmatprep.subr.bf16.mxu0 %v11720
        %11778 = vmatpush2.bf16.msra.mxu0 %v11719
        %11779 = vmatprep.subr.bf16.mxu0 %v11718
        %11780 = vmatpush2.bf16.msra.mxu0 %v11717
        %11781 = vmatprep.subr.bf16.mxu0 %v11716
        %11782 = vmatpush2.bf16.msra.mxu0 %v11715
        %11783 = vmatprep.subr.bf16.mxu0 %v11714
        %11784 = vmatpush2.bf16.msra.mxu0 %v11713
        %11785 = vmatprep.subr.bf16.mxu0 %v11712
        %11786 = vmatpush2.bf16.msra.mxu0 %v11711
        %11787 = vmatprep.subr.bf16.mxu0 %v11710
        %11788 = vmatpush2.bf16.msra.mxu0 %v11709
        %11789 = vmatprep.mubr.bf16.mxu0 %v11534
        %11790 = vmatmul.mubr.bf16.gmra.mxu0 %v11533
        %v11791 = vpop.f32.mrf.mxu0
        %v11792 = vadd.f32 0.0, %v11791
        %v11793 = vpop.f32.mrf.mxu0
        %v11794 = vadd.f32 0.0, %v11793
        %v11795 = vpop.f32.mrf.mxu0
        %v11796 = vadd.f32 0.0, %v11795
        %v11797 = vpop.f32.mrf.mxu0
        %v11798 = vadd.f32 0.0, %v11797
        %11799 = vmatprep.mubr.bf16.mxu0 %v11536
        %11800 = vmatmul.mubr.bf16.gmra.mxu0 %v11535
        %v11801 = vpop.f32.mrf.mxu0
        %v11802 = vadd.f32 0.0, %v11801
        %v11803 = vpop.f32.mrf.mxu0
        %v11804 = vadd.f32 0.0, %v11803
        %v11805 = vpop.f32.mrf.mxu0
        %v11806 = vadd.f32 0.0, %v11805
        %v11807 = vpop.f32.mrf.mxu0
        %v11808 = vadd.f32 0.0, %v11807
        %11809 = vmatprep.mubr.bf16.mxu0 %v11538
        %11810 = vmatmul.mubr.bf16.gmra.mxu0 %v11537
        %v11811 = vpop.f32.mrf.mxu0
        %v11812 = vadd.f32 0.0, %v11811
        %v11813 = vpop.f32.mrf.mxu0
        %v11814 = vadd.f32 0.0, %v11813
        %v11815 = vpop.f32.mrf.mxu0
        %v11816 = vadd.f32 0.0, %v11815
        %v11817 = vpop.f32.mrf.mxu0
        %v11818 = vadd.f32 0.0, %v11817
        %11819 = vmatprep.mubr.bf16.mxu0 %v11540
        %11820 = vmatmul.mubr.bf16.gmra.mxu0 %v11539
        %v11821 = vpop.f32.mrf.mxu0
        %v11822 = vadd.f32 0.0, %v11821
        %v11823 = vpop.f32.mrf.mxu0
        %v11824 = vadd.f32 0.0, %v11823
        %v11825 = vpop.f32.mrf.mxu0
        %v11826 = vadd.f32 0.0, %v11825
        %v11827 = vpop.f32.mrf.mxu0
        %v11828 = vadd.f32 0.0, %v11827
        %11829 = vmatprep.mubr.bf16.mxu0 %v11542
        %11830 = vmatmul.mubr.bf16.gmra.mxu0 %v11541
        %v11831 = vpop.f32.mrf.mxu0
        %v11832 = vadd.f32 0.0, %v11831
        %v11833 = vpop.f32.mrf.mxu0
        %v11834 = vadd.f32 0.0, %v11833
        %v11835 = vpop.f32.mrf.mxu0
        %v11836 = vadd.f32 0.0, %v11835
        %v11837 = vpop.f32.mrf.mxu0
        %v11838 = vadd.f32 0.0, %v11837
        %11839 = vmatprep.mubr.bf16.mxu0 %v11544
        %11840 = vmatmul.mubr.bf16.gmra.mxu0 %v11543
        %v11841 = vpop.f32.mrf.mxu0
        %v11842 = vadd.f32 0.0, %v11841
        %v11843 = vpop.f32.mrf.mxu0
        %v11844 = vadd.f32 0.0, %v11843
        %v11845 = vpop.f32.mrf.mxu0
        %v11846 = vadd.f32 0.0, %v11845
        %v11847 = vpop.f32.mrf.mxu0
        %v11848 = vadd.f32 0.0, %v11847
        %11849 = vmatprep.mubr.bf16.mxu0 %v11546
        %11850 = vmatmul.mubr.bf16.gmra.mxu0 %v11545
        %v11851 = vpop.f32.mrf.mxu0
        %v11852 = vadd.f32 0.0, %v11851
        %v11853 = vpop.f32.mrf.mxu0
        %v11854 = vadd.f32 0.0, %v11853
        %v11855 = vpop.f32.mrf.mxu0
        %v11856 = vadd.f32 0.0, %v11855
        %v11857 = vpop.f32.mrf.mxu0
        %v11858 = vadd.f32 0.0, %v11857
        %11859 = vmatprep.mubr.bf16.mxu0 %v11548
        %11860 = vmatmul.mubr.bf16.gmra.mxu0 %v11547
        %v11861 = vpop.f32.mrf.mxu0
        %v11862 = vadd.f32 0.0, %v11861
        %v11863 = vpop.f32.mrf.mxu0
        %v11864 = vadd.f32 0.0, %v11863
        %v11865 = vpop.f32.mrf.mxu0
        %v11866 = vadd.f32 0.0, %v11865
        %v11867 = vpop.f32.mrf.mxu0
        %v11868 = vadd.f32 0.0, %v11867
        %11869 = vmatprep.mubr.bf16.mxu0 %v11550
        %11870 = vmatmul.mubr.bf16.gmra.mxu0 %v11549
        %v11871 = vpop.f32.mrf.mxu0
        %v11872 = vadd.f32 0.0, %v11871
        %v11873 = vpop.f32.mrf.mxu0
        %v11874 = vadd.f32 0.0, %v11873
        %v11875 = vpop.f32.mrf.mxu0
        %v11876 = vadd.f32 0.0, %v11875
        %v11877 = vpop.f32.mrf.mxu0
        %v11878 = vadd.f32 0.0, %v11877
        %11879 = vmatprep.mubr.bf16.mxu0 %v11552
        %11880 = vmatmul.mubr.bf16.gmra.mxu0 %v11551
        %v11881 = vpop.f32.mrf.mxu0
        %v11882 = vadd.f32 0.0, %v11881
        %v11883 = vpop.f32.mrf.mxu0
        %v11884 = vadd.f32 0.0, %v11883
        %v11885 = vpop.f32.mrf.mxu0
        %v11886 = vadd.f32 0.0, %v11885
        %v11887 = vpop.f32.mrf.mxu0
        %v11888 = vadd.f32 0.0, %v11887
        %11889 = vmatprep.mubr.bf16.mxu0 %v11554
        %11890 = vmatmul.mubr.bf16.gmra.mxu0 %v11553
        %v11891 = vpop.f32.mrf.mxu0
        %v11892 = vadd.f32 0.0, %v11891
        %v11893 = vpop.f32.mrf.mxu0
        %v11894 = vadd.f32 0.0, %v11893
        %v11895 = vpop.f32.mrf.mxu0
        %v11896 = vadd.f32 0.0, %v11895
        %v11897 = vpop.f32.mrf.mxu0
        %v11898 = vadd.f32 0.0, %v11897
        %11899 = vmatprep.mubr.bf16.mxu0 %v11556
        %11900 = vmatmul.mubr.bf16.gmra.mxu0 %v11555
        %v11901 = vpop.f32.mrf.mxu0
        %v11902 = vadd.f32 0.0, %v11901
        %v11903 = vpop.f32.mrf.mxu0
        %v11904 = vadd.f32 0.0, %v11903
        %v11905 = vpop.f32.mrf.mxu0
        %v11906 = vadd.f32 0.0, %v11905
        %v11907 = vpop.f32.mrf.mxu0
        %v11908 = vadd.f32 0.0, %v11907
        %11909 = vmatprep.mubr.bf16.mxu0 %v11558
        %11910 = vmatmul.mubr.bf16.gmra.mxu0 %v11557
        %v11911 = vpop.f32.mrf.mxu0
        %v11912 = vadd.f32 0.0, %v11911
        %v11913 = vpop.f32.mrf.mxu0
        %v11914 = vadd.f32 0.0, %v11913
        %v11915 = vpop.f32.mrf.mxu0
        %v11916 = vadd.f32 0.0, %v11915
        %v11917 = vpop.f32.mrf.mxu0
        %v11918 = vadd.f32 0.0, %v11917
        %11919 = vmatprep.mubr.bf16.mxu0 %v11560
        %11920 = vmatmul.mubr.bf16.gmra.mxu0 %v11559
        %v11921 = vpop.f32.mrf.mxu0
        %v11922 = vadd.f32 0.0, %v11921
        %v11923 = vpop.f32.mrf.mxu0
        %v11924 = vadd.f32 0.0, %v11923
        %v11925 = vpop.f32.mrf.mxu0
        %v11926 = vadd.f32 0.0, %v11925
        %v11927 = vpop.f32.mrf.mxu0
        %v11928 = vadd.f32 0.0, %v11927
        %11929 = vmatprep.mubr.bf16.mxu0 %v11562
        %11930 = vmatmul.mubr.bf16.gmra.mxu0 %v11561
        %v11931 = vpop.f32.mrf.mxu0
        %v11932 = vadd.f32 0.0, %v11931
        %v11933 = vpop.f32.mrf.mxu0
        %v11934 = vadd.f32 0.0, %v11933
        %v11935 = vpop.f32.mrf.mxu0
        %v11936 = vadd.f32 0.0, %v11935
        %v11937 = vpop.f32.mrf.mxu0
        %v11938 = vadd.f32 0.0, %v11937
        %11939 = vmatprep.mubr.bf16.mxu0 %v11564
        %11940 = vmatmul.mubr.bf16.gmra.mxu0 %v11563
        %v11941 = vpop.f32.mrf.mxu0
        %v11942 = vadd.f32 0.0, %v11941
        %v11943 = vpop.f32.mrf.mxu0
        %v11944 = vadd.f32 0.0, %v11943
        %v11945 = vpop.f32.mrf.mxu0
        %v11946 = vadd.f32 0.0, %v11945
        %v11947 = vpop.f32.mrf.mxu0
        %v11948 = vadd.f32 0.0, %v11947
        %11949 = vdwg.mxu0
        %v11950 = vadd.f32 %v10940, %v11792
        %v11951 = vadd.f32 %v10941, %v11794
        %v11952 = vadd.f32 %v10942, %v11796
        %v11953 = vadd.f32 %v10943, %v11798
        %v11954 = vadd.f32 %v10944, %v11802
        %v11955 = vadd.f32 %v10945, %v11804
        %v11956 = vadd.f32 %v10946, %v11806
        %v11957 = vadd.f32 %v10947, %v11808
        %v11958 = vadd.f32 %v10948, %v11812
        %v11959 = vadd.f32 %v10949, %v11814
        %v11960 = vadd.f32 %v10950, %v11816
        %v11961 = vadd.f32 %v10951, %v11818
        %v11962 = vadd.f32 %v10952, %v11822
        %v11963 = vadd.f32 %v10953, %v11824
        %v11964 = vadd.f32 %v10954, %v11826
        %v11965 = vadd.f32 %v10955, %v11828
        %v11966 = vadd.f32 %v10956, %v11832
        %v11967 = vadd.f32 %v10957, %v11834
        %v11968 = vadd.f32 %v10958, %v11836
        %v11969 = vadd.f32 %v10959, %v11838
        %v11970 = vadd.f32 %v10960, %v11842
        %v11971 = vadd.f32 %v10961, %v11844
        %v11972 = vadd.f32 %v10962, %v11846
        %v11973 = vadd.f32 %v10963, %v11848
        %v11974 = vadd.f32 %v10964, %v11852
        %v11975 = vadd.f32 %v10965, %v11854
        %v11976 = vadd.f32 %v10966, %v11856
        %v11977 = vadd.f32 %v10967, %v11858
        %v11978 = vadd.f32 %v10968, %v11862
        %v11979 = vadd.f32 %v10969, %v11864
        %v11980 = vadd.f32 %v10970, %v11866
        %v11981 = vadd.f32 %v10971, %v11868
        %v11982 = vadd.f32 %v10972, %v11872
        %v11983 = vadd.f32 %v10973, %v11874
        %v11984 = vadd.f32 %v10974, %v11876
        %v11985 = vadd.f32 %v10975, %v11878
        %v11986 = vadd.f32 %v10976, %v11882
        %v11987 = vadd.f32 %v10977, %v11884
        %v11988 = vadd.f32 %v10978, %v11886
        %v11989 = vadd.f32 %v10979, %v11888
        %v11990 = vadd.f32 %v10980, %v11892
        %v11991 = vadd.f32 %v10981, %v11894
        %v11992 = vadd.f32 %v10982, %v11896
        %v11993 = vadd.f32 %v10983, %v11898
        %v11994 = vadd.f32 %v10984, %v11902
        %v11995 = vadd.f32 %v10985, %v11904
        %v11996 = vadd.f32 %v10986, %v11906
        %v11997 = vadd.f32 %v10987, %v11908
        %v11998 = vadd.f32 %v10988, %v11912
        %v11999 = vadd.f32 %v10989, %v11914
        %v12000 = vadd.f32 %v10990, %v11916
        %v12001 = vadd.f32 %v10991, %v11918
        %v12002 = vadd.f32 %v10992, %v11922
        %v12003 = vadd.f32 %v10993, %v11924
        %v12004 = vadd.f32 %v10994, %v11926
        %v12005 = vadd.f32 %v10995, %v11928
        %v12006 = vadd.f32 %v10996, %v11932
        %v12007 = vadd.f32 %v10997, %v11934
        %v12008 = vadd.f32 %v10998, %v11936
        %v12009 = vadd.f32 %v10999, %v11938
        %v12010 = vadd.f32 %v11000, %v11942
        %v12011 = vadd.f32 %v11001, %v11944
        %v12012 = vadd.f32 %v11002, %v11946
        %v12013 = vadd.f32 %v11003, %v11948
        %v12014 = vld [vmem:[%s10361] sm:$0xee]
        %v12015 = vld [vmem:[%s10361 + $0x18] sm:$0xee]
        %v12016 = vld [vmem:[%s10361 + $0x30] sm:$0xee]
        %v12017 = vld [vmem:[%s10361 + $0x48] sm:$0xee]
        %v12018 = vld [vmem:[%s10361 + $0x60] sm:$0xee]
        %v12019 = vld [vmem:[%s10361 + $0x78] sm:$0xee]
        %v12020 = vld [vmem:[%s10361 + $0x90] sm:$0xee]
        %v12021 = vld [vmem:[%s10361 + $0xa8] sm:$0xee]
        %v12022 = vld [vmem:[%s10361 + $0xc0] sm:$0xee]
        %v12023 = vld [vmem:[%s10361 + $0xd8] sm:$0xee]
        %v12024 = vld [vmem:[%s10361 + $0xf0] sm:$0xee]
        %v12025 = vld [vmem:[%s10361 + $0x108] sm:$0xee]
        %v12026 = vld [vmem:[%s10361 + $0x120] sm:$0xee]
        %v12027 = vld [vmem:[%s10361 + $0x138] sm:$0xee]
        %v12028 = vld [vmem:[%s10361 + $0x150] sm:$0xee]
        %v12029 = vld [vmem:[%s10361 + $0x168] sm:$0xee]
        %s12030 = scalar_lea.vmem [#allocation8], 2048
        %v12031 = vld [vmem:[%s12030] sm:$0xff]
        %v12032 = vld [vmem:[%s12030 + $0x8] sm:$0xff]
        %v12033 = vld [vmem:[%s12030 + $0x10] sm:$0xff]
        %v12034 = vld [vmem:[%s12030 + $0x18] sm:$0xff]
        %v12035 = vld [vmem:[%s12030 + $0x20] sm:$0xff]
        %v12036 = vld [vmem:[%s12030 + $0x28] sm:$0xff]
        %v12037 = vld [vmem:[%s12030 + $0x30] sm:$0xff]
        %v12038 = vld [vmem:[%s12030 + $0x38] sm:$0xff]
        %v12039 = vld [vmem:[%s12030 + $0x40] sm:$0xff]
        %v12040 = vld [vmem:[%s12030 + $0x48] sm:$0xff]
        %v12041 = vld [vmem:[%s12030 + $0x50] sm:$0xff]
        %v12042 = vld [vmem:[%s12030 + $0x58] sm:$0xff]
        %v12043 = vld [vmem:[%s12030 + $0x60] sm:$0xff]
        %v12044 = vld [vmem:[%s12030 + $0x68] sm:$0xff]
        %v12045 = vld [vmem:[%s12030 + $0x70] sm:$0xff]
        %v12046 = vld [vmem:[%s12030 + $0x78] sm:$0xff]
        %v12047 = vld [vmem:[%s12030 + $0x80] sm:$0xff]
        %v12048 = vld [vmem:[%s12030 + $0x88] sm:$0xff]
        %v12049 = vld [vmem:[%s12030 + $0x90] sm:$0xff]
        %v12050 = vld [vmem:[%s12030 + $0x98] sm:$0xff]
        %v12051 = vld [vmem:[%s12030 + $0xa0] sm:$0xff]
        %v12052 = vld [vmem:[%s12030 + $0xa8] sm:$0xff]
        %v12053 = vld [vmem:[%s12030 + $0xb0] sm:$0xff]
        %v12054 = vld [vmem:[%s12030 + $0xb8] sm:$0xff]
        %v12055 = vld [vmem:[%s12030 + $0xc0] sm:$0xff]
        %v12056 = vld [vmem:[%s12030 + $0xc8] sm:$0xff]
        %v12057 = vld [vmem:[%s12030 + $0xd0] sm:$0xff]
        %v12058 = vld [vmem:[%s12030 + $0xd8] sm:$0xff]
        %v12059 = vld [vmem:[%s12030 + $0xe0] sm:$0xff]
        %v12060 = vld [vmem:[%s12030 + $0xe8] sm:$0xff]
        %v12061 = vld [vmem:[%s12030 + $0xf0] sm:$0xff]
        %v12062 = vld [vmem:[%s12030 + $0xf8] sm:$0xff]
        %v12111 = vrot.slane %v12014, 5
        %v12112 = vrot.slane %v12111, 4
        %v12113 = vrot.slane %v11005, 5
        %v12114 = vsel %vm7296, %v12112, %v12113
        %v12115 = vrot.slane %v12113, 4
        %v12116 = vrot.slane %v11006, 5
        %v12117 = vsel %vm7296, %v12115, %v12116
        %v12118 = vrot.slane %v12015, 5
        %v12119 = vrot.slane %v12118, 4
        %v12120 = vrot.slane %v11008, 5
        %v12121 = vsel %vm7296, %v12119, %v12120
        %v12122 = vrot.slane %v12120, 4
        %v12123 = vrot.slane %v11009, 5
        %v12124 = vsel %vm7296, %v12122, %v12123
        %v12125 = vrot.slane %v12016, 5
        %v12126 = vrot.slane %v12125, 4
        %v12127 = vrot.slane %v11011, 5
        %v12128 = vsel %vm7296, %v12126, %v12127
        %v12129 = vrot.slane %v12127, 4
        %v12130 = vrot.slane %v11012, 5
        %v12131 = vsel %vm7296, %v12129, %v12130
        %v12132 = vrot.slane %v12017, 5
        %v12133 = vrot.slane %v12132, 4
        %v12134 = vrot.slane %v11014, 5
        %v12135 = vsel %vm7296, %v12133, %v12134
        %v12136 = vrot.slane %v12134, 4
        %v12137 = vrot.slane %v11015, 5
        %v12138 = vsel %vm7296, %v12136, %v12137
        %v12139 = vrot.slane %v12018, 5
        %v12140 = vrot.slane %v12139, 4
        %v12141 = vrot.slane %v11017, 5
        %v12142 = vsel %vm7296, %v12140, %v12141
        %v12143 = vrot.slane %v12141, 4
        %v12144 = vrot.slane %v11018, 5
        %v12145 = vsel %vm7296, %v12143, %v12144
        %v12146 = vrot.slane %v12019, 5
        %v12147 = vrot.slane %v12146, 4
        %v12148 = vrot.slane %v11020, 5
        %v12149 = vsel %vm7296, %v12147, %v12148
        %v12150 = vrot.slane %v12148, 4
        %v12151 = vrot.slane %v11021, 5
        %v12152 = vsel %vm7296, %v12150, %v12151
        %v12153 = vrot.slane %v12020, 5
        %v12154 = vrot.slane %v12153, 4
        %v12155 = vrot.slane %v11023, 5
        %v12156 = vsel %vm7296, %v12154, %v12155
        %v12157 = vrot.slane %v12155, 4
        %v12158 = vrot.slane %v11024, 5
        %v12159 = vsel %vm7296, %v12157, %v12158
        %v12160 = vrot.slane %v12021, 5
        %v12161 = vrot.slane %v12160, 4
        %v12162 = vrot.slane %v11026, 5
        %v12163 = vsel %vm7296, %v12161, %v12162
        %v12164 = vrot.slane %v12162, 4
        %v12165 = vrot.slane %v11027, 5
        %v12166 = vsel %vm7296, %v12164, %v12165
        %v12167 = vrot.slane %v12022, 5
        %v12168 = vrot.slane %v12167, 4
        %v12169 = vrot.slane %v11029, 5
        %v12170 = vsel %vm7296, %v12168, %v12169
        %v12171 = vrot.slane %v12169, 4
        %v12172 = vrot.slane %v11030, 5
        %v12173 = vsel %vm7296, %v12171, %v12172
        %v12174 = vrot.slane %v12023, 5
        %v12175 = vrot.slane %v12174, 4
        %v12176 = vrot.slane %v11032, 5
        %v12177 = vsel %vm7296, %v12175, %v12176
        %v12178 = vrot.slane %v12176, 4
        %v12179 = vrot.slane %v11033, 5
        %v12180 = vsel %vm7296, %v12178, %v12179
        %v12181 = vrot.slane %v12024, 5
        %v12182 = vrot.slane %v12181, 4
        %v12183 = vrot.slane %v11035, 5
        %v12184 = vsel %vm7296, %v12182, %v12183
        %v12185 = vrot.slane %v12183, 4
        %v12186 = vrot.slane %v11036, 5
        %v12187 = vsel %vm7296, %v12185, %v12186
        %v12188 = vrot.slane %v12025, 5
        %v12189 = vrot.slane %v12188, 4
        %v12190 = vrot.slane %v11038, 5
        %v12191 = vsel %vm7296, %v12189, %v12190
        %v12192 = vrot.slane %v12190, 4
        %v12193 = vrot.slane %v11039, 5
        %v12194 = vsel %vm7296, %v12192, %v12193
        %v12195 = vrot.slane %v12026, 5
        %v12196 = vrot.slane %v12195, 4
        %v12197 = vrot.slane %v11041, 5
        %v12198 = vsel %vm7296, %v12196, %v12197
        %v12199 = vrot.slane %v12197, 4
        %v12200 = vrot.slane %v11042, 5
        %v12201 = vsel %vm7296, %v12199, %v12200
        %v12202 = vrot.slane %v12027, 5
        %v12203 = vrot.slane %v12202, 4
        %v12204 = vrot.slane %v11044, 5
        %v12205 = vsel %vm7296, %v12203, %v12204
        %v12206 = vrot.slane %v12204, 4
        %v12207 = vrot.slane %v11045, 5
        %v12208 = vsel %vm7296, %v12206, %v12207
        %v12209 = vrot.slane %v12028, 5
        %v12210 = vrot.slane %v12209, 4
        %v12211 = vrot.slane %v11047, 5
        %v12212 = vsel %vm7296, %v12210, %v12211
        %v12213 = vrot.slane %v12211, 4
        %v12214 = vrot.slane %v11048, 5
        %v12215 = vsel %vm7296, %v12213, %v12214
        %v12216 = vrot.slane %v12029, 5
        %v12217 = vrot.slane %v12216, 4
        %v12218 = vrot.slane %v11050, 5
        %v12219 = vsel %vm7296, %v12217, %v12218
        %v12220 = vrot.slane %v12218, 4
        %v12221 = vrot.slane %v11051, 5
        %v12222 = vsel %vm7296, %v12220, %v12221
        %v12223 = vunpack.c.l.b16 %v12114
        %v12224 = vunpack.c.h.b16 %v12114
        %v12225 = vunpack.c.l.b16 %v12117
        %v12226 = vunpack.c.h.b16 %v12117
        %v12227 = vunpack.c.l.b16 %v12121
        %v12228 = vunpack.c.h.b16 %v12121
        %v12229 = vunpack.c.l.b16 %v12124
        %v12230 = vunpack.c.h.b16 %v12124
        %v12231 = vunpack.c.l.b16 %v12128
        %v12232 = vunpack.c.h.b16 %v12128
        %v12233 = vunpack.c.l.b16 %v12131
        %v12234 = vunpack.c.h.b16 %v12131
        %v12235 = vunpack.c.l.b16 %v12135
        %v12236 = vunpack.c.h.b16 %v12135
        %v12237 = vunpack.c.l.b16 %v12138
        %v12238 = vunpack.c.h.b16 %v12138
        %v12239 = vunpack.c.l.b16 %v12142
        %v12240 = vunpack.c.h.b16 %v12142
        %v12241 = vunpack.c.l.b16 %v12145
        %v12242 = vunpack.c.h.b16 %v12145
        %v12243 = vunpack.c.l.b16 %v12149
        %v12244 = vunpack.c.h.b16 %v12149
        %v12245 = vunpack.c.l.b16 %v12152
        %v12246 = vunpack.c.h.b16 %v12152
        %v12247 = vunpack.c.l.b16 %v12156
        %v12248 = vunpack.c.h.b16 %v12156
        %v12249 = vunpack.c.l.b16 %v12159
        %v12250 = vunpack.c.h.b16 %v12159
        %v12251 = vunpack.c.l.b16 %v12163
        %v12252 = vunpack.c.h.b16 %v12163
        %v12253 = vunpack.c.l.b16 %v12166
        %v12254 = vunpack.c.h.b16 %v12166
        %v12255 = vunpack.c.l.b16 %v12170
        %v12256 = vunpack.c.h.b16 %v12170
        %v12257 = vunpack.c.l.b16 %v12173
        %v12258 = vunpack.c.h.b16 %v12173
        %v12259 = vunpack.c.l.b16 %v12177
        %v12260 = vunpack.c.h.b16 %v12177
        %v12261 = vunpack.c.l.b16 %v12180
        %v12262 = vunpack.c.h.b16 %v12180
        %v12263 = vunpack.c.l.b16 %v12184
        %v12264 = vunpack.c.h.b16 %v12184
        %v12265 = vunpack.c.l.b16 %v12187
        %v12266 = vunpack.c.h.b16 %v12187
        %v12267 = vunpack.c.l.b16 %v12191
        %v12268 = vunpack.c.h.b16 %v12191
        %v12269 = vunpack.c.l.b16 %v12194
        %v12270 = vunpack.c.h.b16 %v12194
        %v12271 = vunpack.c.l.b16 %v12198
        %v12272 = vunpack.c.h.b16 %v12198
        %v12273 = vunpack.c.l.b16 %v12201
        %v12274 = vunpack.c.h.b16 %v12201
        %v12275 = vunpack.c.l.b16 %v12205
        %v12276 = vunpack.c.h.b16 %v12205
        %v12277 = vunpack.c.l.b16 %v12208
        %v12278 = vunpack.c.h.b16 %v12208
        %v12279 = vunpack.c.l.b16 %v12212
        %v12280 = vunpack.c.h.b16 %v12212
        %v12281 = vunpack.c.l.b16 %v12215
        %v12282 = vunpack.c.h.b16 %v12215
        %v12283 = vunpack.c.l.b16 %v12219
        %v12284 = vunpack.c.h.b16 %v12219
        %v12285 = vunpack.c.l.b16 %v12222
        %v12286 = vunpack.c.h.b16 %v12222
        %v12287 = vpack.c.b16 %v12225, %v12223
        %v12288 = vpack.c.b16 %v12226, %v12224
        %v12289 = vpack.c.b16 %v12229, %v12227
        %v12290 = vpack.c.b16 %v12230, %v12228
        %v12291 = vpack.c.b16 %v12233, %v12231
        %v12292 = vpack.c.b16 %v12234, %v12232
        %v12293 = vpack.c.b16 %v12237, %v12235
        %v12294 = vpack.c.b16 %v12238, %v12236
        %v12295 = vpack.c.b16 %v12241, %v12239
        %v12296 = vpack.c.b16 %v12242, %v12240
        %v12297 = vpack.c.b16 %v12245, %v12243
        %v12298 = vpack.c.b16 %v12246, %v12244
        %v12299 = vpack.c.b16 %v12249, %v12247
        %v12300 = vpack.c.b16 %v12250, %v12248
        %v12301 = vpack.c.b16 %v12253, %v12251
        %v12302 = vpack.c.b16 %v12254, %v12252
        %v12303 = vpack.c.b16 %v12257, %v12255
        %v12304 = vpack.c.b16 %v12258, %v12256
        %v12305 = vpack.c.b16 %v12261, %v12259
        %v12306 = vpack.c.b16 %v12262, %v12260
        %v12307 = vpack.c.b16 %v12265, %v12263
        %v12308 = vpack.c.b16 %v12266, %v12264
        %v12309 = vpack.c.b16 %v12269, %v12267
        %v12310 = vpack.c.b16 %v12270, %v12268
        %v12311 = vpack.c.b16 %v12273, %v12271
        %v12312 = vpack.c.b16 %v12274, %v12272
        %v12313 = vpack.c.b16 %v12277, %v12275
        %v12314 = vpack.c.b16 %v12278, %v12276
        %v12315 = vpack.c.b16 %v12281, %v12279
        %v12316 = vpack.c.b16 %v12282, %v12280
        %v12317 = vpack.c.b16 %v12285, %v12283
        %v12318 = vpack.c.b16 %v12286, %v12284
        %v12383 = vunpack.c.l.b16 %v12031
        %v12384 = vunpack.c.h.b16 %v12031
        %v12385 = vunpack.c.l.b16 %v12032
        %v12386 = vunpack.c.h.b16 %v12032
        %v12387 = vunpack.c.l.b16 %v12033
        %v12388 = vunpack.c.h.b16 %v12033
        %v12389 = vunpack.c.l.b16 %v12034
        %v12390 = vunpack.c.h.b16 %v12034
        %v12391 = vunpack.c.l.b16 %v12035
        %v12392 = vunpack.c.h.b16 %v12035
        %v12393 = vunpack.c.l.b16 %v12036
        %v12394 = vunpack.c.h.b16 %v12036
        %v12395 = vunpack.c.l.b16 %v12037
        %v12396 = vunpack.c.h.b16 %v12037
        %v12397 = vunpack.c.l.b16 %v12038
        %v12398 = vunpack.c.h.b16 %v12038
        %v12399 = vunpack.c.l.b16 %v12039
        %v12400 = vunpack.c.h.b16 %v12039
        %v12401 = vunpack.c.l.b16 %v12040
        %v12402 = vunpack.c.h.b16 %v12040
        %v12403 = vunpack.c.l.b16 %v12041
        %v12404 = vunpack.c.h.b16 %v12041
        %v12405 = vunpack.c.l.b16 %v12042
        %v12406 = vunpack.c.h.b16 %v12042
        %v12407 = vunpack.c.l.b16 %v12043
        %v12408 = vunpack.c.h.b16 %v12043
        %v12409 = vunpack.c.l.b16 %v12044
        %v12410 = vunpack.c.h.b16 %v12044
        %v12411 = vunpack.c.l.b16 %v12045
        %v12412 = vunpack.c.h.b16 %v12045
        %v12413 = vunpack.c.l.b16 %v12046
        %v12414 = vunpack.c.h.b16 %v12046
        %v12415 = vunpack.c.l.b16 %v12047
        %v12416 = vunpack.c.h.b16 %v12047
        %v12417 = vunpack.c.l.b16 %v12048
        %v12418 = vunpack.c.h.b16 %v12048
        %v12419 = vunpack.c.l.b16 %v12049
        %v12420 = vunpack.c.h.b16 %v12049
        %v12421 = vunpack.c.l.b16 %v12050
        %v12422 = vunpack.c.h.b16 %v12050
        %v12423 = vunpack.c.l.b16 %v12051
        %v12424 = vunpack.c.h.b16 %v12051
        %v12425 = vunpack.c.l.b16 %v12052
        %v12426 = vunpack.c.h.b16 %v12052
        %v12427 = vunpack.c.l.b16 %v12053
        %v12428 = vunpack.c.h.b16 %v12053
        %v12429 = vunpack.c.l.b16 %v12054
        %v12430 = vunpack.c.h.b16 %v12054
        %v12431 = vunpack.c.l.b16 %v12055
        %v12432 = vunpack.c.h.b16 %v12055
        %v12433 = vunpack.c.l.b16 %v12056
        %v12434 = vunpack.c.h.b16 %v12056
        %v12435 = vunpack.c.l.b16 %v12057
        %v12436 = vunpack.c.h.b16 %v12057
        %v12437 = vunpack.c.l.b16 %v12058
        %v12438 = vunpack.c.h.b16 %v12058
        %v12439 = vunpack.c.l.b16 %v12059
        %v12440 = vunpack.c.h.b16 %v12059
        %v12441 = vunpack.c.l.b16 %v12060
        %v12442 = vunpack.c.h.b16 %v12060
        %v12443 = vunpack.c.l.b16 %v12061
        %v12444 = vunpack.c.h.b16 %v12061
        %v12445 = vunpack.c.l.b16 %v12062
        %v12446 = vunpack.c.h.b16 %v12062
        %v12447 = vpack.c.b16 %v12385, %v12383
        %v12448 = vpack.c.b16 %v12386, %v12384
        %v12449 = vpack.c.b16 %v12389, %v12387
        %v12450 = vpack.c.b16 %v12390, %v12388
        %v12451 = vpack.c.b16 %v12393, %v12391
        %v12452 = vpack.c.b16 %v12394, %v12392
        %v12453 = vpack.c.b16 %v12397, %v12395
        %v12454 = vpack.c.b16 %v12398, %v12396
        %v12455 = vpack.c.b16 %v12401, %v12399
        %v12456 = vpack.c.b16 %v12402, %v12400
        %v12457 = vpack.c.b16 %v12405, %v12403
        %v12458 = vpack.c.b16 %v12406, %v12404
        %v12459 = vpack.c.b16 %v12409, %v12407
        %v12460 = vpack.c.b16 %v12410, %v12408
        %v12461 = vpack.c.b16 %v12413, %v12411
        %v12462 = vpack.c.b16 %v12414, %v12412
        %v12463 = vpack.c.b16 %v12417, %v12415
        %v12464 = vpack.c.b16 %v12418, %v12416
        %v12465 = vpack.c.b16 %v12421, %v12419
        %v12466 = vpack.c.b16 %v12422, %v12420
        %v12467 = vpack.c.b16 %v12425, %v12423
        %v12468 = vpack.c.b16 %v12426, %v12424
        %v12469 = vpack.c.b16 %v12429, %v12427
        %v12470 = vpack.c.b16 %v12430, %v12428
        %v12471 = vpack.c.b16 %v12433, %v12431
        %v12472 = vpack.c.b16 %v12434, %v12432
        %v12473 = vpack.c.b16 %v12437, %v12435
        %v12474 = vpack.c.b16 %v12438, %v12436
        %v12475 = vpack.c.b16 %v12441, %v12439
        %v12476 = vpack.c.b16 %v12442, %v12440
        %v12477 = vpack.c.b16 %v12445, %v12443
        %v12478 = vpack.c.b16 %v12446, %v12444
        %12511 = vmatprep.subr.bf16.mxu0 %v12462
        %12512 = vmatpush1.bf16.msra.mxu0 %v12461
        %12513 = vmatprep.subr.bf16.mxu0 %v12460
        %12514 = vmatpush1.bf16.msra.mxu0 %v12459
        %12515 = vmatprep.subr.bf16.mxu0 %v12458
        %12516 = vmatpush1.bf16.msra.mxu0 %v12457
        %12517 = vmatprep.subr.bf16.mxu0 %v12456
        %12518 = vmatpush1.bf16.msra.mxu0 %v12455
        %12519 = vmatprep.subr.bf16.mxu0 %v12454
        %12520 = vmatpush1.bf16.msra.mxu0 %v12453
        %12521 = vmatprep.subr.bf16.mxu0 %v12452
        %12522 = vmatpush1.bf16.msra.mxu0 %v12451
        %12523 = vmatprep.subr.bf16.mxu0 %v12450
        %12524 = vmatpush1.bf16.msra.mxu0 %v12449
        %12525 = vmatprep.subr.bf16.mxu0 %v12448
        %12526 = vmatpush1.bf16.msra.mxu0 %v12447
        %12527 = vmatprep.subr.bf16.mxu0 %v12478
        %12528 = vmatpush2.bf16.msra.mxu0 %v12477
        %12529 = vmatprep.subr.bf16.mxu0 %v12476
        %12530 = vmatpush2.bf16.msra.mxu0 %v12475
        %12531 = vmatprep.subr.bf16.mxu0 %v12474
        %12532 = vmatpush2.bf16.msra.mxu0 %v12473
        %12533 = vmatprep.subr.bf16.mxu0 %v12472
        %12534 = vmatpush2.bf16.msra.mxu0 %v12471
        %12535 = vmatprep.subr.bf16.mxu0 %v12470
        %12536 = vmatpush2.bf16.msra.mxu0 %v12469
        %12537 = vmatprep.subr.bf16.mxu0 %v12468
        %12538 = vmatpush2.bf16.msra.mxu0 %v12467
        %12539 = vmatprep.subr.bf16.mxu0 %v12466
        %12540 = vmatpush2.bf16.msra.mxu0 %v12465
        %12541 = vmatprep.subr.bf16.mxu0 %v12464
        %12542 = vmatpush2.bf16.msra.mxu0 %v12463
        %12543 = vmatprep.mubr.bf16.mxu0 %v12288
        %12544 = vmatmul.mubr.bf16.gmra.mxu0 %v12287
        %v12545 = vpop.f32.mrf.mxu0
        %v12546 = vadd.f32 0.0, %v12545
        %v12547 = vpop.f32.mrf.mxu0
        %v12548 = vadd.f32 0.0, %v12547
        %v12549 = vpop.f32.mrf.mxu0
        %v12550 = vadd.f32 0.0, %v12549
        %v12551 = vpop.f32.mrf.mxu0
        %v12552 = vadd.f32 0.0, %v12551
        %12553 = vmatprep.mubr.bf16.mxu0 %v12290
        %12554 = vmatmul.mubr.bf16.gmra.mxu0 %v12289
        %v12555 = vpop.f32.mrf.mxu0
        %v12556 = vadd.f32 0.0, %v12555
        %v12557 = vpop.f32.mrf.mxu0
        %v12558 = vadd.f32 0.0, %v12557
        %v12559 = vpop.f32.mrf.mxu0
        %v12560 = vadd.f32 0.0, %v12559
        %v12561 = vpop.f32.mrf.mxu0
        %v12562 = vadd.f32 0.0, %v12561
        %12563 = vmatprep.mubr.bf16.mxu0 %v12292
        %12564 = vmatmul.mubr.bf16.gmra.mxu0 %v12291
        %v12565 = vpop.f32.mrf.mxu0
        %v12566 = vadd.f32 0.0, %v12565
        %v12567 = vpop.f32.mrf.mxu0
        %v12568 = vadd.f32 0.0, %v12567
        %v12569 = vpop.f32.mrf.mxu0
        %v12570 = vadd.f32 0.0, %v12569
        %v12571 = vpop.f32.mrf.mxu0
        %v12572 = vadd.f32 0.0, %v12571
        %12573 = vmatprep.mubr.bf16.mxu0 %v12294
        %12574 = vmatmul.mubr.bf16.gmra.mxu0 %v12293
        %v12575 = vpop.f32.mrf.mxu0
        %v12576 = vadd.f32 0.0, %v12575
        %v12577 = vpop.f32.mrf.mxu0
        %v12578 = vadd.f32 0.0, %v12577
        %v12579 = vpop.f32.mrf.mxu0
        %v12580 = vadd.f32 0.0, %v12579
        %v12581 = vpop.f32.mrf.mxu0
        %v12582 = vadd.f32 0.0, %v12581
        %12583 = vmatprep.mubr.bf16.mxu0 %v12296
        %12584 = vmatmul.mubr.bf16.gmra.mxu0 %v12295
        %v12585 = vpop.f32.mrf.mxu0
        %v12586 = vadd.f32 0.0, %v12585
        %v12587 = vpop.f32.mrf.mxu0
        %v12588 = vadd.f32 0.0, %v12587
        %v12589 = vpop.f32.mrf.mxu0
        %v12590 = vadd.f32 0.0, %v12589
        %v12591 = vpop.f32.mrf.mxu0
        %v12592 = vadd.f32 0.0, %v12591
        %12593 = vmatprep.mubr.bf16.mxu0 %v12298
        %12594 = vmatmul.mubr.bf16.gmra.mxu0 %v12297
        %v12595 = vpop.f32.mrf.mxu0
        %v12596 = vadd.f32 0.0, %v12595
        %v12597 = vpop.f32.mrf.mxu0
        %v12598 = vadd.f32 0.0, %v12597
        %v12599 = vpop.f32.mrf.mxu0
        %v12600 = vadd.f32 0.0, %v12599
        %v12601 = vpop.f32.mrf.mxu0
        %v12602 = vadd.f32 0.0, %v12601
        %12603 = vmatprep.mubr.bf16.mxu0 %v12300
        %12604 = vmatmul.mubr.bf16.gmra.mxu0 %v12299
        %v12605 = vpop.f32.mrf.mxu0
        %v12606 = vadd.f32 0.0, %v12605
        %v12607 = vpop.f32.mrf.mxu0
        %v12608 = vadd.f32 0.0, %v12607
        %v12609 = vpop.f32.mrf.mxu0
        %v12610 = vadd.f32 0.0, %v12609
        %v12611 = vpop.f32.mrf.mxu0
        %v12612 = vadd.f32 0.0, %v12611
        %12613 = vmatprep.mubr.bf16.mxu0 %v12302
        %12614 = vmatmul.mubr.bf16.gmra.mxu0 %v12301
        %v12615 = vpop.f32.mrf.mxu0
        %v12616 = vadd.f32 0.0, %v12615
        %v12617 = vpop.f32.mrf.mxu0
        %v12618 = vadd.f32 0.0, %v12617
        %v12619 = vpop.f32.mrf.mxu0
        %v12620 = vadd.f32 0.0, %v12619
        %v12621 = vpop.f32.mrf.mxu0
        %v12622 = vadd.f32 0.0, %v12621
        %12623 = vmatprep.mubr.bf16.mxu0 %v12304
        %12624 = vmatmul.mubr.bf16.gmra.mxu0 %v12303
        %v12625 = vpop.f32.mrf.mxu0
        %v12626 = vadd.f32 0.0, %v12625
        %v12627 = vpop.f32.mrf.mxu0
        %v12628 = vadd.f32 0.0, %v12627
        %v12629 = vpop.f32.mrf.mxu0
        %v12630 = vadd.f32 0.0, %v12629
        %v12631 = vpop.f32.mrf.mxu0
        %v12632 = vadd.f32 0.0, %v12631
        %12633 = vmatprep.mubr.bf16.mxu0 %v12306
        %12634 = vmatmul.mubr.bf16.gmra.mxu0 %v12305
        %v12635 = vpop.f32.mrf.mxu0
        %v12636 = vadd.f32 0.0, %v12635
        %v12637 = vpop.f32.mrf.mxu0
        %v12638 = vadd.f32 0.0, %v12637
        %v12639 = vpop.f32.mrf.mxu0
        %v12640 = vadd.f32 0.0, %v12639
        %v12641 = vpop.f32.mrf.mxu0
        %v12642 = vadd.f32 0.0, %v12641
        %12643 = vmatprep.mubr.bf16.mxu0 %v12308
        %12644 = vmatmul.mubr.bf16.gmra.mxu0 %v12307
        %v12645 = vpop.f32.mrf.mxu0
        %v12646 = vadd.f32 0.0, %v12645
        %v12647 = vpop.f32.mrf.mxu0
        %v12648 = vadd.f32 0.0, %v12647
        %v12649 = vpop.f32.mrf.mxu0
        %v12650 = vadd.f32 0.0, %v12649
        %v12651 = vpop.f32.mrf.mxu0
        %v12652 = vadd.f32 0.0, %v12651
        %12653 = vmatprep.mubr.bf16.mxu0 %v12310
        %12654 = vmatmul.mubr.bf16.gmra.mxu0 %v12309
        %v12655 = vpop.f32.mrf.mxu0
        %v12656 = vadd.f32 0.0, %v12655
        %v12657 = vpop.f32.mrf.mxu0
        %v12658 = vadd.f32 0.0, %v12657
        %v12659 = vpop.f32.mrf.mxu0
        %v12660 = vadd.f32 0.0, %v12659
        %v12661 = vpop.f32.mrf.mxu0
        %v12662 = vadd.f32 0.0, %v12661
        %12663 = vmatprep.mubr.bf16.mxu0 %v12312
        %12664 = vmatmul.mubr.bf16.gmra.mxu0 %v12311
        %v12665 = vpop.f32.mrf.mxu0
        %v12666 = vadd.f32 0.0, %v12665
        %v12667 = vpop.f32.mrf.mxu0
        %v12668 = vadd.f32 0.0, %v12667
        %v12669 = vpop.f32.mrf.mxu0
        %v12670 = vadd.f32 0.0, %v12669
        %v12671 = vpop.f32.mrf.mxu0
        %v12672 = vadd.f32 0.0, %v12671
        %12673 = vmatprep.mubr.bf16.mxu0 %v12314
        %12674 = vmatmul.mubr.bf16.gmra.mxu0 %v12313
        %v12675 = vpop.f32.mrf.mxu0
        %v12676 = vadd.f32 0.0, %v12675
        %v12677 = vpop.f32.mrf.mxu0
        %v12678 = vadd.f32 0.0, %v12677
        %v12679 = vpop.f32.mrf.mxu0
        %v12680 = vadd.f32 0.0, %v12679
        %v12681 = vpop.f32.mrf.mxu0
        %v12682 = vadd.f32 0.0, %v12681
        %12683 = vmatprep.mubr.bf16.mxu0 %v12316
        %12684 = vmatmul.mubr.bf16.gmra.mxu0 %v12315
        %v12685 = vpop.f32.mrf.mxu0
        %v12686 = vadd.f32 0.0, %v12685
        %v12687 = vpop.f32.mrf.mxu0
        %v12688 = vadd.f32 0.0, %v12687
        %v12689 = vpop.f32.mrf.mxu0
        %v12690 = vadd.f32 0.0, %v12689
        %v12691 = vpop.f32.mrf.mxu0
        %v12692 = vadd.f32 0.0, %v12691
        %12693 = vmatprep.mubr.bf16.mxu0 %v12318
        %12694 = vmatmul.mubr.bf16.gmra.mxu0 %v12317
        %v12695 = vpop.f32.mrf.mxu0
        %v12696 = vadd.f32 0.0, %v12695
        %v12697 = vpop.f32.mrf.mxu0
        %v12698 = vadd.f32 0.0, %v12697
        %v12699 = vpop.f32.mrf.mxu0
        %v12700 = vadd.f32 0.0, %v12699
        %v12701 = vpop.f32.mrf.mxu0
        %v12702 = vadd.f32 0.0, %v12701
        %12703 = vdwg.mxu0
        %v12704 = vadd.f32 %v11950, %v12546
        %v12705 = vadd.f32 %v11951, %v12548
        %v12706 = vadd.f32 %v11952, %v12550
        %v12707 = vadd.f32 %v11953, %v12552
        %v12708 = vadd.f32 %v11954, %v12556
        %v12709 = vadd.f32 %v11955, %v12558
        %v12710 = vadd.f32 %v11956, %v12560
        %v12711 = vadd.f32 %v11957, %v12562
        %v12712 = vadd.f32 %v11958, %v12566
        %v12713 = vadd.f32 %v11959, %v12568
        %v12714 = vadd.f32 %v11960, %v12570
        %v12715 = vadd.f32 %v11961, %v12572
        %v12716 = vadd.f32 %v11962, %v12576
        %v12717 = vadd.f32 %v11963, %v12578
        %v12718 = vadd.f32 %v11964, %v12580
        %v12719 = vadd.f32 %v11965, %v12582
        %v12720 = vadd.f32 %v11966, %v12586
        %v12721 = vadd.f32 %v11967, %v12588
        %v12722 = vadd.f32 %v11968, %v12590
        %v12723 = vadd.f32 %v11969, %v12592
        %v12724 = vadd.f32 %v11970, %v12596
        %v12725 = vadd.f32 %v11971, %v12598
        %v12726 = vadd.f32 %v11972, %v12600
        %v12727 = vadd.f32 %v11973, %v12602
        %v12728 = vadd.f32 %v11974, %v12606
        %v12729 = vadd.f32 %v11975, %v12608
        %v12730 = vadd.f32 %v11976, %v12610
        %v12731 = vadd.f32 %v11977, %v12612
        %v12732 = vadd.f32 %v11978, %v12616
        %v12733 = vadd.f32 %v11979, %v12618
        %v12734 = vadd.f32 %v11980, %v12620
        %v12735 = vadd.f32 %v11981, %v12622
        %v12736 = vadd.f32 %v11982, %v12626
        %v12737 = vadd.f32 %v11983, %v12628
        %v12738 = vadd.f32 %v11984, %v12630
        %v12739 = vadd.f32 %v11985, %v12632
        %v12740 = vadd.f32 %v11986, %v12636
        %v12741 = vadd.f32 %v11987, %v12638
        %v12742 = vadd.f32 %v11988, %v12640
        %v12743 = vadd.f32 %v11989, %v12642
        %v12744 = vadd.f32 %v11990, %v12646
        %v12745 = vadd.f32 %v11991, %v12648
        %v12746 = vadd.f32 %v11992, %v12650
        %v12747 = vadd.f32 %v11993, %v12652
        %v12748 = vadd.f32 %v11994, %v12656
        %v12749 = vadd.f32 %v11995, %v12658
        %v12750 = vadd.f32 %v11996, %v12660
        %v12751 = vadd.f32 %v11997, %v12662
        %v12752 = vadd.f32 %v11998, %v12666
        %v12753 = vadd.f32 %v11999, %v12668
        %v12754 = vadd.f32 %v12000, %v12670
        %v12755 = vadd.f32 %v12001, %v12672
        %v12756 = vadd.f32 %v12002, %v12676
        %v12757 = vadd.f32 %v12003, %v12678
        %v12758 = vadd.f32 %v12004, %v12680
        %v12759 = vadd.f32 %v12005, %v12682
        %v12760 = vadd.f32 %v12006, %v12686
        %v12761 = vadd.f32 %v12007, %v12688
        %v12762 = vadd.f32 %v12008, %v12690
        %v12763 = vadd.f32 %v12009, %v12692
        %v12764 = vadd.f32 %v12010, %v12696
        %v12765 = vadd.f32 %v12011, %v12698
        %v12766 = vadd.f32 %v12012, %v12700
        %v12767 = vadd.f32 %v12013, %v12702
        %v12768 = vld [vmem:[#allocation9] sm:$0x3]
        %v12770 = vlaneseq
        %v12771 = vshrl.u32 %v12770, 7
        %v12772 = vsub.s32 0, %v12771
        %v12773 = vrot.slane %v12768, %v12772
        %v12774 = vlaneseq
        %v12775 = vshrl.u32 %v12774, 7
        %v12776 = vsub.s32 1, %v12775
        %v12777 = vrot.slane %v12768, %v12776
        %v12780 = vadd.f32 %v12704, %v12773
        %v12781 = vadd.f32 %v12705, %v12777
        %v12782 = vadd.f32 %v12706, %v12773
        %v12783 = vadd.f32 %v12707, %v12777
        %v12784 = vadd.f32 %v12708, %v12773
        %v12785 = vadd.f32 %v12709, %v12777
        %v12786 = vadd.f32 %v12710, %v12773
        %v12787 = vadd.f32 %v12711, %v12777
        %v12788 = vadd.f32 %v12712, %v12773
        %v12789 = vadd.f32 %v12713, %v12777
        %v12790 = vadd.f32 %v12714, %v12773
        %v12791 = vadd.f32 %v12715, %v12777
        %v12792 = vadd.f32 %v12716, %v12773
        %v12793 = vadd.f32 %v12717, %v12777
        %v12794 = vadd.f32 %v12718, %v12773
        %v12795 = vadd.f32 %v12719, %v12777
        %v12796 = vadd.f32 %v12720, %v12773
        %v12797 = vadd.f32 %v12721, %v12777
        %v12798 = vadd.f32 %v12722, %v12773
        %v12799 = vadd.f32 %v12723, %v12777
        %v12800 = vadd.f32 %v12724, %v12773
        %v12801 = vadd.f32 %v12725, %v12777
        %v12802 = vadd.f32 %v12726, %v12773
        %v12803 = vadd.f32 %v12727, %v12777
        %v12804 = vadd.f32 %v12728, %v12773
        %v12805 = vadd.f32 %v12729, %v12777
        %v12806 = vadd.f32 %v12730, %v12773
        %v12807 = vadd.f32 %v12731, %v12777
        %v12808 = vadd.f32 %v12732, %v12773
        %v12809 = vadd.f32 %v12733, %v12777
        %v12810 = vadd.f32 %v12734, %v12773
        %v12811 = vadd.f32 %v12735, %v12777
        %v12812 = vadd.f32 %v12736, %v12773
        %v12813 = vadd.f32 %v12737, %v12777
        %v12814 = vadd.f32 %v12738, %v12773
        %v12815 = vadd.f32 %v12739, %v12777
        %v12816 = vadd.f32 %v12740, %v12773
        %v12817 = vadd.f32 %v12741, %v12777
        %v12818 = vadd.f32 %v12742, %v12773
        %v12819 = vadd.f32 %v12743, %v12777
        %v12820 = vadd.f32 %v12744, %v12773
        %v12821 = vadd.f32 %v12745, %v12777
        %v12822 = vadd.f32 %v12746, %v12773
        %v12823 = vadd.f32 %v12747, %v12777
        %v12824 = vadd.f32 %v12748, %v12773
        %v12825 = vadd.f32 %v12749, %v12777
        %v12826 = vadd.f32 %v12750, %v12773
        %v12827 = vadd.f32 %v12751, %v12777
        %v12828 = vadd.f32 %v12752, %v12773
        %v12829 = vadd.f32 %v12753, %v12777
        %v12830 = vadd.f32 %v12754, %v12773
        %v12831 = vadd.f32 %v12755, %v12777
        %v12832 = vadd.f32 %v12756, %v12773
        %v12833 = vadd.f32 %v12757, %v12777
        %v12834 = vadd.f32 %v12758, %v12773
        %v12835 = vadd.f32 %v12759, %v12777
        %v12836 = vadd.f32 %v12760, %v12773
        %v12837 = vadd.f32 %v12761, %v12777
        %v12838 = vadd.f32 %v12762, %v12773
        %v12839 = vadd.f32 %v12763, %v12777
        %v12840 = vadd.f32 %v12764, %v12773
        %v12841 = vadd.f32 %v12765, %v12777
        %v12842 = vadd.f32 %v12766, %v12773
        %v12843 = vadd.f32 %v12767, %v12777
        %v12844 = vmax.f32 %v12780, 0.0
        %v12845 = vmax.f32 %v12781, 0.0
        %v12846 = vmax.f32 %v12782, 0.0
        %v12847 = vmax.f32 %v12783, 0.0
        %v12848 = vmax.f32 %v12784, 0.0
        %v12849 = vmax.f32 %v12785, 0.0
        %v12850 = vmax.f32 %v12786, 0.0
        %v12851 = vmax.f32 %v12787, 0.0
        %v12852 = vmax.f32 %v12788, 0.0
        %v12853 = vmax.f32 %v12789, 0.0
        %v12854 = vmax.f32 %v12790, 0.0
        %v12855 = vmax.f32 %v12791, 0.0
        %v12856 = vmax.f32 %v12792, 0.0
        %v12857 = vmax.f32 %v12793, 0.0
        %v12858 = vmax.f32 %v12794, 0.0
        %v12859 = vmax.f32 %v12795, 0.0
        %v12860 = vmax.f32 %v12796, 0.0
        %v12861 = vmax.f32 %v12797, 0.0
        %v12862 = vmax.f32 %v12798, 0.0
        %v12863 = vmax.f32 %v12799, 0.0
        %v12864 = vmax.f32 %v12800, 0.0
        %v12865 = vmax.f32 %v12801, 0.0
        %v12866 = vmax.f32 %v12802, 0.0
        %v12867 = vmax.f32 %v12803, 0.0
        %v12868 = vmax.f32 %v12804, 0.0
        %v12869 = vmax.f32 %v12805, 0.0
        %v12870 = vmax.f32 %v12806, 0.0
        %v12871 = vmax.f32 %v12807, 0.0
        %v12872 = vmax.f32 %v12808, 0.0
        %v12873 = vmax.f32 %v12809, 0.0
        %v12874 = vmax.f32 %v12810, 0.0
        %v12875 = vmax.f32 %v12811, 0.0
        %v12876 = vmax.f32 %v12812, 0.0
        %v12877 = vmax.f32 %v12813, 0.0
        %v12878 = vmax.f32 %v12814, 0.0
        %v12879 = vmax.f32 %v12815, 0.0
        %v12880 = vmax.f32 %v12816, 0.0
        %v12881 = vmax.f32 %v12817, 0.0
        %v12882 = vmax.f32 %v12818, 0.0
        %v12883 = vmax.f32 %v12819, 0.0
        %v12884 = vmax.f32 %v12820, 0.0
        %v12885 = vmax.f32 %v12821, 0.0
        %v12886 = vmax.f32 %v12822, 0.0
        %v12887 = vmax.f32 %v12823, 0.0
        %v12888 = vmax.f32 %v12824, 0.0
        %v12889 = vmax.f32 %v12825, 0.0
        %v12890 = vmax.f32 %v12826, 0.0
        %v12891 = vmax.f32 %v12827, 0.0
        %v12892 = vmax.f32 %v12828, 0.0
        %v12893 = vmax.f32 %v12829, 0.0
        %v12894 = vmax.f32 %v12830, 0.0
        %v12895 = vmax.f32 %v12831, 0.0
        %v12896 = vmax.f32 %v12832, 0.0
        %v12897 = vmax.f32 %v12833, 0.0
        %v12898 = vmax.f32 %v12834, 0.0
        %v12899 = vmax.f32 %v12835, 0.0
        %v12900 = vmax.f32 %v12836, 0.0
        %v12901 = vmax.f32 %v12837, 0.0
        %v12902 = vmax.f32 %v12838, 0.0
        %v12903 = vmax.f32 %v12839, 0.0
        %v12904 = vmax.f32 %v12840, 0.0
        %v12905 = vmax.f32 %v12841, 0.0
        %v12906 = vmax.f32 %v12842, 0.0
        %v12907 = vmax.f32 %v12843, 0.0
        %12908 = vst [vmem:[%s291] sm:$0xff] %v12844
        %12909 = vst [vmem:[%s291 + $0x8] sm:$0xff] %v12845
        %12910 = vst [vmem:[%s291 + $0x10] sm:$0xff] %v12846
        %12911 = vst [vmem:[%s291 + $0x18] sm:$0xff] %v12847
        %12912 = vst [vmem:[%s291 + $0x20] sm:$0xff] %v12848
        %12913 = vst [vmem:[%s291 + $0x28] sm:$0xff] %v12849
        %12914 = vst [vmem:[%s291 + $0x30] sm:$0xff] %v12850
        %12915 = vst [vmem:[%s291 + $0x38] sm:$0xff] %v12851
        %12916 = vst [vmem:[%s291 + $0x40] sm:$0xff] %v12852
        %12917 = vst [vmem:[%s291 + $0x48] sm:$0xff] %v12853
        %12918 = vst [vmem:[%s291 + $0x50] sm:$0xff] %v12854
        %12919 = vst [vmem:[%s291 + $0x58] sm:$0xff] %v12855
        %12920 = vst [vmem:[%s291 + $0x60] sm:$0xff] %v12856
        %12921 = vst [vmem:[%s291 + $0x68] sm:$0xff] %v12857
        %12922 = vst [vmem:[%s291 + $0x70] sm:$0xff] %v12858
        %12923 = vst [vmem:[%s291 + $0x78] sm:$0xff] %v12859
        %12924 = vst [vmem:[%s291 + $0x80] sm:$0xff] %v12860
        %12925 = vst [vmem:[%s291 + $0x88] sm:$0xff] %v12861
        %12926 = vst [vmem:[%s291 + $0x90] sm:$0xff] %v12862
        %12927 = vst [vmem:[%s291 + $0x98] sm:$0xff] %v12863
        %12928 = vst [vmem:[%s291 + $0xa0] sm:$0xff] %v12864
        %12929 = vst [vmem:[%s291 + $0xa8] sm:$0xff] %v12865
        %12930 = vst [vmem:[%s291 + $0xb0] sm:$0xff] %v12866
        %12931 = vst [vmem:[%s291 + $0xb8] sm:$0xff] %v12867
        %12932 = vst [vmem:[%s291 + $0xc0] sm:$0xff] %v12868
        %12933 = vst [vmem:[%s291 + $0xc8] sm:$0xff] %v12869
        %12934 = vst [vmem:[%s291 + $0xd0] sm:$0xff] %v12870
        %12935 = vst [vmem:[%s291 + $0xd8] sm:$0xff] %v12871
        %12936 = vst [vmem:[%s291 + $0xe0] sm:$0xff] %v12872
        %12937 = vst [vmem:[%s291 + $0xe8] sm:$0xff] %v12873
        %12938 = vst [vmem:[%s291 + $0xf0] sm:$0xff] %v12874
        %12939 = vst [vmem:[%s291 + $0xf8] sm:$0xff] %v12875
        %12940 = vst [vmem:[%s291 + $0x100] sm:$0xff] %v12876
        %12941 = vst [vmem:[%s291 + $0x108] sm:$0xff] %v12877
        %12942 = vst [vmem:[%s291 + $0x110] sm:$0xff] %v12878
        %12943 = vst [vmem:[%s291 + $0x118] sm:$0xff] %v12879
        %12944 = vst [vmem:[%s291 + $0x120] sm:$0xff] %v12880
        %12945 = vst [vmem:[%s291 + $0x128] sm:$0xff] %v12881
        %12946 = vst [vmem:[%s291 + $0x130] sm:$0xff] %v12882
        %12947 = vst [vmem:[%s291 + $0x138] sm:$0xff] %v12883
        %12948 = vst [vmem:[%s291 + $0x140] sm:$0xff] %v12884
        %12949 = vst [vmem:[%s291 + $0x148] sm:$0xff] %v12885
        %12950 = vst [vmem:[%s291 + $0x150] sm:$0xff] %v12886
        %12951 = vst [vmem:[%s291 + $0x158] sm:$0xff] %v12887
        %12952 = vst [vmem:[%s291 + $0x160] sm:$0xff] %v12888
        %12953 = vst [vmem:[%s291 + $0x168] sm:$0xff] %v12889
        %12954 = vst [vmem:[%s291 + $0x170] sm:$0xff] %v12890
        %12955 = vst [vmem:[%s291 + $0x178] sm:$0xff] %v12891
        %12956 = vst [vmem:[%s291 + $0x180] sm:$0xff] %v12892
        %12957 = vst [vmem:[%s291 + $0x188] sm:$0xff] %v12893
        %12958 = vst [vmem:[%s291 + $0x190] sm:$0xff] %v12894
        %12959 = vst [vmem:[%s291 + $0x198] sm:$0xff] %v12895
        %12960 = vst [vmem:[%s291 + $0x1a0] sm:$0xff] %v12896
        %12961 = vst [vmem:[%s291 + $0x1a8] sm:$0xff] %v12897
        %12962 = vst [vmem:[%s291 + $0x1b0] sm:$0xff] %v12898
        %12963 = vst [vmem:[%s291 + $0x1b8] sm:$0xff] %v12899
        %12964 = vst [vmem:[%s291 + $0x1c0] sm:$0xff] %v12900
        %12965 = vst [vmem:[%s291 + $0x1c8] sm:$0xff] %v12901
        %12966 = vst [vmem:[%s291 + $0x1d0] sm:$0xff] %v12902
        %12967 = vst [vmem:[%s291 + $0x1d8] sm:$0xff] %v12903
        %12968 = vst [vmem:[%s291 + $0x1e0] sm:$0xff] %v12904
        %12969 = vst [vmem:[%s291 + $0x1e8] sm:$0xff] %v12905
        %12970 = vst [vmem:[%s291 + $0x1f0] sm:$0xff] %v12906
        %12971 = vst [vmem:[%s291 + $0x1f8] sm:$0xff] %v12907
        %s12972 = sand.u32 %s156, 1
        %s12973 = scalar_lea.sflag [#allocation5], %s12972
        %s12974 = sand.u32 %s156, 1
        %s12975 = smul.addr %s12974, 512
        %s12976 = scalar_lea.vmem [#allocation11], %s12975
        // Predicated region
        $region61: #{tpu_custom_call.1} parent=39 // pred_check
          %p12977 = pneg %p166
        $region62: #{tpu_custom_call.1} parent=39 // pred_check_branch
          %12979 = sbr.rel (%p12977) target = $region64
        $region63: #{tpu_custom_call.1} parent=39 // pred_region
          %s12980 = smul.u32 16, %s27
          %s12982 = ssub.s32 8192, 8192
          %12983 = vsyncadd %s12973, %s12982
          %s12984 = smul.addr %s12980, 4
          %s12985 = smul.addr %s26, 64
          %s12986 = sadd.s32 %s12984, %s12985
          %s12987 = smul.addr %s12986, 128
          %s12988 = scalar_lea.hbm %s5, %s12987
          %s12989 = sshll.u32 %s12976, 4
          %s12990 = int_to_ptr.vmem [resolvable:$true] %s12989
          %12995 = dma.vmem_to_hbm [thread:$0]  %s12990, 8192, %s12988, %s12973, 256, 256, 16
        $region64: #{tpu_custom_call.1} parent=39 // pred_fallthru
          _
      $region40: #{tpu_custom_call.1} parent=5 // pred_fallthru
        _
      %p12996 = scmp.le.s32.totalorder 2, %s17
      // Predicated region
      $region65: #{tpu_custom_call.1} parent=5 // pred_check
        %p12997 = pneg %p12996
      $region66: #{tpu_custom_call.1} parent=5 // pred_check_branch
        %12999 = sbr.rel (%p12997) target = $region68
      $region67: #{tpu_custom_call.1} parent=5 // pred_region
        %s13000 = ssub.s32 %s17, 2
        // Predicated region
        $region69: #{tpu_custom_call.1} parent=67 // pred_check
          %p13001 = pneg %p172
        $region70: #{tpu_custom_call.1} parent=67 // pred_check_branch
          %13003 = sbr.rel (%p13001) target = $region72
        $region71: #{tpu_custom_call.1} parent=67 // pred_region
          %s13004 = sand.u32 %s157, 1
          %s13005 = scalar_lea.sflag [#allocation5], %s13004
          %s13006 = sand.u32 %s157, 1
          %s13007 = smul.addr %s13006, 512
          %s13008 = scalar_lea.vmem [#allocation11], %s13007
          %13009 = dma.done %s13005, 8192
        $region72: #{tpu_custom_call.1} parent=67 // pred_fallthru
          _
      $region68: #{tpu_custom_call.1} parent=5 // pred_fallthru
        _
    $region6: #{tpu_custom_call.1} parent=1 // loop_footer
      %s21 = sadd.s32 1, %s17
    $region7: #{tpu_custom_call.1} parent=1 // loop_footer_branch
      %16 = sbr.rel target = $region3
    $region8: #{tpu_custom_call.1} parent=1 // loop_exit
      _
    %13010 = vsyncpa [#allocation4], 1
    %s13011 = scalar_lea.sflag [#allocation4], 1
    %13012 = vsyncpa %s13011, 1
    %13013 = vsyncpa [#allocation7], 1
    %13014 = vsyncpa [#allocation10], 1
    %13015 = vsyncpa [#allocation5], 1
    %s13016 = scalar_lea.sflag [#allocation5], 1
    %13017 = vsyncpa %s13016, 1

</llo_original>
